<compile_context>
chip_gen: v6e
topology: v6e:2x2x1
jax: 0.10.0
libtpu: 0.0.40
codegen_flags: <defaults>
</compile_context>

<pallas_src>
import jax
import jax.numpy as jnp
from jax.experimental import pallas as pl
from jax.experimental.pallas import tpu as pltpu

LANES = 128          # conv output channels are zero-padded to 128 lanes
BN_EPS = 1e-5
CONV_CFG = [(1, 32), (32, 64), (64, 128)]


# ----------------------------- Pallas kernels ------------------------------

def _conv_pool_kernel(x_ref, w_ref, shift_ref, o_ref):
    """Fused conv-as-matmul + folded BN/bias + ReLU + 2x2x2 max-pool.

    x_ref:     (1, R, K)   bf16 im2col patch rows in pool-group order
                           (8 consecutive rows = one 2x2x2 pooling window)
    w_ref:     (K, 128)    bf16 folded conv weights (BN scale folded, lane pad)
    shift_ref: (1, 128)    f32 folded BN/bias shift (zero in padded lanes)
    o_ref:     (1, P, 128) bf16 pooled conv+BN+ReLU output, P = R // 8
    """
    x = x_ref[0]                                                   # (R, K)
    acc = jnp.dot(x, w_ref[...], preferred_element_type=jnp.float32)
    act = jnp.maximum(acc + shift_ref[...], 0.0)                   # (R, 128) f32
    p = o_ref.shape[1]
    # Tile-aligned sublane split (R,128)->(P,8,128); reduce the 8-row window.
    pooled = jnp.max(act.reshape(p, 8, LANES), axis=1)
    o_ref[0] = pooled.astype(o_ref.dtype)


def conv_pool_block(pat, wk, shift, *, row_splits=1):
    """pat: (B, R, K) pool-ordered patches -> (B, R // 8, 128) pooled output."""
    B, R, K = pat.shape
    assert R % 8 == 0
    P = R // 8
    assert R % row_splits == 0 and P % row_splits == 0
    rb, pb = R // row_splits, P // row_splits
    assert rb % 8 == 0 and (row_splits == 1 or pb % 8 == 0)
    # Per-block working set (patch tile + f32 acc + pooled out) is a few
    # hundred KB at these shapes -- far below scoped-VMEM limits on v5e-v7x.
    return pl.pallas_call(
        _conv_pool_kernel,
        out_shape=jax.ShapeDtypeStruct((B, P, LANES), jnp.bfloat16),
        grid=(B, row_splits),
        in_specs=[
            pl.BlockSpec((1, rb, K), lambda b, s: (b, s, 0)),
            pl.BlockSpec((K, LANES), lambda b, s: (0, 0)),
            pl.BlockSpec((1, LANES), lambda b, s: (0, 0)),
        ],
        out_specs=pl.BlockSpec((1, pb, LANES), lambda b, s: (b, s, 0)),
        # "parallel" on both axes: independent blocks; on v7x the two
        # TensorCores split the grid, on v5e/v6e it is a pipelined loop.
        compiler_params=pltpu.CompilerParams(
            dimension_semantics=("parallel", "parallel")),
    )(pat, wk, shift)


def _fc_head_kernel(x_ref, w1_ref, b1_ref, w2_ref, b2_ref, w3_ref, b3_ref, o_ref):
    """fc1 -> ReLU -> fc2 -> ReLU -> output head; all weights resident in VMEM."""
    h = jnp.dot(x_ref[...], w1_ref[...], preferred_element_type=jnp.float32)
    h = jnp.maximum(h + b1_ref[...], 0.0).astype(jnp.bfloat16)
    h = jnp.dot(h, w2_ref[...], preferred_element_type=jnp.float32)
    h = jnp.maximum(h + b2_ref[...], 0.0).astype(jnp.bfloat16)
    o_ref[...] = (jnp.dot(h, w3_ref[...], preferred_element_type=jnp.float32)
                  + b3_ref[...])


def fc_head(x, w1, b1, w2, b2, w3, b3):
    # TODO(synk): at tiny batch this kernel is pure weight DMA; a cross-call
    # prefetch of the FC weights during conv2/conv3 (or int8 weights on
    # v5e/v6e) would hide/halve it.
    B = x.shape[0]
    N = w3.shape[1]
    vmem = pl.BlockSpec(memory_space=pltpu.MemorySpace.VMEM)
    return pl.pallas_call(
        _fc_head_kernel,
        out_shape=jax.ShapeDtypeStruct((B, N), jnp.float32),
        in_specs=[vmem] * 7,
        out_specs=vmem,
    )(x, w1, b1, w2, b2, w3, b3)


# ------------------------------- JAX glue ----------------------------------

def build_pool_patches(x, k_pad=None):
    """x: (B, D, H, W, C) -> (B, 8*P, K) bf16 im2col patches in pool order.

    P = (D//2)*(H//2)*(W//2) pooled positions (floor-mode MaxPool3d(2)); each
    group of 8 consecutive rows holds the 3x3x3 'same'-padded patches of the
    2x2x2 pooling window of one pooled position, so the conv kernel can fuse
    the max-pool as a tile-aligned 8-row reduction before the store.
    """
    B, D, H, W, C = x.shape
    D2, H2, W2 = D // 2, H // 2, W // 2
    K = 27 * C
    xp = jnp.pad(x, ((0, 0), (1, 1), (1, 1), (1, 1), (0, 0)))
    slabs = [xp[:, kd:kd + D, kh:kh + H, kw:kw + W, :]
             for kd in range(3) for kh in range(3) for kw in range(3)]
    pat = jnp.stack(slabs, axis=4).reshape(B, D, H, W, K)
    pat = pat[:, :2 * D2, :2 * H2, :2 * W2, :]           # floor-mode pool crop
    pat = pat.reshape(B, D2, 2, H2, 2, W2, 2, K)
    pat = jnp.transpose(pat, (0, 1, 3, 5, 2, 4, 6, 7))   # (B,D2,H2,W2,2,2,2,K)
    pat = pat.reshape(B, D2 * H2 * W2 * 8, K)
    if k_pad is not None and k_pad > K:
        pat = jnp.pad(pat, ((0, 0), (0, 0), (0, k_pad - K)))
    return pat.astype(jnp.bfloat16)


# ----------------------------- Parameters ----------------------------------

def init_params(key):
    keys = jax.random.split(key, 24)
    i = 0

    def nrm(shape, s):
        nonlocal i
        k = keys[i]
        i += 1
        return s * jax.random.normal(k, shape, jnp.float32)

    p = {}
    for li, (cin, cout) in enumerate(CONV_CFG, start=1):
        p[f"conv{li}_w"] = nrm((cout, cin, 3, 3, 3), 0.1)   # PyTorch layout
        p[f"conv{li}_b"] = nrm((cout,), 0.05)
        p[f"bn{li}_gamma"] = 1.0 + nrm((cout,), 0.05)
        p[f"bn{li}_beta"] = nrm((cout,), 0.05)
        p[f"bn{li}_mean"] = nrm((cout,), 0.02)
        p[f"bn{li}_var"] = 1.0 + jnp.abs(nrm((cout,), 0.05))
    for name, fin, fout in [("fc1", 512, 1024), ("fc2", 1024, 512), ("out", 512, 10)]:
        p[f"{name}_w"] = nrm((fin, fout), 0.05)             # stored as (in, out)
        p[f"{name}_b"] = nrm((fout,), 0.02)
    return p


def prepare_params(p, input_shape=(1, 21, 11, 16)):
    """Fold inference-mode BN into the conv weights, pad lanes/K, bake the
    NCDHW flatten permutation into fc1, cast weights to bf16."""
    prep = {}
    for li, (cin, cout) in enumerate(CONV_CFG, start=1):
        w = p[f"conv{li}_w"].astype(jnp.float32)             # (cout, cin, 3, 3, 3)
        scale = p[f"bn{li}_gamma"] / jnp.sqrt(p[f"bn{li}_var"] + BN_EPS)
        shift = p[f"bn{li}_beta"] + (p[f"conv{li}_b"] - p[f"bn{li}_mean"]) * scale
        w = w * scale[:, None, None, None, None]             # fold BN scale
        w = jnp.transpose(w, (2, 3, 4, 1, 0)).reshape(27 * cin, cout)
        k_pad = 32 if li == 1 else 27 * cin                  # conv1: K 27 -> 32
        w = jnp.pad(w, ((0, k_pad - 27 * cin), (0, LANES - cout)))
        prep[f"conv{li}_wk"] = w.astype(jnp.bfloat16)
        prep[f"conv{li}_shift"] = (jnp.pad(shift, (0, LANES - cout))
                                   .reshape(1, LANES).astype(jnp.float32))

    # Geometry after the three floor-mode 2x2x2 pools.
    d, h, w_ = input_shape[1], input_shape[2], input_shape[3]
    for _ in range(3):
        d, h, w_ = d // 2, h // 2, w_ // 2
    p3 = d * h * w_                                          # pooled positions (4)
    c3 = CONV_CFG[-1][1]
    assert c3 == LANES                                       # no junk lanes in flatten
    # PyTorch flattens NCDHW (feature idx = c*p3 + pos); our conv3 output is
    # (B, pos, c).  Permute fc1's input rows so a plain reshape matches.
    w1 = p["fc1_w"].reshape(c3, p3, -1).transpose(1, 0, 2).reshape(c3 * p3, -1)
    prep["fc1_w"] = w1.astype(jnp.bfloat16)
    prep["fc1_b"] = p["fc1_b"].reshape(1, -1).astype(jnp.float32)
    for name in ("fc2", "out"):
        prep[f"{name}_w"] = p[f"{name}_w"].astype(jnp.bfloat16)
        prep[f"{name}_b"] = p[f"{name}_b"].reshape(1, -1).astype(jnp.float32)
    return prep


# ------------------------------- Forward -----------------------------------

def forward(prep, x_ncdhw):
    # TODO(synk): BatchNorm3d is applied in inference mode (running statistics
    # folded into the conv weights); training-mode batch stats are not reproduced.
    x = jnp.transpose(x_ncdhw, (0, 2, 3, 4, 1)).astype(jnp.float32)  # (B,D,H,W,1)
    B = x.shape[0]

    # conv1 + bn1 + ReLU + pool1 (K padded 27->32); rows split in two per batch
    # item for DMA/compute overlap and v7x 2-TC sharding.
    pat = build_pool_patches(x, k_pad=32)
    y = conv_pool_block(pat, prep["conv1_wk"], prep["conv1_shift"], row_splits=2)
    d, h, w = x.shape[1] // 2, x.shape[2] // 2, x.shape[3] // 2
    y = y.reshape(B, d, h, w, LANES)[..., :CONV_CFG[0][1]]

    # conv2 + bn2 + ReLU + pool2
    pat = build_pool_patches(y)
    y = conv_pool_block(pat, prep["conv2_wk"], prep["conv2_shift"])
    d, h, w = d // 2, h // 2, w // 2
    y = y.reshape(B, d, h, w, LANES)[..., :CONV_CFG[1][1]]

    # conv3 + bn3 + ReLU + pool3
    pat = build_pool_patches(y)
    y = conv_pool_block(pat, prep["conv3_wk"], prep["conv3_shift"])

    # Flatten (fc1 rows were pre-permuted to PyTorch's NCDHW order) + FC head.
    feat = y.reshape(B, -1)
    return fc_head(feat, prep["fc1_w"], prep["fc1_b"],
                   prep["fc2_w"], prep["fc2_b"],
                   prep["out_w"], prep["out_b"])


# --------------------------------- Main ------------------------------------

if __name__ == "__main__":
    key = jax.random.PRNGKey(0)
    pkey, xkey = jax.random.split(key)
    params = init_params(pkey)
    prep = prepare_params(params)

    # Batch of 2, default module input_shape (C=1, D=21, H=11, W=16), NCDHW.
    x = jax.random.normal(xkey, (2, 1, 21, 11, 16), jnp.float32)

    out = jax.jit(forward)(prep, x)
    out = jax.block_until_ready(out)
    assert out.shape == (2, 10), out.shape
    assert bool(jnp.all(jnp.isfinite(out)))
    print("KERNEL_OK")
</pallas_src>

<mosaic_0001>
module attributes {stable_mosaic.version = 11 : i64} {
  func.func @_conv_pool_kernel(%arg0: i32, %arg1: i32, %arg2: memref<1x1600x32xbf16, #tpu.memory_space<vmem>>, %arg3: memref<32x128xbf16, #tpu.memory_space<vmem>>, %arg4: memref<1x128xf32, #tpu.memory_space<vmem>>, %arg5: memref<1x200x128xbf16, #tpu.memory_space<vmem>>) attributes {dimension_semantics = [#tpu.dimension_semantics<parallel>, #tpu.dimension_semantics<parallel>], iteration_bounds = array<i64: 2, 2>, scalar_prefetch = 0 : i64, scratch_operands = 0 : i64, tpu.core_type = #tpu.core_type<tc>, window_params = [{transform_indices = @transform_0, window_bounds = array<i64: 1, 1600, 32>}, {pipeline_mode = #tpu.pipeline_mode<synchronous>, transform_indices = @transform_1, window_bounds = array<i64: 32, 128>}, {pipeline_mode = #tpu.pipeline_mode<synchronous>, transform_indices = @transform_2, window_bounds = array<i64: 1, 128>}, {transform_indices = @transform_3, window_bounds = array<i64: 1, 200, 128>}]} {
    %c0 = arith.constant 0 : index
    %c0_0 = arith.constant 0 : index
    %c0_1 = arith.constant 0 : index
    %0 = vector.load %arg2[%c0, %c0_0, %c0_1] : memref<1x1600x32xbf16, #tpu.memory_space<vmem>>, vector<1x1600x32xbf16>
    %1 = vector.shape_cast %0 : vector<1x1600x32xbf16> to vector<1600x32xbf16>
    %c0_2 = arith.constant 0 : index
    %c0_3 = arith.constant 0 : index
    %2 = vector.load %arg3[%c0_2, %c0_3] : memref<32x128xbf16, #tpu.memory_space<vmem>>, vector<32x128xbf16>
    %cst = arith.constant dense<0.000000e+00> : vector<1600x128xf32>
    %3 = tpu.matmul %1, %2, %cst {dimension_numbers = #tpu.dot_dimension_numbers<[1], [0], [0], [1], [0, 0, 1, 1], [], []>} : vector<1600x32xbf16>, vector<32x128xbf16>, vector<1600x128xf32> -> vector<1600x128xf32>
    %c0_4 = arith.constant 0 : index
    %c0_5 = arith.constant 0 : index
    %4 = vector.load %arg4[%c0_4, %c0_5] : memref<1x128xf32, #tpu.memory_space<vmem>>, vector<1x128xf32>
    %5 = vector.broadcast %4 : vector<1x128xf32> to vector<1600x128xf32>
    %6 = arith.addf %3, %5 : vector<1600x128xf32>
    %cst_6 = arith.constant 0.000000e+00 : f32
    %7 = vector.broadcast %cst_6 : f32 to vector<1600x128xf32>
    %8 = arith.maximumf %6, %7 : vector<1600x128xf32>
    %9 = vector.shape_cast %8 : vector<1600x128xf32> to vector<200x8x128xf32>
    %cst_7 = arith.constant dense<0xFF800000> : vector<200x128xf32>
    %10 = vector.multi_reduction <maximumf>, %9, %cst_7 [1] : vector<200x8x128xf32> to vector<200x128xf32>
    %11 = arith.truncf %10 : vector<200x128xf32> to vector<200x128xbf16>
    %c0_8 = arith.constant 0 : index
    %c0_9 = arith.constant 0 : index
    %c0_10 = arith.constant 0 : index
    %12 = vector.load %arg5[%c0_8, %c0_9, %c0_10] : memref<1x200x128xbf16, #tpu.memory_space<vmem>>, vector<1x200x128xbf16>
    %13 = vector.shape_cast %12 : vector<1x200x128xbf16> to vector<200x128xbf16>
    %14 = vector.shape_cast %11 : vector<200x128xbf16> to vector<1x200x128xbf16>
    tpu.vector_store %arg5[%c0_8, %c0_9, %c0_10], %14 {strides = array<i32>} : memref<1x200x128xbf16, #tpu.memory_space<vmem>>, vector<1x200x128xbf16>,
    return
  }
  func.func @transform_0(%arg0: i32, %arg1: i32) -> (i32, i32, i32) {
    %c0_i32 = arith.constant 0 : i32
    %c0_i32_0 = arith.constant 0 : i32
    return %arg0, %arg1, %c0_i32 : i32, i32, i32
  }
  func.func @transform_1(%arg0: i32, %arg1: i32) -> (i32, i32) {
    %c0_i32 = arith.constant 0 : i32
    %c0_i32_0 = arith.constant 0 : i32
    %c0_i32_1 = arith.constant 0 : i32
    return %c0_i32, %c0_i32_0 : i32, i32
  }
  func.func @transform_2(%arg0: i32, %arg1: i32) -> (i32, i32) {
    %c0_i32 = arith.constant 0 : i32
    %c0_i32_0 = arith.constant 0 : i32
    %c0_i32_1 = arith.constant 0 : i32
    return %c0_i32, %c0_i32_0 : i32, i32
  }
  func.func @transform_3(%arg0: i32, %arg1: i32) -> (i32, i32, i32) {
    %c0_i32 = arith.constant 0 : i32
    %c0_i32_0 = arith.constant 0 : i32
    return %arg0, %arg1, %c0_i32 : i32, i32, i32
  }
}

module attributes {stable_mosaic.version = 11 : i64} {
  func.func @_conv_pool_kernel(%arg0: i32, %arg1: i32, %arg2: memref<1x320x864xbf16, #tpu.memory_space<vmem>>, %arg3: memref<864x128xbf16, #tpu.memory_space<vmem>>, %arg4: memref<1x128xf32, #tpu.memory_space<vmem>>, %arg5: memref<1x40x128xbf16, #tpu.memory_space<vmem>>) attributes {dimension_semantics = [#tpu.dimension_semantics<parallel>, #tpu.dimension_semantics<parallel>], iteration_bounds = array<i64: 2, 1>, scalar_prefetch = 0 : i64, scratch_operands = 0 : i64, tpu.core_type = #tpu.core_type<tc>, window_params = [{transform_indices = @transform_0, window_bounds = array<i64: 1, 320, 864>}, {pipeline_mode = #tpu.pipeline_mode<synchronous>, transform_indices = @transform_1, window_bounds = array<i64: 864, 128>}, {pipeline_mode = #tpu.pipeline_mode<synchronous>, transform_indices = @transform_2, window_bounds = array<i64: 1, 128>}, {transform_indices = @transform_3, window_bounds = array<i64: 1, 40, 128>}]} {
    %c0 = arith.constant 0 : index
    %c0_0 = arith.constant 0 : index
    %c0_1 = arith.constant 0 : index
    %0 = vector.load %arg2[%c0, %c0_0, %c0_1] : memref<1x320x864xbf16, #tpu.memory_space<vmem>>, vector<1x320x864xbf16>
    %1 = vector.shape_cast %0 : vector<1x320x864xbf16> to vector<320x864xbf16>
    %c0_2 = arith.constant 0 : index
    %c0_3 = arith.constant 0 : index
    %2 = vector.load %arg3[%c0_2, %c0_3] : memref<864x128xbf16, #tpu.memory_space<vmem>>, vector<864x128xbf16>
    %cst = arith.constant dense<0.000000e+00> : vector<320x128xf32>
    %3 = tpu.matmul %1, %2, %cst {dimension_numbers = #tpu.dot_dimension_numbers<[1], [0], [0], [1], [0, 0, 1, 1], [], []>} : vector<320x864xbf16>, vector<864x128xbf16>, vector<320x128xf32> -> vector<320x128xf32>
    %c0_4 = arith.constant 0 : index
    %c0_5 = arith.constant 0 : index
    %4 = vector.load %arg4[%c0_4, %c0_5] : memref<1x128xf32, #tpu.memory_space<vmem>>, vector<1x128xf32>
    %5 = vector.broadcast %4 : vector<1x128xf32> to vector<320x128xf32>
    %6 = arith.addf %3, %5 : vector<320x128xf32>
    %cst_6 = arith.constant 0.000000e+00 : f32
    %7 = vector.broadcast %cst_6 : f32 to vector<320x128xf32>
    %8 = arith.maximumf %6, %7 : vector<320x128xf32>
    %9 = vector.shape_cast %8 : vector<320x128xf32> to vector<40x8x128xf32>
    %cst_7 = arith.constant dense<0xFF800000> : vector<40x128xf32>
    %10 = vector.multi_reduction <maximumf>, %9, %cst_7 [1] : vector<40x8x128xf32> to vector<40x128xf32>
    %11 = arith.truncf %10 : vector<40x128xf32> to vector<40x128xbf16>
    %c0_8 = arith.constant 0 : index
    %c0_9 = arith.constant 0 : index
    %c0_10 = arith.constant 0 : index
    %12 = vector.load %arg5[%c0_8, %c0_9, %c0_10] : memref<1x40x128xbf16, #tpu.memory_space<vmem>>, vector<1x40x128xbf16>
    %13 = vector.shape_cast %12 : vector<1x40x128xbf16> to vector<40x128xbf16>
    %14 = vector.shape_cast %11 : vector<40x128xbf16> to vector<1x40x128xbf16>
    tpu.vector_store %arg5[%c0_8, %c0_9, %c0_10], %14 {strides = array<i32>} : memref<1x40x128xbf16, #tpu.memory_space<vmem>>, vector<1x40x128xbf16>,
    return
  }
  func.func @transform_0(%arg0: i32, %arg1: i32) -> (i32, i32, i32) {
    %c0_i32 = arith.constant 0 : i32
    %c0_i32_0 = arith.constant 0 : i32
    return %arg0, %arg1, %c0_i32 : i32, i32, i32
  }
  func.func @transform_1(%arg0: i32, %arg1: i32) -> (i32, i32) {
    %c0_i32 = arith.constant 0 : i32
    %c0_i32_0 = arith.constant 0 : i32
    %c0_i32_1 = arith.constant 0 : i32
    return %c0_i32, %c0_i32_0 : i32, i32
  }
  func.func @transform_2(%arg0: i32, %arg1: i32) -> (i32, i32) {
    %c0_i32 = arith.constant 0 : i32
    %c0_i32_0 = arith.constant 0 : i32
    %c0_i32_1 = arith.constant 0 : i32
    return %c0_i32, %c0_i32_0 : i32, i32
  }
  func.func @transform_3(%arg0: i32, %arg1: i32) -> (i32, i32, i32) {
    %c0_i32 = arith.constant 0 : i32
    %c0_i32_0 = arith.constant 0 : i32
    return %arg0, %arg1, %c0_i32 : i32, i32, i32
  }
}

module attributes {stable_mosaic.version = 11 : i64} {
  func.func @_conv_pool_kernel(%arg0: i32, %arg1: i32, %arg2: memref<1x32x1728xbf16, #tpu.memory_space<vmem>>, %arg3: memref<1728x128xbf16, #tpu.memory_space<vmem>>, %arg4: memref<1x128xf32, #tpu.memory_space<vmem>>, %arg5: memref<1x4x128xbf16, #tpu.memory_space<vmem>>) attributes {dimension_semantics = [#tpu.dimension_semantics<parallel>, #tpu.dimension_semantics<parallel>], iteration_bounds = array<i64: 2, 1>, scalar_prefetch = 0 : i64, scratch_operands = 0 : i64, tpu.core_type = #tpu.core_type<tc>, window_params = [{transform_indices = @transform_0, window_bounds = array<i64: 1, 32, 1728>}, {pipeline_mode = #tpu.pipeline_mode<synchronous>, transform_indices = @transform_1, window_bounds = array<i64: 1728, 128>}, {pipeline_mode = #tpu.pipeline_mode<synchronous>, transform_indices = @transform_2, window_bounds = array<i64: 1, 128>}, {transform_indices = @transform_3, window_bounds = array<i64: 1, 4, 128>}]} {
    %c0 = arith.constant 0 : index
    %c0_0 = arith.constant 0 : index
    %c0_1 = arith.constant 0 : index
    %0 = vector.load %arg2[%c0, %c0_0, %c0_1] : memref<1x32x1728xbf16, #tpu.memory_space<vmem>>, vector<1x32x1728xbf16>
    %1 = vector.shape_cast %0 : vector<1x32x1728xbf16> to vector<32x1728xbf16>
    %c0_2 = arith.constant 0 : index
    %c0_3 = arith.constant 0 : index
    %2 = vector.load %arg3[%c0_2, %c0_3] : memref<1728x128xbf16, #tpu.memory_space<vmem>>, vector<1728x128xbf16>
    %cst = arith.constant dense<0.000000e+00> : vector<32x128xf32>
    %3 = tpu.matmul %1, %2, %cst {dimension_numbers = #tpu.dot_dimension_numbers<[1], [0], [0], [1], [0, 0, 1, 1], [], []>} : vector<32x1728xbf16>, vector<1728x128xbf16>, vector<32x128xf32> -> vector<32x128xf32>
    %c0_4 = arith.constant 0 : index
    %c0_5 = arith.constant 0 : index
    %4 = vector.load %arg4[%c0_4, %c0_5] : memref<1x128xf32, #tpu.memory_space<vmem>>, vector<1x128xf32>
    %5 = vector.broadcast %4 : vector<1x128xf32> to vector<32x128xf32>
    %6 = arith.addf %3, %5 : vector<32x128xf32>
    %cst_6 = arith.constant 0.000000e+00 : f32
    %7 = vector.broadcast %cst_6 : f32 to vector<32x128xf32>
    %8 = arith.maximumf %6, %7 : vector<32x128xf32>
    %9 = vector.shape_cast %8 : vector<32x128xf32> to vector<4x8x128xf32>
    %cst_7 = arith.constant dense<0xFF800000> : vector<4x128xf32>
    %10 = vector.multi_reduction <maximumf>, %9, %cst_7 [1] : vector<4x8x128xf32> to vector<4x128xf32>
    %11 = arith.truncf %10 : vector<4x128xf32> to vector<4x128xbf16>
    %c0_8 = arith.constant 0 : index
    %c0_9 = arith.constant 0 : index
    %c0_10 = arith.constant 0 : index
    %12 = vector.load %arg5[%c0_8, %c0_9, %c0_10] : memref<1x4x128xbf16, #tpu.memory_space<vmem>>, vector<1x4x128xbf16>
    %13 = vector.shape_cast %12 : vector<1x4x128xbf16> to vector<4x128xbf16>
    %14 = vector.shape_cast %11 : vector<4x128xbf16> to vector<1x4x128xbf16>
    tpu.vector_store %arg5[%c0_8, %c0_9, %c0_10], %14 {strides = array<i32>} : memref<1x4x128xbf16, #tpu.memory_space<vmem>>, vector<1x4x128xbf16>,
    return
  }
  func.func @transform_0(%arg0: i32, %arg1: i32) -> (i32, i32, i32) {
    %c0_i32 = arith.constant 0 : i32
    %c0_i32_0 = arith.constant 0 : i32
    return %arg0, %arg1, %c0_i32 : i32, i32, i32
  }
  func.func @transform_1(%arg0: i32, %arg1: i32) -> (i32, i32) {
    %c0_i32 = arith.constant 0 : i32
    %c0_i32_0 = arith.constant 0 : i32
    %c0_i32_1 = arith.constant 0 : i32
    return %c0_i32, %c0_i32_0 : i32, i32
  }
  func.func @transform_2(%arg0: i32, %arg1: i32) -> (i32, i32) {
    %c0_i32 = arith.constant 0 : i32
    %c0_i32_0 = arith.constant 0 : i32
    %c0_i32_1 = arith.constant 0 : i32
    return %c0_i32, %c0_i32_0 : i32, i32
  }
  func.func @transform_3(%arg0: i32, %arg1: i32) -> (i32, i32, i32) {
    %c0_i32 = arith.constant 0 : i32
    %c0_i32_0 = arith.constant 0 : i32
    return %arg0, %arg1, %c0_i32 : i32, i32, i32
  }
}

module attributes {stable_mosaic.version = 11 : i64} {
  func.func @_fc_head_kernel(%arg0: memref<2x512xbf16, #tpu.memory_space<vmem>>, %arg1: memref<512x1024xbf16, #tpu.memory_space<vmem>>, %arg2: memref<1x1024xf32, #tpu.memory_space<vmem>>, %arg3: memref<1024x512xbf16, #tpu.memory_space<vmem>>, %arg4: memref<1x512xf32, #tpu.memory_space<vmem>>, %arg5: memref<512x10xbf16, #tpu.memory_space<vmem>>, %arg6: memref<1x10xf32, #tpu.memory_space<vmem>>, %arg7: memref<2x10xf32, #tpu.memory_space<vmem>>) attributes {dimension_semantics = [], scalar_prefetch = 0 : i64, scratch_operands = 0 : i64, tpu.core_type = #tpu.core_type<tc>} {
    %c0 = arith.constant 0 : index
    %c0_0 = arith.constant 0 : index
    %0 = vector.load %arg0[%c0, %c0_0] : memref<2x512xbf16, #tpu.memory_space<vmem>>, vector<2x512xbf16>
    %c0_1 = arith.constant 0 : index
    %c0_2 = arith.constant 0 : index
    %1 = vector.load %arg1[%c0_1, %c0_2] : memref<512x1024xbf16, #tpu.memory_space<vmem>>, vector<512x1024xbf16>
    %cst = arith.constant dense<0.000000e+00> : vector<2x1024xf32>
    %2 = tpu.matmul %0, %1, %cst {dimension_numbers = #tpu.dot_dimension_numbers<[1], [0], [0], [1], [0, 0, 1, 1], [], []>} : vector<2x512xbf16>, vector<512x1024xbf16>, vector<2x1024xf32> -> vector<2x1024xf32>
    %c0_3 = arith.constant 0 : index
    %c0_4 = arith.constant 0 : index
    %3 = vector.load %arg2[%c0_3, %c0_4] : memref<1x1024xf32, #tpu.memory_space<vmem>>, vector<1x1024xf32>
    %4 = vector.broadcast %3 : vector<1x1024xf32> to vector<2x1024xf32>
    %5 = arith.addf %2, %4 : vector<2x1024xf32>
    %cst_5 = arith.constant 0.000000e+00 : f32
    %6 = vector.broadcast %cst_5 : f32 to vector<2x1024xf32>
    %7 = arith.maximumf %5, %6 : vector<2x1024xf32>
    %8 = arith.truncf %7 : vector<2x1024xf32> to vector<2x1024xbf16>
    %c0_6 = arith.constant 0 : index
    %c0_7 = arith.constant 0 : index
    %9 = vector.load %arg3[%c0_6, %c0_7] : memref<1024x512xbf16, #tpu.memory_space<vmem>>, vector<1024x512xbf16>
    %cst_8 = arith.constant dense<0.000000e+00> : vector<2x512xf32>
    %10 = tpu.matmul %8, %9, %cst_8 {dimension_numbers = #tpu.dot_dimension_numbers<[1], [0], [0], [1], [0, 0, 1, 1], [], []>} : vector<2x1024xbf16>, vector<1024x512xbf16>, vector<2x512xf32> -> vector<2x512xf32>
    %c0_9 = arith.constant 0 : index
    %c0_10 = arith.constant 0 : index
    %11 = vector.load %arg4[%c0_9, %c0_10] : memref<1x512xf32, #tpu.memory_space<vmem>>, vector<1x512xf32>
    %12 = vector.broadcast %11 : vector<1x512xf32> to vector<2x512xf32>
    %13 = arith.addf %10, %12 : vector<2x512xf32>
    %cst_11 = arith.constant 0.000000e+00 : f32
    %14 = vector.broadcast %cst_11 : f32 to vector<2x512xf32>
    %15 = arith.maximumf %13, %14 : vector<2x512xf32>
    %16 = arith.truncf %15 : vector<2x512xf32> to vector<2x512xbf16>
    %c0_12 = arith.constant 0 : index
    %c0_13 = arith.constant 0 : index
    %17 = vector.load %arg5[%c0_12, %c0_13] : memref<512x10xbf16, #tpu.memory_space<vmem>>, vector<512x10xbf16>
    %cst_14 = arith.constant dense<0.000000e+00> : vector<2x10xf32>
    %18 = tpu.matmul %16, %17, %cst_14 {dimension_numbers = #tpu.dot_dimension_numbers<[1], [0], [0], [1], [0, 0, 1, 1], [], []>} : vector<2x512xbf16>, vector<512x10xbf16>, vector<2x10xf32> -> vector<2x10xf32>
    %c0_15 = arith.constant 0 : index
    %c0_16 = arith.constant 0 : index
    %19 = vector.load %arg6[%c0_15, %c0_16] : memref<1x10xf32, #tpu.memory_space<vmem>>, vector<1x10xf32>
    %20 = vector.broadcast %19 : vector<1x10xf32> to vector<2x10xf32>
    %21 = arith.addf %18, %20 : vector<2x10xf32>
    %c0_17 = arith.constant 0 : index
    %c0_18 = arith.constant 0 : index
    %22 = vector.load %arg7[%c0_17, %c0_18] : memref<2x10xf32, #tpu.memory_space<vmem>>, vector<2x10xf32>
    tpu.vector_store %arg7[%c0_17, %c0_18], %21 {strides = array<i32>} : memref<2x10xf32, #tpu.memory_space<vmem>>, vector<2x10xf32>,
    return
  }
}

</mosaic_0001>

<llo_original>
// kernel: forward.4
$region0: #{forward.4}
  #allocation0 [shape = 'u32[]', space=smem, size = 0x4, offset = 0x4, fixed_abs, tag = 'smem constant byte address 0x4 - core index']
  #allocation1 [shape = 'u32[144,128]{1,0:T(1,128)}', space=vmem, size = 0x12000, scoped, tag = 'internal scratch']
  %s0 = inlined_call_operand.vmem [shape: bf16[2,3200,32], index: 0, kind: input, shape index: {}]
  %s1 = inlined_call_operand.vmem [shape: bf16[32,128], index: 1, kind: input, shape index: {}]
  %s2 = inlined_call_operand.vmem [shape: f32[1,128], index: 2, kind: input, shape index: {}]
  %s3 = inlined_call_operand.vmem [shape: bf16[2,400,128], index: 3, kind: output, shape index: {}]
  %s4 = sld [smem:[#allocation0]]
  $region45: #{forward.4} parent=0
    _
  %s6 = ssub.s32 1, %s4
  %s7 = scalar_select 0, %s6, %s4
  loop: start=0, step=1, limit=6
  $region2: #{forward.4} parent=0 // loop_pre_header
    _
  $region3: #{forward.4} parent=0 // loop_header
    %s9 = sphi 0, %s13
    %p10 = scmp.ge.s32.totalorder %s9, 6
    %s16 = sphi 0, %s28
    %s17 = sphi 0, %s24
    %s18 = sphi 0, %s16
    %s19 = sphi 0, %s17
    %s20 = sphi 0, %s18
    %s21 = sphi 0, %s19
    %s33 = sphi 0, %s35
    %s36 = sphi 0, %s33
    %s37 = sphi 0, %s36
    %s53 = sphi 0, %s37
    %s57 = sphi 0, %s57
    %s59 = sphi 0, %s57
    %s60 = sphi 0, %s59
    %s74 = sphi 0, %s60
    %s78 = sphi 0, %s78
    %s80 = sphi 0, %s78
    %s81 = sphi 0, %s80
    %s95 = sphi 0, %s81
    %s103 = sphi 0, %s105
    %s106 = sphi 0, %s103
    %s107 = sphi 0, %s106
    %s123 = sphi 0, %s107
  $region4: #{forward.4} parent=0 // loop_header_branch
    %12 = sbr.rel (%p10) target = $region8
  $region5: #{forward.4} parent=0 // loop_body
    %s14 = ssub.s32 %s9, 1
    %s15 = ssub.s32 %s9, 2
    %s22 = sadd.s32 1, %s17
    %p23 = scmp.ge.s32.totalorder %s22, 2
    %s24 = scalar_select %p23, 0, %s22
    %s25 = sadd.s32 1, %s16
    %s26 = scalar_select %p23, %s25, %s16
    %p27 = scmp.ge.s32.totalorder %s26, 2
    %s28 = scalar_select %p27, 0, %s26
    %s29 = ssub.s32 %s16, %s28
    %s30 = ssub.s32 %s17, %s24
    %s31 = sor.u32 %s29, %s30
    %p32 = scmp.eq.s32.totalorder %s31, 0
    %s34 = sadd.s32 %s33, 1
    %s35 = scalar_select %p32, %s33, %s34
    %p38 = pneg %p32
    %p39 = scmp.eq.s32.totalorder %s9, 3
    %p40 = por %p38, %p39
    %p41 = scmp.ne.s32.totalorder %s33, %s36
    %p42 = scmp.eq.s32.totalorder %s9, 0
    %p43 = por %p41, %p42
    %p44 = scmp.ne.s32.totalorder %s33, %s36
    %p45 = scmp.eq.s32.totalorder %s14, 3
    %p46 = por %p44, %p45
    %p47 = scmp.ne.s32.totalorder %s36, %s37
    %p48 = scmp.eq.s32.totalorder %s14, 0
    %p49 = por %p47, %p48
    %p50 = scmp.ne.s32.totalorder %s36, %s37
    %p51 = scmp.eq.s32.totalorder %s15, 3
    %p52 = por %p50, %p51
    %p54 = scmp.ne.s32.totalorder %s37, %s53
    %p55 = scmp.eq.s32.totalorder %s15, 0
    %p56 = por %p54, %p55
    %s58 = sadd.s32 %s57, 1
    %p61 = scmp.eq.s32.totalorder %s9, 3
    %p62 = scmp.ne.s32.totalorder %s57, %s59
    %p63 = scmp.eq.s32.totalorder %s9, 0
    %p64 = por %p62, %p63
    %p65 = scmp.ne.s32.totalorder %s57, %s59
    %p66 = scmp.eq.s32.totalorder %s14, 3
    %p67 = por %p65, %p66
    %p68 = scmp.ne.s32.totalorder %s59, %s60
    %p69 = scmp.eq.s32.totalorder %s14, 0
    %p70 = por %p68, %p69
    %p71 = scmp.ne.s32.totalorder %s59, %s60
    %p72 = scmp.eq.s32.totalorder %s15, 3
    %p73 = por %p71, %p72
    %p75 = scmp.ne.s32.totalorder %s60, %s74
    %p76 = scmp.eq.s32.totalorder %s15, 0
    %p77 = por %p75, %p76
    %s79 = sadd.s32 %s78, 1
    %p82 = scmp.eq.s32.totalorder %s9, 3
    %p83 = scmp.ne.s32.totalorder %s78, %s80
    %p84 = scmp.eq.s32.totalorder %s9, 0
    %p85 = por %p83, %p84
    %p86 = scmp.ne.s32.totalorder %s78, %s80
    %p87 = scmp.eq.s32.totalorder %s14, 3
    %p88 = por %p86, %p87
    %p89 = scmp.ne.s32.totalorder %s80, %s81
    %p90 = scmp.eq.s32.totalorder %s14, 0
    %p91 = por %p89, %p90
    %p92 = scmp.ne.s32.totalorder %s80, %s81
    %p93 = scmp.eq.s32.totalorder %s15, 3
    %p94 = por %p92, %p93
    %p96 = scmp.ne.s32.totalorder %s81, %s95
    %p97 = scmp.eq.s32.totalorder %s15, 0
    %p98 = por %p96, %p97
    %s99 = ssub.s32 %s16, %s28
    %s100 = ssub.s32 %s17, %s24
    %s101 = sor.u32 %s99, %s100
    %p102 = scmp.eq.s32.totalorder %s101, 0
    %s104 = sadd.s32 %s103, 1
    %s105 = scalar_select %p102, %s103, %s104
    %p108 = pneg %p102
    %p109 = scmp.eq.s32.totalorder %s9, 3
    %p110 = por %p108, %p109
    %p111 = scmp.ne.s32.totalorder %s103, %s106
    %p112 = scmp.eq.s32.totalorder %s9, 0
    %p113 = por %p111, %p112
    %p114 = scmp.ne.s32.totalorder %s103, %s106
    %p115 = scmp.eq.s32.totalorder %s14, 3
    %p116 = por %p114, %p115
    %p117 = scmp.ne.s32.totalorder %s106, %s107
    %p118 = scmp.eq.s32.totalorder %s14, 0
    %p119 = por %p117, %p118
    %p120 = scmp.ne.s32.totalorder %s106, %s107
    %p121 = scmp.eq.s32.totalorder %s15, 3
    %p122 = por %p120, %p121
    %p124 = scmp.ne.s32.totalorder %s107, %s123
    %p125 = scmp.eq.s32.totalorder %s15, 0
    %p126 = por %p124, %p125
    %p127 = scmp.le.s32.totalorder 1, %s9
    %p128 = scmp.lt.s32.totalorder %s9, 5
    %p129 = pnand %p127, %p128
    %p130 = pneg %p129
    // Predicated region
    $region9: #{forward.4} parent=5 // pred_check
      _
    $region10: #{forward.4} parent=5 // pred_check_branch
      %132 = sbr.rel (%p129) target = $region12
    $region11: #{forward.4} parent=5 // pred_region
      %s133 = ssub.s32 %s9, 1
      // Predicated region
      $region13: #{forward.4} parent=11 // pred_check
        %p134 = pneg %p70
      $region14: #{forward.4} parent=11 // pred_check_branch
        %136 = sbr.rel (%p134) target = $region16
      $region15: #{forward.4} parent=11 // pred_region
        _
      $region16: #{forward.4} parent=11 // pred_fallthru
        _
      // Predicated region
      $region17: #{forward.4} parent=11 // pred_check
        %p137 = pneg %p91
      $region18: #{forward.4} parent=11 // pred_check_branch
        %139 = sbr.rel (%p137) target = $region20
      $region19: #{forward.4} parent=11 // pred_region
        _
      $region20: #{forward.4} parent=11 // pred_fallthru
        _
    $region12: #{forward.4} parent=5 // pred_fallthru
      _
    %p140 = scmp.lt.s32.totalorder %s9, 4
    // Predicated region
    $region21: #{forward.4} parent=5 // pred_check
      %p141 = pneg %p140
    $region22: #{forward.4} parent=5 // pred_check_branch
      %143 = sbr.rel (%p141) target = $region24
    $region23: #{forward.4} parent=5 // pred_region
      // Predicated region
      $region25: #{forward.4} parent=23 // pred_check
        %p144 = pneg %p43
      $region26: #{forward.4} parent=23 // pred_check_branch
        %146 = sbr.rel (%p144) target = $region28
      $region27: #{forward.4} parent=23 // pred_region
        %s147 = smul.u32 200, %s17
        %p148 = scmp.lt.s32.totalorder %s16, 1
        %s149 = scalar_select %p148, %s16, 1
        %p150 = scmp.lt.s32.totalorder %s147, 399
        %s151 = scalar_select %p150, %s147, 399
        %s152 = smul.addr %s149, 400
        %s153 = sadd.s32 %s151, %s152
        %s154 = smul.addr %s153, 4
        %s155 = scalar_lea.vmem %s0, %s154
        %s156 = smul.u32 200, %s17
      $region28: #{forward.4} parent=23 // pred_fallthru
        _
    $region24: #{forward.4} parent=5 // pred_fallthru
      _
    %p157 = scmp.le.s32.totalorder 1, %s9
    %p158 = scmp.lt.s32.totalorder %s9, 5
    %p159 = pnand %p157, %p158
    %p160 = pneg %p159
    // Predicated region
    $region29: #{forward.4} parent=5 // pred_check
      _
    $region30: #{forward.4} parent=5 // pred_check_branch
      %162 = sbr.rel (%p159) target = $region32
    $region31: #{forward.4} parent=5 // pred_region
      %s163 = ssub.s32 %s9, 1
      %s164 = smul.u32 200, %s19
      %p165 = scmp.lt.s32.totalorder %s18, 1
      %s166 = scalar_select %p165, %s18, 1
      %p167 = scmp.lt.s32.totalorder %s164, 399
      %s168 = scalar_select %p167, %s164, 399
      %s169 = smul.addr %s166, 400
      %s170 = sadd.s32 %s168, %s169
      %s171 = smul.addr %s170, 4
      %s172 = scalar_lea.vmem %s0, %s171
      %p173 = pneg %p49
      %p174 = pneg %p46
      %p175 = pneg %p70
      %p176 = pneg %p67
      %p177 = pneg %p91
      %p178 = pneg %p88
      %p179 = pneg %p119
      %p180 = pneg %p116
      %s181 = smul.u32 25, %s19
      %p182 = scmp.lt.s32.totalorder %s18, 1
      %s183 = scalar_select %p182, %s18, 1
      %p184 = scmp.lt.s32.totalorder %s181, 49
      %s185 = scalar_select %p184, %s181, 49
      %s186 = smul.addr %s183, 50
      %s187 = sadd.s32 %s185, %s186
      %s188 = smul.addr %s187, 4
      %s189 = scalar_lea.vmem %s3, %s188
      %s190 = smul.u32 200, %s19
      %p191 = scmp.lt.s32.totalorder %s18, 1
      %s192 = scalar_select %p191, %s18, 1
      %p193 = scmp.lt.s32.totalorder %s190, 399
      %s194 = scalar_select %p193, %s190, 399
      %s195 = smul.addr %s192, 400
      %s196 = sadd.s32 %s194, %s195
      %s197 = smul.addr %s196, 4
      %s198 = scalar_lea.vmem %s0, %s197
      %s199 = smul.u32 200, %s19
      %s200 = smul.u32 25, %s19
      %p201 = scmp.lt.s32.totalorder %s18, 1
      %s202 = scalar_select %p201, %s18, 1
      %p203 = scmp.lt.s32.totalorder %s200, 49
      %s204 = scalar_select %p203, %s200, 49
      %s205 = smul.addr %s202, 50
      %s206 = sadd.s32 %s204, %s205
      %s207 = smul.addr %s206, 4
      %s208 = scalar_lea.vmem %s3, %s207
      %s209 = smul.u32 25, %s19
      %v211 = vld [vmem:[%s198] sm:$0xf]
      %v212 = vld [vmem:[%s198 + $0x4] sm:$0xf]
      %v213 = vld [vmem:[%s198 + $0x8] sm:$0xf]
      %v214 = vld [vmem:[%s198 + $0xc] sm:$0xf]
      %v215 = vld [vmem:[%s198 + $0x10] sm:$0xf]
      %v216 = vld [vmem:[%s198 + $0x14] sm:$0xf]
      %v217 = vld [vmem:[%s198 + $0x18] sm:$0xf]
      %v218 = vld [vmem:[%s198 + $0x1c] sm:$0xf]
      %v219 = vld [vmem:[%s198 + $0x20] sm:$0xf]
      %v220 = vld [vmem:[%s198 + $0x24] sm:$0xf]
      %v221 = vld [vmem:[%s198 + $0x28] sm:$0xf]
      %v222 = vld [vmem:[%s198 + $0x2c] sm:$0xf]
      %v223 = vld [vmem:[%s198 + $0x30] sm:$0xf]
      %v224 = vld [vmem:[%s198 + $0x34] sm:$0xf]
      %v225 = vld [vmem:[%s198 + $0x38] sm:$0xf]
      %v226 = vld [vmem:[%s198 + $0x3c] sm:$0xf]
      %v227 = vld [vmem:[%s198 + $0x40] sm:$0xf]
      %v228 = vld [vmem:[%s198 + $0x44] sm:$0xf]
      %v229 = vld [vmem:[%s198 + $0x48] sm:$0xf]
      %v230 = vld [vmem:[%s198 + $0x4c] sm:$0xf]
      %v231 = vld [vmem:[%s198 + $0x50] sm:$0xf]
      %v232 = vld [vmem:[%s198 + $0x54] sm:$0xf]
      %v233 = vld [vmem:[%s198 + $0x58] sm:$0xf]
      %v234 = vld [vmem:[%s198 + $0x5c] sm:$0xf]
      %v235 = vld [vmem:[%s198 + $0x60] sm:$0xf]
      %v236 = vld [vmem:[%s198 + $0x64] sm:$0xf]
      %v237 = vld [vmem:[%s198 + $0x68] sm:$0xf]
      %v238 = vld [vmem:[%s198 + $0x6c] sm:$0xf]
      %v239 = vld [vmem:[%s198 + $0x70] sm:$0xf]
      %v240 = vld [vmem:[%s198 + $0x74] sm:$0xf]
      %v241 = vld [vmem:[%s198 + $0x78] sm:$0xf]
      %v242 = vld [vmem:[%s198 + $0x7c] sm:$0xf]
      %v243 = vld [vmem:[%s198 + $0x80] sm:$0xf]
      %v244 = vld [vmem:[%s198 + $0x84] sm:$0xf]
      %v245 = vld [vmem:[%s198 + $0x88] sm:$0xf]
      %v246 = vld [vmem:[%s198 + $0x8c] sm:$0xf]
      %v247 = vld [vmem:[%s198 + $0x90] sm:$0xf]
      %v248 = vld [vmem:[%s198 + $0x94] sm:$0xf]
      %v249 = vld [vmem:[%s198 + $0x98] sm:$0xf]
      %v250 = vld [vmem:[%s198 + $0x9c] sm:$0xf]
      %v251 = vld [vmem:[%s198 + $0xa0] sm:$0xf]
      %v252 = vld [vmem:[%s198 + $0xa4] sm:$0xf]
      %v253 = vld [vmem:[%s198 + $0xa8] sm:$0xf]
      %v254 = vld [vmem:[%s198 + $0xac] sm:$0xf]
      %v255 = vld [vmem:[%s198 + $0xb0] sm:$0xf]
      %v256 = vld [vmem:[%s198 + $0xb4] sm:$0xf]
      %v257 = vld [vmem:[%s198 + $0xb8] sm:$0xf]
      %v258 = vld [vmem:[%s198 + $0xbc] sm:$0xf]
      %v259 = vld [vmem:[%s198 + $0xc0] sm:$0xf]
      %v260 = vld [vmem:[%s198 + $0xc4] sm:$0xf]
      %v261 = vld [vmem:[%s198 + $0xc8] sm:$0xf]
      %v262 = vld [vmem:[%s198 + $0xcc] sm:$0xf]
      %v263 = vld [vmem:[%s198 + $0xd0] sm:$0xf]
      %v264 = vld [vmem:[%s198 + $0xd4] sm:$0xf]
      %v265 = vld [vmem:[%s198 + $0xd8] sm:$0xf]
      %v266 = vld [vmem:[%s198 + $0xdc] sm:$0xf]
      %v267 = vld [vmem:[%s198 + $0xe0] sm:$0xf]
      %v268 = vld [vmem:[%s198 + $0xe4] sm:$0xf]
      %v269 = vld [vmem:[%s198 + $0xe8] sm:$0xf]
      %v270 = vld [vmem:[%s198 + $0xec] sm:$0xf]
      %v271 = vld [vmem:[%s198 + $0xf0] sm:$0xf]
      %v272 = vld [vmem:[%s198 + $0xf4] sm:$0xf]
      %v273 = vld [vmem:[%s198 + $0xf8] sm:$0xf]
      %v274 = vld [vmem:[%s198 + $0xfc] sm:$0xf]
      %v275 = vld [vmem:[%s198 + $0x100] sm:$0xf]
      %v276 = vld [vmem:[%s198 + $0x104] sm:$0xf]
      %v277 = vld [vmem:[%s198 + $0x108] sm:$0xf]
      %v278 = vld [vmem:[%s198 + $0x10c] sm:$0xf]
      %v279 = vld [vmem:[%s198 + $0x110] sm:$0xf]
      %v280 = vld [vmem:[%s198 + $0x114] sm:$0xf]
      %v281 = vld [vmem:[%s198 + $0x118] sm:$0xf]
      %v282 = vld [vmem:[%s198 + $0x11c] sm:$0xf]
      %v283 = vld [vmem:[%s198 + $0x120] sm:$0xf]
      %v284 = vld [vmem:[%s198 + $0x124] sm:$0xf]
      %v285 = vld [vmem:[%s198 + $0x128] sm:$0xf]
      %v286 = vld [vmem:[%s198 + $0x12c] sm:$0xf]
      %v287 = vld [vmem:[%s198 + $0x130] sm:$0xf]
      %v288 = vld [vmem:[%s198 + $0x134] sm:$0xf]
      %v289 = vld [vmem:[%s198 + $0x138] sm:$0xf]
      %v290 = vld [vmem:[%s198 + $0x13c] sm:$0xf]
      %v291 = vld [vmem:[%s198 + $0x140] sm:$0xf]
      %v292 = vld [vmem:[%s198 + $0x144] sm:$0xf]
      %v293 = vld [vmem:[%s198 + $0x148] sm:$0xf]
      %v294 = vld [vmem:[%s198 + $0x14c] sm:$0xf]
      %v295 = vld [vmem:[%s198 + $0x150] sm:$0xf]
      %v296 = vld [vmem:[%s198 + $0x154] sm:$0xf]
      %v297 = vld [vmem:[%s198 + $0x158] sm:$0xf]
      %v298 = vld [vmem:[%s198 + $0x15c] sm:$0xf]
      %v299 = vld [vmem:[%s198 + $0x160] sm:$0xf]
      %v300 = vld [vmem:[%s198 + $0x164] sm:$0xf]
      %v301 = vld [vmem:[%s198 + $0x168] sm:$0xf]
      %v302 = vld [vmem:[%s198 + $0x16c] sm:$0xf]
      %v303 = vld [vmem:[%s198 + $0x170] sm:$0xf]
      %v304 = vld [vmem:[%s198 + $0x174] sm:$0xf]
      %v305 = vld [vmem:[%s198 + $0x178] sm:$0xf]
      %v306 = vld [vmem:[%s198 + $0x17c] sm:$0xf]
      %v307 = vld [vmem:[%s198 + $0x180] sm:$0xf]
      %v308 = vld [vmem:[%s198 + $0x184] sm:$0xf]
      %v309 = vld [vmem:[%s198 + $0x188] sm:$0xf]
      %v310 = vld [vmem:[%s198 + $0x18c] sm:$0xf]
      %v311 = vld [vmem:[%s198 + $0x190] sm:$0xf]
      %v312 = vld [vmem:[%s198 + $0x194] sm:$0xf]
      %v313 = vld [vmem:[%s198 + $0x198] sm:$0xf]
      %v314 = vld [vmem:[%s198 + $0x19c] sm:$0xf]
      %v315 = vld [vmem:[%s198 + $0x1a0] sm:$0xf]
      %v316 = vld [vmem:[%s198 + $0x1a4] sm:$0xf]
      %v317 = vld [vmem:[%s198 + $0x1a8] sm:$0xf]
      %v318 = vld [vmem:[%s198 + $0x1ac] sm:$0xf]
      %v319 = vld [vmem:[%s198 + $0x1b0] sm:$0xf]
      %v320 = vld [vmem:[%s198 + $0x1b4] sm:$0xf]
      %v321 = vld [vmem:[%s198 + $0x1b8] sm:$0xf]
      %v322 = vld [vmem:[%s198 + $0x1bc] sm:$0xf]
      %v323 = vld [vmem:[%s198 + $0x1c0] sm:$0xf]
      %v324 = vld [vmem:[%s198 + $0x1c4] sm:$0xf]
      %v325 = vld [vmem:[%s198 + $0x1c8] sm:$0xf]
      %v326 = vld [vmem:[%s198 + $0x1cc] sm:$0xf]
      %v327 = vld [vmem:[%s198 + $0x1d0] sm:$0xf]
      %v328 = vld [vmem:[%s198 + $0x1d4] sm:$0xf]
      %v329 = vld [vmem:[%s198 + $0x1d8] sm:$0xf]
      %v330 = vld [vmem:[%s198 + $0x1dc] sm:$0xf]
      %v331 = vld [vmem:[%s198 + $0x1e0] sm:$0xf]
      %v332 = vld [vmem:[%s198 + $0x1e4] sm:$0xf]
      %v333 = vld [vmem:[%s198 + $0x1e8] sm:$0xf]
      %v334 = vld [vmem:[%s198 + $0x1ec] sm:$0xf]
      %v335 = vld [vmem:[%s198 + $0x1f0] sm:$0xf]
      %v336 = vld [vmem:[%s198 + $0x1f4] sm:$0xf]
      %v337 = vld [vmem:[%s198 + $0x1f8] sm:$0xf]
      %v338 = vld [vmem:[%s198 + $0x1fc] sm:$0xf]
      %v339 = vld [vmem:[%s198 + $0x200] sm:$0xf]
      %v340 = vld [vmem:[%s198 + $0x204] sm:$0xf]
      %v341 = vld [vmem:[%s198 + $0x208] sm:$0xf]
      %v342 = vld [vmem:[%s198 + $0x20c] sm:$0xf]
      %v343 = vld [vmem:[%s198 + $0x210] sm:$0xf]
      %v344 = vld [vmem:[%s198 + $0x214] sm:$0xf]
      %v345 = vld [vmem:[%s198 + $0x218] sm:$0xf]
      %v346 = vld [vmem:[%s198 + $0x21c] sm:$0xf]
      %v347 = vld [vmem:[%s198 + $0x220] sm:$0xf]
      %v348 = vld [vmem:[%s198 + $0x224] sm:$0xf]
      %v349 = vld [vmem:[%s198 + $0x228] sm:$0xf]
      %v350 = vld [vmem:[%s198 + $0x22c] sm:$0xf]
      %v351 = vld [vmem:[%s198 + $0x230] sm:$0xf]
      %v352 = vld [vmem:[%s198 + $0x234] sm:$0xf]
      %v353 = vld [vmem:[%s198 + $0x238] sm:$0xf]
      %v354 = vld [vmem:[%s198 + $0x23c] sm:$0xf]
      %v355 = vld [vmem:[%s198 + $0x240] sm:$0xf]
      %v356 = vld [vmem:[%s198 + $0x244] sm:$0xf]
      %v357 = vld [vmem:[%s198 + $0x248] sm:$0xf]
      %v358 = vld [vmem:[%s198 + $0x24c] sm:$0xf]
      %v359 = vld [vmem:[%s198 + $0x250] sm:$0xf]
      %v360 = vld [vmem:[%s198 + $0x254] sm:$0xf]
      %v361 = vld [vmem:[%s198 + $0x258] sm:$0xf]
      %v362 = vld [vmem:[%s198 + $0x25c] sm:$0xf]
      %v363 = vld [vmem:[%s198 + $0x260] sm:$0xf]
      %v364 = vld [vmem:[%s198 + $0x264] sm:$0xf]
      %v365 = vld [vmem:[%s198 + $0x268] sm:$0xf]
      %v366 = vld [vmem:[%s198 + $0x26c] sm:$0xf]
      %v367 = vld [vmem:[%s198 + $0x270] sm:$0xf]
      %v368 = vld [vmem:[%s198 + $0x274] sm:$0xf]
      %v369 = vld [vmem:[%s198 + $0x278] sm:$0xf]
      %v370 = vld [vmem:[%s198 + $0x27c] sm:$0xf]
      %v371 = vld [vmem:[%s198 + $0x280] sm:$0xf]
      %v372 = vld [vmem:[%s198 + $0x284] sm:$0xf]
      %v373 = vld [vmem:[%s198 + $0x288] sm:$0xf]
      %v374 = vld [vmem:[%s198 + $0x28c] sm:$0xf]
      %v375 = vld [vmem:[%s198 + $0x290] sm:$0xf]
      %v376 = vld [vmem:[%s198 + $0x294] sm:$0xf]
      %v377 = vld [vmem:[%s198 + $0x298] sm:$0xf]
      %v378 = vld [vmem:[%s198 + $0x29c] sm:$0xf]
      %v379 = vld [vmem:[%s198 + $0x2a0] sm:$0xf]
      %v380 = vld [vmem:[%s198 + $0x2a4] sm:$0xf]
      %v381 = vld [vmem:[%s198 + $0x2a8] sm:$0xf]
      %v382 = vld [vmem:[%s198 + $0x2ac] sm:$0xf]
      %v383 = vld [vmem:[%s198 + $0x2b0] sm:$0xf]
      %v384 = vld [vmem:[%s198 + $0x2b4] sm:$0xf]
      %v385 = vld [vmem:[%s198 + $0x2b8] sm:$0xf]
      %v386 = vld [vmem:[%s198 + $0x2bc] sm:$0xf]
      %v387 = vld [vmem:[%s198 + $0x2c0] sm:$0xf]
      %v388 = vld [vmem:[%s198 + $0x2c4] sm:$0xf]
      %v389 = vld [vmem:[%s198 + $0x2c8] sm:$0xf]
      %v390 = vld [vmem:[%s198 + $0x2cc] sm:$0xf]
      %v391 = vld [vmem:[%s198 + $0x2d0] sm:$0xf]
      %v392 = vld [vmem:[%s198 + $0x2d4] sm:$0xf]
      %v393 = vld [vmem:[%s198 + $0x2d8] sm:$0xf]
      %v394 = vld [vmem:[%s198 + $0x2dc] sm:$0xf]
      %v395 = vld [vmem:[%s198 + $0x2e0] sm:$0xf]
      %v396 = vld [vmem:[%s198 + $0x2e4] sm:$0xf]
      %v397 = vld [vmem:[%s198 + $0x2e8] sm:$0xf]
      %v398 = vld [vmem:[%s198 + $0x2ec] sm:$0xf]
      %v399 = vld [vmem:[%s198 + $0x2f0] sm:$0xf]
      %v400 = vld [vmem:[%s198 + $0x2f4] sm:$0xf]
      %v401 = vld [vmem:[%s198 + $0x2f8] sm:$0xf]
      %v402 = vld [vmem:[%s198 + $0x2fc] sm:$0xf]
      %v403 = vld [vmem:[%s198 + $0x300] sm:$0xf]
      %v404 = vld [vmem:[%s198 + $0x304] sm:$0xf]
      %v405 = vld [vmem:[%s198 + $0x308] sm:$0xf]
      %v406 = vld [vmem:[%s198 + $0x30c] sm:$0xf]
      %v407 = vld [vmem:[%s198 + $0x310] sm:$0xf]
      %v408 = vld [vmem:[%s198 + $0x314] sm:$0xf]
      %v409 = vld [vmem:[%s198 + $0x318] sm:$0xf]
      %v410 = vld [vmem:[%s198 + $0x31c] sm:$0xf]
      %v411 = vld [vmem:[%s1] sm:$0xf]
      %v412 = vld [vmem:[%s1 + $0x4] sm:$0xf]
      %v413 = vld [vmem:[%s1 + $0x8] sm:$0xf]
      %v414 = vld [vmem:[%s1 + $0xc] sm:$0xf]
      %v415 = vld [vmem:[%s2] sm:$0x1]
      %v417 = vlaneseq
      %v418 = vshrl.u32 %v417, 7
      %v419 = vsub.s32 0, %v418
      %v420 = vrot.slane %v415, %v419
      %v622 = vunpack.c.l.b16 %v211
      %v623 = vunpack.c.l.b16 %v212
      %v624 = vunpack.c.l.b16 %v213
      %v625 = vunpack.c.l.b16 %v214
      %v626 = vunpack.c.l.b16 %v215
      %v627 = vunpack.c.l.b16 %v216
      %v628 = vunpack.c.l.b16 %v217
      %v629 = vunpack.c.l.b16 %v218
      %v630 = vunpack.c.l.b16 %v219
      %v631 = vunpack.c.l.b16 %v220
      %v632 = vunpack.c.l.b16 %v221
      %v633 = vunpack.c.l.b16 %v222
      %v634 = vunpack.c.l.b16 %v223
      %v635 = vunpack.c.l.b16 %v224
      %v636 = vunpack.c.l.b16 %v225
      %v637 = vunpack.c.l.b16 %v226
      %v638 = vunpack.c.l.b16 %v227
      %v639 = vunpack.c.l.b16 %v228
      %v640 = vunpack.c.l.b16 %v229
      %v641 = vunpack.c.l.b16 %v230
      %v642 = vunpack.c.l.b16 %v231
      %v643 = vunpack.c.l.b16 %v232
      %v644 = vunpack.c.l.b16 %v233
      %v645 = vunpack.c.l.b16 %v234
      %v646 = vunpack.c.l.b16 %v235
      %v647 = vunpack.c.l.b16 %v236
      %v648 = vunpack.c.l.b16 %v237
      %v649 = vunpack.c.l.b16 %v238
      %v650 = vunpack.c.l.b16 %v239
      %v651 = vunpack.c.l.b16 %v240
      %v652 = vunpack.c.l.b16 %v241
      %v653 = vunpack.c.l.b16 %v242
      %v654 = vunpack.c.l.b16 %v243
      %v655 = vunpack.c.l.b16 %v244
      %v656 = vunpack.c.l.b16 %v245
      %v657 = vunpack.c.l.b16 %v246
      %v658 = vunpack.c.l.b16 %v247
      %v659 = vunpack.c.l.b16 %v248
      %v660 = vunpack.c.l.b16 %v249
      %v661 = vunpack.c.l.b16 %v250
      %v662 = vunpack.c.l.b16 %v251
      %v663 = vunpack.c.l.b16 %v252
      %v664 = vunpack.c.l.b16 %v253
      %v665 = vunpack.c.l.b16 %v254
      %v666 = vunpack.c.l.b16 %v255
      %v667 = vunpack.c.l.b16 %v256
      %v668 = vunpack.c.l.b16 %v257
      %v669 = vunpack.c.l.b16 %v258
      %v670 = vunpack.c.l.b16 %v259
      %v671 = vunpack.c.l.b16 %v260
      %v672 = vunpack.c.l.b16 %v261
      %v673 = vunpack.c.l.b16 %v262
      %v674 = vunpack.c.l.b16 %v263
      %v675 = vunpack.c.l.b16 %v264
      %v676 = vunpack.c.l.b16 %v265
      %v677 = vunpack.c.l.b16 %v266
      %v678 = vunpack.c.l.b16 %v267
      %v679 = vunpack.c.l.b16 %v268
      %v680 = vunpack.c.l.b16 %v269
      %v681 = vunpack.c.l.b16 %v270
      %v682 = vunpack.c.l.b16 %v271
      %v683 = vunpack.c.l.b16 %v272
      %v684 = vunpack.c.l.b16 %v273
      %v685 = vunpack.c.l.b16 %v274
      %v686 = vunpack.c.l.b16 %v275
      %v687 = vunpack.c.l.b16 %v276
      %v688 = vunpack.c.l.b16 %v277
      %v689 = vunpack.c.l.b16 %v278
      %v690 = vunpack.c.l.b16 %v279
      %v691 = vunpack.c.l.b16 %v280
      %v692 = vunpack.c.l.b16 %v281
      %v693 = vunpack.c.l.b16 %v282
      %v694 = vunpack.c.l.b16 %v283
      %v695 = vunpack.c.l.b16 %v284
      %v696 = vunpack.c.l.b16 %v285
      %v697 = vunpack.c.l.b16 %v286
      %v698 = vunpack.c.l.b16 %v287
      %v699 = vunpack.c.l.b16 %v288
      %v700 = vunpack.c.l.b16 %v289
      %v701 = vunpack.c.l.b16 %v290
      %v702 = vunpack.c.l.b16 %v291
      %v703 = vunpack.c.l.b16 %v292
      %v704 = vunpack.c.l.b16 %v293
      %v705 = vunpack.c.l.b16 %v294
      %v706 = vunpack.c.l.b16 %v295
      %v707 = vunpack.c.l.b16 %v296
      %v708 = vunpack.c.l.b16 %v297
      %v709 = vunpack.c.l.b16 %v298
      %v710 = vunpack.c.l.b16 %v299
      %v711 = vunpack.c.l.b16 %v300
      %v712 = vunpack.c.l.b16 %v301
      %v713 = vunpack.c.l.b16 %v302
      %v714 = vunpack.c.l.b16 %v303
      %v715 = vunpack.c.l.b16 %v304
      %v716 = vunpack.c.l.b16 %v305
      %v717 = vunpack.c.l.b16 %v306
      %v718 = vunpack.c.l.b16 %v307
      %v719 = vunpack.c.l.b16 %v308
      %v720 = vunpack.c.l.b16 %v309
      %v721 = vunpack.c.l.b16 %v310
      %v722 = vunpack.c.l.b16 %v311
      %v723 = vunpack.c.l.b16 %v312
      %v724 = vunpack.c.l.b16 %v313
      %v725 = vunpack.c.l.b16 %v314
      %v726 = vunpack.c.l.b16 %v315
      %v727 = vunpack.c.l.b16 %v316
      %v728 = vunpack.c.l.b16 %v317
      %v729 = vunpack.c.l.b16 %v318
      %v730 = vunpack.c.l.b16 %v319
      %v731 = vunpack.c.l.b16 %v320
      %v732 = vunpack.c.l.b16 %v321
      %v733 = vunpack.c.l.b16 %v322
      %v734 = vunpack.c.l.b16 %v323
      %v735 = vunpack.c.l.b16 %v324
      %v736 = vunpack.c.l.b16 %v325
      %v737 = vunpack.c.l.b16 %v326
      %v738 = vunpack.c.l.b16 %v327
      %v739 = vunpack.c.l.b16 %v328
      %v740 = vunpack.c.l.b16 %v329
      %v741 = vunpack.c.l.b16 %v330
      %v742 = vunpack.c.l.b16 %v331
      %v743 = vunpack.c.l.b16 %v332
      %v744 = vunpack.c.l.b16 %v333
      %v745 = vunpack.c.l.b16 %v334
      %v746 = vunpack.c.l.b16 %v335
      %v747 = vunpack.c.l.b16 %v336
      %v748 = vunpack.c.l.b16 %v337
      %v749 = vunpack.c.l.b16 %v338
      %v750 = vunpack.c.l.b16 %v339
      %v751 = vunpack.c.l.b16 %v340
      %v752 = vunpack.c.l.b16 %v341
      %v753 = vunpack.c.l.b16 %v342
      %v754 = vunpack.c.l.b16 %v343
      %v755 = vunpack.c.l.b16 %v344
      %v756 = vunpack.c.l.b16 %v345
      %v757 = vunpack.c.l.b16 %v346
      %v758 = vunpack.c.l.b16 %v347
      %v759 = vunpack.c.l.b16 %v348
      %v760 = vunpack.c.l.b16 %v349
      %v761 = vunpack.c.l.b16 %v350
      %v762 = vunpack.c.l.b16 %v351
      %v763 = vunpack.c.l.b16 %v352
      %v764 = vunpack.c.l.b16 %v353
      %v765 = vunpack.c.l.b16 %v354
      %v766 = vunpack.c.l.b16 %v355
      %v767 = vunpack.c.l.b16 %v356
      %v768 = vunpack.c.l.b16 %v357
      %v769 = vunpack.c.l.b16 %v358
      %v770 = vunpack.c.l.b16 %v359
      %v771 = vunpack.c.l.b16 %v360
      %v772 = vunpack.c.l.b16 %v361
      %v773 = vunpack.c.l.b16 %v362
      %v774 = vunpack.c.l.b16 %v363
      %v775 = vunpack.c.l.b16 %v364
      %v776 = vunpack.c.l.b16 %v365
      %v777 = vunpack.c.l.b16 %v366
      %v778 = vunpack.c.l.b16 %v367
      %v779 = vunpack.c.l.b16 %v368
      %v780 = vunpack.c.l.b16 %v369
      %v781 = vunpack.c.l.b16 %v370
      %v782 = vunpack.c.l.b16 %v371
      %v783 = vunpack.c.l.b16 %v372
      %v784 = vunpack.c.l.b16 %v373
      %v785 = vunpack.c.l.b16 %v374
      %v786 = vunpack.c.l.b16 %v375
      %v787 = vunpack.c.l.b16 %v376
      %v788 = vunpack.c.l.b16 %v377
      %v789 = vunpack.c.l.b16 %v378
      %v790 = vunpack.c.l.b16 %v379
      %v791 = vunpack.c.l.b16 %v380
      %v792 = vunpack.c.l.b16 %v381
      %v793 = vunpack.c.l.b16 %v382
      %v794 = vunpack.c.l.b16 %v383
      %v795 = vunpack.c.l.b16 %v384
      %v796 = vunpack.c.l.b16 %v385
      %v797 = vunpack.c.l.b16 %v386
      %v798 = vunpack.c.l.b16 %v387
      %v799 = vunpack.c.l.b16 %v388
      %v800 = vunpack.c.l.b16 %v389
      %v801 = vunpack.c.l.b16 %v390
      %v802 = vunpack.c.l.b16 %v391
      %v803 = vunpack.c.l.b16 %v392
      %v804 = vunpack.c.l.b16 %v393
      %v805 = vunpack.c.l.b16 %v394
      %v806 = vunpack.c.l.b16 %v395
      %v807 = vunpack.c.l.b16 %v396
      %v808 = vunpack.c.l.b16 %v397
      %v809 = vunpack.c.l.b16 %v398
      %v810 = vunpack.c.l.b16 %v399
      %v811 = vunpack.c.l.b16 %v400
      %v812 = vunpack.c.l.b16 %v401
      %v813 = vunpack.c.l.b16 %v402
      %v814 = vunpack.c.l.b16 %v403
      %v815 = vunpack.c.l.b16 %v404
      %v816 = vunpack.c.l.b16 %v405
      %v817 = vunpack.c.l.b16 %v406
      %v818 = vunpack.c.l.b16 %v407
      %v819 = vunpack.c.l.b16 %v408
      %v820 = vunpack.c.l.b16 %v409
      %v821 = vunpack.c.l.b16 %v410
      %v822 = vpack.c.b16 %v623, %v622
      %v823 = vpack.c.b16 %v625, %v624
      %v824 = vpack.c.b16 %v627, %v626
      %v825 = vpack.c.b16 %v629, %v628
      %v826 = vpack.c.b16 %v631, %v630
      %v827 = vpack.c.b16 %v633, %v632
      %v828 = vpack.c.b16 %v635, %v634
      %v829 = vpack.c.b16 %v637, %v636
      %v830 = vpack.c.b16 %v639, %v638
      %v831 = vpack.c.b16 %v641, %v640
      %v832 = vpack.c.b16 %v643, %v642
      %v833 = vpack.c.b16 %v645, %v644
      %v834 = vpack.c.b16 %v647, %v646
      %v835 = vpack.c.b16 %v649, %v648
      %v836 = vpack.c.b16 %v651, %v650
      %v837 = vpack.c.b16 %v653, %v652
      %v838 = vpack.c.b16 %v655, %v654
      %v839 = vpack.c.b16 %v657, %v656
      %v840 = vpack.c.b16 %v659, %v658
      %v841 = vpack.c.b16 %v661, %v660
      %v842 = vpack.c.b16 %v663, %v662
      %v843 = vpack.c.b16 %v665, %v664
      %v844 = vpack.c.b16 %v667, %v666
      %v845 = vpack.c.b16 %v669, %v668
      %v846 = vpack.c.b16 %v671, %v670
      %v847 = vpack.c.b16 %v673, %v672
      %v848 = vpack.c.b16 %v675, %v674
      %v849 = vpack.c.b16 %v677, %v676
      %v850 = vpack.c.b16 %v679, %v678
      %v851 = vpack.c.b16 %v681, %v680
      %v852 = vpack.c.b16 %v683, %v682
      %v853 = vpack.c.b16 %v685, %v684
      %v854 = vpack.c.b16 %v687, %v686
      %v855 = vpack.c.b16 %v689, %v688
      %v856 = vpack.c.b16 %v691, %v690
      %v857 = vpack.c.b16 %v693, %v692
      %v858 = vpack.c.b16 %v695, %v694
      %v859 = vpack.c.b16 %v697, %v696
      %v860 = vpack.c.b16 %v699, %v698
      %v861 = vpack.c.b16 %v701, %v700
      %v862 = vpack.c.b16 %v703, %v702
      %v863 = vpack.c.b16 %v705, %v704
      %v864 = vpack.c.b16 %v707, %v706
      %v865 = vpack.c.b16 %v709, %v708
      %v866 = vpack.c.b16 %v711, %v710
      %v867 = vpack.c.b16 %v713, %v712
      %v868 = vpack.c.b16 %v715, %v714
      %v869 = vpack.c.b16 %v717, %v716
      %v870 = vpack.c.b16 %v719, %v718
      %v871 = vpack.c.b16 %v721, %v720
      %v872 = vpack.c.b16 %v723, %v722
      %v873 = vpack.c.b16 %v725, %v724
      %v874 = vpack.c.b16 %v727, %v726
      %v875 = vpack.c.b16 %v729, %v728
      %v876 = vpack.c.b16 %v731, %v730
      %v877 = vpack.c.b16 %v733, %v732
      %v878 = vpack.c.b16 %v735, %v734
      %v879 = vpack.c.b16 %v737, %v736
      %v880 = vpack.c.b16 %v739, %v738
      %v881 = vpack.c.b16 %v741, %v740
      %v882 = vpack.c.b16 %v743, %v742
      %v883 = vpack.c.b16 %v745, %v744
      %v884 = vpack.c.b16 %v747, %v746
      %v885 = vpack.c.b16 %v749, %v748
      %v886 = vpack.c.b16 %v751, %v750
      %v887 = vpack.c.b16 %v753, %v752
      %v888 = vpack.c.b16 %v755, %v754
      %v889 = vpack.c.b16 %v757, %v756
      %v890 = vpack.c.b16 %v759, %v758
      %v891 = vpack.c.b16 %v761, %v760
      %v892 = vpack.c.b16 %v763, %v762
      %v893 = vpack.c.b16 %v765, %v764
      %v894 = vpack.c.b16 %v767, %v766
      %v895 = vpack.c.b16 %v769, %v768
      %v896 = vpack.c.b16 %v771, %v770
      %v897 = vpack.c.b16 %v773, %v772
      %v898 = vpack.c.b16 %v775, %v774
      %v899 = vpack.c.b16 %v777, %v776
      %v900 = vpack.c.b16 %v779, %v778
      %v901 = vpack.c.b16 %v781, %v780
      %v902 = vpack.c.b16 %v783, %v782
      %v903 = vpack.c.b16 %v785, %v784
      %v904 = vpack.c.b16 %v787, %v786
      %v905 = vpack.c.b16 %v789, %v788
      %v906 = vpack.c.b16 %v791, %v790
      %v907 = vpack.c.b16 %v793, %v792
      %v908 = vpack.c.b16 %v795, %v794
      %v909 = vpack.c.b16 %v797, %v796
      %v910 = vpack.c.b16 %v799, %v798
      %v911 = vpack.c.b16 %v801, %v800
      %v912 = vpack.c.b16 %v803, %v802
      %v913 = vpack.c.b16 %v805, %v804
      %v914 = vpack.c.b16 %v807, %v806
      %v915 = vpack.c.b16 %v809, %v808
      %v916 = vpack.c.b16 %v811, %v810
      %v917 = vpack.c.b16 %v813, %v812
      %v918 = vpack.c.b16 %v815, %v814
      %v919 = vpack.c.b16 %v817, %v816
      %v920 = vpack.c.b16 %v819, %v818
      %v921 = vpack.c.b16 %v821, %v820
      %v926 = vunpack.c.l.b16 %v411
      %v927 = vunpack.c.l.b16 %v412
      %v928 = vunpack.c.l.b16 %v413
      %v929 = vunpack.c.l.b16 %v414
      %v930 = vpack.c.b16 %v927, %v926
      %v931 = vpack.c.b16 %v929, %v928
      %vm934 = vcmask 261120
      %v936 = vsel %vm934, %v822, 0
      %v939 = vsel %vm934, %v823, 0
      %v942 = vsel %vm934, %v824, 0
      %v945 = vsel %vm934, %v825, 0
      %v948 = vsel %vm934, %v826, 0
      %v951 = vsel %vm934, %v827, 0
      %v954 = vsel %vm934, %v828, 0
      %v957 = vsel %vm934, %v829, 0
      %v960 = vsel %vm934, %v830, 0
      %v963 = vsel %vm934, %v831, 0
      %v966 = vsel %vm934, %v832, 0
      %v969 = vsel %vm934, %v833, 0
      %v972 = vsel %vm934, %v834, 0
      %v975 = vsel %vm934, %v835, 0
      %v978 = vsel %vm934, %v836, 0
      %v981 = vsel %vm934, %v837, 0
      %v984 = vsel %vm934, %v838, 0
      %v987 = vsel %vm934, %v839, 0
      %v990 = vsel %vm934, %v840, 0
      %v993 = vsel %vm934, %v841, 0
      %v996 = vsel %vm934, %v842, 0
      %v999 = vsel %vm934, %v843, 0
      %v1002 = vsel %vm934, %v844, 0
      %v1005 = vsel %vm934, %v845, 0
      %v1008 = vsel %vm934, %v846, 0
      %v1011 = vsel %vm934, %v847, 0
      %v1014 = vsel %vm934, %v848, 0
      %v1017 = vsel %vm934, %v849, 0
      %v1020 = vsel %vm934, %v850, 0
      %v1023 = vsel %vm934, %v851, 0
      %v1026 = vsel %vm934, %v852, 0
      %v1029 = vsel %vm934, %v853, 0
      %v1032 = vsel %vm934, %v854, 0
      %v1035 = vsel %vm934, %v855, 0
      %v1038 = vsel %vm934, %v856, 0
      %v1041 = vsel %vm934, %v857, 0
      %v1044 = vsel %vm934, %v858, 0
      %v1047 = vsel %vm934, %v859, 0
      %v1050 = vsel %vm934, %v860, 0
      %v1053 = vsel %vm934, %v861, 0
      %v1056 = vsel %vm934, %v862, 0
      %v1059 = vsel %vm934, %v863, 0
      %v1062 = vsel %vm934, %v864, 0
      %v1065 = vsel %vm934, %v865, 0
      %v1068 = vsel %vm934, %v866, 0
      %v1071 = vsel %vm934, %v867, 0
      %v1074 = vsel %vm934, %v868, 0
      %v1077 = vsel %vm934, %v869, 0
      %v1080 = vsel %vm934, %v870, 0
      %v1083 = vsel %vm934, %v871, 0
      %v1086 = vsel %vm934, %v872, 0
      %v1089 = vsel %vm934, %v873, 0
      %v1092 = vsel %vm934, %v874, 0
      %v1095 = vsel %vm934, %v875, 0
      %v1098 = vsel %vm934, %v876, 0
      %v1101 = vsel %vm934, %v877, 0
      %v1104 = vsel %vm934, %v878, 0
      %v1107 = vsel %vm934, %v879, 0
      %v1110 = vsel %vm934, %v880, 0
      %v1113 = vsel %vm934, %v881, 0
      %v1116 = vsel %vm934, %v882, 0
      %v1119 = vsel %vm934, %v883, 0
      %v1122 = vsel %vm934, %v884, 0
      %v1125 = vsel %vm934, %v885, 0
      %v1128 = vsel %vm934, %v886, 0
      %v1131 = vsel %vm934, %v887, 0
      %v1134 = vsel %vm934, %v888, 0
      %v1137 = vsel %vm934, %v889, 0
      %v1140 = vsel %vm934, %v890, 0
      %v1143 = vsel %vm934, %v891, 0
      %v1146 = vsel %vm934, %v892, 0
      %v1149 = vsel %vm934, %v893, 0
      %v1152 = vsel %vm934, %v894, 0
      %v1155 = vsel %vm934, %v895, 0
      %v1158 = vsel %vm934, %v896, 0
      %v1161 = vsel %vm934, %v897, 0
      %v1164 = vsel %vm934, %v898, 0
      %v1167 = vsel %vm934, %v899, 0
      %v1170 = vsel %vm934, %v900, 0
      %v1173 = vsel %vm934, %v901, 0
      %v1176 = vsel %vm934, %v902, 0
      %v1179 = vsel %vm934, %v903, 0
      %v1182 = vsel %vm934, %v904, 0
      %v1185 = vsel %vm934, %v905, 0
      %v1188 = vsel %vm934, %v906, 0
      %v1191 = vsel %vm934, %v907, 0
      %v1194 = vsel %vm934, %v908, 0
      %v1197 = vsel %vm934, %v909, 0
      %v1200 = vsel %vm934, %v910, 0
      %v1203 = vsel %vm934, %v911, 0
      %v1206 = vsel %vm934, %v912, 0
      %v1209 = vsel %vm934, %v913, 0
      %v1212 = vsel %vm934, %v914, 0
      %v1215 = vsel %vm934, %v915, 0
      %v1218 = vsel %vm934, %v916, 0
      %v1221 = vsel %vm934, %v917, 0
      %v1224 = vsel %vm934, %v918, 0
      %v1227 = vsel %vm934, %v919, 0
      %v1230 = vsel %vm934, %v920, 0
      %v1233 = vsel %vm934, %v921, 0
      %1235 = vmatprep.subr.bf16.mxu0 0
      %1236 = vmatpush1.bf16.msra.mxu0 0
      %1237 = vmatprep.subr.bf16.mxu0 0
      %1238 = vmatpush1.bf16.msra.mxu0 0
      %1239 = vmatprep.subr.bf16.mxu0 0
      %1240 = vmatpush1.bf16.msra.mxu0 0
      %1241 = vmatprep.subr.bf16.mxu0 0
      %1242 = vmatpush1.bf16.msra.mxu0 0
      %1243 = vmatprep.subr.bf16.mxu0 0
      %1244 = vmatpush1.bf16.msra.mxu0 0
      %1245 = vmatprep.subr.bf16.mxu0 0
      %1246 = vmatpush1.bf16.msra.mxu0 0
      %1247 = vmatprep.subr.bf16.mxu0 0
      %1248 = vmatpush1.bf16.msra.mxu0 %v931
      %1249 = vmatprep.subr.bf16.mxu0 0
      %1250 = vmatpush1.bf16.msra.mxu0 %v930
      %1251 = vmatprep.subr.bf16.mxu0 0
      %1252 = vmatpush2.bf16.msra.mxu0 0
      %1253 = vmatprep.subr.bf16.mxu0 0
      %1254 = vmatpush2.bf16.msra.mxu0 0
      %1255 = vmatprep.subr.bf16.mxu0 0
      %1256 = vmatpush2.bf16.msra.mxu0 0
      %1257 = vmatprep.subr.bf16.mxu0 0
      %1258 = vmatpush2.bf16.msra.mxu0 0
      %1259 = vmatprep.subr.bf16.mxu0 0
      %1260 = vmatpush2.bf16.msra.mxu0 0
      %1261 = vmatprep.subr.bf16.mxu0 0
      %1262 = vmatpush2.bf16.msra.mxu0 0
      %1263 = vmatprep.subr.bf16.mxu0 0
      %1264 = vmatpush2.bf16.msra.mxu0 0
      %1265 = vmatprep.subr.bf16.mxu0 0
      %1266 = vmatpush2.bf16.msra.mxu0 0
      %1267 = vmatprep.mubr.bf16.mxu0 0
      %1268 = vmatmul.mubr.bf16.gmra.mxu0 %v936
      %v1269 = vpop.f32.mrf.mxu0
      %v1270 = vadd.f32 %v420, %v1269
      %v1271 = vpop.f32.mrf.mxu0
      %v1272 = vpop.f32.mrf.mxu0
      %v1273 = vadd.f32 %v420, %v1272
      %v1274 = vpop.f32.mrf.mxu0
      %1275 = vmatprep.mubr.bf16.mxu0 0
      %1276 = vmatmul.mubr.bf16.gmra.mxu0 %v939
      %v1277 = vpop.f32.mrf.mxu0
      %v1278 = vadd.f32 %v420, %v1277
      %v1279 = vpop.f32.mrf.mxu0
      %v1280 = vpop.f32.mrf.mxu0
      %v1281 = vadd.f32 %v420, %v1280
      %v1282 = vpop.f32.mrf.mxu0
      %1283 = vmatprep.mubr.bf16.mxu0 0
      %1284 = vmatmul.mubr.bf16.gmra.mxu0 %v942
      %v1285 = vpop.f32.mrf.mxu0
      %v1286 = vadd.f32 %v420, %v1285
      %v1287 = vpop.f32.mrf.mxu0
      %v1288 = vpop.f32.mrf.mxu0
      %v1289 = vadd.f32 %v420, %v1288
      %v1290 = vpop.f32.mrf.mxu0
      %1291 = vmatprep.mubr.bf16.mxu0 0
      %1292 = vmatmul.mubr.bf16.gmra.mxu0 %v945
      %v1293 = vpop.f32.mrf.mxu0
      %v1294 = vadd.f32 %v420, %v1293
      %v1295 = vpop.f32.mrf.mxu0
      %v1296 = vpop.f32.mrf.mxu0
      %v1297 = vadd.f32 %v420, %v1296
      %v1298 = vpop.f32.mrf.mxu0
      %1299 = vmatprep.mubr.bf16.mxu0 0
      %1300 = vmatmul.mubr.bf16.gmra.mxu0 %v948
      %v1301 = vpop.f32.mrf.mxu0
      %v1302 = vadd.f32 %v420, %v1301
      %v1303 = vpop.f32.mrf.mxu0
      %v1304 = vpop.f32.mrf.mxu0
      %v1305 = vadd.f32 %v420, %v1304
      %v1306 = vpop.f32.mrf.mxu0
      %1307 = vmatprep.mubr.bf16.mxu0 0
      %1308 = vmatmul.mubr.bf16.gmra.mxu0 %v951
      %v1309 = vpop.f32.mrf.mxu0
      %v1310 = vadd.f32 %v420, %v1309
      %v1311 = vpop.f32.mrf.mxu0
      %v1312 = vpop.f32.mrf.mxu0
      %v1313 = vadd.f32 %v420, %v1312
      %v1314 = vpop.f32.mrf.mxu0
      %1315 = vmatprep.mubr.bf16.mxu0 0
      %1316 = vmatmul.mubr.bf16.gmra.mxu0 %v954
      %v1317 = vpop.f32.mrf.mxu0
      %v1318 = vadd.f32 %v420, %v1317
      %v1319 = vpop.f32.mrf.mxu0
      %v1320 = vpop.f32.mrf.mxu0
      %v1321 = vadd.f32 %v420, %v1320
      %v1322 = vpop.f32.mrf.mxu0
      %1323 = vmatprep.mubr.bf16.mxu0 0
      %1324 = vmatmul.mubr.bf16.gmra.mxu0 %v957
      %v1325 = vpop.f32.mrf.mxu0
      %v1326 = vadd.f32 %v420, %v1325
      %v1327 = vpop.f32.mrf.mxu0
      %v1328 = vpop.f32.mrf.mxu0
      %v1329 = vadd.f32 %v420, %v1328
      %v1330 = vpop.f32.mrf.mxu0
      %1331 = vmatprep.mubr.bf16.mxu0 0
      %1332 = vmatmul.mubr.bf16.gmra.mxu0 %v960
      %v1333 = vpop.f32.mrf.mxu0
      %v1334 = vadd.f32 %v420, %v1333
      %v1335 = vpop.f32.mrf.mxu0
      %v1336 = vpop.f32.mrf.mxu0
      %v1337 = vadd.f32 %v420, %v1336
      %v1338 = vpop.f32.mrf.mxu0
      %1339 = vmatprep.mubr.bf16.mxu0 0
      %1340 = vmatmul.mubr.bf16.gmra.mxu0 %v963
      %v1341 = vpop.f32.mrf.mxu0
      %v1342 = vadd.f32 %v420, %v1341
      %v1343 = vpop.f32.mrf.mxu0
      %v1344 = vpop.f32.mrf.mxu0
      %v1345 = vadd.f32 %v420, %v1344
      %v1346 = vpop.f32.mrf.mxu0
      %1347 = vmatprep.mubr.bf16.mxu0 0
      %1348 = vmatmul.mubr.bf16.gmra.mxu0 %v966
      %v1349 = vpop.f32.mrf.mxu0
      %v1350 = vadd.f32 %v420, %v1349
      %v1351 = vpop.f32.mrf.mxu0
      %v1352 = vpop.f32.mrf.mxu0
      %v1353 = vadd.f32 %v420, %v1352
      %v1354 = vpop.f32.mrf.mxu0
      %1355 = vmatprep.mubr.bf16.mxu0 0
      %1356 = vmatmul.mubr.bf16.gmra.mxu0 %v969
      %v1357 = vpop.f32.mrf.mxu0
      %v1358 = vadd.f32 %v420, %v1357
      %v1359 = vpop.f32.mrf.mxu0
      %v1360 = vpop.f32.mrf.mxu0
      %v1361 = vadd.f32 %v420, %v1360
      %v1362 = vpop.f32.mrf.mxu0
      %1363 = vmatprep.mubr.bf16.mxu0 0
      %1364 = vmatmul.mubr.bf16.gmra.mxu0 %v972
      %v1365 = vpop.f32.mrf.mxu0
      %v1366 = vadd.f32 %v420, %v1365
      %v1367 = vpop.f32.mrf.mxu0
      %v1368 = vpop.f32.mrf.mxu0
      %v1369 = vadd.f32 %v420, %v1368
      %v1370 = vpop.f32.mrf.mxu0
      %1371 = vmatprep.mubr.bf16.mxu0 0
      %1372 = vmatmul.mubr.bf16.gmra.mxu0 %v975
      %v1373 = vpop.f32.mrf.mxu0
      %v1374 = vadd.f32 %v420, %v1373
      %v1375 = vpop.f32.mrf.mxu0
      %v1376 = vpop.f32.mrf.mxu0
      %v1377 = vadd.f32 %v420, %v1376
      %v1378 = vpop.f32.mrf.mxu0
      %1379 = vmatprep.mubr.bf16.mxu0 0
      %1380 = vmatmul.mubr.bf16.gmra.mxu0 %v978
      %v1381 = vpop.f32.mrf.mxu0
      %v1382 = vadd.f32 %v420, %v1381
      %v1383 = vpop.f32.mrf.mxu0
      %v1384 = vpop.f32.mrf.mxu0
      %v1385 = vadd.f32 %v420, %v1384
      %v1386 = vpop.f32.mrf.mxu0
      %1387 = vmatprep.mubr.bf16.mxu0 0
      %1388 = vmatmul.mubr.bf16.gmra.mxu0 %v981
      %v1389 = vpop.f32.mrf.mxu0
      %v1390 = vadd.f32 %v420, %v1389
      %v1391 = vpop.f32.mrf.mxu0
      %v1392 = vpop.f32.mrf.mxu0
      %v1393 = vadd.f32 %v420, %v1392
      %v1394 = vpop.f32.mrf.mxu0
      %1395 = vmatprep.mubr.bf16.mxu0 0
      %1396 = vmatmul.mubr.bf16.gmra.mxu0 %v984
      %v1397 = vpop.f32.mrf.mxu0
      %v1398 = vadd.f32 %v420, %v1397
      %v1399 = vpop.f32.mrf.mxu0
      %v1400 = vpop.f32.mrf.mxu0
      %v1401 = vadd.f32 %v420, %v1400
      %v1402 = vpop.f32.mrf.mxu0
      %1403 = vmatprep.mubr.bf16.mxu0 0
      %1404 = vmatmul.mubr.bf16.gmra.mxu0 %v987
      %v1405 = vpop.f32.mrf.mxu0
      %v1406 = vadd.f32 %v420, %v1405
      %v1407 = vpop.f32.mrf.mxu0
      %v1408 = vpop.f32.mrf.mxu0
      %v1409 = vadd.f32 %v420, %v1408
      %v1410 = vpop.f32.mrf.mxu0
      %1411 = vmatprep.mubr.bf16.mxu0 0
      %1412 = vmatmul.mubr.bf16.gmra.mxu0 %v990
      %v1413 = vpop.f32.mrf.mxu0
      %v1414 = vadd.f32 %v420, %v1413
      %v1415 = vpop.f32.mrf.mxu0
      %v1416 = vpop.f32.mrf.mxu0
      %v1417 = vadd.f32 %v420, %v1416
      %v1418 = vpop.f32.mrf.mxu0
      %1419 = vmatprep.mubr.bf16.mxu0 0
      %1420 = vmatmul.mubr.bf16.gmra.mxu0 %v993
      %v1421 = vpop.f32.mrf.mxu0
      %v1422 = vadd.f32 %v420, %v1421
      %v1423 = vpop.f32.mrf.mxu0
      %v1424 = vpop.f32.mrf.mxu0
      %v1425 = vadd.f32 %v420, %v1424
      %v1426 = vpop.f32.mrf.mxu0
      %1427 = vmatprep.mubr.bf16.mxu0 0
      %1428 = vmatmul.mubr.bf16.gmra.mxu0 %v996
      %v1429 = vpop.f32.mrf.mxu0
      %v1430 = vadd.f32 %v420, %v1429
      %v1431 = vpop.f32.mrf.mxu0
      %v1432 = vpop.f32.mrf.mxu0
      %v1433 = vadd.f32 %v420, %v1432
      %v1434 = vpop.f32.mrf.mxu0
      %1435 = vmatprep.mubr.bf16.mxu0 0
      %1436 = vmatmul.mubr.bf16.gmra.mxu0 %v999
      %v1437 = vpop.f32.mrf.mxu0
      %v1438 = vadd.f32 %v420, %v1437
      %v1439 = vpop.f32.mrf.mxu0
      %v1440 = vpop.f32.mrf.mxu0
      %v1441 = vadd.f32 %v420, %v1440
      %v1442 = vpop.f32.mrf.mxu0
      %1443 = vmatprep.mubr.bf16.mxu0 0
      %1444 = vmatmul.mubr.bf16.gmra.mxu0 %v1002
      %v1445 = vpop.f32.mrf.mxu0
      %v1446 = vadd.f32 %v420, %v1445
      %v1447 = vpop.f32.mrf.mxu0
      %v1448 = vpop.f32.mrf.mxu0
      %v1449 = vadd.f32 %v420, %v1448
      %v1450 = vpop.f32.mrf.mxu0
      %1451 = vmatprep.mubr.bf16.mxu0 0
      %1452 = vmatmul.mubr.bf16.gmra.mxu0 %v1005
      %v1453 = vpop.f32.mrf.mxu0
      %v1454 = vadd.f32 %v420, %v1453
      %v1455 = vpop.f32.mrf.mxu0
      %v1456 = vpop.f32.mrf.mxu0
      %v1457 = vadd.f32 %v420, %v1456
      %v1458 = vpop.f32.mrf.mxu0
      %1459 = vmatprep.mubr.bf16.mxu0 0
      %1460 = vmatmul.mubr.bf16.gmra.mxu0 %v1008
      %v1461 = vpop.f32.mrf.mxu0
      %v1462 = vadd.f32 %v420, %v1461
      %v1463 = vpop.f32.mrf.mxu0
      %v1464 = vpop.f32.mrf.mxu0
      %v1465 = vadd.f32 %v420, %v1464
      %v1466 = vpop.f32.mrf.mxu0
      %1467 = vmatprep.mubr.bf16.mxu0 0
      %1468 = vmatmul.mubr.bf16.gmra.mxu0 %v1011
      %v1469 = vpop.f32.mrf.mxu0
      %v1470 = vadd.f32 %v420, %v1469
      %v1471 = vpop.f32.mrf.mxu0
      %v1472 = vpop.f32.mrf.mxu0
      %v1473 = vadd.f32 %v420, %v1472
      %v1474 = vpop.f32.mrf.mxu0
      %1475 = vmatprep.mubr.bf16.mxu0 0
      %1476 = vmatmul.mubr.bf16.gmra.mxu0 %v1014
      %v1477 = vpop.f32.mrf.mxu0
      %v1478 = vadd.f32 %v420, %v1477
      %v1479 = vpop.f32.mrf.mxu0
      %v1480 = vpop.f32.mrf.mxu0
      %v1481 = vadd.f32 %v420, %v1480
      %v1482 = vpop.f32.mrf.mxu0
      %1483 = vmatprep.mubr.bf16.mxu0 0
      %1484 = vmatmul.mubr.bf16.gmra.mxu0 %v1017
      %v1485 = vpop.f32.mrf.mxu0
      %v1486 = vadd.f32 %v420, %v1485
      %v1487 = vpop.f32.mrf.mxu0
      %v1488 = vpop.f32.mrf.mxu0
      %v1489 = vadd.f32 %v420, %v1488
      %v1490 = vpop.f32.mrf.mxu0
      %1491 = vmatprep.mubr.bf16.mxu0 0
      %1492 = vmatmul.mubr.bf16.gmra.mxu0 %v1020
      %v1493 = vpop.f32.mrf.mxu0
      %v1494 = vadd.f32 %v420, %v1493
      %v1495 = vpop.f32.mrf.mxu0
      %v1496 = vpop.f32.mrf.mxu0
      %v1497 = vadd.f32 %v420, %v1496
      %v1498 = vpop.f32.mrf.mxu0
      %1499 = vmatprep.mubr.bf16.mxu0 0
      %1500 = vmatmul.mubr.bf16.gmra.mxu0 %v1023
      %v1501 = vpop.f32.mrf.mxu0
      %v1502 = vadd.f32 %v420, %v1501
      %v1503 = vpop.f32.mrf.mxu0
      %v1504 = vpop.f32.mrf.mxu0
      %v1505 = vadd.f32 %v420, %v1504
      %v1506 = vpop.f32.mrf.mxu0
      %1507 = vmatprep.mubr.bf16.mxu0 0
      %1508 = vmatmul.mubr.bf16.gmra.mxu0 %v1026
      %v1509 = vpop.f32.mrf.mxu0
      %v1510 = vadd.f32 %v420, %v1509
      %v1511 = vpop.f32.mrf.mxu0
      %v1512 = vpop.f32.mrf.mxu0
      %v1513 = vadd.f32 %v420, %v1512
      %v1514 = vpop.f32.mrf.mxu0
      %1515 = vmatprep.mubr.bf16.mxu0 0
      %1516 = vmatmul.mubr.bf16.gmra.mxu0 %v1029
      %v1517 = vpop.f32.mrf.mxu0
      %v1518 = vadd.f32 %v420, %v1517
      %v1519 = vpop.f32.mrf.mxu0
      %v1520 = vpop.f32.mrf.mxu0
      %v1521 = vadd.f32 %v420, %v1520
      %v1522 = vpop.f32.mrf.mxu0
      %1523 = vmatprep.mubr.bf16.mxu0 0
      %1524 = vmatmul.mubr.bf16.gmra.mxu0 %v1032
      %v1525 = vpop.f32.mrf.mxu0
      %v1526 = vadd.f32 %v420, %v1525
      %v1527 = vpop.f32.mrf.mxu0
      %v1528 = vpop.f32.mrf.mxu0
      %v1529 = vadd.f32 %v420, %v1528
      %v1530 = vpop.f32.mrf.mxu0
      %1531 = vmatprep.mubr.bf16.mxu0 0
      %1532 = vmatmul.mubr.bf16.gmra.mxu0 %v1035
      %v1533 = vpop.f32.mrf.mxu0
      %v1534 = vadd.f32 %v420, %v1533
      %v1535 = vpop.f32.mrf.mxu0
      %v1536 = vpop.f32.mrf.mxu0
      %v1537 = vadd.f32 %v420, %v1536
      %v1538 = vpop.f32.mrf.mxu0
      %1539 = vmatprep.mubr.bf16.mxu0 0
      %1540 = vmatmul.mubr.bf16.gmra.mxu0 %v1038
      %v1541 = vpop.f32.mrf.mxu0
      %v1542 = vadd.f32 %v420, %v1541
      %v1543 = vpop.f32.mrf.mxu0
      %v1544 = vpop.f32.mrf.mxu0
      %v1545 = vadd.f32 %v420, %v1544
      %v1546 = vpop.f32.mrf.mxu0
      %1547 = vmatprep.mubr.bf16.mxu0 0
      %1548 = vmatmul.mubr.bf16.gmra.mxu0 %v1041
      %v1549 = vpop.f32.mrf.mxu0
      %v1550 = vadd.f32 %v420, %v1549
      %v1551 = vpop.f32.mrf.mxu0
      %v1552 = vpop.f32.mrf.mxu0
      %v1553 = vadd.f32 %v420, %v1552
      %v1554 = vpop.f32.mrf.mxu0
      %1555 = vmatprep.mubr.bf16.mxu0 0
      %1556 = vmatmul.mubr.bf16.gmra.mxu0 %v1044
      %v1557 = vpop.f32.mrf.mxu0
      %v1558 = vadd.f32 %v420, %v1557
      %v1559 = vpop.f32.mrf.mxu0
      %v1560 = vpop.f32.mrf.mxu0
      %v1561 = vadd.f32 %v420, %v1560
      %v1562 = vpop.f32.mrf.mxu0
      %1563 = vmatprep.mubr.bf16.mxu0 0
      %1564 = vmatmul.mubr.bf16.gmra.mxu0 %v1047
      %v1565 = vpop.f32.mrf.mxu0
      %v1566 = vadd.f32 %v420, %v1565
      %v1567 = vpop.f32.mrf.mxu0
      %v1568 = vpop.f32.mrf.mxu0
      %v1569 = vadd.f32 %v420, %v1568
      %v1570 = vpop.f32.mrf.mxu0
      %1571 = vmatprep.mubr.bf16.mxu0 0
      %1572 = vmatmul.mubr.bf16.gmra.mxu0 %v1050
      %v1573 = vpop.f32.mrf.mxu0
      %v1574 = vadd.f32 %v420, %v1573
      %v1575 = vpop.f32.mrf.mxu0
      %v1576 = vpop.f32.mrf.mxu0
      %v1577 = vadd.f32 %v420, %v1576
      %v1578 = vpop.f32.mrf.mxu0
      %1579 = vmatprep.mubr.bf16.mxu0 0
      %1580 = vmatmul.mubr.bf16.gmra.mxu0 %v1053
      %v1581 = vpop.f32.mrf.mxu0
      %v1582 = vadd.f32 %v420, %v1581
      %v1583 = vpop.f32.mrf.mxu0
      %v1584 = vpop.f32.mrf.mxu0
      %v1585 = vadd.f32 %v420, %v1584
      %v1586 = vpop.f32.mrf.mxu0
      %1587 = vmatprep.mubr.bf16.mxu0 0
      %1588 = vmatmul.mubr.bf16.gmra.mxu0 %v1056
      %v1589 = vpop.f32.mrf.mxu0
      %v1590 = vadd.f32 %v420, %v1589
      %v1591 = vpop.f32.mrf.mxu0
      %v1592 = vpop.f32.mrf.mxu0
      %v1593 = vadd.f32 %v420, %v1592
      %v1594 = vpop.f32.mrf.mxu0
      %1595 = vmatprep.mubr.bf16.mxu0 0
      %1596 = vmatmul.mubr.bf16.gmra.mxu0 %v1059
      %v1597 = vpop.f32.mrf.mxu0
      %v1598 = vadd.f32 %v420, %v1597
      %v1599 = vpop.f32.mrf.mxu0
      %v1600 = vpop.f32.mrf.mxu0
      %v1601 = vadd.f32 %v420, %v1600
      %v1602 = vpop.f32.mrf.mxu0
      %1603 = vmatprep.mubr.bf16.mxu0 0
      %1604 = vmatmul.mubr.bf16.gmra.mxu0 %v1062
      %v1605 = vpop.f32.mrf.mxu0
      %v1606 = vadd.f32 %v420, %v1605
      %v1607 = vpop.f32.mrf.mxu0
      %v1608 = vpop.f32.mrf.mxu0
      %v1609 = vadd.f32 %v420, %v1608
      %v1610 = vpop.f32.mrf.mxu0
      %1611 = vmatprep.mubr.bf16.mxu0 0
      %1612 = vmatmul.mubr.bf16.gmra.mxu0 %v1065
      %v1613 = vpop.f32.mrf.mxu0
      %v1614 = vadd.f32 %v420, %v1613
      %v1615 = vpop.f32.mrf.mxu0
      %v1616 = vpop.f32.mrf.mxu0
      %v1617 = vadd.f32 %v420, %v1616
      %v1618 = vpop.f32.mrf.mxu0
      %1619 = vmatprep.mubr.bf16.mxu0 0
      %1620 = vmatmul.mubr.bf16.gmra.mxu0 %v1068
      %v1621 = vpop.f32.mrf.mxu0
      %v1622 = vadd.f32 %v420, %v1621
      %v1623 = vpop.f32.mrf.mxu0
      %v1624 = vpop.f32.mrf.mxu0
      %v1625 = vadd.f32 %v420, %v1624
      %v1626 = vpop.f32.mrf.mxu0
      %1627 = vmatprep.mubr.bf16.mxu0 0
      %1628 = vmatmul.mubr.bf16.gmra.mxu0 %v1071
      %v1629 = vpop.f32.mrf.mxu0
      %v1630 = vadd.f32 %v420, %v1629
      %v1631 = vpop.f32.mrf.mxu0
      %v1632 = vpop.f32.mrf.mxu0
      %v1633 = vadd.f32 %v420, %v1632
      %v1634 = vpop.f32.mrf.mxu0
      %1635 = vmatprep.mubr.bf16.mxu0 0
      %1636 = vmatmul.mubr.bf16.gmra.mxu0 %v1074
      %v1637 = vpop.f32.mrf.mxu0
      %v1638 = vadd.f32 %v420, %v1637
      %v1639 = vpop.f32.mrf.mxu0
      %v1640 = vpop.f32.mrf.mxu0
      %v1641 = vadd.f32 %v420, %v1640
      %v1642 = vpop.f32.mrf.mxu0
      %1643 = vmatprep.mubr.bf16.mxu0 0
      %1644 = vmatmul.mubr.bf16.gmra.mxu0 %v1077
      %v1645 = vpop.f32.mrf.mxu0
      %v1646 = vadd.f32 %v420, %v1645
      %v1647 = vpop.f32.mrf.mxu0
      %v1648 = vpop.f32.mrf.mxu0
      %v1649 = vadd.f32 %v420, %v1648
      %v1650 = vpop.f32.mrf.mxu0
      %1651 = vmatprep.mubr.bf16.mxu0 0
      %1652 = vmatmul.mubr.bf16.gmra.mxu0 %v1080
      %v1653 = vpop.f32.mrf.mxu0
      %v1654 = vadd.f32 %v420, %v1653
      %v1655 = vpop.f32.mrf.mxu0
      %v1656 = vpop.f32.mrf.mxu0
      %v1657 = vadd.f32 %v420, %v1656
      %v1658 = vpop.f32.mrf.mxu0
      %1659 = vmatprep.mubr.bf16.mxu0 0
      %1660 = vmatmul.mubr.bf16.gmra.mxu0 %v1083
      %v1661 = vpop.f32.mrf.mxu0
      %v1662 = vadd.f32 %v420, %v1661
      %v1663 = vpop.f32.mrf.mxu0
      %v1664 = vpop.f32.mrf.mxu0
      %v1665 = vadd.f32 %v420, %v1664
      %v1666 = vpop.f32.mrf.mxu0
      %1667 = vmatprep.mubr.bf16.mxu0 0
      %1668 = vmatmul.mubr.bf16.gmra.mxu0 %v1086
      %v1669 = vpop.f32.mrf.mxu0
      %v1670 = vadd.f32 %v420, %v1669
      %v1671 = vpop.f32.mrf.mxu0
      %v1672 = vpop.f32.mrf.mxu0
      %v1673 = vadd.f32 %v420, %v1672
      %v1674 = vpop.f32.mrf.mxu0
      %1675 = vmatprep.mubr.bf16.mxu0 0
      %1676 = vmatmul.mubr.bf16.gmra.mxu0 %v1089
      %v1677 = vpop.f32.mrf.mxu0
      %v1678 = vadd.f32 %v420, %v1677
      %v1679 = vpop.f32.mrf.mxu0
      %v1680 = vpop.f32.mrf.mxu0
      %v1681 = vadd.f32 %v420, %v1680
      %v1682 = vpop.f32.mrf.mxu0
      %1683 = vmatprep.mubr.bf16.mxu0 0
      %1684 = vmatmul.mubr.bf16.gmra.mxu0 %v1092
      %v1685 = vpop.f32.mrf.mxu0
      %v1686 = vadd.f32 %v420, %v1685
      %v1687 = vpop.f32.mrf.mxu0
      %v1688 = vpop.f32.mrf.mxu0
      %v1689 = vadd.f32 %v420, %v1688
      %v1690 = vpop.f32.mrf.mxu0
      %1691 = vmatprep.mubr.bf16.mxu0 0
      %1692 = vmatmul.mubr.bf16.gmra.mxu0 %v1095
      %v1693 = vpop.f32.mrf.mxu0
      %v1694 = vadd.f32 %v420, %v1693
      %v1695 = vpop.f32.mrf.mxu0
      %v1696 = vpop.f32.mrf.mxu0
      %v1697 = vadd.f32 %v420, %v1696
      %v1698 = vpop.f32.mrf.mxu0
      %1699 = vmatprep.mubr.bf16.mxu0 0
      %1700 = vmatmul.mubr.bf16.gmra.mxu0 %v1098
      %v1701 = vpop.f32.mrf.mxu0
      %v1702 = vadd.f32 %v420, %v1701
      %v1703 = vpop.f32.mrf.mxu0
      %v1704 = vpop.f32.mrf.mxu0
      %v1705 = vadd.f32 %v420, %v1704
      %v1706 = vpop.f32.mrf.mxu0
      %1707 = vmatprep.mubr.bf16.mxu0 0
      %1708 = vmatmul.mubr.bf16.gmra.mxu0 %v1101
      %v1709 = vpop.f32.mrf.mxu0
      %v1710 = vadd.f32 %v420, %v1709
      %v1711 = vpop.f32.mrf.mxu0
      %v1712 = vpop.f32.mrf.mxu0
      %v1713 = vadd.f32 %v420, %v1712
      %v1714 = vpop.f32.mrf.mxu0
      %1715 = vmatprep.mubr.bf16.mxu0 0
      %1716 = vmatmul.mubr.bf16.gmra.mxu0 %v1104
      %v1717 = vpop.f32.mrf.mxu0
      %v1718 = vadd.f32 %v420, %v1717
      %v1719 = vpop.f32.mrf.mxu0
      %v1720 = vpop.f32.mrf.mxu0
      %v1721 = vadd.f32 %v420, %v1720
      %v1722 = vpop.f32.mrf.mxu0
      %1723 = vmatprep.mubr.bf16.mxu0 0
      %1724 = vmatmul.mubr.bf16.gmra.mxu0 %v1107
      %v1725 = vpop.f32.mrf.mxu0
      %v1726 = vadd.f32 %v420, %v1725
      %v1727 = vpop.f32.mrf.mxu0
      %v1728 = vpop.f32.mrf.mxu0
      %v1729 = vadd.f32 %v420, %v1728
      %v1730 = vpop.f32.mrf.mxu0
      %1731 = vmatprep.mubr.bf16.mxu0 0
      %1732 = vmatmul.mubr.bf16.gmra.mxu0 %v1110
      %v1733 = vpop.f32.mrf.mxu0
      %v1734 = vadd.f32 %v420, %v1733
      %v1735 = vpop.f32.mrf.mxu0
      %v1736 = vpop.f32.mrf.mxu0
      %v1737 = vadd.f32 %v420, %v1736
      %v1738 = vpop.f32.mrf.mxu0
      %1739 = vmatprep.mubr.bf16.mxu0 0
      %1740 = vmatmul.mubr.bf16.gmra.mxu0 %v1113
      %v1741 = vpop.f32.mrf.mxu0
      %v1742 = vadd.f32 %v420, %v1741
      %v1743 = vpop.f32.mrf.mxu0
      %v1744 = vpop.f32.mrf.mxu0
      %v1745 = vadd.f32 %v420, %v1744
      %v1746 = vpop.f32.mrf.mxu0
      %1747 = vmatprep.mubr.bf16.mxu0 0
      %1748 = vmatmul.mubr.bf16.gmra.mxu0 %v1116
      %v1749 = vpop.f32.mrf.mxu0
      %v1750 = vadd.f32 %v420, %v1749
      %v1751 = vpop.f32.mrf.mxu0
      %v1752 = vpop.f32.mrf.mxu0
      %v1753 = vadd.f32 %v420, %v1752
      %v1754 = vpop.f32.mrf.mxu0
      %1755 = vmatprep.mubr.bf16.mxu0 0
      %1756 = vmatmul.mubr.bf16.gmra.mxu0 %v1119
      %v1757 = vpop.f32.mrf.mxu0
      %v1758 = vadd.f32 %v420, %v1757
      %v1759 = vpop.f32.mrf.mxu0
      %v1760 = vpop.f32.mrf.mxu0
      %v1761 = vadd.f32 %v420, %v1760
      %v1762 = vpop.f32.mrf.mxu0
      %1763 = vmatprep.mubr.bf16.mxu0 0
      %1764 = vmatmul.mubr.bf16.gmra.mxu0 %v1122
      %v1765 = vpop.f32.mrf.mxu0
      %v1766 = vadd.f32 %v420, %v1765
      %v1767 = vpop.f32.mrf.mxu0
      %v1768 = vpop.f32.mrf.mxu0
      %v1769 = vadd.f32 %v420, %v1768
      %v1770 = vpop.f32.mrf.mxu0
      %1771 = vmatprep.mubr.bf16.mxu0 0
      %1772 = vmatmul.mubr.bf16.gmra.mxu0 %v1125
      %v1773 = vpop.f32.mrf.mxu0
      %v1774 = vadd.f32 %v420, %v1773
      %v1775 = vpop.f32.mrf.mxu0
      %v1776 = vpop.f32.mrf.mxu0
      %v1777 = vadd.f32 %v420, %v1776
      %v1778 = vpop.f32.mrf.mxu0
      %1779 = vmatprep.mubr.bf16.mxu0 0
      %1780 = vmatmul.mubr.bf16.gmra.mxu0 %v1128
      %v1781 = vpop.f32.mrf.mxu0
      %v1782 = vadd.f32 %v420, %v1781
      %v1783 = vpop.f32.mrf.mxu0
      %v1784 = vpop.f32.mrf.mxu0
      %v1785 = vadd.f32 %v420, %v1784
      %v1786 = vpop.f32.mrf.mxu0
      %1787 = vmatprep.mubr.bf16.mxu0 0
      %1788 = vmatmul.mubr.bf16.gmra.mxu0 %v1131
      %v1789 = vpop.f32.mrf.mxu0
      %v1790 = vadd.f32 %v420, %v1789
      %v1791 = vpop.f32.mrf.mxu0
      %v1792 = vpop.f32.mrf.mxu0
      %v1793 = vadd.f32 %v420, %v1792
      %v1794 = vpop.f32.mrf.mxu0
      %1795 = vmatprep.mubr.bf16.mxu0 0
      %1796 = vmatmul.mubr.bf16.gmra.mxu0 %v1134
      %v1797 = vpop.f32.mrf.mxu0
      %v1798 = vadd.f32 %v420, %v1797
      %v1799 = vpop.f32.mrf.mxu0
      %v1800 = vpop.f32.mrf.mxu0
      %v1801 = vadd.f32 %v420, %v1800
      %v1802 = vpop.f32.mrf.mxu0
      %1803 = vmatprep.mubr.bf16.mxu0 0
      %1804 = vmatmul.mubr.bf16.gmra.mxu0 %v1137
      %v1805 = vpop.f32.mrf.mxu0
      %v1806 = vadd.f32 %v420, %v1805
      %v1807 = vpop.f32.mrf.mxu0
      %v1808 = vpop.f32.mrf.mxu0
      %v1809 = vadd.f32 %v420, %v1808
      %v1810 = vpop.f32.mrf.mxu0
      %1811 = vmatprep.mubr.bf16.mxu0 0
      %1812 = vmatmul.mubr.bf16.gmra.mxu0 %v1140
      %v1813 = vpop.f32.mrf.mxu0
      %v1814 = vadd.f32 %v420, %v1813
      %v1815 = vpop.f32.mrf.mxu0
      %v1816 = vpop.f32.mrf.mxu0
      %v1817 = vadd.f32 %v420, %v1816
      %v1818 = vpop.f32.mrf.mxu0
      %1819 = vmatprep.mubr.bf16.mxu0 0
      %1820 = vmatmul.mubr.bf16.gmra.mxu0 %v1143
      %v1821 = vpop.f32.mrf.mxu0
      %v1822 = vadd.f32 %v420, %v1821
      %v1823 = vpop.f32.mrf.mxu0
      %v1824 = vpop.f32.mrf.mxu0
      %v1825 = vadd.f32 %v420, %v1824
      %v1826 = vpop.f32.mrf.mxu0
      %1827 = vmatprep.mubr.bf16.mxu0 0
      %1828 = vmatmul.mubr.bf16.gmra.mxu0 %v1146
      %v1829 = vpop.f32.mrf.mxu0
      %v1830 = vadd.f32 %v420, %v1829
      %v1831 = vpop.f32.mrf.mxu0
      %v1832 = vpop.f32.mrf.mxu0
      %v1833 = vadd.f32 %v420, %v1832
      %v1834 = vpop.f32.mrf.mxu0
      %1835 = vmatprep.mubr.bf16.mxu0 0
      %1836 = vmatmul.mubr.bf16.gmra.mxu0 %v1149
      %v1837 = vpop.f32.mrf.mxu0
      %v1838 = vadd.f32 %v420, %v1837
      %v1839 = vpop.f32.mrf.mxu0
      %v1840 = vpop.f32.mrf.mxu0
      %v1841 = vadd.f32 %v420, %v1840
      %v1842 = vpop.f32.mrf.mxu0
      %1843 = vmatprep.mubr.bf16.mxu0 0
      %1844 = vmatmul.mubr.bf16.gmra.mxu0 %v1152
      %v1845 = vpop.f32.mrf.mxu0
      %v1846 = vadd.f32 %v420, %v1845
      %v1847 = vpop.f32.mrf.mxu0
      %v1848 = vpop.f32.mrf.mxu0
      %v1849 = vadd.f32 %v420, %v1848
      %v1850 = vpop.f32.mrf.mxu0
      %1851 = vmatprep.mubr.bf16.mxu0 0
      %1852 = vmatmul.mubr.bf16.gmra.mxu0 %v1155
      %v1853 = vpop.f32.mrf.mxu0
      %v1854 = vadd.f32 %v420, %v1853
      %v1855 = vpop.f32.mrf.mxu0
      %v1856 = vpop.f32.mrf.mxu0
      %v1857 = vadd.f32 %v420, %v1856
      %v1858 = vpop.f32.mrf.mxu0
      %1859 = vmatprep.mubr.bf16.mxu0 0
      %1860 = vmatmul.mubr.bf16.gmra.mxu0 %v1158
      %v1861 = vpop.f32.mrf.mxu0
      %v1862 = vadd.f32 %v420, %v1861
      %v1863 = vpop.f32.mrf.mxu0
      %v1864 = vpop.f32.mrf.mxu0
      %v1865 = vadd.f32 %v420, %v1864
      %v1866 = vpop.f32.mrf.mxu0
      %1867 = vmatprep.mubr.bf16.mxu0 0
      %1868 = vmatmul.mubr.bf16.gmra.mxu0 %v1161
      %v1869 = vpop.f32.mrf.mxu0
      %v1870 = vadd.f32 %v420, %v1869
      %v1871 = vpop.f32.mrf.mxu0
      %v1872 = vpop.f32.mrf.mxu0
      %v1873 = vadd.f32 %v420, %v1872
      %v1874 = vpop.f32.mrf.mxu0
      %1875 = vmatprep.mubr.bf16.mxu0 0
      %1876 = vmatmul.mubr.bf16.gmra.mxu0 %v1164
      %v1877 = vpop.f32.mrf.mxu0
      %v1878 = vadd.f32 %v420, %v1877
      %v1879 = vpop.f32.mrf.mxu0
      %v1880 = vpop.f32.mrf.mxu0
      %v1881 = vadd.f32 %v420, %v1880
      %v1882 = vpop.f32.mrf.mxu0
      %1883 = vmatprep.mubr.bf16.mxu0 0
      %1884 = vmatmul.mubr.bf16.gmra.mxu0 %v1167
      %v1885 = vpop.f32.mrf.mxu0
      %v1886 = vadd.f32 %v420, %v1885
      %v1887 = vpop.f32.mrf.mxu0
      %v1888 = vpop.f32.mrf.mxu0
      %v1889 = vadd.f32 %v420, %v1888
      %v1890 = vpop.f32.mrf.mxu0
      %1891 = vmatprep.mubr.bf16.mxu0 0
      %1892 = vmatmul.mubr.bf16.gmra.mxu0 %v1170
      %v1893 = vpop.f32.mrf.mxu0
      %v1894 = vadd.f32 %v420, %v1893
      %v1895 = vpop.f32.mrf.mxu0
      %v1896 = vpop.f32.mrf.mxu0
      %v1897 = vadd.f32 %v420, %v1896
      %v1898 = vpop.f32.mrf.mxu0
      %1899 = vmatprep.mubr.bf16.mxu0 0
      %1900 = vmatmul.mubr.bf16.gmra.mxu0 %v1173
      %v1901 = vpop.f32.mrf.mxu0
      %v1902 = vadd.f32 %v420, %v1901
      %v1903 = vpop.f32.mrf.mxu0
      %v1904 = vpop.f32.mrf.mxu0
      %v1905 = vadd.f32 %v420, %v1904
      %v1906 = vpop.f32.mrf.mxu0
      %1907 = vmatprep.mubr.bf16.mxu0 0
      %1908 = vmatmul.mubr.bf16.gmra.mxu0 %v1176
      %v1909 = vpop.f32.mrf.mxu0
      %v1910 = vadd.f32 %v420, %v1909
      %v1911 = vpop.f32.mrf.mxu0
      %v1912 = vpop.f32.mrf.mxu0
      %v1913 = vadd.f32 %v420, %v1912
      %v1914 = vpop.f32.mrf.mxu0
      %1915 = vmatprep.mubr.bf16.mxu0 0
      %1916 = vmatmul.mubr.bf16.gmra.mxu0 %v1179
      %v1917 = vpop.f32.mrf.mxu0
      %v1918 = vadd.f32 %v420, %v1917
      %v1919 = vpop.f32.mrf.mxu0
      %v1920 = vpop.f32.mrf.mxu0
      %v1921 = vadd.f32 %v420, %v1920
      %v1922 = vpop.f32.mrf.mxu0
      %1923 = vmatprep.mubr.bf16.mxu0 0
      %1924 = vmatmul.mubr.bf16.gmra.mxu0 %v1182
      %v1925 = vpop.f32.mrf.mxu0
      %v1926 = vadd.f32 %v420, %v1925
      %v1927 = vpop.f32.mrf.mxu0
      %v1928 = vpop.f32.mrf.mxu0
      %v1929 = vadd.f32 %v420, %v1928
      %v1930 = vpop.f32.mrf.mxu0
      %1931 = vmatprep.mubr.bf16.mxu0 0
      %1932 = vmatmul.mubr.bf16.gmra.mxu0 %v1185
      %v1933 = vpop.f32.mrf.mxu0
      %v1934 = vadd.f32 %v420, %v1933
      %v1935 = vpop.f32.mrf.mxu0
      %v1936 = vpop.f32.mrf.mxu0
      %v1937 = vadd.f32 %v420, %v1936
      %v1938 = vpop.f32.mrf.mxu0
      %1939 = vmatprep.mubr.bf16.mxu0 0
      %1940 = vmatmul.mubr.bf16.gmra.mxu0 %v1188
      %v1941 = vpop.f32.mrf.mxu0
      %v1942 = vadd.f32 %v420, %v1941
      %v1943 = vpop.f32.mrf.mxu0
      %v1944 = vpop.f32.mrf.mxu0
      %v1945 = vadd.f32 %v420, %v1944
      %v1946 = vpop.f32.mrf.mxu0
      %1947 = vmatprep.mubr.bf16.mxu0 0
      %1948 = vmatmul.mubr.bf16.gmra.mxu0 %v1191
      %v1949 = vpop.f32.mrf.mxu0
      %v1950 = vadd.f32 %v420, %v1949
      %v1951 = vpop.f32.mrf.mxu0
      %v1952 = vpop.f32.mrf.mxu0
      %v1953 = vadd.f32 %v420, %v1952
      %v1954 = vpop.f32.mrf.mxu0
      %1955 = vmatprep.mubr.bf16.mxu0 0
      %1956 = vmatmul.mubr.bf16.gmra.mxu0 %v1194
      %v1957 = vpop.f32.mrf.mxu0
      %v1958 = vadd.f32 %v420, %v1957
      %v1959 = vpop.f32.mrf.mxu0
      %v1960 = vpop.f32.mrf.mxu0
      %v1961 = vadd.f32 %v420, %v1960
      %v1962 = vpop.f32.mrf.mxu0
      %1963 = vmatprep.mubr.bf16.mxu0 0
      %1964 = vmatmul.mubr.bf16.gmra.mxu0 %v1197
      %v1965 = vpop.f32.mrf.mxu0
      %v1966 = vadd.f32 %v420, %v1965
      %v1967 = vpop.f32.mrf.mxu0
      %v1968 = vpop.f32.mrf.mxu0
      %v1969 = vadd.f32 %v420, %v1968
      %v1970 = vpop.f32.mrf.mxu0
      %1971 = vmatprep.mubr.bf16.mxu0 0
      %1972 = vmatmul.mubr.bf16.gmra.mxu0 %v1200
      %v1973 = vpop.f32.mrf.mxu0
      %v1974 = vadd.f32 %v420, %v1973
      %v1975 = vpop.f32.mrf.mxu0
      %v1976 = vpop.f32.mrf.mxu0
      %v1977 = vadd.f32 %v420, %v1976
      %v1978 = vpop.f32.mrf.mxu0
      %1979 = vmatprep.mubr.bf16.mxu0 0
      %1980 = vmatmul.mubr.bf16.gmra.mxu0 %v1203
      %v1981 = vpop.f32.mrf.mxu0
      %v1982 = vadd.f32 %v420, %v1981
      %v1983 = vpop.f32.mrf.mxu0
      %v1984 = vpop.f32.mrf.mxu0
      %v1985 = vadd.f32 %v420, %v1984
      %v1986 = vpop.f32.mrf.mxu0
      %1987 = vmatprep.mubr.bf16.mxu0 0
      %1988 = vmatmul.mubr.bf16.gmra.mxu0 %v1206
      %v1989 = vpop.f32.mrf.mxu0
      %v1990 = vadd.f32 %v420, %v1989
      %v1991 = vpop.f32.mrf.mxu0
      %v1992 = vpop.f32.mrf.mxu0
      %v1993 = vadd.f32 %v420, %v1992
      %v1994 = vpop.f32.mrf.mxu0
      %1995 = vmatprep.mubr.bf16.mxu0 0
      %1996 = vmatmul.mubr.bf16.gmra.mxu0 %v1209
      %v1997 = vpop.f32.mrf.mxu0
      %v1998 = vadd.f32 %v420, %v1997
      %v1999 = vpop.f32.mrf.mxu0
      %v2000 = vpop.f32.mrf.mxu0
      %v2001 = vadd.f32 %v420, %v2000
      %v2002 = vpop.f32.mrf.mxu0
      %2003 = vmatprep.mubr.bf16.mxu0 0
      %2004 = vmatmul.mubr.bf16.gmra.mxu0 %v1212
      %v2005 = vpop.f32.mrf.mxu0
      %v2006 = vadd.f32 %v420, %v2005
      %v2007 = vpop.f32.mrf.mxu0
      %v2008 = vpop.f32.mrf.mxu0
      %v2009 = vadd.f32 %v420, %v2008
      %v2010 = vpop.f32.mrf.mxu0
      %2011 = vmatprep.mubr.bf16.mxu0 0
      %2012 = vmatmul.mubr.bf16.gmra.mxu0 %v1215
      %v2013 = vpop.f32.mrf.mxu0
      %v2014 = vadd.f32 %v420, %v2013
      %v2015 = vpop.f32.mrf.mxu0
      %v2016 = vpop.f32.mrf.mxu0
      %v2017 = vadd.f32 %v420, %v2016
      %v2018 = vpop.f32.mrf.mxu0
      %2019 = vmatprep.mubr.bf16.mxu0 0
      %2020 = vmatmul.mubr.bf16.gmra.mxu0 %v1218
      %v2021 = vpop.f32.mrf.mxu0
      %v2022 = vadd.f32 %v420, %v2021
      %v2023 = vpop.f32.mrf.mxu0
      %v2024 = vpop.f32.mrf.mxu0
      %v2025 = vadd.f32 %v420, %v2024
      %v2026 = vpop.f32.mrf.mxu0
      %2027 = vmatprep.mubr.bf16.mxu0 0
      %2028 = vmatmul.mubr.bf16.gmra.mxu0 %v1221
      %v2029 = vpop.f32.mrf.mxu0
      %v2030 = vadd.f32 %v420, %v2029
      %v2031 = vpop.f32.mrf.mxu0
      %v2032 = vpop.f32.mrf.mxu0
      %v2033 = vadd.f32 %v420, %v2032
      %v2034 = vpop.f32.mrf.mxu0
      %2035 = vmatprep.mubr.bf16.mxu0 0
      %2036 = vmatmul.mubr.bf16.gmra.mxu0 %v1224
      %v2037 = vpop.f32.mrf.mxu0
      %v2038 = vadd.f32 %v420, %v2037
      %v2039 = vpop.f32.mrf.mxu0
      %v2040 = vpop.f32.mrf.mxu0
      %v2041 = vadd.f32 %v420, %v2040
      %v2042 = vpop.f32.mrf.mxu0
      %2043 = vmatprep.mubr.bf16.mxu0 0
      %2044 = vmatmul.mubr.bf16.gmra.mxu0 %v1227
      %v2045 = vpop.f32.mrf.mxu0
      %v2046 = vadd.f32 %v420, %v2045
      %v2047 = vpop.f32.mrf.mxu0
      %v2048 = vpop.f32.mrf.mxu0
      %v2049 = vadd.f32 %v420, %v2048
      %v2050 = vpop.f32.mrf.mxu0
      %2051 = vmatprep.mubr.bf16.mxu0 0
      %2052 = vmatmul.mubr.bf16.gmra.mxu0 %v1230
      %v2053 = vpop.f32.mrf.mxu0
      %v2054 = vadd.f32 %v420, %v2053
      %v2055 = vpop.f32.mrf.mxu0
      %v2056 = vpop.f32.mrf.mxu0
      %v2057 = vadd.f32 %v420, %v2056
      %v2058 = vpop.f32.mrf.mxu0
      %2059 = vmatprep.mubr.bf16.mxu0 0
      %2060 = vmatmul.mubr.bf16.gmra.mxu0 %v1233
      %v2061 = vpop.f32.mrf.mxu0
      %v2062 = vadd.f32 %v420, %v2061
      %v2063 = vpop.f32.mrf.mxu0
      %v2064 = vpop.f32.mrf.mxu0
      %v2065 = vadd.f32 %v420, %v2064
      %v2066 = vpop.f32.mrf.mxu0
      %2067 = vdwg.mxu0
      %v2068 = vmax.f32 %v1270, 0.0
      %v2069 = vmax.f32 %v1273, 0.0
      %v2070 = vmax.f32 %v1278, 0.0
      %v2071 = vmax.f32 %v1281, 0.0
      %v2072 = vmax.f32 %v1286, 0.0
      %v2073 = vmax.f32 %v1289, 0.0
      %v2074 = vmax.f32 %v1294, 0.0
      %v2075 = vmax.f32 %v1297, 0.0
      %v2076 = vmax.f32 %v1302, 0.0
      %v2077 = vmax.f32 %v1305, 0.0
      %v2078 = vmax.f32 %v1310, 0.0
      %v2079 = vmax.f32 %v1313, 0.0
      %v2080 = vmax.f32 %v1318, 0.0
      %v2081 = vmax.f32 %v1321, 0.0
      %v2082 = vmax.f32 %v1326, 0.0
      %v2083 = vmax.f32 %v1329, 0.0
      %v2084 = vmax.f32 %v1334, 0.0
      %v2085 = vmax.f32 %v1337, 0.0
      %v2086 = vmax.f32 %v1342, 0.0
      %v2087 = vmax.f32 %v1345, 0.0
      %v2088 = vmax.f32 %v1350, 0.0
      %v2089 = vmax.f32 %v1353, 0.0
      %v2090 = vmax.f32 %v1358, 0.0
      %v2091 = vmax.f32 %v1361, 0.0
      %v2092 = vmax.f32 %v1366, 0.0
      %v2093 = vmax.f32 %v1369, 0.0
      %v2094 = vmax.f32 %v1374, 0.0
      %v2095 = vmax.f32 %v1377, 0.0
      %v2096 = vmax.f32 %v1382, 0.0
      %v2097 = vmax.f32 %v1385, 0.0
      %v2098 = vmax.f32 %v1390, 0.0
      %v2099 = vmax.f32 %v1393, 0.0
      %v2100 = vmax.f32 %v1398, 0.0
      %v2101 = vmax.f32 %v1401, 0.0
      %v2102 = vmax.f32 %v1406, 0.0
      %v2103 = vmax.f32 %v1409, 0.0
      %v2104 = vmax.f32 %v1414, 0.0
      %v2105 = vmax.f32 %v1417, 0.0
      %v2106 = vmax.f32 %v1422, 0.0
      %v2107 = vmax.f32 %v1425, 0.0
      %v2108 = vmax.f32 %v1430, 0.0
      %v2109 = vmax.f32 %v1433, 0.0
      %v2110 = vmax.f32 %v1438, 0.0
      %v2111 = vmax.f32 %v1441, 0.0
      %v2112 = vmax.f32 %v1446, 0.0
      %v2113 = vmax.f32 %v1449, 0.0
      %v2114 = vmax.f32 %v1454, 0.0
      %v2115 = vmax.f32 %v1457, 0.0
      %v2116 = vmax.f32 %v1462, 0.0
      %v2117 = vmax.f32 %v1465, 0.0
      %v2118 = vmax.f32 %v1470, 0.0
      %v2119 = vmax.f32 %v1473, 0.0
      %v2120 = vmax.f32 %v1478, 0.0
      %v2121 = vmax.f32 %v1481, 0.0
      %v2122 = vmax.f32 %v1486, 0.0
      %v2123 = vmax.f32 %v1489, 0.0
      %v2124 = vmax.f32 %v1494, 0.0
      %v2125 = vmax.f32 %v1497, 0.0
      %v2126 = vmax.f32 %v1502, 0.0
      %v2127 = vmax.f32 %v1505, 0.0
      %v2128 = vmax.f32 %v1510, 0.0
      %v2129 = vmax.f32 %v1513, 0.0
      %v2130 = vmax.f32 %v1518, 0.0
      %v2131 = vmax.f32 %v1521, 0.0
      %v2132 = vmax.f32 %v1526, 0.0
      %v2133 = vmax.f32 %v1529, 0.0
      %v2134 = vmax.f32 %v1534, 0.0
      %v2135 = vmax.f32 %v1537, 0.0
      %v2136 = vmax.f32 %v1542, 0.0
      %v2137 = vmax.f32 %v1545, 0.0
      %v2138 = vmax.f32 %v1550, 0.0
      %v2139 = vmax.f32 %v1553, 0.0
      %v2140 = vmax.f32 %v1558, 0.0
      %v2141 = vmax.f32 %v1561, 0.0
      %v2142 = vmax.f32 %v1566, 0.0
      %v2143 = vmax.f32 %v1569, 0.0
      %v2144 = vmax.f32 %v1574, 0.0
      %v2145 = vmax.f32 %v1577, 0.0
      %v2146 = vmax.f32 %v1582, 0.0
      %v2147 = vmax.f32 %v1585, 0.0
      %v2148 = vmax.f32 %v1590, 0.0
      %v2149 = vmax.f32 %v1593, 0.0
      %v2150 = vmax.f32 %v1598, 0.0
      %v2151 = vmax.f32 %v1601, 0.0
      %v2152 = vmax.f32 %v1606, 0.0
      %v2153 = vmax.f32 %v1609, 0.0
      %v2154 = vmax.f32 %v1614, 0.0
      %v2155 = vmax.f32 %v1617, 0.0
      %v2156 = vmax.f32 %v1622, 0.0
      %v2157 = vmax.f32 %v1625, 0.0
      %v2158 = vmax.f32 %v1630, 0.0
      %v2159 = vmax.f32 %v1633, 0.0
      %v2160 = vmax.f32 %v1638, 0.0
      %v2161 = vmax.f32 %v1641, 0.0
      %v2162 = vmax.f32 %v1646, 0.0
      %v2163 = vmax.f32 %v1649, 0.0
      %v2164 = vmax.f32 %v1654, 0.0
      %v2165 = vmax.f32 %v1657, 0.0
      %v2166 = vmax.f32 %v1662, 0.0
      %v2167 = vmax.f32 %v1665, 0.0
      %v2168 = vmax.f32 %v1670, 0.0
      %v2169 = vmax.f32 %v1673, 0.0
      %v2170 = vmax.f32 %v1678, 0.0
      %v2171 = vmax.f32 %v1681, 0.0
      %v2172 = vmax.f32 %v1686, 0.0
      %v2173 = vmax.f32 %v1689, 0.0
      %v2174 = vmax.f32 %v1694, 0.0
      %v2175 = vmax.f32 %v1697, 0.0
      %v2176 = vmax.f32 %v1702, 0.0
      %v2177 = vmax.f32 %v1705, 0.0
      %v2178 = vmax.f32 %v1710, 0.0
      %v2179 = vmax.f32 %v1713, 0.0
      %v2180 = vmax.f32 %v1718, 0.0
      %v2181 = vmax.f32 %v1721, 0.0
      %v2182 = vmax.f32 %v1726, 0.0
      %v2183 = vmax.f32 %v1729, 0.0
      %v2184 = vmax.f32 %v1734, 0.0
      %v2185 = vmax.f32 %v1737, 0.0
      %v2186 = vmax.f32 %v1742, 0.0
      %v2187 = vmax.f32 %v1745, 0.0
      %v2188 = vmax.f32 %v1750, 0.0
      %v2189 = vmax.f32 %v1753, 0.0
      %v2190 = vmax.f32 %v1758, 0.0
      %v2191 = vmax.f32 %v1761, 0.0
      %v2192 = vmax.f32 %v1766, 0.0
      %v2193 = vmax.f32 %v1769, 0.0
      %v2194 = vmax.f32 %v1774, 0.0
      %v2195 = vmax.f32 %v1777, 0.0
      %v2196 = vmax.f32 %v1782, 0.0
      %v2197 = vmax.f32 %v1785, 0.0
      %v2198 = vmax.f32 %v1790, 0.0
      %v2199 = vmax.f32 %v1793, 0.0
      %v2200 = vmax.f32 %v1798, 0.0
      %v2201 = vmax.f32 %v1801, 0.0
      %v2202 = vmax.f32 %v1806, 0.0
      %v2203 = vmax.f32 %v1809, 0.0
      %v2204 = vmax.f32 %v1814, 0.0
      %v2205 = vmax.f32 %v1817, 0.0
      %v2206 = vmax.f32 %v1822, 0.0
      %v2207 = vmax.f32 %v1825, 0.0
      %v2208 = vmax.f32 %v1830, 0.0
      %v2209 = vmax.f32 %v1833, 0.0
      %v2210 = vmax.f32 %v1838, 0.0
      %v2211 = vmax.f32 %v1841, 0.0
      %v2212 = vmax.f32 %v1846, 0.0
      %v2213 = vmax.f32 %v1849, 0.0
      %v2214 = vmax.f32 %v1854, 0.0
      %v2215 = vmax.f32 %v1857, 0.0
      %v2216 = vmax.f32 %v1862, 0.0
      %v2217 = vmax.f32 %v1865, 0.0
      %v2218 = vmax.f32 %v1870, 0.0
      %v2219 = vmax.f32 %v1873, 0.0
      %v2220 = vmax.f32 %v1878, 0.0
      %v2221 = vmax.f32 %v1881, 0.0
      %v2222 = vmax.f32 %v1886, 0.0
      %v2223 = vmax.f32 %v1889, 0.0
      %v2224 = vmax.f32 %v1894, 0.0
      %v2225 = vmax.f32 %v1897, 0.0
      %v2226 = vmax.f32 %v1902, 0.0
      %v2227 = vmax.f32 %v1905, 0.0
      %v2228 = vmax.f32 %v1910, 0.0
      %v2229 = vmax.f32 %v1913, 0.0
      %v2230 = vmax.f32 %v1918, 0.0
      %v2231 = vmax.f32 %v1921, 0.0
      %v2232 = vmax.f32 %v1926, 0.0
      %v2233 = vmax.f32 %v1929, 0.0
      %v2234 = vmax.f32 %v1934, 0.0
      %v2235 = vmax.f32 %v1937, 0.0
      %v2236 = vmax.f32 %v1942, 0.0
      %v2237 = vmax.f32 %v1945, 0.0
      %v2238 = vmax.f32 %v1950, 0.0
      %v2239 = vmax.f32 %v1953, 0.0
      %v2240 = vmax.f32 %v1958, 0.0
      %v2241 = vmax.f32 %v1961, 0.0
      %v2242 = vmax.f32 %v1966, 0.0
      %v2243 = vmax.f32 %v1969, 0.0
      %v2244 = vmax.f32 %v1974, 0.0
      %v2245 = vmax.f32 %v1977, 0.0
      %v2246 = vmax.f32 %v1982, 0.0
      %v2247 = vmax.f32 %v1985, 0.0
      %v2248 = vmax.f32 %v1990, 0.0
      %v2249 = vmax.f32 %v1993, 0.0
      %v2250 = vmax.f32 %v1998, 0.0
      %v2251 = vmax.f32 %v2001, 0.0
      %v2252 = vmax.f32 %v2006, 0.0
      %v2253 = vmax.f32 %v2009, 0.0
      %v2254 = vmax.f32 %v2014, 0.0
      %v2255 = vmax.f32 %v2017, 0.0
      %v2256 = vmax.f32 %v2022, 0.0
      %v2257 = vmax.f32 %v2025, 0.0
      %v2258 = vmax.f32 %v2030, 0.0
      %v2259 = vmax.f32 %v2033, 0.0
      %v2260 = vmax.f32 %v2038, 0.0
      %v2261 = vmax.f32 %v2041, 0.0
      %v2262 = vmax.f32 %v2046, 0.0
      %v2263 = vmax.f32 %v2049, 0.0
      %v2264 = vmax.f32 %v2054, 0.0
      %v2265 = vmax.f32 %v2057, 0.0
      %v2266 = vmax.f32 %v2062, 0.0
      %v2267 = vmax.f32 %v2065, 0.0
      %v2268 = vrot.slane %v2068, 4
      %v2269 = vmax.f32 %v2068, %v2268
      %v2270 = vrot.slane %v2269, 2
      %v2271 = vmax.f32 %v2269, %v2270
      %v2272 = vrot.slane %v2271, 1
      %v2273 = vmax.f32 %v2271, %v2272
      %v2274 = vrot.slane %v2069, 4
      %v2275 = vmax.f32 %v2069, %v2274
      %v2276 = vrot.slane %v2275, 2
      %v2277 = vmax.f32 %v2275, %v2276
      %v2278 = vrot.slane %v2277, 1
      %v2279 = vmax.f32 %v2277, %v2278
      %v2280 = vrot.slane %v2070, 4
      %v2281 = vmax.f32 %v2070, %v2280
      %v2282 = vrot.slane %v2281, 2
      %v2283 = vmax.f32 %v2281, %v2282
      %v2284 = vrot.slane %v2283, 1
      %v2285 = vmax.f32 %v2283, %v2284
      %v2286 = vrot.slane %v2071, 4
      %v2287 = vmax.f32 %v2071, %v2286
      %v2288 = vrot.slane %v2287, 2
      %v2289 = vmax.f32 %v2287, %v2288
      %v2290 = vrot.slane %v2289, 1
      %v2291 = vmax.f32 %v2289, %v2290
      %v2292 = vrot.slane %v2072, 4
      %v2293 = vmax.f32 %v2072, %v2292
      %v2294 = vrot.slane %v2293, 2
      %v2295 = vmax.f32 %v2293, %v2294
      %v2296 = vrot.slane %v2295, 1
      %v2297 = vmax.f32 %v2295, %v2296
      %v2298 = vrot.slane %v2073, 4
      %v2299 = vmax.f32 %v2073, %v2298
      %v2300 = vrot.slane %v2299, 2
      %v2301 = vmax.f32 %v2299, %v2300
      %v2302 = vrot.slane %v2301, 1
      %v2303 = vmax.f32 %v2301, %v2302
      %v2304 = vrot.slane %v2074, 4
      %v2305 = vmax.f32 %v2074, %v2304
      %v2306 = vrot.slane %v2305, 2
      %v2307 = vmax.f32 %v2305, %v2306
      %v2308 = vrot.slane %v2307, 1
      %v2309 = vmax.f32 %v2307, %v2308
      %v2310 = vrot.slane %v2075, 4
      %v2311 = vmax.f32 %v2075, %v2310
      %v2312 = vrot.slane %v2311, 2
      %v2313 = vmax.f32 %v2311, %v2312
      %v2314 = vrot.slane %v2313, 1
      %v2315 = vmax.f32 %v2313, %v2314
      %v2316 = vrot.slane %v2076, 4
      %v2317 = vmax.f32 %v2076, %v2316
      %v2318 = vrot.slane %v2317, 2
      %v2319 = vmax.f32 %v2317, %v2318
      %v2320 = vrot.slane %v2319, 1
      %v2321 = vmax.f32 %v2319, %v2320
      %v2322 = vrot.slane %v2077, 4
      %v2323 = vmax.f32 %v2077, %v2322
      %v2324 = vrot.slane %v2323, 2
      %v2325 = vmax.f32 %v2323, %v2324
      %v2326 = vrot.slane %v2325, 1
      %v2327 = vmax.f32 %v2325, %v2326
      %v2328 = vrot.slane %v2078, 4
      %v2329 = vmax.f32 %v2078, %v2328
      %v2330 = vrot.slane %v2329, 2
      %v2331 = vmax.f32 %v2329, %v2330
      %v2332 = vrot.slane %v2331, 1
      %v2333 = vmax.f32 %v2331, %v2332
      %v2334 = vrot.slane %v2079, 4
      %v2335 = vmax.f32 %v2079, %v2334
      %v2336 = vrot.slane %v2335, 2
      %v2337 = vmax.f32 %v2335, %v2336
      %v2338 = vrot.slane %v2337, 1
      %v2339 = vmax.f32 %v2337, %v2338
      %v2340 = vrot.slane %v2080, 4
      %v2341 = vmax.f32 %v2080, %v2340
      %v2342 = vrot.slane %v2341, 2
      %v2343 = vmax.f32 %v2341, %v2342
      %v2344 = vrot.slane %v2343, 1
      %v2345 = vmax.f32 %v2343, %v2344
      %v2346 = vrot.slane %v2081, 4
      %v2347 = vmax.f32 %v2081, %v2346
      %v2348 = vrot.slane %v2347, 2
      %v2349 = vmax.f32 %v2347, %v2348
      %v2350 = vrot.slane %v2349, 1
      %v2351 = vmax.f32 %v2349, %v2350
      %v2352 = vrot.slane %v2082, 4
      %v2353 = vmax.f32 %v2082, %v2352
      %v2354 = vrot.slane %v2353, 2
      %v2355 = vmax.f32 %v2353, %v2354
      %v2356 = vrot.slane %v2355, 1
      %v2357 = vmax.f32 %v2355, %v2356
      %v2358 = vrot.slane %v2083, 4
      %v2359 = vmax.f32 %v2083, %v2358
      %v2360 = vrot.slane %v2359, 2
      %v2361 = vmax.f32 %v2359, %v2360
      %v2362 = vrot.slane %v2361, 1
      %v2363 = vmax.f32 %v2361, %v2362
      %v2364 = vrot.slane %v2084, 4
      %v2365 = vmax.f32 %v2084, %v2364
      %v2366 = vrot.slane %v2365, 2
      %v2367 = vmax.f32 %v2365, %v2366
      %v2368 = vrot.slane %v2367, 1
      %v2369 = vmax.f32 %v2367, %v2368
      %v2370 = vrot.slane %v2085, 4
      %v2371 = vmax.f32 %v2085, %v2370
      %v2372 = vrot.slane %v2371, 2
      %v2373 = vmax.f32 %v2371, %v2372
      %v2374 = vrot.slane %v2373, 1
      %v2375 = vmax.f32 %v2373, %v2374
      %v2376 = vrot.slane %v2086, 4
      %v2377 = vmax.f32 %v2086, %v2376
      %v2378 = vrot.slane %v2377, 2
      %v2379 = vmax.f32 %v2377, %v2378
      %v2380 = vrot.slane %v2379, 1
      %v2381 = vmax.f32 %v2379, %v2380
      %v2382 = vrot.slane %v2087, 4
      %v2383 = vmax.f32 %v2087, %v2382
      %v2384 = vrot.slane %v2383, 2
      %v2385 = vmax.f32 %v2383, %v2384
      %v2386 = vrot.slane %v2385, 1
      %v2387 = vmax.f32 %v2385, %v2386
      %v2388 = vrot.slane %v2088, 4
      %v2389 = vmax.f32 %v2088, %v2388
      %v2390 = vrot.slane %v2389, 2
      %v2391 = vmax.f32 %v2389, %v2390
      %v2392 = vrot.slane %v2391, 1
      %v2393 = vmax.f32 %v2391, %v2392
      %v2394 = vrot.slane %v2089, 4
      %v2395 = vmax.f32 %v2089, %v2394
      %v2396 = vrot.slane %v2395, 2
      %v2397 = vmax.f32 %v2395, %v2396
      %v2398 = vrot.slane %v2397, 1
      %v2399 = vmax.f32 %v2397, %v2398
      %v2400 = vrot.slane %v2090, 4
      %v2401 = vmax.f32 %v2090, %v2400
      %v2402 = vrot.slane %v2401, 2
      %v2403 = vmax.f32 %v2401, %v2402
      %v2404 = vrot.slane %v2403, 1
      %v2405 = vmax.f32 %v2403, %v2404
      %v2406 = vrot.slane %v2091, 4
      %v2407 = vmax.f32 %v2091, %v2406
      %v2408 = vrot.slane %v2407, 2
      %v2409 = vmax.f32 %v2407, %v2408
      %v2410 = vrot.slane %v2409, 1
      %v2411 = vmax.f32 %v2409, %v2410
      %v2412 = vrot.slane %v2092, 4
      %v2413 = vmax.f32 %v2092, %v2412
      %v2414 = vrot.slane %v2413, 2
      %v2415 = vmax.f32 %v2413, %v2414
      %v2416 = vrot.slane %v2415, 1
      %v2417 = vmax.f32 %v2415, %v2416
      %v2418 = vrot.slane %v2093, 4
      %v2419 = vmax.f32 %v2093, %v2418
      %v2420 = vrot.slane %v2419, 2
      %v2421 = vmax.f32 %v2419, %v2420
      %v2422 = vrot.slane %v2421, 1
      %v2423 = vmax.f32 %v2421, %v2422
      %v2424 = vrot.slane %v2094, 4
      %v2425 = vmax.f32 %v2094, %v2424
      %v2426 = vrot.slane %v2425, 2
      %v2427 = vmax.f32 %v2425, %v2426
      %v2428 = vrot.slane %v2427, 1
      %v2429 = vmax.f32 %v2427, %v2428
      %v2430 = vrot.slane %v2095, 4
      %v2431 = vmax.f32 %v2095, %v2430
      %v2432 = vrot.slane %v2431, 2
      %v2433 = vmax.f32 %v2431, %v2432
      %v2434 = vrot.slane %v2433, 1
      %v2435 = vmax.f32 %v2433, %v2434
      %v2436 = vrot.slane %v2096, 4
      %v2437 = vmax.f32 %v2096, %v2436
      %v2438 = vrot.slane %v2437, 2
      %v2439 = vmax.f32 %v2437, %v2438
      %v2440 = vrot.slane %v2439, 1
      %v2441 = vmax.f32 %v2439, %v2440
      %v2442 = vrot.slane %v2097, 4
      %v2443 = vmax.f32 %v2097, %v2442
      %v2444 = vrot.slane %v2443, 2
      %v2445 = vmax.f32 %v2443, %v2444
      %v2446 = vrot.slane %v2445, 1
      %v2447 = vmax.f32 %v2445, %v2446
      %v2448 = vrot.slane %v2098, 4
      %v2449 = vmax.f32 %v2098, %v2448
      %v2450 = vrot.slane %v2449, 2
      %v2451 = vmax.f32 %v2449, %v2450
      %v2452 = vrot.slane %v2451, 1
      %v2453 = vmax.f32 %v2451, %v2452
      %v2454 = vrot.slane %v2099, 4
      %v2455 = vmax.f32 %v2099, %v2454
      %v2456 = vrot.slane %v2455, 2
      %v2457 = vmax.f32 %v2455, %v2456
      %v2458 = vrot.slane %v2457, 1
      %v2459 = vmax.f32 %v2457, %v2458
      %v2460 = vrot.slane %v2100, 4
      %v2461 = vmax.f32 %v2100, %v2460
      %v2462 = vrot.slane %v2461, 2
      %v2463 = vmax.f32 %v2461, %v2462
      %v2464 = vrot.slane %v2463, 1
      %v2465 = vmax.f32 %v2463, %v2464
      %v2466 = vrot.slane %v2101, 4
      %v2467 = vmax.f32 %v2101, %v2466
      %v2468 = vrot.slane %v2467, 2
      %v2469 = vmax.f32 %v2467, %v2468
      %v2470 = vrot.slane %v2469, 1
      %v2471 = vmax.f32 %v2469, %v2470
      %v2472 = vrot.slane %v2102, 4
      %v2473 = vmax.f32 %v2102, %v2472
      %v2474 = vrot.slane %v2473, 2
      %v2475 = vmax.f32 %v2473, %v2474
      %v2476 = vrot.slane %v2475, 1
      %v2477 = vmax.f32 %v2475, %v2476
      %v2478 = vrot.slane %v2103, 4
      %v2479 = vmax.f32 %v2103, %v2478
      %v2480 = vrot.slane %v2479, 2
      %v2481 = vmax.f32 %v2479, %v2480
      %v2482 = vrot.slane %v2481, 1
      %v2483 = vmax.f32 %v2481, %v2482
      %v2484 = vrot.slane %v2104, 4
      %v2485 = vmax.f32 %v2104, %v2484
      %v2486 = vrot.slane %v2485, 2
      %v2487 = vmax.f32 %v2485, %v2486
      %v2488 = vrot.slane %v2487, 1
      %v2489 = vmax.f32 %v2487, %v2488
      %v2490 = vrot.slane %v2105, 4
      %v2491 = vmax.f32 %v2105, %v2490
      %v2492 = vrot.slane %v2491, 2
      %v2493 = vmax.f32 %v2491, %v2492
      %v2494 = vrot.slane %v2493, 1
      %v2495 = vmax.f32 %v2493, %v2494
      %v2496 = vrot.slane %v2106, 4
      %v2497 = vmax.f32 %v2106, %v2496
      %v2498 = vrot.slane %v2497, 2
      %v2499 = vmax.f32 %v2497, %v2498
      %v2500 = vrot.slane %v2499, 1
      %v2501 = vmax.f32 %v2499, %v2500
      %v2502 = vrot.slane %v2107, 4
      %v2503 = vmax.f32 %v2107, %v2502
      %v2504 = vrot.slane %v2503, 2
      %v2505 = vmax.f32 %v2503, %v2504
      %v2506 = vrot.slane %v2505, 1
      %v2507 = vmax.f32 %v2505, %v2506
      %v2508 = vrot.slane %v2108, 4
      %v2509 = vmax.f32 %v2108, %v2508
      %v2510 = vrot.slane %v2509, 2
      %v2511 = vmax.f32 %v2509, %v2510
      %v2512 = vrot.slane %v2511, 1
      %v2513 = vmax.f32 %v2511, %v2512
      %v2514 = vrot.slane %v2109, 4
      %v2515 = vmax.f32 %v2109, %v2514
      %v2516 = vrot.slane %v2515, 2
      %v2517 = vmax.f32 %v2515, %v2516
      %v2518 = vrot.slane %v2517, 1
      %v2519 = vmax.f32 %v2517, %v2518
      %v2520 = vrot.slane %v2110, 4
      %v2521 = vmax.f32 %v2110, %v2520
      %v2522 = vrot.slane %v2521, 2
      %v2523 = vmax.f32 %v2521, %v2522
      %v2524 = vrot.slane %v2523, 1
      %v2525 = vmax.f32 %v2523, %v2524
      %v2526 = vrot.slane %v2111, 4
      %v2527 = vmax.f32 %v2111, %v2526
      %v2528 = vrot.slane %v2527, 2
      %v2529 = vmax.f32 %v2527, %v2528
      %v2530 = vrot.slane %v2529, 1
      %v2531 = vmax.f32 %v2529, %v2530
      %v2532 = vrot.slane %v2112, 4
      %v2533 = vmax.f32 %v2112, %v2532
      %v2534 = vrot.slane %v2533, 2
      %v2535 = vmax.f32 %v2533, %v2534
      %v2536 = vrot.slane %v2535, 1
      %v2537 = vmax.f32 %v2535, %v2536
      %v2538 = vrot.slane %v2113, 4
      %v2539 = vmax.f32 %v2113, %v2538
      %v2540 = vrot.slane %v2539, 2
      %v2541 = vmax.f32 %v2539, %v2540
      %v2542 = vrot.slane %v2541, 1
      %v2543 = vmax.f32 %v2541, %v2542
      %v2544 = vrot.slane %v2114, 4
      %v2545 = vmax.f32 %v2114, %v2544
      %v2546 = vrot.slane %v2545, 2
      %v2547 = vmax.f32 %v2545, %v2546
      %v2548 = vrot.slane %v2547, 1
      %v2549 = vmax.f32 %v2547, %v2548
      %v2550 = vrot.slane %v2115, 4
      %v2551 = vmax.f32 %v2115, %v2550
      %v2552 = vrot.slane %v2551, 2
      %v2553 = vmax.f32 %v2551, %v2552
      %v2554 = vrot.slane %v2553, 1
      %v2555 = vmax.f32 %v2553, %v2554
      %v2556 = vrot.slane %v2116, 4
      %v2557 = vmax.f32 %v2116, %v2556
      %v2558 = vrot.slane %v2557, 2
      %v2559 = vmax.f32 %v2557, %v2558
      %v2560 = vrot.slane %v2559, 1
      %v2561 = vmax.f32 %v2559, %v2560
      %v2562 = vrot.slane %v2117, 4
      %v2563 = vmax.f32 %v2117, %v2562
      %v2564 = vrot.slane %v2563, 2
      %v2565 = vmax.f32 %v2563, %v2564
      %v2566 = vrot.slane %v2565, 1
      %v2567 = vmax.f32 %v2565, %v2566
      %v2568 = vrot.slane %v2118, 4
      %v2569 = vmax.f32 %v2118, %v2568
      %v2570 = vrot.slane %v2569, 2
      %v2571 = vmax.f32 %v2569, %v2570
      %v2572 = vrot.slane %v2571, 1
      %v2573 = vmax.f32 %v2571, %v2572
      %v2574 = vrot.slane %v2119, 4
      %v2575 = vmax.f32 %v2119, %v2574
      %v2576 = vrot.slane %v2575, 2
      %v2577 = vmax.f32 %v2575, %v2576
      %v2578 = vrot.slane %v2577, 1
      %v2579 = vmax.f32 %v2577, %v2578
      %v2580 = vrot.slane %v2120, 4
      %v2581 = vmax.f32 %v2120, %v2580
      %v2582 = vrot.slane %v2581, 2
      %v2583 = vmax.f32 %v2581, %v2582
      %v2584 = vrot.slane %v2583, 1
      %v2585 = vmax.f32 %v2583, %v2584
      %v2586 = vrot.slane %v2121, 4
      %v2587 = vmax.f32 %v2121, %v2586
      %v2588 = vrot.slane %v2587, 2
      %v2589 = vmax.f32 %v2587, %v2588
      %v2590 = vrot.slane %v2589, 1
      %v2591 = vmax.f32 %v2589, %v2590
      %v2592 = vrot.slane %v2122, 4
      %v2593 = vmax.f32 %v2122, %v2592
      %v2594 = vrot.slane %v2593, 2
      %v2595 = vmax.f32 %v2593, %v2594
      %v2596 = vrot.slane %v2595, 1
      %v2597 = vmax.f32 %v2595, %v2596
      %v2598 = vrot.slane %v2123, 4
      %v2599 = vmax.f32 %v2123, %v2598
      %v2600 = vrot.slane %v2599, 2
      %v2601 = vmax.f32 %v2599, %v2600
      %v2602 = vrot.slane %v2601, 1
      %v2603 = vmax.f32 %v2601, %v2602
      %v2604 = vrot.slane %v2124, 4
      %v2605 = vmax.f32 %v2124, %v2604
      %v2606 = vrot.slane %v2605, 2
      %v2607 = vmax.f32 %v2605, %v2606
      %v2608 = vrot.slane %v2607, 1
      %v2609 = vmax.f32 %v2607, %v2608
      %v2610 = vrot.slane %v2125, 4
      %v2611 = vmax.f32 %v2125, %v2610
      %v2612 = vrot.slane %v2611, 2
      %v2613 = vmax.f32 %v2611, %v2612
      %v2614 = vrot.slane %v2613, 1
      %v2615 = vmax.f32 %v2613, %v2614
      %v2616 = vrot.slane %v2126, 4
      %v2617 = vmax.f32 %v2126, %v2616
      %v2618 = vrot.slane %v2617, 2
      %v2619 = vmax.f32 %v2617, %v2618
      %v2620 = vrot.slane %v2619, 1
      %v2621 = vmax.f32 %v2619, %v2620
      %v2622 = vrot.slane %v2127, 4
      %v2623 = vmax.f32 %v2127, %v2622
      %v2624 = vrot.slane %v2623, 2
      %v2625 = vmax.f32 %v2623, %v2624
      %v2626 = vrot.slane %v2625, 1
      %v2627 = vmax.f32 %v2625, %v2626
      %v2628 = vrot.slane %v2128, 4
      %v2629 = vmax.f32 %v2128, %v2628
      %v2630 = vrot.slane %v2629, 2
      %v2631 = vmax.f32 %v2629, %v2630
      %v2632 = vrot.slane %v2631, 1
      %v2633 = vmax.f32 %v2631, %v2632
      %v2634 = vrot.slane %v2129, 4
      %v2635 = vmax.f32 %v2129, %v2634
      %v2636 = vrot.slane %v2635, 2
      %v2637 = vmax.f32 %v2635, %v2636
      %v2638 = vrot.slane %v2637, 1
      %v2639 = vmax.f32 %v2637, %v2638
      %v2640 = vrot.slane %v2130, 4
      %v2641 = vmax.f32 %v2130, %v2640
      %v2642 = vrot.slane %v2641, 2
      %v2643 = vmax.f32 %v2641, %v2642
      %v2644 = vrot.slane %v2643, 1
      %v2645 = vmax.f32 %v2643, %v2644
      %v2646 = vrot.slane %v2131, 4
      %v2647 = vmax.f32 %v2131, %v2646
      %v2648 = vrot.slane %v2647, 2
      %v2649 = vmax.f32 %v2647, %v2648
      %v2650 = vrot.slane %v2649, 1
      %v2651 = vmax.f32 %v2649, %v2650
      %v2652 = vrot.slane %v2132, 4
      %v2653 = vmax.f32 %v2132, %v2652
      %v2654 = vrot.slane %v2653, 2
      %v2655 = vmax.f32 %v2653, %v2654
      %v2656 = vrot.slane %v2655, 1
      %v2657 = vmax.f32 %v2655, %v2656
      %v2658 = vrot.slane %v2133, 4
      %v2659 = vmax.f32 %v2133, %v2658
      %v2660 = vrot.slane %v2659, 2
      %v2661 = vmax.f32 %v2659, %v2660
      %v2662 = vrot.slane %v2661, 1
      %v2663 = vmax.f32 %v2661, %v2662
      %v2664 = vrot.slane %v2134, 4
      %v2665 = vmax.f32 %v2134, %v2664
      %v2666 = vrot.slane %v2665, 2
      %v2667 = vmax.f32 %v2665, %v2666
      %v2668 = vrot.slane %v2667, 1
      %v2669 = vmax.f32 %v2667, %v2668
      %v2670 = vrot.slane %v2135, 4
      %v2671 = vmax.f32 %v2135, %v2670
      %v2672 = vrot.slane %v2671, 2
      %v2673 = vmax.f32 %v2671, %v2672
      %v2674 = vrot.slane %v2673, 1
      %v2675 = vmax.f32 %v2673, %v2674
      %v2676 = vrot.slane %v2136, 4
      %v2677 = vmax.f32 %v2136, %v2676
      %v2678 = vrot.slane %v2677, 2
      %v2679 = vmax.f32 %v2677, %v2678
      %v2680 = vrot.slane %v2679, 1
      %v2681 = vmax.f32 %v2679, %v2680
      %v2682 = vrot.slane %v2137, 4
      %v2683 = vmax.f32 %v2137, %v2682
      %v2684 = vrot.slane %v2683, 2
      %v2685 = vmax.f32 %v2683, %v2684
      %v2686 = vrot.slane %v2685, 1
      %v2687 = vmax.f32 %v2685, %v2686
      %v2688 = vrot.slane %v2138, 4
      %v2689 = vmax.f32 %v2138, %v2688
      %v2690 = vrot.slane %v2689, 2
      %v2691 = vmax.f32 %v2689, %v2690
      %v2692 = vrot.slane %v2691, 1
      %v2693 = vmax.f32 %v2691, %v2692
      %v2694 = vrot.slane %v2139, 4
      %v2695 = vmax.f32 %v2139, %v2694
      %v2696 = vrot.slane %v2695, 2
      %v2697 = vmax.f32 %v2695, %v2696
      %v2698 = vrot.slane %v2697, 1
      %v2699 = vmax.f32 %v2697, %v2698
      %v2700 = vrot.slane %v2140, 4
      %v2701 = vmax.f32 %v2140, %v2700
      %v2702 = vrot.slane %v2701, 2
      %v2703 = vmax.f32 %v2701, %v2702
      %v2704 = vrot.slane %v2703, 1
      %v2705 = vmax.f32 %v2703, %v2704
      %v2706 = vrot.slane %v2141, 4
      %v2707 = vmax.f32 %v2141, %v2706
      %v2708 = vrot.slane %v2707, 2
      %v2709 = vmax.f32 %v2707, %v2708
      %v2710 = vrot.slane %v2709, 1
      %v2711 = vmax.f32 %v2709, %v2710
      %v2712 = vrot.slane %v2142, 4
      %v2713 = vmax.f32 %v2142, %v2712
      %v2714 = vrot.slane %v2713, 2
      %v2715 = vmax.f32 %v2713, %v2714
      %v2716 = vrot.slane %v2715, 1
      %v2717 = vmax.f32 %v2715, %v2716
      %v2718 = vrot.slane %v2143, 4
      %v2719 = vmax.f32 %v2143, %v2718
      %v2720 = vrot.slane %v2719, 2
      %v2721 = vmax.f32 %v2719, %v2720
      %v2722 = vrot.slane %v2721, 1
      %v2723 = vmax.f32 %v2721, %v2722
      %v2724 = vrot.slane %v2144, 4
      %v2725 = vmax.f32 %v2144, %v2724
      %v2726 = vrot.slane %v2725, 2
      %v2727 = vmax.f32 %v2725, %v2726
      %v2728 = vrot.slane %v2727, 1
      %v2729 = vmax.f32 %v2727, %v2728
      %v2730 = vrot.slane %v2145, 4
      %v2731 = vmax.f32 %v2145, %v2730
      %v2732 = vrot.slane %v2731, 2
      %v2733 = vmax.f32 %v2731, %v2732
      %v2734 = vrot.slane %v2733, 1
      %v2735 = vmax.f32 %v2733, %v2734
      %v2736 = vrot.slane %v2146, 4
      %v2737 = vmax.f32 %v2146, %v2736
      %v2738 = vrot.slane %v2737, 2
      %v2739 = vmax.f32 %v2737, %v2738
      %v2740 = vrot.slane %v2739, 1
      %v2741 = vmax.f32 %v2739, %v2740
      %v2742 = vrot.slane %v2147, 4
      %v2743 = vmax.f32 %v2147, %v2742
      %v2744 = vrot.slane %v2743, 2
      %v2745 = vmax.f32 %v2743, %v2744
      %v2746 = vrot.slane %v2745, 1
      %v2747 = vmax.f32 %v2745, %v2746
      %v2748 = vrot.slane %v2148, 4
      %v2749 = vmax.f32 %v2148, %v2748
      %v2750 = vrot.slane %v2749, 2
      %v2751 = vmax.f32 %v2749, %v2750
      %v2752 = vrot.slane %v2751, 1
      %v2753 = vmax.f32 %v2751, %v2752
      %v2754 = vrot.slane %v2149, 4
      %v2755 = vmax.f32 %v2149, %v2754
      %v2756 = vrot.slane %v2755, 2
      %v2757 = vmax.f32 %v2755, %v2756
      %v2758 = vrot.slane %v2757, 1
      %v2759 = vmax.f32 %v2757, %v2758
      %v2760 = vrot.slane %v2150, 4
      %v2761 = vmax.f32 %v2150, %v2760
      %v2762 = vrot.slane %v2761, 2
      %v2763 = vmax.f32 %v2761, %v2762
      %v2764 = vrot.slane %v2763, 1
      %v2765 = vmax.f32 %v2763, %v2764
      %v2766 = vrot.slane %v2151, 4
      %v2767 = vmax.f32 %v2151, %v2766
      %v2768 = vrot.slane %v2767, 2
      %v2769 = vmax.f32 %v2767, %v2768
      %v2770 = vrot.slane %v2769, 1
      %v2771 = vmax.f32 %v2769, %v2770
      %v2772 = vrot.slane %v2152, 4
      %v2773 = vmax.f32 %v2152, %v2772
      %v2774 = vrot.slane %v2773, 2
      %v2775 = vmax.f32 %v2773, %v2774
      %v2776 = vrot.slane %v2775, 1
      %v2777 = vmax.f32 %v2775, %v2776
      %v2778 = vrot.slane %v2153, 4
      %v2779 = vmax.f32 %v2153, %v2778
      %v2780 = vrot.slane %v2779, 2
      %v2781 = vmax.f32 %v2779, %v2780
      %v2782 = vrot.slane %v2781, 1
      %v2783 = vmax.f32 %v2781, %v2782
      %v2784 = vrot.slane %v2154, 4
      %v2785 = vmax.f32 %v2154, %v2784
      %v2786 = vrot.slane %v2785, 2
      %v2787 = vmax.f32 %v2785, %v2786
      %v2788 = vrot.slane %v2787, 1
      %v2789 = vmax.f32 %v2787, %v2788
      %v2790 = vrot.slane %v2155, 4
      %v2791 = vmax.f32 %v2155, %v2790
      %v2792 = vrot.slane %v2791, 2
      %v2793 = vmax.f32 %v2791, %v2792
      %v2794 = vrot.slane %v2793, 1
      %v2795 = vmax.f32 %v2793, %v2794
      %v2796 = vrot.slane %v2156, 4
      %v2797 = vmax.f32 %v2156, %v2796
      %v2798 = vrot.slane %v2797, 2
      %v2799 = vmax.f32 %v2797, %v2798
      %v2800 = vrot.slane %v2799, 1
      %v2801 = vmax.f32 %v2799, %v2800
      %v2802 = vrot.slane %v2157, 4
      %v2803 = vmax.f32 %v2157, %v2802
      %v2804 = vrot.slane %v2803, 2
      %v2805 = vmax.f32 %v2803, %v2804
      %v2806 = vrot.slane %v2805, 1
      %v2807 = vmax.f32 %v2805, %v2806
      %v2808 = vrot.slane %v2158, 4
      %v2809 = vmax.f32 %v2158, %v2808
      %v2810 = vrot.slane %v2809, 2
      %v2811 = vmax.f32 %v2809, %v2810
      %v2812 = vrot.slane %v2811, 1
      %v2813 = vmax.f32 %v2811, %v2812
      %v2814 = vrot.slane %v2159, 4
      %v2815 = vmax.f32 %v2159, %v2814
      %v2816 = vrot.slane %v2815, 2
      %v2817 = vmax.f32 %v2815, %v2816
      %v2818 = vrot.slane %v2817, 1
      %v2819 = vmax.f32 %v2817, %v2818
      %v2820 = vrot.slane %v2160, 4
      %v2821 = vmax.f32 %v2160, %v2820
      %v2822 = vrot.slane %v2821, 2
      %v2823 = vmax.f32 %v2821, %v2822
      %v2824 = vrot.slane %v2823, 1
      %v2825 = vmax.f32 %v2823, %v2824
      %v2826 = vrot.slane %v2161, 4
      %v2827 = vmax.f32 %v2161, %v2826
      %v2828 = vrot.slane %v2827, 2
      %v2829 = vmax.f32 %v2827, %v2828
      %v2830 = vrot.slane %v2829, 1
      %v2831 = vmax.f32 %v2829, %v2830
      %v2832 = vrot.slane %v2162, 4
      %v2833 = vmax.f32 %v2162, %v2832
      %v2834 = vrot.slane %v2833, 2
      %v2835 = vmax.f32 %v2833, %v2834
      %v2836 = vrot.slane %v2835, 1
      %v2837 = vmax.f32 %v2835, %v2836
      %v2838 = vrot.slane %v2163, 4
      %v2839 = vmax.f32 %v2163, %v2838
      %v2840 = vrot.slane %v2839, 2
      %v2841 = vmax.f32 %v2839, %v2840
      %v2842 = vrot.slane %v2841, 1
      %v2843 = vmax.f32 %v2841, %v2842
      %v2844 = vrot.slane %v2164, 4
      %v2845 = vmax.f32 %v2164, %v2844
      %v2846 = vrot.slane %v2845, 2
      %v2847 = vmax.f32 %v2845, %v2846
      %v2848 = vrot.slane %v2847, 1
      %v2849 = vmax.f32 %v2847, %v2848
      %v2850 = vrot.slane %v2165, 4
      %v2851 = vmax.f32 %v2165, %v2850
      %v2852 = vrot.slane %v2851, 2
      %v2853 = vmax.f32 %v2851, %v2852
      %v2854 = vrot.slane %v2853, 1
      %v2855 = vmax.f32 %v2853, %v2854
      %v2856 = vrot.slane %v2166, 4
      %v2857 = vmax.f32 %v2166, %v2856
      %v2858 = vrot.slane %v2857, 2
      %v2859 = vmax.f32 %v2857, %v2858
      %v2860 = vrot.slane %v2859, 1
      %v2861 = vmax.f32 %v2859, %v2860
      %v2862 = vrot.slane %v2167, 4
      %v2863 = vmax.f32 %v2167, %v2862
      %v2864 = vrot.slane %v2863, 2
      %v2865 = vmax.f32 %v2863, %v2864
      %v2866 = vrot.slane %v2865, 1
      %v2867 = vmax.f32 %v2865, %v2866
      %v2868 = vrot.slane %v2168, 4
      %v2869 = vmax.f32 %v2168, %v2868
      %v2870 = vrot.slane %v2869, 2
      %v2871 = vmax.f32 %v2869, %v2870
      %v2872 = vrot.slane %v2871, 1
      %v2873 = vmax.f32 %v2871, %v2872
      %v2874 = vrot.slane %v2169, 4
      %v2875 = vmax.f32 %v2169, %v2874
      %v2876 = vrot.slane %v2875, 2
      %v2877 = vmax.f32 %v2875, %v2876
      %v2878 = vrot.slane %v2877, 1
      %v2879 = vmax.f32 %v2877, %v2878
      %v2880 = vrot.slane %v2170, 4
      %v2881 = vmax.f32 %v2170, %v2880
      %v2882 = vrot.slane %v2881, 2
      %v2883 = vmax.f32 %v2881, %v2882
      %v2884 = vrot.slane %v2883, 1
      %v2885 = vmax.f32 %v2883, %v2884
      %v2886 = vrot.slane %v2171, 4
      %v2887 = vmax.f32 %v2171, %v2886
      %v2888 = vrot.slane %v2887, 2
      %v2889 = vmax.f32 %v2887, %v2888
      %v2890 = vrot.slane %v2889, 1
      %v2891 = vmax.f32 %v2889, %v2890
      %v2892 = vrot.slane %v2172, 4
      %v2893 = vmax.f32 %v2172, %v2892
      %v2894 = vrot.slane %v2893, 2
      %v2895 = vmax.f32 %v2893, %v2894
      %v2896 = vrot.slane %v2895, 1
      %v2897 = vmax.f32 %v2895, %v2896
      %v2898 = vrot.slane %v2173, 4
      %v2899 = vmax.f32 %v2173, %v2898
      %v2900 = vrot.slane %v2899, 2
      %v2901 = vmax.f32 %v2899, %v2900
      %v2902 = vrot.slane %v2901, 1
      %v2903 = vmax.f32 %v2901, %v2902
      %v2904 = vrot.slane %v2174, 4
      %v2905 = vmax.f32 %v2174, %v2904
      %v2906 = vrot.slane %v2905, 2
      %v2907 = vmax.f32 %v2905, %v2906
      %v2908 = vrot.slane %v2907, 1
      %v2909 = vmax.f32 %v2907, %v2908
      %v2910 = vrot.slane %v2175, 4
      %v2911 = vmax.f32 %v2175, %v2910
      %v2912 = vrot.slane %v2911, 2
      %v2913 = vmax.f32 %v2911, %v2912
      %v2914 = vrot.slane %v2913, 1
      %v2915 = vmax.f32 %v2913, %v2914
      %v2916 = vrot.slane %v2176, 4
      %v2917 = vmax.f32 %v2176, %v2916
      %v2918 = vrot.slane %v2917, 2
      %v2919 = vmax.f32 %v2917, %v2918
      %v2920 = vrot.slane %v2919, 1
      %v2921 = vmax.f32 %v2919, %v2920
      %v2922 = vrot.slane %v2177, 4
      %v2923 = vmax.f32 %v2177, %v2922
      %v2924 = vrot.slane %v2923, 2
      %v2925 = vmax.f32 %v2923, %v2924
      %v2926 = vrot.slane %v2925, 1
      %v2927 = vmax.f32 %v2925, %v2926
      %v2928 = vrot.slane %v2178, 4
      %v2929 = vmax.f32 %v2178, %v2928
      %v2930 = vrot.slane %v2929, 2
      %v2931 = vmax.f32 %v2929, %v2930
      %v2932 = vrot.slane %v2931, 1
      %v2933 = vmax.f32 %v2931, %v2932
      %v2934 = vrot.slane %v2179, 4
      %v2935 = vmax.f32 %v2179, %v2934
      %v2936 = vrot.slane %v2935, 2
      %v2937 = vmax.f32 %v2935, %v2936
      %v2938 = vrot.slane %v2937, 1
      %v2939 = vmax.f32 %v2937, %v2938
      %v2940 = vrot.slane %v2180, 4
      %v2941 = vmax.f32 %v2180, %v2940
      %v2942 = vrot.slane %v2941, 2
      %v2943 = vmax.f32 %v2941, %v2942
      %v2944 = vrot.slane %v2943, 1
      %v2945 = vmax.f32 %v2943, %v2944
      %v2946 = vrot.slane %v2181, 4
      %v2947 = vmax.f32 %v2181, %v2946
      %v2948 = vrot.slane %v2947, 2
      %v2949 = vmax.f32 %v2947, %v2948
      %v2950 = vrot.slane %v2949, 1
      %v2951 = vmax.f32 %v2949, %v2950
      %v2952 = vrot.slane %v2182, 4
      %v2953 = vmax.f32 %v2182, %v2952
      %v2954 = vrot.slane %v2953, 2
      %v2955 = vmax.f32 %v2953, %v2954
      %v2956 = vrot.slane %v2955, 1
      %v2957 = vmax.f32 %v2955, %v2956
      %v2958 = vrot.slane %v2183, 4
      %v2959 = vmax.f32 %v2183, %v2958
      %v2960 = vrot.slane %v2959, 2
      %v2961 = vmax.f32 %v2959, %v2960
      %v2962 = vrot.slane %v2961, 1
      %v2963 = vmax.f32 %v2961, %v2962
      %v2964 = vrot.slane %v2184, 4
      %v2965 = vmax.f32 %v2184, %v2964
      %v2966 = vrot.slane %v2965, 2
      %v2967 = vmax.f32 %v2965, %v2966
      %v2968 = vrot.slane %v2967, 1
      %v2969 = vmax.f32 %v2967, %v2968
      %v2970 = vrot.slane %v2185, 4
      %v2971 = vmax.f32 %v2185, %v2970
      %v2972 = vrot.slane %v2971, 2
      %v2973 = vmax.f32 %v2971, %v2972
      %v2974 = vrot.slane %v2973, 1
      %v2975 = vmax.f32 %v2973, %v2974
      %v2976 = vrot.slane %v2186, 4
      %v2977 = vmax.f32 %v2186, %v2976
      %v2978 = vrot.slane %v2977, 2
      %v2979 = vmax.f32 %v2977, %v2978
      %v2980 = vrot.slane %v2979, 1
      %v2981 = vmax.f32 %v2979, %v2980
      %v2982 = vrot.slane %v2187, 4
      %v2983 = vmax.f32 %v2187, %v2982
      %v2984 = vrot.slane %v2983, 2
      %v2985 = vmax.f32 %v2983, %v2984
      %v2986 = vrot.slane %v2985, 1
      %v2987 = vmax.f32 %v2985, %v2986
      %v2988 = vrot.slane %v2188, 4
      %v2989 = vmax.f32 %v2188, %v2988
      %v2990 = vrot.slane %v2989, 2
      %v2991 = vmax.f32 %v2989, %v2990
      %v2992 = vrot.slane %v2991, 1
      %v2993 = vmax.f32 %v2991, %v2992
      %v2994 = vrot.slane %v2189, 4
      %v2995 = vmax.f32 %v2189, %v2994
      %v2996 = vrot.slane %v2995, 2
      %v2997 = vmax.f32 %v2995, %v2996
      %v2998 = vrot.slane %v2997, 1
      %v2999 = vmax.f32 %v2997, %v2998
      %v3000 = vrot.slane %v2190, 4
      %v3001 = vmax.f32 %v2190, %v3000
      %v3002 = vrot.slane %v3001, 2
      %v3003 = vmax.f32 %v3001, %v3002
      %v3004 = vrot.slane %v3003, 1
      %v3005 = vmax.f32 %v3003, %v3004
      %v3006 = vrot.slane %v2191, 4
      %v3007 = vmax.f32 %v2191, %v3006
      %v3008 = vrot.slane %v3007, 2
      %v3009 = vmax.f32 %v3007, %v3008
      %v3010 = vrot.slane %v3009, 1
      %v3011 = vmax.f32 %v3009, %v3010
      %v3012 = vrot.slane %v2192, 4
      %v3013 = vmax.f32 %v2192, %v3012
      %v3014 = vrot.slane %v3013, 2
      %v3015 = vmax.f32 %v3013, %v3014
      %v3016 = vrot.slane %v3015, 1
      %v3017 = vmax.f32 %v3015, %v3016
      %v3018 = vrot.slane %v2193, 4
      %v3019 = vmax.f32 %v2193, %v3018
      %v3020 = vrot.slane %v3019, 2
      %v3021 = vmax.f32 %v3019, %v3020
      %v3022 = vrot.slane %v3021, 1
      %v3023 = vmax.f32 %v3021, %v3022
      %v3024 = vrot.slane %v2194, 4
      %v3025 = vmax.f32 %v2194, %v3024
      %v3026 = vrot.slane %v3025, 2
      %v3027 = vmax.f32 %v3025, %v3026
      %v3028 = vrot.slane %v3027, 1
      %v3029 = vmax.f32 %v3027, %v3028
      %v3030 = vrot.slane %v2195, 4
      %v3031 = vmax.f32 %v2195, %v3030
      %v3032 = vrot.slane %v3031, 2
      %v3033 = vmax.f32 %v3031, %v3032
      %v3034 = vrot.slane %v3033, 1
      %v3035 = vmax.f32 %v3033, %v3034
      %v3036 = vrot.slane %v2196, 4
      %v3037 = vmax.f32 %v2196, %v3036
      %v3038 = vrot.slane %v3037, 2
      %v3039 = vmax.f32 %v3037, %v3038
      %v3040 = vrot.slane %v3039, 1
      %v3041 = vmax.f32 %v3039, %v3040
      %v3042 = vrot.slane %v2197, 4
      %v3043 = vmax.f32 %v2197, %v3042
      %v3044 = vrot.slane %v3043, 2
      %v3045 = vmax.f32 %v3043, %v3044
      %v3046 = vrot.slane %v3045, 1
      %v3047 = vmax.f32 %v3045, %v3046
      %v3048 = vrot.slane %v2198, 4
      %v3049 = vmax.f32 %v2198, %v3048
      %v3050 = vrot.slane %v3049, 2
      %v3051 = vmax.f32 %v3049, %v3050
      %v3052 = vrot.slane %v3051, 1
      %v3053 = vmax.f32 %v3051, %v3052
      %v3054 = vrot.slane %v2199, 4
      %v3055 = vmax.f32 %v2199, %v3054
      %v3056 = vrot.slane %v3055, 2
      %v3057 = vmax.f32 %v3055, %v3056
      %v3058 = vrot.slane %v3057, 1
      %v3059 = vmax.f32 %v3057, %v3058
      %v3060 = vrot.slane %v2200, 4
      %v3061 = vmax.f32 %v2200, %v3060
      %v3062 = vrot.slane %v3061, 2
      %v3063 = vmax.f32 %v3061, %v3062
      %v3064 = vrot.slane %v3063, 1
      %v3065 = vmax.f32 %v3063, %v3064
      %v3066 = vrot.slane %v2201, 4
      %v3067 = vmax.f32 %v2201, %v3066
      %v3068 = vrot.slane %v3067, 2
      %v3069 = vmax.f32 %v3067, %v3068
      %v3070 = vrot.slane %v3069, 1
      %v3071 = vmax.f32 %v3069, %v3070
      %v3072 = vrot.slane %v2202, 4
      %v3073 = vmax.f32 %v2202, %v3072
      %v3074 = vrot.slane %v3073, 2
      %v3075 = vmax.f32 %v3073, %v3074
      %v3076 = vrot.slane %v3075, 1
      %v3077 = vmax.f32 %v3075, %v3076
      %v3078 = vrot.slane %v2203, 4
      %v3079 = vmax.f32 %v2203, %v3078
      %v3080 = vrot.slane %v3079, 2
      %v3081 = vmax.f32 %v3079, %v3080
      %v3082 = vrot.slane %v3081, 1
      %v3083 = vmax.f32 %v3081, %v3082
      %v3084 = vrot.slane %v2204, 4
      %v3085 = vmax.f32 %v2204, %v3084
      %v3086 = vrot.slane %v3085, 2
      %v3087 = vmax.f32 %v3085, %v3086
      %v3088 = vrot.slane %v3087, 1
      %v3089 = vmax.f32 %v3087, %v3088
      %v3090 = vrot.slane %v2205, 4
      %v3091 = vmax.f32 %v2205, %v3090
      %v3092 = vrot.slane %v3091, 2
      %v3093 = vmax.f32 %v3091, %v3092
      %v3094 = vrot.slane %v3093, 1
      %v3095 = vmax.f32 %v3093, %v3094
      %v3096 = vrot.slane %v2206, 4
      %v3097 = vmax.f32 %v2206, %v3096
      %v3098 = vrot.slane %v3097, 2
      %v3099 = vmax.f32 %v3097, %v3098
      %v3100 = vrot.slane %v3099, 1
      %v3101 = vmax.f32 %v3099, %v3100
      %v3102 = vrot.slane %v2207, 4
      %v3103 = vmax.f32 %v2207, %v3102
      %v3104 = vrot.slane %v3103, 2
      %v3105 = vmax.f32 %v3103, %v3104
      %v3106 = vrot.slane %v3105, 1
      %v3107 = vmax.f32 %v3105, %v3106
      %v3108 = vrot.slane %v2208, 4
      %v3109 = vmax.f32 %v2208, %v3108
      %v3110 = vrot.slane %v3109, 2
      %v3111 = vmax.f32 %v3109, %v3110
      %v3112 = vrot.slane %v3111, 1
      %v3113 = vmax.f32 %v3111, %v3112
      %v3114 = vrot.slane %v2209, 4
      %v3115 = vmax.f32 %v2209, %v3114
      %v3116 = vrot.slane %v3115, 2
      %v3117 = vmax.f32 %v3115, %v3116
      %v3118 = vrot.slane %v3117, 1
      %v3119 = vmax.f32 %v3117, %v3118
      %v3120 = vrot.slane %v2210, 4
      %v3121 = vmax.f32 %v2210, %v3120
      %v3122 = vrot.slane %v3121, 2
      %v3123 = vmax.f32 %v3121, %v3122
      %v3124 = vrot.slane %v3123, 1
      %v3125 = vmax.f32 %v3123, %v3124
      %v3126 = vrot.slane %v2211, 4
      %v3127 = vmax.f32 %v2211, %v3126
      %v3128 = vrot.slane %v3127, 2
      %v3129 = vmax.f32 %v3127, %v3128
      %v3130 = vrot.slane %v3129, 1
      %v3131 = vmax.f32 %v3129, %v3130
      %v3132 = vrot.slane %v2212, 4
      %v3133 = vmax.f32 %v2212, %v3132
      %v3134 = vrot.slane %v3133, 2
      %v3135 = vmax.f32 %v3133, %v3134
      %v3136 = vrot.slane %v3135, 1
      %v3137 = vmax.f32 %v3135, %v3136
      %v3138 = vrot.slane %v2213, 4
      %v3139 = vmax.f32 %v2213, %v3138
      %v3140 = vrot.slane %v3139, 2
      %v3141 = vmax.f32 %v3139, %v3140
      %v3142 = vrot.slane %v3141, 1
      %v3143 = vmax.f32 %v3141, %v3142
      %v3144 = vrot.slane %v2214, 4
      %v3145 = vmax.f32 %v2214, %v3144
      %v3146 = vrot.slane %v3145, 2
      %v3147 = vmax.f32 %v3145, %v3146
      %v3148 = vrot.slane %v3147, 1
      %v3149 = vmax.f32 %v3147, %v3148
      %v3150 = vrot.slane %v2215, 4
      %v3151 = vmax.f32 %v2215, %v3150
      %v3152 = vrot.slane %v3151, 2
      %v3153 = vmax.f32 %v3151, %v3152
      %v3154 = vrot.slane %v3153, 1
      %v3155 = vmax.f32 %v3153, %v3154
      %v3156 = vrot.slane %v2216, 4
      %v3157 = vmax.f32 %v2216, %v3156
      %v3158 = vrot.slane %v3157, 2
      %v3159 = vmax.f32 %v3157, %v3158
      %v3160 = vrot.slane %v3159, 1
      %v3161 = vmax.f32 %v3159, %v3160
      %v3162 = vrot.slane %v2217, 4
      %v3163 = vmax.f32 %v2217, %v3162
      %v3164 = vrot.slane %v3163, 2
      %v3165 = vmax.f32 %v3163, %v3164
      %v3166 = vrot.slane %v3165, 1
      %v3167 = vmax.f32 %v3165, %v3166
      %v3168 = vrot.slane %v2218, 4
      %v3169 = vmax.f32 %v2218, %v3168
      %v3170 = vrot.slane %v3169, 2
      %v3171 = vmax.f32 %v3169, %v3170
      %v3172 = vrot.slane %v3171, 1
      %v3173 = vmax.f32 %v3171, %v3172
      %v3174 = vrot.slane %v2219, 4
      %v3175 = vmax.f32 %v2219, %v3174
      %v3176 = vrot.slane %v3175, 2
      %v3177 = vmax.f32 %v3175, %v3176
      %v3178 = vrot.slane %v3177, 1
      %v3179 = vmax.f32 %v3177, %v3178
      %v3180 = vrot.slane %v2220, 4
      %v3181 = vmax.f32 %v2220, %v3180
      %v3182 = vrot.slane %v3181, 2
      %v3183 = vmax.f32 %v3181, %v3182
      %v3184 = vrot.slane %v3183, 1
      %v3185 = vmax.f32 %v3183, %v3184
      %v3186 = vrot.slane %v2221, 4
      %v3187 = vmax.f32 %v2221, %v3186
      %v3188 = vrot.slane %v3187, 2
      %v3189 = vmax.f32 %v3187, %v3188
      %v3190 = vrot.slane %v3189, 1
      %v3191 = vmax.f32 %v3189, %v3190
      %v3192 = vrot.slane %v2222, 4
      %v3193 = vmax.f32 %v2222, %v3192
      %v3194 = vrot.slane %v3193, 2
      %v3195 = vmax.f32 %v3193, %v3194
      %v3196 = vrot.slane %v3195, 1
      %v3197 = vmax.f32 %v3195, %v3196
      %v3198 = vrot.slane %v2223, 4
      %v3199 = vmax.f32 %v2223, %v3198
      %v3200 = vrot.slane %v3199, 2
      %v3201 = vmax.f32 %v3199, %v3200
      %v3202 = vrot.slane %v3201, 1
      %v3203 = vmax.f32 %v3201, %v3202
      %v3204 = vrot.slane %v2224, 4
      %v3205 = vmax.f32 %v2224, %v3204
      %v3206 = vrot.slane %v3205, 2
      %v3207 = vmax.f32 %v3205, %v3206
      %v3208 = vrot.slane %v3207, 1
      %v3209 = vmax.f32 %v3207, %v3208
      %v3210 = vrot.slane %v2225, 4
      %v3211 = vmax.f32 %v2225, %v3210
      %v3212 = vrot.slane %v3211, 2
      %v3213 = vmax.f32 %v3211, %v3212
      %v3214 = vrot.slane %v3213, 1
      %v3215 = vmax.f32 %v3213, %v3214
      %v3216 = vrot.slane %v2226, 4
      %v3217 = vmax.f32 %v2226, %v3216
      %v3218 = vrot.slane %v3217, 2
      %v3219 = vmax.f32 %v3217, %v3218
      %v3220 = vrot.slane %v3219, 1
      %v3221 = vmax.f32 %v3219, %v3220
      %v3222 = vrot.slane %v2227, 4
      %v3223 = vmax.f32 %v2227, %v3222
      %v3224 = vrot.slane %v3223, 2
      %v3225 = vmax.f32 %v3223, %v3224
      %v3226 = vrot.slane %v3225, 1
      %v3227 = vmax.f32 %v3225, %v3226
      %v3228 = vrot.slane %v2228, 4
      %v3229 = vmax.f32 %v2228, %v3228
      %v3230 = vrot.slane %v3229, 2
      %v3231 = vmax.f32 %v3229, %v3230
      %v3232 = vrot.slane %v3231, 1
      %v3233 = vmax.f32 %v3231, %v3232
      %v3234 = vrot.slane %v2229, 4
      %v3235 = vmax.f32 %v2229, %v3234
      %v3236 = vrot.slane %v3235, 2
      %v3237 = vmax.f32 %v3235, %v3236
      %v3238 = vrot.slane %v3237, 1
      %v3239 = vmax.f32 %v3237, %v3238
      %v3240 = vrot.slane %v2230, 4
      %v3241 = vmax.f32 %v2230, %v3240
      %v3242 = vrot.slane %v3241, 2
      %v3243 = vmax.f32 %v3241, %v3242
      %v3244 = vrot.slane %v3243, 1
      %v3245 = vmax.f32 %v3243, %v3244
      %v3246 = vrot.slane %v2231, 4
      %v3247 = vmax.f32 %v2231, %v3246
      %v3248 = vrot.slane %v3247, 2
      %v3249 = vmax.f32 %v3247, %v3248
      %v3250 = vrot.slane %v3249, 1
      %v3251 = vmax.f32 %v3249, %v3250
      %v3252 = vrot.slane %v2232, 4
      %v3253 = vmax.f32 %v2232, %v3252
      %v3254 = vrot.slane %v3253, 2
      %v3255 = vmax.f32 %v3253, %v3254
      %v3256 = vrot.slane %v3255, 1
      %v3257 = vmax.f32 %v3255, %v3256
      %v3258 = vrot.slane %v2233, 4
      %v3259 = vmax.f32 %v2233, %v3258
      %v3260 = vrot.slane %v3259, 2
      %v3261 = vmax.f32 %v3259, %v3260
      %v3262 = vrot.slane %v3261, 1
      %v3263 = vmax.f32 %v3261, %v3262
      %v3264 = vrot.slane %v2234, 4
      %v3265 = vmax.f32 %v2234, %v3264
      %v3266 = vrot.slane %v3265, 2
      %v3267 = vmax.f32 %v3265, %v3266
      %v3268 = vrot.slane %v3267, 1
      %v3269 = vmax.f32 %v3267, %v3268
      %v3270 = vrot.slane %v2235, 4
      %v3271 = vmax.f32 %v2235, %v3270
      %v3272 = vrot.slane %v3271, 2
      %v3273 = vmax.f32 %v3271, %v3272
      %v3274 = vrot.slane %v3273, 1
      %v3275 = vmax.f32 %v3273, %v3274
      %v3276 = vrot.slane %v2236, 4
      %v3277 = vmax.f32 %v2236, %v3276
      %v3278 = vrot.slane %v3277, 2
      %v3279 = vmax.f32 %v3277, %v3278
      %v3280 = vrot.slane %v3279, 1
      %v3281 = vmax.f32 %v3279, %v3280
      %v3282 = vrot.slane %v2237, 4
      %v3283 = vmax.f32 %v2237, %v3282
      %v3284 = vrot.slane %v3283, 2
      %v3285 = vmax.f32 %v3283, %v3284
      %v3286 = vrot.slane %v3285, 1
      %v3287 = vmax.f32 %v3285, %v3286
      %v3288 = vrot.slane %v2238, 4
      %v3289 = vmax.f32 %v2238, %v3288
      %v3290 = vrot.slane %v3289, 2
      %v3291 = vmax.f32 %v3289, %v3290
      %v3292 = vrot.slane %v3291, 1
      %v3293 = vmax.f32 %v3291, %v3292
      %v3294 = vrot.slane %v2239, 4
      %v3295 = vmax.f32 %v2239, %v3294
      %v3296 = vrot.slane %v3295, 2
      %v3297 = vmax.f32 %v3295, %v3296
      %v3298 = vrot.slane %v3297, 1
      %v3299 = vmax.f32 %v3297, %v3298
      %v3300 = vrot.slane %v2240, 4
      %v3301 = vmax.f32 %v2240, %v3300
      %v3302 = vrot.slane %v3301, 2
      %v3303 = vmax.f32 %v3301, %v3302
      %v3304 = vrot.slane %v3303, 1
      %v3305 = vmax.f32 %v3303, %v3304
      %v3306 = vrot.slane %v2241, 4
      %v3307 = vmax.f32 %v2241, %v3306
      %v3308 = vrot.slane %v3307, 2
      %v3309 = vmax.f32 %v3307, %v3308
      %v3310 = vrot.slane %v3309, 1
      %v3311 = vmax.f32 %v3309, %v3310
      %v3312 = vrot.slane %v2242, 4
      %v3313 = vmax.f32 %v2242, %v3312
      %v3314 = vrot.slane %v3313, 2
      %v3315 = vmax.f32 %v3313, %v3314
      %v3316 = vrot.slane %v3315, 1
      %v3317 = vmax.f32 %v3315, %v3316
      %v3318 = vrot.slane %v2243, 4
      %v3319 = vmax.f32 %v2243, %v3318
      %v3320 = vrot.slane %v3319, 2
      %v3321 = vmax.f32 %v3319, %v3320
      %v3322 = vrot.slane %v3321, 1
      %v3323 = vmax.f32 %v3321, %v3322
      %v3324 = vrot.slane %v2244, 4
      %v3325 = vmax.f32 %v2244, %v3324
      %v3326 = vrot.slane %v3325, 2
      %v3327 = vmax.f32 %v3325, %v3326
      %v3328 = vrot.slane %v3327, 1
      %v3329 = vmax.f32 %v3327, %v3328
      %v3330 = vrot.slane %v2245, 4
      %v3331 = vmax.f32 %v2245, %v3330
      %v3332 = vrot.slane %v3331, 2
      %v3333 = vmax.f32 %v3331, %v3332
      %v3334 = vrot.slane %v3333, 1
      %v3335 = vmax.f32 %v3333, %v3334
      %v3336 = vrot.slane %v2246, 4
      %v3337 = vmax.f32 %v2246, %v3336
      %v3338 = vrot.slane %v3337, 2
      %v3339 = vmax.f32 %v3337, %v3338
      %v3340 = vrot.slane %v3339, 1
      %v3341 = vmax.f32 %v3339, %v3340
      %v3342 = vrot.slane %v2247, 4
      %v3343 = vmax.f32 %v2247, %v3342
      %v3344 = vrot.slane %v3343, 2
      %v3345 = vmax.f32 %v3343, %v3344
      %v3346 = vrot.slane %v3345, 1
      %v3347 = vmax.f32 %v3345, %v3346
      %v3348 = vrot.slane %v2248, 4
      %v3349 = vmax.f32 %v2248, %v3348
      %v3350 = vrot.slane %v3349, 2
      %v3351 = vmax.f32 %v3349, %v3350
      %v3352 = vrot.slane %v3351, 1
      %v3353 = vmax.f32 %v3351, %v3352
      %v3354 = vrot.slane %v2249, 4
      %v3355 = vmax.f32 %v2249, %v3354
      %v3356 = vrot.slane %v3355, 2
      %v3357 = vmax.f32 %v3355, %v3356
      %v3358 = vrot.slane %v3357, 1
      %v3359 = vmax.f32 %v3357, %v3358
      %v3360 = vrot.slane %v2250, 4
      %v3361 = vmax.f32 %v2250, %v3360
      %v3362 = vrot.slane %v3361, 2
      %v3363 = vmax.f32 %v3361, %v3362
      %v3364 = vrot.slane %v3363, 1
      %v3365 = vmax.f32 %v3363, %v3364
      %v3366 = vrot.slane %v2251, 4
      %v3367 = vmax.f32 %v2251, %v3366
      %v3368 = vrot.slane %v3367, 2
      %v3369 = vmax.f32 %v3367, %v3368
      %v3370 = vrot.slane %v3369, 1
      %v3371 = vmax.f32 %v3369, %v3370
      %v3372 = vrot.slane %v2252, 4
      %v3373 = vmax.f32 %v2252, %v3372
      %v3374 = vrot.slane %v3373, 2
      %v3375 = vmax.f32 %v3373, %v3374
      %v3376 = vrot.slane %v3375, 1
      %v3377 = vmax.f32 %v3375, %v3376
      %v3378 = vrot.slane %v2253, 4
      %v3379 = vmax.f32 %v2253, %v3378
      %v3380 = vrot.slane %v3379, 2
      %v3381 = vmax.f32 %v3379, %v3380
      %v3382 = vrot.slane %v3381, 1
      %v3383 = vmax.f32 %v3381, %v3382
      %v3384 = vrot.slane %v2254, 4
      %v3385 = vmax.f32 %v2254, %v3384
      %v3386 = vrot.slane %v3385, 2
      %v3387 = vmax.f32 %v3385, %v3386
      %v3388 = vrot.slane %v3387, 1
      %v3389 = vmax.f32 %v3387, %v3388
      %v3390 = vrot.slane %v2255, 4
      %v3391 = vmax.f32 %v2255, %v3390
      %v3392 = vrot.slane %v3391, 2
      %v3393 = vmax.f32 %v3391, %v3392
      %v3394 = vrot.slane %v3393, 1
      %v3395 = vmax.f32 %v3393, %v3394
      %v3396 = vrot.slane %v2256, 4
      %v3397 = vmax.f32 %v2256, %v3396
      %v3398 = vrot.slane %v3397, 2
      %v3399 = vmax.f32 %v3397, %v3398
      %v3400 = vrot.slane %v3399, 1
      %v3401 = vmax.f32 %v3399, %v3400
      %v3402 = vrot.slane %v2257, 4
      %v3403 = vmax.f32 %v2257, %v3402
      %v3404 = vrot.slane %v3403, 2
      %v3405 = vmax.f32 %v3403, %v3404
      %v3406 = vrot.slane %v3405, 1
      %v3407 = vmax.f32 %v3405, %v3406
      %v3408 = vrot.slane %v2258, 4
      %v3409 = vmax.f32 %v2258, %v3408
      %v3410 = vrot.slane %v3409, 2
      %v3411 = vmax.f32 %v3409, %v3410
      %v3412 = vrot.slane %v3411, 1
      %v3413 = vmax.f32 %v3411, %v3412
      %v3414 = vrot.slane %v2259, 4
      %v3415 = vmax.f32 %v2259, %v3414
      %v3416 = vrot.slane %v3415, 2
      %v3417 = vmax.f32 %v3415, %v3416
      %v3418 = vrot.slane %v3417, 1
      %v3419 = vmax.f32 %v3417, %v3418
      %v3420 = vrot.slane %v2260, 4
      %v3421 = vmax.f32 %v2260, %v3420
      %v3422 = vrot.slane %v3421, 2
      %v3423 = vmax.f32 %v3421, %v3422
      %v3424 = vrot.slane %v3423, 1
      %v3425 = vmax.f32 %v3423, %v3424
      %v3426 = vrot.slane %v2261, 4
      %v3427 = vmax.f32 %v2261, %v3426
      %v3428 = vrot.slane %v3427, 2
      %v3429 = vmax.f32 %v3427, %v3428
      %v3430 = vrot.slane %v3429, 1
      %v3431 = vmax.f32 %v3429, %v3430
      %v3432 = vrot.slane %v2262, 4
      %v3433 = vmax.f32 %v2262, %v3432
      %v3434 = vrot.slane %v3433, 2
      %v3435 = vmax.f32 %v3433, %v3434
      %v3436 = vrot.slane %v3435, 1
      %v3437 = vmax.f32 %v3435, %v3436
      %v3438 = vrot.slane %v2263, 4
      %v3439 = vmax.f32 %v2263, %v3438
      %v3440 = vrot.slane %v3439, 2
      %v3441 = vmax.f32 %v3439, %v3440
      %v3442 = vrot.slane %v3441, 1
      %v3443 = vmax.f32 %v3441, %v3442
      %v3444 = vrot.slane %v2264, 4
      %v3445 = vmax.f32 %v2264, %v3444
      %v3446 = vrot.slane %v3445, 2
      %v3447 = vmax.f32 %v3445, %v3446
      %v3448 = vrot.slane %v3447, 1
      %v3449 = vmax.f32 %v3447, %v3448
      %v3450 = vrot.slane %v2265, 4
      %v3451 = vmax.f32 %v2265, %v3450
      %v3452 = vrot.slane %v3451, 2
      %v3453 = vmax.f32 %v3451, %v3452
      %v3454 = vrot.slane %v3453, 1
      %v3455 = vmax.f32 %v3453, %v3454
      %v3456 = vrot.slane %v2266, 4
      %v3457 = vmax.f32 %v2266, %v3456
      %v3458 = vrot.slane %v3457, 2
      %v3459 = vmax.f32 %v3457, %v3458
      %v3460 = vrot.slane %v3459, 1
      %v3461 = vmax.f32 %v3459, %v3460
      %v3462 = vrot.slane %v2267, 4
      %v3463 = vmax.f32 %v2267, %v3462
      %v3464 = vrot.slane %v3463, 2
      %v3465 = vmax.f32 %v3463, %v3464
      %v3466 = vrot.slane %v3465, 1
      %v3467 = vmax.f32 %v3465, %v3466
      %v3468 = vpack.c.bf16 %v2273, %v2273
      %v3469 = vpack.c.bf16 %v2279, %v2279
      %v3470 = vpack.c.bf16 %v2285, %v2285
      %v3471 = vpack.c.bf16 %v2291, %v2291
      %v3472 = vpack.c.bf16 %v2297, %v2297
      %v3473 = vpack.c.bf16 %v2303, %v2303
      %v3474 = vpack.c.bf16 %v2309, %v2309
      %v3475 = vpack.c.bf16 %v2315, %v2315
      %v3476 = vpack.c.bf16 %v2321, %v2321
      %v3477 = vpack.c.bf16 %v2327, %v2327
      %v3478 = vpack.c.bf16 %v2333, %v2333
      %v3479 = vpack.c.bf16 %v2339, %v2339
      %v3480 = vpack.c.bf16 %v2345, %v2345
      %v3481 = vpack.c.bf16 %v2351, %v2351
      %v3482 = vpack.c.bf16 %v2357, %v2357
      %v3483 = vpack.c.bf16 %v2363, %v2363
      %v3484 = vpack.c.bf16 %v2369, %v2369
      %v3485 = vpack.c.bf16 %v2375, %v2375
      %v3486 = vpack.c.bf16 %v2381, %v2381
      %v3487 = vpack.c.bf16 %v2387, %v2387
      %v3488 = vpack.c.bf16 %v2393, %v2393
      %v3489 = vpack.c.bf16 %v2399, %v2399
      %v3490 = vpack.c.bf16 %v2405, %v2405
      %v3491 = vpack.c.bf16 %v2411, %v2411
      %v3492 = vpack.c.bf16 %v2417, %v2417
      %v3493 = vpack.c.bf16 %v2423, %v2423
      %v3494 = vpack.c.bf16 %v2429, %v2429
      %v3495 = vpack.c.bf16 %v2435, %v2435
      %v3496 = vpack.c.bf16 %v2441, %v2441
      %v3497 = vpack.c.bf16 %v2447, %v2447
      %v3498 = vpack.c.bf16 %v2453, %v2453
      %v3499 = vpack.c.bf16 %v2459, %v2459
      %v3500 = vpack.c.bf16 %v2465, %v2465
      %v3501 = vpack.c.bf16 %v2471, %v2471
      %v3502 = vpack.c.bf16 %v2477, %v2477
      %v3503 = vpack.c.bf16 %v2483, %v2483
      %v3504 = vpack.c.bf16 %v2489, %v2489
      %v3505 = vpack.c.bf16 %v2495, %v2495
      %v3506 = vpack.c.bf16 %v2501, %v2501
      %v3507 = vpack.c.bf16 %v2507, %v2507
      %v3508 = vpack.c.bf16 %v2513, %v2513
      %v3509 = vpack.c.bf16 %v2519, %v2519
      %v3510 = vpack.c.bf16 %v2525, %v2525
      %v3511 = vpack.c.bf16 %v2531, %v2531
      %v3512 = vpack.c.bf16 %v2537, %v2537
      %v3513 = vpack.c.bf16 %v2543, %v2543
      %v3514 = vpack.c.bf16 %v2549, %v2549
      %v3515 = vpack.c.bf16 %v2555, %v2555
      %v3516 = vpack.c.bf16 %v2561, %v2561
      %v3517 = vpack.c.bf16 %v2567, %v2567
      %v3518 = vpack.c.bf16 %v2573, %v2573
      %v3519 = vpack.c.bf16 %v2579, %v2579
      %v3520 = vpack.c.bf16 %v2585, %v2585
      %v3521 = vpack.c.bf16 %v2591, %v2591
      %v3522 = vpack.c.bf16 %v2597, %v2597
      %v3523 = vpack.c.bf16 %v2603, %v2603
      %v3524 = vpack.c.bf16 %v2609, %v2609
      %v3525 = vpack.c.bf16 %v2615, %v2615
      %v3526 = vpack.c.bf16 %v2621, %v2621
      %v3527 = vpack.c.bf16 %v2627, %v2627
      %v3528 = vpack.c.bf16 %v2633, %v2633
      %v3529 = vpack.c.bf16 %v2639, %v2639
      %v3530 = vpack.c.bf16 %v2645, %v2645
      %v3531 = vpack.c.bf16 %v2651, %v2651
      %v3532 = vpack.c.bf16 %v2657, %v2657
      %v3533 = vpack.c.bf16 %v2663, %v2663
      %v3534 = vpack.c.bf16 %v2669, %v2669
      %v3535 = vpack.c.bf16 %v2675, %v2675
      %v3536 = vpack.c.bf16 %v2681, %v2681
      %v3537 = vpack.c.bf16 %v2687, %v2687
      %v3538 = vpack.c.bf16 %v2693, %v2693
      %v3539 = vpack.c.bf16 %v2699, %v2699
      %v3540 = vpack.c.bf16 %v2705, %v2705
      %v3541 = vpack.c.bf16 %v2711, %v2711
      %v3542 = vpack.c.bf16 %v2717, %v2717
      %v3543 = vpack.c.bf16 %v2723, %v2723
      %v3544 = vpack.c.bf16 %v2729, %v2729
      %v3545 = vpack.c.bf16 %v2735, %v2735
      %v3546 = vpack.c.bf16 %v2741, %v2741
      %v3547 = vpack.c.bf16 %v2747, %v2747
      %v3548 = vpack.c.bf16 %v2753, %v2753
      %v3549 = vpack.c.bf16 %v2759, %v2759
      %v3550 = vpack.c.bf16 %v2765, %v2765
      %v3551 = vpack.c.bf16 %v2771, %v2771
      %v3552 = vpack.c.bf16 %v2777, %v2777
      %v3553 = vpack.c.bf16 %v2783, %v2783
      %v3554 = vpack.c.bf16 %v2789, %v2789
      %v3555 = vpack.c.bf16 %v2795, %v2795
      %v3556 = vpack.c.bf16 %v2801, %v2801
      %v3557 = vpack.c.bf16 %v2807, %v2807
      %v3558 = vpack.c.bf16 %v2813, %v2813
      %v3559 = vpack.c.bf16 %v2819, %v2819
      %v3560 = vpack.c.bf16 %v2825, %v2825
      %v3561 = vpack.c.bf16 %v2831, %v2831
      %v3562 = vpack.c.bf16 %v2837, %v2837
      %v3563 = vpack.c.bf16 %v2843, %v2843
      %v3564 = vpack.c.bf16 %v2849, %v2849
      %v3565 = vpack.c.bf16 %v2855, %v2855
      %v3566 = vpack.c.bf16 %v2861, %v2861
      %v3567 = vpack.c.bf16 %v2867, %v2867
      %v3568 = vpack.c.bf16 %v2873, %v2873
      %v3569 = vpack.c.bf16 %v2879, %v2879
      %v3570 = vpack.c.bf16 %v2885, %v2885
      %v3571 = vpack.c.bf16 %v2891, %v2891
      %v3572 = vpack.c.bf16 %v2897, %v2897
      %v3573 = vpack.c.bf16 %v2903, %v2903
      %v3574 = vpack.c.bf16 %v2909, %v2909
      %v3575 = vpack.c.bf16 %v2915, %v2915
      %v3576 = vpack.c.bf16 %v2921, %v2921
      %v3577 = vpack.c.bf16 %v2927, %v2927
      %v3578 = vpack.c.bf16 %v2933, %v2933
      %v3579 = vpack.c.bf16 %v2939, %v2939
      %v3580 = vpack.c.bf16 %v2945, %v2945
      %v3581 = vpack.c.bf16 %v2951, %v2951
      %v3582 = vpack.c.bf16 %v2957, %v2957
      %v3583 = vpack.c.bf16 %v2963, %v2963
      %v3584 = vpack.c.bf16 %v2969, %v2969
      %v3585 = vpack.c.bf16 %v2975, %v2975
      %v3586 = vpack.c.bf16 %v2981, %v2981
      %v3587 = vpack.c.bf16 %v2987, %v2987
      %v3588 = vpack.c.bf16 %v2993, %v2993
      %v3589 = vpack.c.bf16 %v2999, %v2999
      %v3590 = vpack.c.bf16 %v3005, %v3005
      %v3591 = vpack.c.bf16 %v3011, %v3011
      %v3592 = vpack.c.bf16 %v3017, %v3017
      %v3593 = vpack.c.bf16 %v3023, %v3023
      %v3594 = vpack.c.bf16 %v3029, %v3029
      %v3595 = vpack.c.bf16 %v3035, %v3035
      %v3596 = vpack.c.bf16 %v3041, %v3041
      %v3597 = vpack.c.bf16 %v3047, %v3047
      %v3598 = vpack.c.bf16 %v3053, %v3053
      %v3599 = vpack.c.bf16 %v3059, %v3059
      %v3600 = vpack.c.bf16 %v3065, %v3065
      %v3601 = vpack.c.bf16 %v3071, %v3071
      %v3602 = vpack.c.bf16 %v3077, %v3077
      %v3603 = vpack.c.bf16 %v3083, %v3083
      %v3604 = vpack.c.bf16 %v3089, %v3089
      %v3605 = vpack.c.bf16 %v3095, %v3095
      %v3606 = vpack.c.bf16 %v3101, %v3101
      %v3607 = vpack.c.bf16 %v3107, %v3107
      %v3608 = vpack.c.bf16 %v3113, %v3113
      %v3609 = vpack.c.bf16 %v3119, %v3119
      %v3610 = vpack.c.bf16 %v3125, %v3125
      %v3611 = vpack.c.bf16 %v3131, %v3131
      %v3612 = vpack.c.bf16 %v3137, %v3137
      %v3613 = vpack.c.bf16 %v3143, %v3143
      %v3614 = vpack.c.bf16 %v3149, %v3149
      %v3615 = vpack.c.bf16 %v3155, %v3155
      %v3616 = vpack.c.bf16 %v3161, %v3161
      %v3617 = vpack.c.bf16 %v3167, %v3167
      %v3618 = vpack.c.bf16 %v3173, %v3173
      %v3619 = vpack.c.bf16 %v3179, %v3179
      %v3620 = vpack.c.bf16 %v3185, %v3185
      %v3621 = vpack.c.bf16 %v3191, %v3191
      %v3622 = vpack.c.bf16 %v3197, %v3197
      %v3623 = vpack.c.bf16 %v3203, %v3203
      %v3624 = vpack.c.bf16 %v3209, %v3209
      %v3625 = vpack.c.bf16 %v3215, %v3215
      %v3626 = vpack.c.bf16 %v3221, %v3221
      %v3627 = vpack.c.bf16 %v3227, %v3227
      %v3628 = vpack.c.bf16 %v3233, %v3233
      %v3629 = vpack.c.bf16 %v3239, %v3239
      %v3630 = vpack.c.bf16 %v3245, %v3245
      %v3631 = vpack.c.bf16 %v3251, %v3251
      %v3632 = vpack.c.bf16 %v3257, %v3257
      %v3633 = vpack.c.bf16 %v3263, %v3263
      %v3634 = vpack.c.bf16 %v3269, %v3269
      %v3635 = vpack.c.bf16 %v3275, %v3275
      %v3636 = vpack.c.bf16 %v3281, %v3281
      %v3637 = vpack.c.bf16 %v3287, %v3287
      %v3638 = vpack.c.bf16 %v3293, %v3293
      %v3639 = vpack.c.bf16 %v3299, %v3299
      %v3640 = vpack.c.bf16 %v3305, %v3305
      %v3641 = vpack.c.bf16 %v3311, %v3311
      %v3642 = vpack.c.bf16 %v3317, %v3317
      %v3643 = vpack.c.bf16 %v3323, %v3323
      %v3644 = vpack.c.bf16 %v3329, %v3329
      %v3645 = vpack.c.bf16 %v3335, %v3335
      %v3646 = vpack.c.bf16 %v3341, %v3341
      %v3647 = vpack.c.bf16 %v3347, %v3347
      %v3648 = vpack.c.bf16 %v3353, %v3353
      %v3649 = vpack.c.bf16 %v3359, %v3359
      %v3650 = vpack.c.bf16 %v3365, %v3365
      %v3651 = vpack.c.bf16 %v3371, %v3371
      %v3652 = vpack.c.bf16 %v3377, %v3377
      %v3653 = vpack.c.bf16 %v3383, %v3383
      %v3654 = vpack.c.bf16 %v3389, %v3389
      %v3655 = vpack.c.bf16 %v3395, %v3395
      %v3656 = vpack.c.bf16 %v3401, %v3401
      %v3657 = vpack.c.bf16 %v3407, %v3407
      %v3658 = vpack.c.bf16 %v3413, %v3413
      %v3659 = vpack.c.bf16 %v3419, %v3419
      %v3660 = vpack.c.bf16 %v3425, %v3425
      %v3661 = vpack.c.bf16 %v3431, %v3431
      %v3662 = vpack.c.bf16 %v3437, %v3437
      %v3663 = vpack.c.bf16 %v3443, %v3443
      %v3664 = vpack.c.bf16 %v3449, %v3449
      %v3665 = vpack.c.bf16 %v3455, %v3455
      %v3666 = vpack.c.bf16 %v3461, %v3461
      %v3667 = vpack.c.bf16 %v3467, %v3467
      %v3868 = vunpack.c.l.b16 %v3468
      %v3869 = vunpack.c.l.b16 %v3469
      %v3870 = vunpack.c.l.b16 %v3470
      %v3871 = vunpack.c.l.b16 %v3471
      %v3872 = vunpack.c.l.b16 %v3472
      %v3873 = vunpack.c.l.b16 %v3473
      %v3874 = vunpack.c.l.b16 %v3474
      %v3875 = vunpack.c.l.b16 %v3475
      %v3876 = vunpack.c.l.b16 %v3476
      %v3877 = vunpack.c.l.b16 %v3477
      %v3878 = vunpack.c.l.b16 %v3478
      %v3879 = vunpack.c.l.b16 %v3479
      %v3880 = vunpack.c.l.b16 %v3480
      %v3881 = vunpack.c.l.b16 %v3481
      %v3882 = vunpack.c.l.b16 %v3482
      %v3883 = vunpack.c.l.b16 %v3483
      %v3884 = vunpack.c.l.b16 %v3484
      %v3885 = vunpack.c.l.b16 %v3485
      %v3886 = vunpack.c.l.b16 %v3486
      %v3887 = vunpack.c.l.b16 %v3487
      %v3888 = vunpack.c.l.b16 %v3488
      %v3889 = vunpack.c.l.b16 %v3489
      %v3890 = vunpack.c.l.b16 %v3490
      %v3891 = vunpack.c.l.b16 %v3491
      %v3892 = vunpack.c.l.b16 %v3492
      %v3893 = vunpack.c.l.b16 %v3493
      %v3894 = vunpack.c.l.b16 %v3494
      %v3895 = vunpack.c.l.b16 %v3495
      %v3896 = vunpack.c.l.b16 %v3496
      %v3897 = vunpack.c.l.b16 %v3497
      %v3898 = vunpack.c.l.b16 %v3498
      %v3899 = vunpack.c.l.b16 %v3499
      %v3900 = vunpack.c.l.b16 %v3500
      %v3901 = vunpack.c.l.b16 %v3501
      %v3902 = vunpack.c.l.b16 %v3502
      %v3903 = vunpack.c.l.b16 %v3503
      %v3904 = vunpack.c.l.b16 %v3504
      %v3905 = vunpack.c.l.b16 %v3505
      %v3906 = vunpack.c.l.b16 %v3506
      %v3907 = vunpack.c.l.b16 %v3507
      %v3908 = vunpack.c.l.b16 %v3508
      %v3909 = vunpack.c.l.b16 %v3509
      %v3910 = vunpack.c.l.b16 %v3510
      %v3911 = vunpack.c.l.b16 %v3511
      %v3912 = vunpack.c.l.b16 %v3512
      %v3913 = vunpack.c.l.b16 %v3513
      %v3914 = vunpack.c.l.b16 %v3514
      %v3915 = vunpack.c.l.b16 %v3515
      %v3916 = vunpack.c.l.b16 %v3516
      %v3917 = vunpack.c.l.b16 %v3517
      %v3918 = vunpack.c.l.b16 %v3518
      %v3919 = vunpack.c.l.b16 %v3519
      %v3920 = vunpack.c.l.b16 %v3520
      %v3921 = vunpack.c.l.b16 %v3521
      %v3922 = vunpack.c.l.b16 %v3522
      %v3923 = vunpack.c.l.b16 %v3523
      %v3924 = vunpack.c.l.b16 %v3524
      %v3925 = vunpack.c.l.b16 %v3525
      %v3926 = vunpack.c.l.b16 %v3526
      %v3927 = vunpack.c.l.b16 %v3527
      %v3928 = vunpack.c.l.b16 %v3528
      %v3929 = vunpack.c.l.b16 %v3529
      %v3930 = vunpack.c.l.b16 %v3530
      %v3931 = vunpack.c.l.b16 %v3531
      %v3932 = vunpack.c.l.b16 %v3532
      %v3933 = vunpack.c.l.b16 %v3533
      %v3934 = vunpack.c.l.b16 %v3534
      %v3935 = vunpack.c.l.b16 %v3535
      %v3936 = vunpack.c.l.b16 %v3536
      %v3937 = vunpack.c.l.b16 %v3537
      %v3938 = vunpack.c.l.b16 %v3538
      %v3939 = vunpack.c.l.b16 %v3539
      %v3940 = vunpack.c.l.b16 %v3540
      %v3941 = vunpack.c.l.b16 %v3541
      %v3942 = vunpack.c.l.b16 %v3542
      %v3943 = vunpack.c.l.b16 %v3543
      %v3944 = vunpack.c.l.b16 %v3544
      %v3945 = vunpack.c.l.b16 %v3545
      %v3946 = vunpack.c.l.b16 %v3546
      %v3947 = vunpack.c.l.b16 %v3547
      %v3948 = vunpack.c.l.b16 %v3548
      %v3949 = vunpack.c.l.b16 %v3549
      %v3950 = vunpack.c.l.b16 %v3550
      %v3951 = vunpack.c.l.b16 %v3551
      %v3952 = vunpack.c.l.b16 %v3552
      %v3953 = vunpack.c.l.b16 %v3553
      %v3954 = vunpack.c.l.b16 %v3554
      %v3955 = vunpack.c.l.b16 %v3555
      %v3956 = vunpack.c.l.b16 %v3556
      %v3957 = vunpack.c.l.b16 %v3557
      %v3958 = vunpack.c.l.b16 %v3558
      %v3959 = vunpack.c.l.b16 %v3559
      %v3960 = vunpack.c.l.b16 %v3560
      %v3961 = vunpack.c.l.b16 %v3561
      %v3962 = vunpack.c.l.b16 %v3562
      %v3963 = vunpack.c.l.b16 %v3563
      %v3964 = vunpack.c.l.b16 %v3564
      %v3965 = vunpack.c.l.b16 %v3565
      %v3966 = vunpack.c.l.b16 %v3566
      %v3967 = vunpack.c.l.b16 %v3567
      %v3968 = vunpack.c.l.b16 %v3568
      %v3969 = vunpack.c.l.b16 %v3569
      %v3970 = vunpack.c.l.b16 %v3570
      %v3971 = vunpack.c.l.b16 %v3571
      %v3972 = vunpack.c.l.b16 %v3572
      %v3973 = vunpack.c.l.b16 %v3573
      %v3974 = vunpack.c.l.b16 %v3574
      %v3975 = vunpack.c.l.b16 %v3575
      %v3976 = vunpack.c.l.b16 %v3576
      %v3977 = vunpack.c.l.b16 %v3577
      %v3978 = vunpack.c.l.b16 %v3578
      %v3979 = vunpack.c.l.b16 %v3579
      %v3980 = vunpack.c.l.b16 %v3580
      %v3981 = vunpack.c.l.b16 %v3581
      %v3982 = vunpack.c.l.b16 %v3582
      %v3983 = vunpack.c.l.b16 %v3583
      %v3984 = vunpack.c.l.b16 %v3584
      %v3985 = vunpack.c.l.b16 %v3585
      %v3986 = vunpack.c.l.b16 %v3586
      %v3987 = vunpack.c.l.b16 %v3587
      %v3988 = vunpack.c.l.b16 %v3588
      %v3989 = vunpack.c.l.b16 %v3589
      %v3990 = vunpack.c.l.b16 %v3590
      %v3991 = vunpack.c.l.b16 %v3591
      %v3992 = vunpack.c.l.b16 %v3592
      %v3993 = vunpack.c.l.b16 %v3593
      %v3994 = vunpack.c.l.b16 %v3594
      %v3995 = vunpack.c.l.b16 %v3595
      %v3996 = vunpack.c.l.b16 %v3596
      %v3997 = vunpack.c.l.b16 %v3597
      %v3998 = vunpack.c.l.b16 %v3598
      %v3999 = vunpack.c.l.b16 %v3599
      %v4000 = vunpack.c.l.b16 %v3600
      %v4001 = vunpack.c.l.b16 %v3601
      %v4002 = vunpack.c.l.b16 %v3602
      %v4003 = vunpack.c.l.b16 %v3603
      %v4004 = vunpack.c.l.b16 %v3604
      %v4005 = vunpack.c.l.b16 %v3605
      %v4006 = vunpack.c.l.b16 %v3606
      %v4007 = vunpack.c.l.b16 %v3607
      %v4008 = vunpack.c.l.b16 %v3608
      %v4009 = vunpack.c.l.b16 %v3609
      %v4010 = vunpack.c.l.b16 %v3610
      %v4011 = vunpack.c.l.b16 %v3611
      %v4012 = vunpack.c.l.b16 %v3612
      %v4013 = vunpack.c.l.b16 %v3613
      %v4014 = vunpack.c.l.b16 %v3614
      %v4015 = vunpack.c.l.b16 %v3615
      %v4016 = vunpack.c.l.b16 %v3616
      %v4017 = vunpack.c.l.b16 %v3617
      %v4018 = vunpack.c.l.b16 %v3618
      %v4019 = vunpack.c.l.b16 %v3619
      %v4020 = vunpack.c.l.b16 %v3620
      %v4021 = vunpack.c.l.b16 %v3621
      %v4022 = vunpack.c.l.b16 %v3622
      %v4023 = vunpack.c.l.b16 %v3623
      %v4024 = vunpack.c.l.b16 %v3624
      %v4025 = vunpack.c.l.b16 %v3625
      %v4026 = vunpack.c.l.b16 %v3626
      %v4027 = vunpack.c.l.b16 %v3627
      %v4028 = vunpack.c.l.b16 %v3628
      %v4029 = vunpack.c.l.b16 %v3629
      %v4030 = vunpack.c.l.b16 %v3630
      %v4031 = vunpack.c.l.b16 %v3631
      %v4032 = vunpack.c.l.b16 %v3632
      %v4033 = vunpack.c.l.b16 %v3633
      %v4034 = vunpack.c.l.b16 %v3634
      %v4035 = vunpack.c.l.b16 %v3635
      %v4036 = vunpack.c.l.b16 %v3636
      %v4037 = vunpack.c.l.b16 %v3637
      %v4038 = vunpack.c.l.b16 %v3638
      %v4039 = vunpack.c.l.b16 %v3639
      %v4040 = vunpack.c.l.b16 %v3640
      %v4041 = vunpack.c.l.b16 %v3641
      %v4042 = vunpack.c.l.b16 %v3642
      %v4043 = vunpack.c.l.b16 %v3643
      %v4044 = vunpack.c.l.b16 %v3644
      %v4045 = vunpack.c.l.b16 %v3645
      %v4046 = vunpack.c.l.b16 %v3646
      %v4047 = vunpack.c.l.b16 %v3647
      %v4048 = vunpack.c.l.b16 %v3648
      %v4049 = vunpack.c.l.b16 %v3649
      %v4050 = vunpack.c.l.b16 %v3650
      %v4051 = vunpack.c.l.b16 %v3651
      %v4052 = vunpack.c.l.b16 %v3652
      %v4053 = vunpack.c.l.b16 %v3653
      %v4054 = vunpack.c.l.b16 %v3654
      %v4055 = vunpack.c.l.b16 %v3655
      %v4056 = vunpack.c.l.b16 %v3656
      %v4057 = vunpack.c.l.b16 %v3657
      %v4058 = vunpack.c.l.b16 %v3658
      %v4059 = vunpack.c.l.b16 %v3659
      %v4060 = vunpack.c.l.b16 %v3660
      %v4061 = vunpack.c.l.b16 %v3661
      %v4062 = vunpack.c.l.b16 %v3662
      %v4063 = vunpack.c.l.b16 %v3663
      %v4064 = vunpack.c.l.b16 %v3664
      %v4065 = vunpack.c.l.b16 %v3665
      %v4066 = vunpack.c.l.b16 %v3666
      %v4067 = vunpack.c.l.b16 %v3667
      %v4068 = vpack.c.b16 %v3868, %v3868
      %v4069 = vpack.c.b16 %v3869, %v3869
      %v4070 = vpack.c.b16 %v3870, %v3870
      %v4071 = vpack.c.b16 %v3871, %v3871
      %v4072 = vpack.c.b16 %v3872, %v3872
      %v4073 = vpack.c.b16 %v3873, %v3873
      %v4074 = vpack.c.b16 %v3874, %v3874
      %v4075 = vpack.c.b16 %v3875, %v3875
      %v4076 = vpack.c.b16 %v3876, %v3876
      %v4077 = vpack.c.b16 %v3877, %v3877
      %v4078 = vpack.c.b16 %v3878, %v3878
      %v4079 = vpack.c.b16 %v3879, %v3879
      %v4080 = vpack.c.b16 %v3880, %v3880
      %v4081 = vpack.c.b16 %v3881, %v3881
      %v4082 = vpack.c.b16 %v3882, %v3882
      %v4083 = vpack.c.b16 %v3883, %v3883
      %v4084 = vpack.c.b16 %v3884, %v3884
      %v4085 = vpack.c.b16 %v3885, %v3885
      %v4086 = vpack.c.b16 %v3886, %v3886
      %v4087 = vpack.c.b16 %v3887, %v3887
      %v4088 = vpack.c.b16 %v3888, %v3888
      %v4089 = vpack.c.b16 %v3889, %v3889
      %v4090 = vpack.c.b16 %v3890, %v3890
      %v4091 = vpack.c.b16 %v3891, %v3891
      %v4092 = vpack.c.b16 %v3892, %v3892
      %v4093 = vpack.c.b16 %v3893, %v3893
      %v4094 = vpack.c.b16 %v3894, %v3894
      %v4095 = vpack.c.b16 %v3895, %v3895
      %v4096 = vpack.c.b16 %v3896, %v3896
      %v4097 = vpack.c.b16 %v3897, %v3897
      %v4098 = vpack.c.b16 %v3898, %v3898
      %v4099 = vpack.c.b16 %v3899, %v3899
      %v4100 = vpack.c.b16 %v3900, %v3900
      %v4101 = vpack.c.b16 %v3901, %v3901
      %v4102 = vpack.c.b16 %v3902, %v3902
      %v4103 = vpack.c.b16 %v3903, %v3903
      %v4104 = vpack.c.b16 %v3904, %v3904
      %v4105 = vpack.c.b16 %v3905, %v3905
      %v4106 = vpack.c.b16 %v3906, %v3906
      %v4107 = vpack.c.b16 %v3907, %v3907
      %v4108 = vpack.c.b16 %v3908, %v3908
      %v4109 = vpack.c.b16 %v3909, %v3909
      %v4110 = vpack.c.b16 %v3910, %v3910
      %v4111 = vpack.c.b16 %v3911, %v3911
      %v4112 = vpack.c.b16 %v3912, %v3912
      %v4113 = vpack.c.b16 %v3913, %v3913
      %v4114 = vpack.c.b16 %v3914, %v3914
      %v4115 = vpack.c.b16 %v3915, %v3915
      %v4116 = vpack.c.b16 %v3916, %v3916
      %v4117 = vpack.c.b16 %v3917, %v3917
      %v4118 = vpack.c.b16 %v3918, %v3918
      %v4119 = vpack.c.b16 %v3919, %v3919
      %v4120 = vpack.c.b16 %v3920, %v3920
      %v4121 = vpack.c.b16 %v3921, %v3921
      %v4122 = vpack.c.b16 %v3922, %v3922
      %v4123 = vpack.c.b16 %v3923, %v3923
      %v4124 = vpack.c.b16 %v3924, %v3924
      %v4125 = vpack.c.b16 %v3925, %v3925
      %v4126 = vpack.c.b16 %v3926, %v3926
      %v4127 = vpack.c.b16 %v3927, %v3927
      %v4128 = vpack.c.b16 %v3928, %v3928
      %v4129 = vpack.c.b16 %v3929, %v3929
      %v4130 = vpack.c.b16 %v3930, %v3930
      %v4131 = vpack.c.b16 %v3931, %v3931
      %v4132 = vpack.c.b16 %v3932, %v3932
      %v4133 = vpack.c.b16 %v3933, %v3933
      %v4134 = vpack.c.b16 %v3934, %v3934
      %v4135 = vpack.c.b16 %v3935, %v3935
      %v4136 = vpack.c.b16 %v3936, %v3936
      %v4137 = vpack.c.b16 %v3937, %v3937
      %v4138 = vpack.c.b16 %v3938, %v3938
      %v4139 = vpack.c.b16 %v3939, %v3939
      %v4140 = vpack.c.b16 %v3940, %v3940
      %v4141 = vpack.c.b16 %v3941, %v3941
      %v4142 = vpack.c.b16 %v3942, %v3942
      %v4143 = vpack.c.b16 %v3943, %v3943
      %v4144 = vpack.c.b16 %v3944, %v3944
      %v4145 = vpack.c.b16 %v3945, %v3945
      %v4146 = vpack.c.b16 %v3946, %v3946
      %v4147 = vpack.c.b16 %v3947, %v3947
      %v4148 = vpack.c.b16 %v3948, %v3948
      %v4149 = vpack.c.b16 %v3949, %v3949
      %v4150 = vpack.c.b16 %v3950, %v3950
      %v4151 = vpack.c.b16 %v3951, %v3951
      %v4152 = vpack.c.b16 %v3952, %v3952
      %v4153 = vpack.c.b16 %v3953, %v3953
      %v4154 = vpack.c.b16 %v3954, %v3954
      %v4155 = vpack.c.b16 %v3955, %v3955
      %v4156 = vpack.c.b16 %v3956, %v3956
      %v4157 = vpack.c.b16 %v3957, %v3957
      %v4158 = vpack.c.b16 %v3958, %v3958
      %v4159 = vpack.c.b16 %v3959, %v3959
      %v4160 = vpack.c.b16 %v3960, %v3960
      %v4161 = vpack.c.b16 %v3961, %v3961
      %v4162 = vpack.c.b16 %v3962, %v3962
      %v4163 = vpack.c.b16 %v3963, %v3963
      %v4164 = vpack.c.b16 %v3964, %v3964
      %v4165 = vpack.c.b16 %v3965, %v3965
      %v4166 = vpack.c.b16 %v3966, %v3966
      %v4167 = vpack.c.b16 %v3967, %v3967
      %v4168 = vpack.c.b16 %v3968, %v3968
      %v4169 = vpack.c.b16 %v3969, %v3969
      %v4170 = vpack.c.b16 %v3970, %v3970
      %v4171 = vpack.c.b16 %v3971, %v3971
      %v4172 = vpack.c.b16 %v3972, %v3972
      %v4173 = vpack.c.b16 %v3973, %v3973
      %v4174 = vpack.c.b16 %v3974, %v3974
      %v4175 = vpack.c.b16 %v3975, %v3975
      %v4176 = vpack.c.b16 %v3976, %v3976
      %v4177 = vpack.c.b16 %v3977, %v3977
      %v4178 = vpack.c.b16 %v3978, %v3978
      %v4179 = vpack.c.b16 %v3979, %v3979
      %v4180 = vpack.c.b16 %v3980, %v3980
      %v4181 = vpack.c.b16 %v3981, %v3981
      %v4182 = vpack.c.b16 %v3982, %v3982
      %v4183 = vpack.c.b16 %v3983, %v3983
      %v4184 = vpack.c.b16 %v3984, %v3984
      %v4185 = vpack.c.b16 %v3985, %v3985
      %v4186 = vpack.c.b16 %v3986, %v3986
      %v4187 = vpack.c.b16 %v3987, %v3987
      %v4188 = vpack.c.b16 %v3988, %v3988
      %v4189 = vpack.c.b16 %v3989, %v3989
      %v4190 = vpack.c.b16 %v3990, %v3990
      %v4191 = vpack.c.b16 %v3991, %v3991
      %v4192 = vpack.c.b16 %v3992, %v3992
      %v4193 = vpack.c.b16 %v3993, %v3993
      %v4194 = vpack.c.b16 %v3994, %v3994
      %v4195 = vpack.c.b16 %v3995, %v3995
      %v4196 = vpack.c.b16 %v3996, %v3996
      %v4197 = vpack.c.b16 %v3997, %v3997
      %v4198 = vpack.c.b16 %v3998, %v3998
      %v4199 = vpack.c.b16 %v3999, %v3999
      %v4200 = vpack.c.b16 %v4000, %v4000
      %v4201 = vpack.c.b16 %v4001, %v4001
      %v4202 = vpack.c.b16 %v4002, %v4002
      %v4203 = vpack.c.b16 %v4003, %v4003
      %v4204 = vpack.c.b16 %v4004, %v4004
      %v4205 = vpack.c.b16 %v4005, %v4005
      %v4206 = vpack.c.b16 %v4006, %v4006
      %v4207 = vpack.c.b16 %v4007, %v4007
      %v4208 = vpack.c.b16 %v4008, %v4008
      %v4209 = vpack.c.b16 %v4009, %v4009
      %v4210 = vpack.c.b16 %v4010, %v4010
      %v4211 = vpack.c.b16 %v4011, %v4011
      %v4212 = vpack.c.b16 %v4012, %v4012
      %v4213 = vpack.c.b16 %v4013, %v4013
      %v4214 = vpack.c.b16 %v4014, %v4014
      %v4215 = vpack.c.b16 %v4015, %v4015
      %v4216 = vpack.c.b16 %v4016, %v4016
      %v4217 = vpack.c.b16 %v4017, %v4017
      %v4218 = vpack.c.b16 %v4018, %v4018
      %v4219 = vpack.c.b16 %v4019, %v4019
      %v4220 = vpack.c.b16 %v4020, %v4020
      %v4221 = vpack.c.b16 %v4021, %v4021
      %v4222 = vpack.c.b16 %v4022, %v4022
      %v4223 = vpack.c.b16 %v4023, %v4023
      %v4224 = vpack.c.b16 %v4024, %v4024
      %v4225 = vpack.c.b16 %v4025, %v4025
      %v4226 = vpack.c.b16 %v4026, %v4026
      %v4227 = vpack.c.b16 %v4027, %v4027
      %v4228 = vpack.c.b16 %v4028, %v4028
      %v4229 = vpack.c.b16 %v4029, %v4029
      %v4230 = vpack.c.b16 %v4030, %v4030
      %v4231 = vpack.c.b16 %v4031, %v4031
      %v4232 = vpack.c.b16 %v4032, %v4032
      %v4233 = vpack.c.b16 %v4033, %v4033
      %v4234 = vpack.c.b16 %v4034, %v4034
      %v4235 = vpack.c.b16 %v4035, %v4035
      %v4236 = vpack.c.b16 %v4036, %v4036
      %v4237 = vpack.c.b16 %v4037, %v4037
      %v4238 = vpack.c.b16 %v4038, %v4038
      %v4239 = vpack.c.b16 %v4039, %v4039
      %v4240 = vpack.c.b16 %v4040, %v4040
      %v4241 = vpack.c.b16 %v4041, %v4041
      %v4242 = vpack.c.b16 %v4042, %v4042
      %v4243 = vpack.c.b16 %v4043, %v4043
      %v4244 = vpack.c.b16 %v4044, %v4044
      %v4245 = vpack.c.b16 %v4045, %v4045
      %v4246 = vpack.c.b16 %v4046, %v4046
      %v4247 = vpack.c.b16 %v4047, %v4047
      %v4248 = vpack.c.b16 %v4048, %v4048
      %v4249 = vpack.c.b16 %v4049, %v4049
      %v4250 = vpack.c.b16 %v4050, %v4050
      %v4251 = vpack.c.b16 %v4051, %v4051
      %v4252 = vpack.c.b16 %v4052, %v4052
      %v4253 = vpack.c.b16 %v4053, %v4053
      %v4254 = vpack.c.b16 %v4054, %v4054
      %v4255 = vpack.c.b16 %v4055, %v4055
      %v4256 = vpack.c.b16 %v4056, %v4056
      %v4257 = vpack.c.b16 %v4057, %v4057
      %v4258 = vpack.c.b16 %v4058, %v4058
      %v4259 = vpack.c.b16 %v4059, %v4059
      %v4260 = vpack.c.b16 %v4060, %v4060
      %v4261 = vpack.c.b16 %v4061, %v4061
      %v4262 = vpack.c.b16 %v4062, %v4062
      %v4263 = vpack.c.b16 %v4063, %v4063
      %v4264 = vpack.c.b16 %v4064, %v4064
      %v4265 = vpack.c.b16 %v4065, %v4065
      %v4266 = vpack.c.b16 %v4066, %v4066
      %v4267 = vpack.c.b16 %v4067, %v4067
      %v4268 = vunpack.c.l.b16 %v4068
      %v4269 = vunpack.c.l.b16 %v4069
      %v4270 = vunpack.c.l.b16 %v4070
      %v4271 = vunpack.c.l.b16 %v4071
      %v4272 = vunpack.c.l.b16 %v4072
      %v4273 = vunpack.c.l.b16 %v4073
      %v4274 = vunpack.c.l.b16 %v4074
      %v4275 = vunpack.c.l.b16 %v4075
      %v4276 = vunpack.c.l.b16 %v4076
      %v4277 = vunpack.c.l.b16 %v4077
      %v4278 = vunpack.c.l.b16 %v4078
      %v4279 = vunpack.c.l.b16 %v4079
      %v4280 = vunpack.c.l.b16 %v4080
      %v4281 = vunpack.c.l.b16 %v4081
      %v4282 = vunpack.c.l.b16 %v4082
      %v4283 = vunpack.c.l.b16 %v4083
      %v4284 = vunpack.c.l.b16 %v4084
      %v4285 = vunpack.c.l.b16 %v4085
      %v4286 = vunpack.c.l.b16 %v4086
      %v4287 = vunpack.c.l.b16 %v4087
      %v4288 = vunpack.c.l.b16 %v4088
      %v4289 = vunpack.c.l.b16 %v4089
      %v4290 = vunpack.c.l.b16 %v4090
      %v4291 = vunpack.c.l.b16 %v4091
      %v4292 = vunpack.c.l.b16 %v4092
      %v4293 = vunpack.c.l.b16 %v4093
      %v4294 = vunpack.c.l.b16 %v4094
      %v4295 = vunpack.c.l.b16 %v4095
      %v4296 = vunpack.c.l.b16 %v4096
      %v4297 = vunpack.c.l.b16 %v4097
      %v4298 = vunpack.c.l.b16 %v4098
      %v4299 = vunpack.c.l.b16 %v4099
      %v4300 = vunpack.c.l.b16 %v4100
      %v4301 = vunpack.c.l.b16 %v4101
      %v4302 = vunpack.c.l.b16 %v4102
      %v4303 = vunpack.c.l.b16 %v4103
      %v4304 = vunpack.c.l.b16 %v4104
      %v4305 = vunpack.c.l.b16 %v4105
      %v4306 = vunpack.c.l.b16 %v4106
      %v4307 = vunpack.c.l.b16 %v4107
      %v4308 = vunpack.c.l.b16 %v4108
      %v4309 = vunpack.c.l.b16 %v4109
      %v4310 = vunpack.c.l.b16 %v4110
      %v4311 = vunpack.c.l.b16 %v4111
      %v4312 = vunpack.c.l.b16 %v4112
      %v4313 = vunpack.c.l.b16 %v4113
      %v4314 = vunpack.c.l.b16 %v4114
      %v4315 = vunpack.c.l.b16 %v4115
      %v4316 = vunpack.c.l.b16 %v4116
      %v4317 = vunpack.c.l.b16 %v4117
      %v4318 = vunpack.c.l.b16 %v4118
      %v4319 = vunpack.c.l.b16 %v4119
      %v4320 = vunpack.c.l.b16 %v4120
      %v4321 = vunpack.c.l.b16 %v4121
      %v4322 = vunpack.c.l.b16 %v4122
      %v4323 = vunpack.c.l.b16 %v4123
      %v4324 = vunpack.c.l.b16 %v4124
      %v4325 = vunpack.c.l.b16 %v4125
      %v4326 = vunpack.c.l.b16 %v4126
      %v4327 = vunpack.c.l.b16 %v4127
      %v4328 = vunpack.c.l.b16 %v4128
      %v4329 = vunpack.c.l.b16 %v4129
      %v4330 = vunpack.c.l.b16 %v4130
      %v4331 = vunpack.c.l.b16 %v4131
      %v4332 = vunpack.c.l.b16 %v4132
      %v4333 = vunpack.c.l.b16 %v4133
      %v4334 = vunpack.c.l.b16 %v4134
      %v4335 = vunpack.c.l.b16 %v4135
      %v4336 = vunpack.c.l.b16 %v4136
      %v4337 = vunpack.c.l.b16 %v4137
      %v4338 = vunpack.c.l.b16 %v4138
      %v4339 = vunpack.c.l.b16 %v4139
      %v4340 = vunpack.c.l.b16 %v4140
      %v4341 = vunpack.c.l.b16 %v4141
      %v4342 = vunpack.c.l.b16 %v4142
      %v4343 = vunpack.c.l.b16 %v4143
      %v4344 = vunpack.c.l.b16 %v4144
      %v4345 = vunpack.c.l.b16 %v4145
      %v4346 = vunpack.c.l.b16 %v4146
      %v4347 = vunpack.c.l.b16 %v4147
      %v4348 = vunpack.c.l.b16 %v4148
      %v4349 = vunpack.c.l.b16 %v4149
      %v4350 = vunpack.c.l.b16 %v4150
      %v4351 = vunpack.c.l.b16 %v4151
      %v4352 = vunpack.c.l.b16 %v4152
      %v4353 = vunpack.c.l.b16 %v4153
      %v4354 = vunpack.c.l.b16 %v4154
      %v4355 = vunpack.c.l.b16 %v4155
      %v4356 = vunpack.c.l.b16 %v4156
      %v4357 = vunpack.c.l.b16 %v4157
      %v4358 = vunpack.c.l.b16 %v4158
      %v4359 = vunpack.c.l.b16 %v4159
      %v4360 = vunpack.c.l.b16 %v4160
      %v4361 = vunpack.c.l.b16 %v4161
      %v4362 = vunpack.c.l.b16 %v4162
      %v4363 = vunpack.c.l.b16 %v4163
      %v4364 = vunpack.c.l.b16 %v4164
      %v4365 = vunpack.c.l.b16 %v4165
      %v4366 = vunpack.c.l.b16 %v4166
      %v4367 = vunpack.c.l.b16 %v4167
      %v4368 = vunpack.c.l.b16 %v4168
      %v4369 = vunpack.c.l.b16 %v4169
      %v4370 = vunpack.c.l.b16 %v4170
      %v4371 = vunpack.c.l.b16 %v4171
      %v4372 = vunpack.c.l.b16 %v4172
      %v4373 = vunpack.c.l.b16 %v4173
      %v4374 = vunpack.c.l.b16 %v4174
      %v4375 = vunpack.c.l.b16 %v4175
      %v4376 = vunpack.c.l.b16 %v4176
      %v4377 = vunpack.c.l.b16 %v4177
      %v4378 = vunpack.c.l.b16 %v4178
      %v4379 = vunpack.c.l.b16 %v4179
      %v4380 = vunpack.c.l.b16 %v4180
      %v4381 = vunpack.c.l.b16 %v4181
      %v4382 = vunpack.c.l.b16 %v4182
      %v4383 = vunpack.c.l.b16 %v4183
      %v4384 = vunpack.c.l.b16 %v4184
      %v4385 = vunpack.c.l.b16 %v4185
      %v4386 = vunpack.c.l.b16 %v4186
      %v4387 = vunpack.c.l.b16 %v4187
      %v4388 = vunpack.c.l.b16 %v4188
      %v4389 = vunpack.c.l.b16 %v4189
      %v4390 = vunpack.c.l.b16 %v4190
      %v4391 = vunpack.c.l.b16 %v4191
      %v4392 = vunpack.c.l.b16 %v4192
      %v4393 = vunpack.c.l.b16 %v4193
      %v4394 = vunpack.c.l.b16 %v4194
      %v4395 = vunpack.c.l.b16 %v4195
      %v4396 = vunpack.c.l.b16 %v4196
      %v4397 = vunpack.c.l.b16 %v4197
      %v4398 = vunpack.c.l.b16 %v4198
      %v4399 = vunpack.c.l.b16 %v4199
      %v4400 = vunpack.c.l.b16 %v4200
      %v4401 = vunpack.c.l.b16 %v4201
      %v4402 = vunpack.c.l.b16 %v4202
      %v4403 = vunpack.c.l.b16 %v4203
      %v4404 = vunpack.c.l.b16 %v4204
      %v4405 = vunpack.c.l.b16 %v4205
      %v4406 = vunpack.c.l.b16 %v4206
      %v4407 = vunpack.c.l.b16 %v4207
      %v4408 = vunpack.c.l.b16 %v4208
      %v4409 = vunpack.c.l.b16 %v4209
      %v4410 = vunpack.c.l.b16 %v4210
      %v4411 = vunpack.c.l.b16 %v4211
      %v4412 = vunpack.c.l.b16 %v4212
      %v4413 = vunpack.c.l.b16 %v4213
      %v4414 = vunpack.c.l.b16 %v4214
      %v4415 = vunpack.c.l.b16 %v4215
      %v4416 = vunpack.c.l.b16 %v4216
      %v4417 = vunpack.c.l.b16 %v4217
      %v4418 = vunpack.c.l.b16 %v4218
      %v4419 = vunpack.c.l.b16 %v4219
      %v4420 = vunpack.c.l.b16 %v4220
      %v4421 = vunpack.c.l.b16 %v4221
      %v4422 = vunpack.c.l.b16 %v4222
      %v4423 = vunpack.c.l.b16 %v4223
      %v4424 = vunpack.c.l.b16 %v4224
      %v4425 = vunpack.c.l.b16 %v4225
      %v4426 = vunpack.c.l.b16 %v4226
      %v4427 = vunpack.c.l.b16 %v4227
      %v4428 = vunpack.c.l.b16 %v4228
      %v4429 = vunpack.c.l.b16 %v4229
      %v4430 = vunpack.c.l.b16 %v4230
      %v4431 = vunpack.c.l.b16 %v4231
      %v4432 = vunpack.c.l.b16 %v4232
      %v4433 = vunpack.c.l.b16 %v4233
      %v4434 = vunpack.c.l.b16 %v4234
      %v4435 = vunpack.c.l.b16 %v4235
      %v4436 = vunpack.c.l.b16 %v4236
      %v4437 = vunpack.c.l.b16 %v4237
      %v4438 = vunpack.c.l.b16 %v4238
      %v4439 = vunpack.c.l.b16 %v4239
      %v4440 = vunpack.c.l.b16 %v4240
      %v4441 = vunpack.c.l.b16 %v4241
      %v4442 = vunpack.c.l.b16 %v4242
      %v4443 = vunpack.c.l.b16 %v4243
      %v4444 = vunpack.c.l.b16 %v4244
      %v4445 = vunpack.c.l.b16 %v4245
      %v4446 = vunpack.c.l.b16 %v4246
      %v4447 = vunpack.c.l.b16 %v4247
      %v4448 = vunpack.c.l.b16 %v4248
      %v4449 = vunpack.c.l.b16 %v4249
      %v4450 = vunpack.c.l.b16 %v4250
      %v4451 = vunpack.c.l.b16 %v4251
      %v4452 = vunpack.c.l.b16 %v4252
      %v4453 = vunpack.c.l.b16 %v4253
      %v4454 = vunpack.c.l.b16 %v4254
      %v4455 = vunpack.c.l.b16 %v4255
      %v4456 = vunpack.c.l.b16 %v4256
      %v4457 = vunpack.c.l.b16 %v4257
      %v4458 = vunpack.c.l.b16 %v4258
      %v4459 = vunpack.c.l.b16 %v4259
      %v4460 = vunpack.c.l.b16 %v4260
      %v4461 = vunpack.c.l.b16 %v4261
      %v4462 = vunpack.c.l.b16 %v4262
      %v4463 = vunpack.c.l.b16 %v4263
      %v4464 = vunpack.c.l.b16 %v4264
      %v4465 = vunpack.c.l.b16 %v4265
      %v4466 = vunpack.c.l.b16 %v4266
      %v4467 = vunpack.c.l.b16 %v4267
      %vm4468 = vcmask 1041409
      %v4469 = vsel %vm4468, %v4269, %v4268
      %vm4470 = vcmask 1042434
      %v4471 = vsel %vm4470, %v4270, %v4469
      %vm4472 = vcmask 1043459
      %v4473 = vsel %vm4472, %v4271, %v4471
      %vm4474 = vcmask 1044484
      %v4475 = vsel %vm4474, %v4272, %v4473
      %vm4476 = vcmask 1045509
      %v4477 = vsel %vm4476, %v4273, %v4475
      %vm4478 = vcmask 1046534
      %v4479 = vsel %vm4478, %v4274, %v4477
      %vm4480 = vcmask 1047559
      %v4481 = vsel %vm4480, %v4275, %v4479
      %v4482 = vsel %vm4468, %v4277, %v4276
      %v4483 = vsel %vm4470, %v4278, %v4482
      %v4484 = vsel %vm4472, %v4279, %v4483
      %v4485 = vsel %vm4474, %v4280, %v4484
      %v4486 = vsel %vm4476, %v4281, %v4485
      %v4487 = vsel %vm4478, %v4282, %v4486
      %v4488 = vsel %vm4480, %v4283, %v4487
      %v4489 = vsel %vm4468, %v4285, %v4284
      %v4490 = vsel %vm4470, %v4286, %v4489
      %v4491 = vsel %vm4472, %v4287, %v4490
      %v4492 = vsel %vm4474, %v4288, %v4491
      %v4493 = vsel %vm4476, %v4289, %v4492
      %v4494 = vsel %vm4478, %v4290, %v4493
      %v4495 = vsel %vm4480, %v4291, %v4494
      %v4496 = vsel %vm4468, %v4293, %v4292
      %v4497 = vsel %vm4470, %v4294, %v4496
      %v4498 = vsel %vm4472, %v4295, %v4497
      %v4499 = vsel %vm4474, %v4296, %v4498
      %v4500 = vsel %vm4476, %v4297, %v4499
      %v4501 = vsel %vm4478, %v4298, %v4500
      %v4502 = vsel %vm4480, %v4299, %v4501
      %v4503 = vsel %vm4468, %v4301, %v4300
      %v4504 = vsel %vm4470, %v4302, %v4503
      %v4505 = vsel %vm4472, %v4303, %v4504
      %v4506 = vsel %vm4474, %v4304, %v4505
      %v4507 = vsel %vm4476, %v4305, %v4506
      %v4508 = vsel %vm4478, %v4306, %v4507
      %v4509 = vsel %vm4480, %v4307, %v4508
      %v4510 = vsel %vm4468, %v4309, %v4308
      %v4511 = vsel %vm4470, %v4310, %v4510
      %v4512 = vsel %vm4472, %v4311, %v4511
      %v4513 = vsel %vm4474, %v4312, %v4512
      %v4514 = vsel %vm4476, %v4313, %v4513
      %v4515 = vsel %vm4478, %v4314, %v4514
      %v4516 = vsel %vm4480, %v4315, %v4515
      %v4517 = vsel %vm4468, %v4317, %v4316
      %v4518 = vsel %vm4470, %v4318, %v4517
      %v4519 = vsel %vm4472, %v4319, %v4518
      %v4520 = vsel %vm4474, %v4320, %v4519
      %v4521 = vsel %vm4476, %v4321, %v4520
      %v4522 = vsel %vm4478, %v4322, %v4521
      %v4523 = vsel %vm4480, %v4323, %v4522
      %v4524 = vsel %vm4468, %v4325, %v4324
      %v4525 = vsel %vm4470, %v4326, %v4524
      %v4526 = vsel %vm4472, %v4327, %v4525
      %v4527 = vsel %vm4474, %v4328, %v4526
      %v4528 = vsel %vm4476, %v4329, %v4527
      %v4529 = vsel %vm4478, %v4330, %v4528
      %v4530 = vsel %vm4480, %v4331, %v4529
      %v4531 = vsel %vm4468, %v4333, %v4332
      %v4532 = vsel %vm4470, %v4334, %v4531
      %v4533 = vsel %vm4472, %v4335, %v4532
      %v4534 = vsel %vm4474, %v4336, %v4533
      %v4535 = vsel %vm4476, %v4337, %v4534
      %v4536 = vsel %vm4478, %v4338, %v4535
      %v4537 = vsel %vm4480, %v4339, %v4536
      %v4538 = vsel %vm4468, %v4341, %v4340
      %v4539 = vsel %vm4470, %v4342, %v4538
      %v4540 = vsel %vm4472, %v4343, %v4539
      %v4541 = vsel %vm4474, %v4344, %v4540
      %v4542 = vsel %vm4476, %v4345, %v4541
      %v4543 = vsel %vm4478, %v4346, %v4542
      %v4544 = vsel %vm4480, %v4347, %v4543
      %v4545 = vsel %vm4468, %v4349, %v4348
      %v4546 = vsel %vm4470, %v4350, %v4545
      %v4547 = vsel %vm4472, %v4351, %v4546
      %v4548 = vsel %vm4474, %v4352, %v4547
      %v4549 = vsel %vm4476, %v4353, %v4548
      %v4550 = vsel %vm4478, %v4354, %v4549
      %v4551 = vsel %vm4480, %v4355, %v4550
      %v4552 = vsel %vm4468, %v4357, %v4356
      %v4553 = vsel %vm4470, %v4358, %v4552
      %v4554 = vsel %vm4472, %v4359, %v4553
      %v4555 = vsel %vm4474, %v4360, %v4554
      %v4556 = vsel %vm4476, %v4361, %v4555
      %v4557 = vsel %vm4478, %v4362, %v4556
      %v4558 = vsel %vm4480, %v4363, %v4557
      %v4559 = vsel %vm4468, %v4365, %v4364
      %v4560 = vsel %vm4470, %v4366, %v4559
      %v4561 = vsel %vm4472, %v4367, %v4560
      %v4562 = vsel %vm4474, %v4368, %v4561
      %v4563 = vsel %vm4476, %v4369, %v4562
      %v4564 = vsel %vm4478, %v4370, %v4563
      %v4565 = vsel %vm4480, %v4371, %v4564
      %v4566 = vsel %vm4468, %v4373, %v4372
      %v4567 = vsel %vm4470, %v4374, %v4566
      %v4568 = vsel %vm4472, %v4375, %v4567
      %v4569 = vsel %vm4474, %v4376, %v4568
      %v4570 = vsel %vm4476, %v4377, %v4569
      %v4571 = vsel %vm4478, %v4378, %v4570
      %v4572 = vsel %vm4480, %v4379, %v4571
      %v4573 = vsel %vm4468, %v4381, %v4380
      %v4574 = vsel %vm4470, %v4382, %v4573
      %v4575 = vsel %vm4472, %v4383, %v4574
      %v4576 = vsel %vm4474, %v4384, %v4575
      %v4577 = vsel %vm4476, %v4385, %v4576
      %v4578 = vsel %vm4478, %v4386, %v4577
      %v4579 = vsel %vm4480, %v4387, %v4578
      %v4580 = vsel %vm4468, %v4389, %v4388
      %v4581 = vsel %vm4470, %v4390, %v4580
      %v4582 = vsel %vm4472, %v4391, %v4581
      %v4583 = vsel %vm4474, %v4392, %v4582
      %v4584 = vsel %vm4476, %v4393, %v4583
      %v4585 = vsel %vm4478, %v4394, %v4584
      %v4586 = vsel %vm4480, %v4395, %v4585
      %v4587 = vsel %vm4468, %v4397, %v4396
      %v4588 = vsel %vm4470, %v4398, %v4587
      %v4589 = vsel %vm4472, %v4399, %v4588
      %v4590 = vsel %vm4474, %v4400, %v4589
      %v4591 = vsel %vm4476, %v4401, %v4590
      %v4592 = vsel %vm4478, %v4402, %v4591
      %v4593 = vsel %vm4480, %v4403, %v4592
      %v4594 = vsel %vm4468, %v4405, %v4404
      %v4595 = vsel %vm4470, %v4406, %v4594
      %v4596 = vsel %vm4472, %v4407, %v4595
      %v4597 = vsel %vm4474, %v4408, %v4596
      %v4598 = vsel %vm4476, %v4409, %v4597
      %v4599 = vsel %vm4478, %v4410, %v4598
      %v4600 = vsel %vm4480, %v4411, %v4599
      %v4601 = vsel %vm4468, %v4413, %v4412
      %v4602 = vsel %vm4470, %v4414, %v4601
      %v4603 = vsel %vm4472, %v4415, %v4602
      %v4604 = vsel %vm4474, %v4416, %v4603
      %v4605 = vsel %vm4476, %v4417, %v4604
      %v4606 = vsel %vm4478, %v4418, %v4605
      %v4607 = vsel %vm4480, %v4419, %v4606
      %v4608 = vsel %vm4468, %v4421, %v4420
      %v4609 = vsel %vm4470, %v4422, %v4608
      %v4610 = vsel %vm4472, %v4423, %v4609
      %v4611 = vsel %vm4474, %v4424, %v4610
      %v4612 = vsel %vm4476, %v4425, %v4611
      %v4613 = vsel %vm4478, %v4426, %v4612
      %v4614 = vsel %vm4480, %v4427, %v4613
      %v4615 = vsel %vm4468, %v4429, %v4428
      %v4616 = vsel %vm4470, %v4430, %v4615
      %v4617 = vsel %vm4472, %v4431, %v4616
      %v4618 = vsel %vm4474, %v4432, %v4617
      %v4619 = vsel %vm4476, %v4433, %v4618
      %v4620 = vsel %vm4478, %v4434, %v4619
      %v4621 = vsel %vm4480, %v4435, %v4620
      %v4622 = vsel %vm4468, %v4437, %v4436
      %v4623 = vsel %vm4470, %v4438, %v4622
      %v4624 = vsel %vm4472, %v4439, %v4623
      %v4625 = vsel %vm4474, %v4440, %v4624
      %v4626 = vsel %vm4476, %v4441, %v4625
      %v4627 = vsel %vm4478, %v4442, %v4626
      %v4628 = vsel %vm4480, %v4443, %v4627
      %v4629 = vsel %vm4468, %v4445, %v4444
      %v4630 = vsel %vm4470, %v4446, %v4629
      %v4631 = vsel %vm4472, %v4447, %v4630
      %v4632 = vsel %vm4474, %v4448, %v4631
      %v4633 = vsel %vm4476, %v4449, %v4632
      %v4634 = vsel %vm4478, %v4450, %v4633
      %v4635 = vsel %vm4480, %v4451, %v4634
      %v4636 = vsel %vm4468, %v4453, %v4452
      %v4637 = vsel %vm4470, %v4454, %v4636
      %v4638 = vsel %vm4472, %v4455, %v4637
      %v4639 = vsel %vm4474, %v4456, %v4638
      %v4640 = vsel %vm4476, %v4457, %v4639
      %v4641 = vsel %vm4478, %v4458, %v4640
      %v4642 = vsel %vm4480, %v4459, %v4641
      %v4643 = vsel %vm4468, %v4461, %v4460
      %v4644 = vsel %vm4470, %v4462, %v4643
      %v4645 = vsel %vm4472, %v4463, %v4644
      %v4646 = vsel %vm4474, %v4464, %v4645
      %v4647 = vsel %vm4476, %v4465, %v4646
      %v4648 = vsel %vm4478, %v4466, %v4647
      %v4649 = vsel %vm4480, %v4467, %v4648
      %v4650 = vpack.c.b16 %v4481, %v4481
      %v4651 = vpack.c.b16 %v4488, %v4488
      %v4652 = vpack.c.b16 %v4495, %v4495
      %v4653 = vpack.c.b16 %v4502, %v4502
      %v4654 = vpack.c.b16 %v4509, %v4509
      %v4655 = vpack.c.b16 %v4516, %v4516
      %v4656 = vpack.c.b16 %v4523, %v4523
      %v4657 = vpack.c.b16 %v4530, %v4530
      %v4658 = vpack.c.b16 %v4537, %v4537
      %v4659 = vpack.c.b16 %v4544, %v4544
      %v4660 = vpack.c.b16 %v4551, %v4551
      %v4661 = vpack.c.b16 %v4558, %v4558
      %v4662 = vpack.c.b16 %v4565, %v4565
      %v4663 = vpack.c.b16 %v4572, %v4572
      %v4664 = vpack.c.b16 %v4579, %v4579
      %v4665 = vpack.c.b16 %v4586, %v4586
      %v4666 = vpack.c.b16 %v4593, %v4593
      %v4667 = vpack.c.b16 %v4600, %v4600
      %v4668 = vpack.c.b16 %v4607, %v4607
      %v4669 = vpack.c.b16 %v4614, %v4614
      %v4670 = vpack.c.b16 %v4621, %v4621
      %v4671 = vpack.c.b16 %v4628, %v4628
      %v4672 = vpack.c.b16 %v4635, %v4635
      %v4673 = vpack.c.b16 %v4642, %v4642
      %v4674 = vpack.c.b16 %v4649, %v4649
      %4700 = vst [vmem:[%s208] sm:$0xf] %v4650
      %4701 = vst [vmem:[%s208 + $0x4] sm:$0xf] %v4651
      %4702 = vst [vmem:[%s208 + $0x8] sm:$0xf] %v4652
      %4703 = vst [vmem:[%s208 + $0xc] sm:$0xf] %v4653
      %4704 = vst [vmem:[%s208 + $0x10] sm:$0xf] %v4654
      %4705 = vst [vmem:[%s208 + $0x14] sm:$0xf] %v4655
      %4706 = vst [vmem:[%s208 + $0x18] sm:$0xf] %v4656
      %4707 = vst [vmem:[%s208 + $0x1c] sm:$0xf] %v4657
      %4708 = vst [vmem:[%s208 + $0x20] sm:$0xf] %v4658
      %4709 = vst [vmem:[%s208 + $0x24] sm:$0xf] %v4659
      %4710 = vst [vmem:[%s208 + $0x28] sm:$0xf] %v4660
      %4711 = vst [vmem:[%s208 + $0x2c] sm:$0xf] %v4661
      %4712 = vst [vmem:[%s208 + $0x30] sm:$0xf] %v4662
      %4713 = vst [vmem:[%s208 + $0x34] sm:$0xf] %v4663
      %4714 = vst [vmem:[%s208 + $0x38] sm:$0xf] %v4664
      %4715 = vst [vmem:[%s208 + $0x3c] sm:$0xf] %v4665
      %4716 = vst [vmem:[%s208 + $0x40] sm:$0xf] %v4666
      %4717 = vst [vmem:[%s208 + $0x44] sm:$0xf] %v4667
      %4718 = vst [vmem:[%s208 + $0x48] sm:$0xf] %v4668
      %4719 = vst [vmem:[%s208 + $0x4c] sm:$0xf] %v4669
      %4720 = vst [vmem:[%s208 + $0x50] sm:$0xf] %v4670
      %4721 = vst [vmem:[%s208 + $0x54] sm:$0xf] %v4671
      %4722 = vst [vmem:[%s208 + $0x58] sm:$0xf] %v4672
      %4723 = vst [vmem:[%s208 + $0x5c] sm:$0xf] %v4673
      %4724 = vst [vmem:[%s208 + $0x60] sm:$0xf] %v4674
      %s4725 = smul.u32 25, %s19
      %p4726 = scmp.lt.s32.totalorder %s18, 1
      %s4727 = scalar_select %p4726, %s18, 1
      %p4728 = scmp.lt.s32.totalorder %s4725, 49
      %s4729 = scalar_select %p4728, %s4725, 49
      %s4730 = smul.addr %s4727, 50
      %s4731 = sadd.s32 %s4729, %s4730
      %s4732 = smul.addr %s4731, 4
      %s4733 = scalar_lea.vmem %s3, %s4732
      // Predicated region
      $region33: #{forward.4} parent=31 // pred_check
        %p4734 = pneg %p116
      $region34: #{forward.4} parent=31 // pred_check_branch
        %4736 = sbr.rel (%p4734) target = $region36
      $region35: #{forward.4} parent=31 // pred_region
        %s4737 = smul.u32 25, %s19
      $region36: #{forward.4} parent=31 // pred_fallthru
        _
    $region32: #{forward.4} parent=5 // pred_fallthru
      _
    %p4738 = scmp.le.s32.totalorder 2, %s9
    // Predicated region
    $region37: #{forward.4} parent=5 // pred_check
      %p4739 = pneg %p4738
    $region38: #{forward.4} parent=5 // pred_check_branch
      %4741 = sbr.rel (%p4739) target = $region40
    $region39: #{forward.4} parent=5 // pred_region
      %s4742 = ssub.s32 %s9, 2
      // Predicated region
      $region41: #{forward.4} parent=39 // pred_check
        %p4743 = pneg %p122
      $region42: #{forward.4} parent=39 // pred_check_branch
        %4745 = sbr.rel (%p4743) target = $region44
      $region43: #{forward.4} parent=39 // pred_region
        %s4746 = smul.u32 25, %s21
        %p4747 = scmp.lt.s32.totalorder %s20, 1
        %s4748 = scalar_select %p4747, %s20, 1
        %p4749 = scmp.lt.s32.totalorder %s4746, 49
        %s4750 = scalar_select %p4749, %s4746, 49
        %s4751 = smul.addr %s4748, 50
        %s4752 = sadd.s32 %s4750, %s4751
        %s4753 = smul.addr %s4752, 4
        %s4754 = scalar_lea.vmem %s3, %s4753
      $region44: #{forward.4} parent=39 // pred_fallthru
        _
    $region40: #{forward.4} parent=5 // pred_fallthru
      _
  $region6: #{forward.4} parent=0 // loop_footer
    %s13 = sadd.s32 1, %s9
  $region7: #{forward.4} parent=0 // loop_footer_branch
    %8 = sbr.rel target = $region3
  $region8: #{forward.4} parent=0 // loop_exit
    _

// kernel: forward.5
$region0: #{forward.5}
  #allocation0 [shape = 'u32[]', space=smem, size = 0x4, offset = 0x4, fixed_abs, tag = 'smem constant byte address 0x4 - core index']
  #allocation1 [shape = 'u32[144,128]{1,0:T(1,128)}', space=vmem, size = 0x12000, scoped, tag = 'internal scratch']
  %s0 = inlined_call_operand.vmem [shape: bf16[2,320,864], index: 0, kind: input, shape index: {}]
  %s1 = inlined_call_operand.vmem [shape: bf16[864,128], index: 1, kind: input, shape index: {}]
  %s2 = inlined_call_operand.vmem [shape: f32[1,128], index: 2, kind: input, shape index: {}]
  %s3 = inlined_call_operand.vmem [shape: bf16[2,40,128], index: 3, kind: output, shape index: {}]
  %s4 = sld [smem:[#allocation0]]
  $region45: #{forward.5} parent=0
    _
  %s6 = ssub.s32 1, %s4
  %s7 = scalar_select 0, %s6, %s4
  loop: start=0, step=1, limit=4
  $region2: #{forward.5} parent=0 // loop_pre_header
    _
  $region3: #{forward.5} parent=0 // loop_header
    %s9 = sphi 0, %s13
    %p10 = scmp.ge.s32.totalorder %s9, 4
    %s16 = sphi 0, %s28
    %s17 = sphi 0, %s24
    %s18 = sphi 0, %s16
    %s19 = sphi 0, %s17
    %s20 = sphi 0, %s18
    %s21 = sphi 0, %s19
    %s33 = sphi 0, %s35
    %s36 = sphi 0, %s33
    %s37 = sphi 0, %s36
    %s53 = sphi 0, %s37
    %s57 = sphi 0, %s57
    %s59 = sphi 0, %s57
    %s60 = sphi 0, %s59
    %s74 = sphi 0, %s60
    %s78 = sphi 0, %s78
    %s80 = sphi 0, %s78
    %s81 = sphi 0, %s80
    %s95 = sphi 0, %s81
    %s103 = sphi 0, %s105
    %s106 = sphi 0, %s103
    %s107 = sphi 0, %s106
    %s123 = sphi 0, %s107
  $region4: #{forward.5} parent=0 // loop_header_branch
    %12 = sbr.rel (%p10) target = $region8
  $region5: #{forward.5} parent=0 // loop_body
    %s14 = ssub.s32 %s9, 1
    %s15 = ssub.s32 %s9, 2
    %s22 = sadd.s32 1, %s17
    %p23 = scmp.ge.s32.totalorder %s22, 1
    %s24 = scalar_select %p23, 0, %s22
    %s25 = sadd.s32 1, %s16
    %s26 = scalar_select %p23, %s25, %s16
    %p27 = scmp.ge.s32.totalorder %s26, 2
    %s28 = scalar_select %p27, 0, %s26
    %s29 = ssub.s32 %s16, %s28
    %s30 = ssub.s32 %s17, %s24
    %s31 = sor.u32 %s29, %s30
    %p32 = scmp.eq.s32.totalorder %s31, 0
    %s34 = sadd.s32 %s33, 1
    %s35 = scalar_select %p32, %s33, %s34
    %p38 = pneg %p32
    %p39 = scmp.eq.s32.totalorder %s9, 1
    %p40 = por %p38, %p39
    %p41 = scmp.ne.s32.totalorder %s33, %s36
    %p42 = scmp.eq.s32.totalorder %s9, 0
    %p43 = por %p41, %p42
    %p44 = scmp.ne.s32.totalorder %s33, %s36
    %p45 = scmp.eq.s32.totalorder %s14, 1
    %p46 = por %p44, %p45
    %p47 = scmp.ne.s32.totalorder %s36, %s37
    %p48 = scmp.eq.s32.totalorder %s14, 0
    %p49 = por %p47, %p48
    %p50 = scmp.ne.s32.totalorder %s36, %s37
    %p51 = scmp.eq.s32.totalorder %s15, 1
    %p52 = por %p50, %p51
    %p54 = scmp.ne.s32.totalorder %s37, %s53
    %p55 = scmp.eq.s32.totalorder %s15, 0
    %p56 = por %p54, %p55
    %s58 = sadd.s32 %s57, 1
    %p61 = scmp.eq.s32.totalorder %s9, 1
    %p62 = scmp.ne.s32.totalorder %s57, %s59
    %p63 = scmp.eq.s32.totalorder %s9, 0
    %p64 = por %p62, %p63
    %p65 = scmp.ne.s32.totalorder %s57, %s59
    %p66 = scmp.eq.s32.totalorder %s14, 1
    %p67 = por %p65, %p66
    %p68 = scmp.ne.s32.totalorder %s59, %s60
    %p69 = scmp.eq.s32.totalorder %s14, 0
    %p70 = por %p68, %p69
    %p71 = scmp.ne.s32.totalorder %s59, %s60
    %p72 = scmp.eq.s32.totalorder %s15, 1
    %p73 = por %p71, %p72
    %p75 = scmp.ne.s32.totalorder %s60, %s74
    %p76 = scmp.eq.s32.totalorder %s15, 0
    %p77 = por %p75, %p76
    %s79 = sadd.s32 %s78, 1
    %p82 = scmp.eq.s32.totalorder %s9, 1
    %p83 = scmp.ne.s32.totalorder %s78, %s80
    %p84 = scmp.eq.s32.totalorder %s9, 0
    %p85 = por %p83, %p84
    %p86 = scmp.ne.s32.totalorder %s78, %s80
    %p87 = scmp.eq.s32.totalorder %s14, 1
    %p88 = por %p86, %p87
    %p89 = scmp.ne.s32.totalorder %s80, %s81
    %p90 = scmp.eq.s32.totalorder %s14, 0
    %p91 = por %p89, %p90
    %p92 = scmp.ne.s32.totalorder %s80, %s81
    %p93 = scmp.eq.s32.totalorder %s15, 1
    %p94 = por %p92, %p93
    %p96 = scmp.ne.s32.totalorder %s81, %s95
    %p97 = scmp.eq.s32.totalorder %s15, 0
    %p98 = por %p96, %p97
    %s99 = ssub.s32 %s16, %s28
    %s100 = ssub.s32 %s17, %s24
    %s101 = sor.u32 %s99, %s100
    %p102 = scmp.eq.s32.totalorder %s101, 0
    %s104 = sadd.s32 %s103, 1
    %s105 = scalar_select %p102, %s103, %s104
    %p108 = pneg %p102
    %p109 = scmp.eq.s32.totalorder %s9, 1
    %p110 = por %p108, %p109
    %p111 = scmp.ne.s32.totalorder %s103, %s106
    %p112 = scmp.eq.s32.totalorder %s9, 0
    %p113 = por %p111, %p112
    %p114 = scmp.ne.s32.totalorder %s103, %s106
    %p115 = scmp.eq.s32.totalorder %s14, 1
    %p116 = por %p114, %p115
    %p117 = scmp.ne.s32.totalorder %s106, %s107
    %p118 = scmp.eq.s32.totalorder %s14, 0
    %p119 = por %p117, %p118
    %p120 = scmp.ne.s32.totalorder %s106, %s107
    %p121 = scmp.eq.s32.totalorder %s15, 1
    %p122 = por %p120, %p121
    %p124 = scmp.ne.s32.totalorder %s107, %s123
    %p125 = scmp.eq.s32.totalorder %s15, 0
    %p126 = por %p124, %p125
    %p127 = scmp.le.s32.totalorder 1, %s9
    %p128 = scmp.lt.s32.totalorder %s9, 3
    %p129 = pnand %p127, %p128
    %p130 = pneg %p129
    // Predicated region
    $region9: #{forward.5} parent=5 // pred_check
      _
    $region10: #{forward.5} parent=5 // pred_check_branch
      %132 = sbr.rel (%p129) target = $region12
    $region11: #{forward.5} parent=5 // pred_region
      %s133 = ssub.s32 %s9, 1
      // Predicated region
      $region13: #{forward.5} parent=11 // pred_check
        %p134 = pneg %p70
      $region14: #{forward.5} parent=11 // pred_check_branch
        %136 = sbr.rel (%p134) target = $region16
      $region15: #{forward.5} parent=11 // pred_region
        _
      $region16: #{forward.5} parent=11 // pred_fallthru
        _
      // Predicated region
      $region17: #{forward.5} parent=11 // pred_check
        %p137 = pneg %p91
      $region18: #{forward.5} parent=11 // pred_check_branch
        %139 = sbr.rel (%p137) target = $region20
      $region19: #{forward.5} parent=11 // pred_region
        _
      $region20: #{forward.5} parent=11 // pred_fallthru
        _
    $region12: #{forward.5} parent=5 // pred_fallthru
      _
    %p140 = scmp.lt.s32.totalorder %s9, 2
    // Predicated region
    $region21: #{forward.5} parent=5 // pred_check
      %p141 = pneg %p140
    $region22: #{forward.5} parent=5 // pred_check_branch
      %143 = sbr.rel (%p141) target = $region24
    $region23: #{forward.5} parent=5 // pred_region
      // Predicated region
      $region25: #{forward.5} parent=23 // pred_check
        %p144 = pneg %p43
      $region26: #{forward.5} parent=23 // pred_check_branch
        %146 = sbr.rel (%p144) target = $region28
      $region27: #{forward.5} parent=23 // pred_region
        %s147 = smul.u32 40, %s17
        %p148 = scmp.lt.s32.totalorder %s16, 1
        %s149 = scalar_select %p148, %s16, 1
        %p150 = scmp.lt.s32.totalorder %s147, 39
        %s151 = scalar_select %p150, %s147, 39
        %s152 = smul.addr %s151, 7
        %s153 = smul.addr %s149, 280
        %s154 = sadd.s32 %s152, %s153
        %s155 = smul.addr %s154, 4
        %s156 = scalar_lea.vmem %s0, %s155
        %s157 = smul.u32 40, %s17
      $region28: #{forward.5} parent=23 // pred_fallthru
        _
    $region24: #{forward.5} parent=5 // pred_fallthru
      _
    %p158 = scmp.le.s32.totalorder 1, %s9
    %p159 = scmp.lt.s32.totalorder %s9, 3
    %p160 = pnand %p158, %p159
    %p161 = pneg %p160
    // Predicated region
    $region29: #{forward.5} parent=5 // pred_check
      _
    $region30: #{forward.5} parent=5 // pred_check_branch
      %163 = sbr.rel (%p160) target = $region32
    $region31: #{forward.5} parent=5 // pred_region
      %s164 = ssub.s32 %s9, 1
      %s165 = smul.u32 40, %s19
      %p166 = scmp.lt.s32.totalorder %s18, 1
      %s167 = scalar_select %p166, %s18, 1
      %p168 = scmp.lt.s32.totalorder %s165, 39
      %s169 = scalar_select %p168, %s165, 39
      %s170 = smul.addr %s169, 7
      %s171 = smul.addr %s167, 280
      %s172 = sadd.s32 %s170, %s171
      %s173 = smul.addr %s172, 4
      %s174 = scalar_lea.vmem %s0, %s173
      %p175 = pneg %p49
      %p176 = pneg %p46
      %p177 = pneg %p70
      %p178 = pneg %p67
      %p179 = pneg %p91
      %p180 = pneg %p88
      %p181 = pneg %p119
      %p182 = pneg %p116
      %s183 = smul.u32 5, %s19
      %p184 = scmp.lt.s32.totalorder %s18, 1
      %s185 = scalar_select %p184, %s18, 1
      %p186 = scmp.lt.s32.totalorder %s183, 4
      %s187 = scalar_select %p186, %s183, 4
      %s188 = smul.addr %s185, 5
      %s189 = sadd.s32 %s187, %s188
      %s190 = smul.addr %s189, 4
      %s191 = scalar_lea.vmem %s3, %s190
      %s192 = smul.u32 40, %s19
      %p193 = scmp.lt.s32.totalorder %s18, 1
      %s194 = scalar_select %p193, %s18, 1
      %p195 = scmp.lt.s32.totalorder %s192, 39
      %s196 = scalar_select %p195, %s192, 39
      %s197 = smul.addr %s196, 7
      %s198 = smul.addr %s194, 280
      %s199 = sadd.s32 %s197, %s198
      %s200 = smul.addr %s199, 4
      %s201 = scalar_lea.vmem %s0, %s200
      %s202 = smul.u32 40, %s19
      %s203 = smul.u32 5, %s19
      %p204 = scmp.lt.s32.totalorder %s18, 1
      %s205 = scalar_select %p204, %s18, 1
      %p206 = scmp.lt.s32.totalorder %s203, 4
      %s207 = scalar_select %p206, %s203, 4
      %s208 = smul.addr %s205, 5
      %s209 = sadd.s32 %s207, %s208
      %s210 = smul.addr %s209, 4
      %s211 = scalar_lea.vmem %s3, %s210
      %s212 = smul.u32 5, %s19
      %v214 = vld [vmem:[%s201] sm:$0xff]
      %v215 = vld [vmem:[%s201 + $0x8] sm:$0xff]
      %v216 = vld [vmem:[%s201 + $0x10] sm:$0xff]
      %v217 = vld [vmem:[%s201 + $0x18] sm:$0xf]
      %v218 = vld [vmem:[%s201 + $0x1c] sm:$0xff]
      %v219 = vld [vmem:[%s201 + $0x24] sm:$0xff]
      %v220 = vld [vmem:[%s201 + $0x2c] sm:$0xff]
      %v221 = vld [vmem:[%s201 + $0x34] sm:$0xf]
      %v222 = vld [vmem:[%s201 + $0x38] sm:$0xff]
      %v223 = vld [vmem:[%s201 + $0x40] sm:$0xff]
      %v224 = vld [vmem:[%s201 + $0x48] sm:$0xff]
      %v225 = vld [vmem:[%s201 + $0x50] sm:$0xf]
      %v226 = vld [vmem:[%s201 + $0x54] sm:$0xff]
      %v227 = vld [vmem:[%s201 + $0x5c] sm:$0xff]
      %v228 = vld [vmem:[%s201 + $0x64] sm:$0xff]
      %v229 = vld [vmem:[%s201 + $0x6c] sm:$0xf]
      %v230 = vld [vmem:[%s201 + $0x70] sm:$0xff]
      %v231 = vld [vmem:[%s201 + $0x78] sm:$0xff]
      %v232 = vld [vmem:[%s201 + $0x80] sm:$0xff]
      %v233 = vld [vmem:[%s201 + $0x88] sm:$0xf]
      %v234 = vld [vmem:[%s201 + $0x8c] sm:$0xff]
      %v235 = vld [vmem:[%s201 + $0x94] sm:$0xff]
      %v236 = vld [vmem:[%s201 + $0x9c] sm:$0xff]
      %v237 = vld [vmem:[%s201 + $0xa4] sm:$0xf]
      %v238 = vld [vmem:[%s201 + $0xa8] sm:$0xff]
      %v239 = vld [vmem:[%s201 + $0xb0] sm:$0xff]
      %v240 = vld [vmem:[%s201 + $0xb8] sm:$0xff]
      %v241 = vld [vmem:[%s201 + $0xc0] sm:$0xf]
      %v242 = vld [vmem:[%s201 + $0xc4] sm:$0xff]
      %v243 = vld [vmem:[%s201 + $0xcc] sm:$0xff]
      %v244 = vld [vmem:[%s201 + $0xd4] sm:$0xff]
      %v245 = vld [vmem:[%s201 + $0xdc] sm:$0xf]
      %v246 = vld [vmem:[%s201 + $0xe0] sm:$0xff]
      %v247 = vld [vmem:[%s201 + $0xe8] sm:$0xff]
      %v248 = vld [vmem:[%s201 + $0xf0] sm:$0xff]
      %v249 = vld [vmem:[%s201 + $0xf8] sm:$0xf]
      %v250 = vld [vmem:[%s201 + $0xfc] sm:$0xff]
      %v251 = vld [vmem:[%s201 + $0x104] sm:$0xff]
      %v252 = vld [vmem:[%s201 + $0x10c] sm:$0xff]
      %v253 = vld [vmem:[%s201 + $0x114] sm:$0xf]
      %v254 = vld [vmem:[%s201 + $0x118] sm:$0xff]
      %v255 = vld [vmem:[%s201 + $0x120] sm:$0xff]
      %v256 = vld [vmem:[%s201 + $0x128] sm:$0xff]
      %v257 = vld [vmem:[%s201 + $0x130] sm:$0xf]
      %v258 = vld [vmem:[%s201 + $0x134] sm:$0xff]
      %v259 = vld [vmem:[%s201 + $0x13c] sm:$0xff]
      %v260 = vld [vmem:[%s201 + $0x144] sm:$0xff]
      %v261 = vld [vmem:[%s201 + $0x14c] sm:$0xf]
      %v262 = vld [vmem:[%s201 + $0x150] sm:$0xff]
      %v263 = vld [vmem:[%s201 + $0x158] sm:$0xff]
      %v264 = vld [vmem:[%s201 + $0x160] sm:$0xff]
      %v265 = vld [vmem:[%s201 + $0x168] sm:$0xf]
      %v266 = vld [vmem:[%s201 + $0x16c] sm:$0xff]
      %v267 = vld [vmem:[%s201 + $0x174] sm:$0xff]
      %v268 = vld [vmem:[%s201 + $0x17c] sm:$0xff]
      %v269 = vld [vmem:[%s201 + $0x184] sm:$0xf]
      %v270 = vld [vmem:[%s201 + $0x188] sm:$0xff]
      %v271 = vld [vmem:[%s201 + $0x190] sm:$0xff]
      %v272 = vld [vmem:[%s201 + $0x198] sm:$0xff]
      %v273 = vld [vmem:[%s201 + $0x1a0] sm:$0xf]
      %v274 = vld [vmem:[%s201 + $0x1a4] sm:$0xff]
      %v275 = vld [vmem:[%s201 + $0x1ac] sm:$0xff]
      %v276 = vld [vmem:[%s201 + $0x1b4] sm:$0xff]
      %v277 = vld [vmem:[%s201 + $0x1bc] sm:$0xf]
      %v278 = vld [vmem:[%s201 + $0x1c0] sm:$0xff]
      %v279 = vld [vmem:[%s201 + $0x1c8] sm:$0xff]
      %v280 = vld [vmem:[%s201 + $0x1d0] sm:$0xff]
      %v281 = vld [vmem:[%s201 + $0x1d8] sm:$0xf]
      %v282 = vld [vmem:[%s201 + $0x1dc] sm:$0xff]
      %v283 = vld [vmem:[%s201 + $0x1e4] sm:$0xff]
      %v284 = vld [vmem:[%s201 + $0x1ec] sm:$0xff]
      %v285 = vld [vmem:[%s201 + $0x1f4] sm:$0xf]
      %v286 = vld [vmem:[%s201 + $0x1f8] sm:$0xff]
      %v287 = vld [vmem:[%s201 + $0x200] sm:$0xff]
      %v288 = vld [vmem:[%s201 + $0x208] sm:$0xff]
      %v289 = vld [vmem:[%s201 + $0x210] sm:$0xf]
      %v290 = vld [vmem:[%s201 + $0x214] sm:$0xff]
      %v291 = vld [vmem:[%s201 + $0x21c] sm:$0xff]
      %v292 = vld [vmem:[%s201 + $0x224] sm:$0xff]
      %v293 = vld [vmem:[%s201 + $0x22c] sm:$0xf]
      %v294 = vld [vmem:[%s201 + $0x230] sm:$0xff]
      %v295 = vld [vmem:[%s201 + $0x238] sm:$0xff]
      %v296 = vld [vmem:[%s201 + $0x240] sm:$0xff]
      %v297 = vld [vmem:[%s201 + $0x248] sm:$0xf]
      %v298 = vld [vmem:[%s201 + $0x24c] sm:$0xff]
      %v299 = vld [vmem:[%s201 + $0x254] sm:$0xff]
      %v300 = vld [vmem:[%s201 + $0x25c] sm:$0xff]
      %v301 = vld [vmem:[%s201 + $0x264] sm:$0xf]
      %v302 = vld [vmem:[%s201 + $0x268] sm:$0xff]
      %v303 = vld [vmem:[%s201 + $0x270] sm:$0xff]
      %v304 = vld [vmem:[%s201 + $0x278] sm:$0xff]
      %v305 = vld [vmem:[%s201 + $0x280] sm:$0xf]
      %v306 = vld [vmem:[%s201 + $0x284] sm:$0xff]
      %v307 = vld [vmem:[%s201 + $0x28c] sm:$0xff]
      %v308 = vld [vmem:[%s201 + $0x294] sm:$0xff]
      %v309 = vld [vmem:[%s201 + $0x29c] sm:$0xf]
      %v310 = vld [vmem:[%s201 + $0x2a0] sm:$0xff]
      %v311 = vld [vmem:[%s201 + $0x2a8] sm:$0xff]
      %v312 = vld [vmem:[%s201 + $0x2b0] sm:$0xff]
      %v313 = vld [vmem:[%s201 + $0x2b8] sm:$0xf]
      %v314 = vld [vmem:[%s201 + $0x2bc] sm:$0xff]
      %v315 = vld [vmem:[%s201 + $0x2c4] sm:$0xff]
      %v316 = vld [vmem:[%s201 + $0x2cc] sm:$0xff]
      %v317 = vld [vmem:[%s201 + $0x2d4] sm:$0xf]
      %v318 = vld [vmem:[%s201 + $0x2d8] sm:$0xff]
      %v319 = vld [vmem:[%s201 + $0x2e0] sm:$0xff]
      %v320 = vld [vmem:[%s201 + $0x2e8] sm:$0xff]
      %v321 = vld [vmem:[%s201 + $0x2f0] sm:$0xf]
      %v322 = vld [vmem:[%s201 + $0x2f4] sm:$0xff]
      %v323 = vld [vmem:[%s201 + $0x2fc] sm:$0xff]
      %v324 = vld [vmem:[%s201 + $0x304] sm:$0xff]
      %v325 = vld [vmem:[%s201 + $0x30c] sm:$0xf]
      %v326 = vld [vmem:[%s201 + $0x310] sm:$0xff]
      %v327 = vld [vmem:[%s201 + $0x318] sm:$0xff]
      %v328 = vld [vmem:[%s201 + $0x320] sm:$0xff]
      %v329 = vld [vmem:[%s201 + $0x328] sm:$0xf]
      %v330 = vld [vmem:[%s201 + $0x32c] sm:$0xff]
      %v331 = vld [vmem:[%s201 + $0x334] sm:$0xff]
      %v332 = vld [vmem:[%s201 + $0x33c] sm:$0xff]
      %v333 = vld [vmem:[%s201 + $0x344] sm:$0xf]
      %v334 = vld [vmem:[%s201 + $0x348] sm:$0xff]
      %v335 = vld [vmem:[%s201 + $0x350] sm:$0xff]
      %v336 = vld [vmem:[%s201 + $0x358] sm:$0xff]
      %v337 = vld [vmem:[%s201 + $0x360] sm:$0xf]
      %v338 = vld [vmem:[%s201 + $0x364] sm:$0xff]
      %v339 = vld [vmem:[%s201 + $0x36c] sm:$0xff]
      %v340 = vld [vmem:[%s201 + $0x374] sm:$0xff]
      %v341 = vld [vmem:[%s201 + $0x37c] sm:$0xf]
      %v342 = vld [vmem:[%s201 + $0x380] sm:$0xff]
      %v343 = vld [vmem:[%s201 + $0x388] sm:$0xff]
      %v344 = vld [vmem:[%s201 + $0x390] sm:$0xff]
      %v345 = vld [vmem:[%s201 + $0x398] sm:$0xf]
      %v346 = vld [vmem:[%s201 + $0x39c] sm:$0xff]
      %v347 = vld [vmem:[%s201 + $0x3a4] sm:$0xff]
      %v348 = vld [vmem:[%s201 + $0x3ac] sm:$0xff]
      %v349 = vld [vmem:[%s201 + $0x3b4] sm:$0xf]
      %v350 = vld [vmem:[%s201 + $0x3b8] sm:$0xff]
      %v351 = vld [vmem:[%s201 + $0x3c0] sm:$0xff]
      %v352 = vld [vmem:[%s201 + $0x3c8] sm:$0xff]
      %v353 = vld [vmem:[%s201 + $0x3d0] sm:$0xf]
      %v354 = vld [vmem:[%s201 + $0x3d4] sm:$0xff]
      %v355 = vld [vmem:[%s201 + $0x3dc] sm:$0xff]
      %v356 = vld [vmem:[%s201 + $0x3e4] sm:$0xff]
      %v357 = vld [vmem:[%s201 + $0x3ec] sm:$0xf]
      %v358 = vld [vmem:[%s201 + $0x3f0] sm:$0xff]
      %v359 = vld [vmem:[%s201 + $0x3f8] sm:$0xff]
      %v360 = vld [vmem:[%s201 + $0x400] sm:$0xff]
      %v361 = vld [vmem:[%s201 + $0x408] sm:$0xf]
      %v362 = vld [vmem:[%s201 + $0x40c] sm:$0xff]
      %v363 = vld [vmem:[%s201 + $0x414] sm:$0xff]
      %v364 = vld [vmem:[%s201 + $0x41c] sm:$0xff]
      %v365 = vld [vmem:[%s201 + $0x424] sm:$0xf]
      %v366 = vld [vmem:[%s201 + $0x428] sm:$0xff]
      %v367 = vld [vmem:[%s201 + $0x430] sm:$0xff]
      %v368 = vld [vmem:[%s201 + $0x438] sm:$0xff]
      %v369 = vld [vmem:[%s201 + $0x440] sm:$0xf]
      %v370 = vld [vmem:[%s201 + $0x444] sm:$0xff]
      %v371 = vld [vmem:[%s201 + $0x44c] sm:$0xff]
      %v372 = vld [vmem:[%s201 + $0x454] sm:$0xff]
      %v373 = vld [vmem:[%s201 + $0x45c] sm:$0xf]
      %v374 = vld [vmem:[%s1] sm:$0xf]
      %v375 = vld [vmem:[%s1 + $0x4] sm:$0xf]
      %v376 = vld [vmem:[%s1 + $0x8] sm:$0xf]
      %v377 = vld [vmem:[%s1 + $0xc] sm:$0xf]
      %v378 = vld [vmem:[%s1 + $0x10] sm:$0xf]
      %v379 = vld [vmem:[%s1 + $0x14] sm:$0xf]
      %v380 = vld [vmem:[%s1 + $0x18] sm:$0xf]
      %v381 = vld [vmem:[%s1 + $0x1c] sm:$0xf]
      %v382 = vld [vmem:[%s1 + $0x20] sm:$0xf]
      %v383 = vld [vmem:[%s1 + $0x24] sm:$0xf]
      %v384 = vld [vmem:[%s1 + $0x28] sm:$0xf]
      %v385 = vld [vmem:[%s1 + $0x2c] sm:$0xf]
      %v386 = vld [vmem:[%s1 + $0x30] sm:$0xf]
      %v387 = vld [vmem:[%s1 + $0x34] sm:$0xf]
      %v388 = vld [vmem:[%s1 + $0x38] sm:$0xf]
      %v389 = vld [vmem:[%s1 + $0x3c] sm:$0xf]
      %v390 = vld [vmem:[%s1 + $0x40] sm:$0xf]
      %v391 = vld [vmem:[%s1 + $0x44] sm:$0xf]
      %v392 = vld [vmem:[%s1 + $0x48] sm:$0xf]
      %v393 = vld [vmem:[%s1 + $0x4c] sm:$0xf]
      %v394 = vld [vmem:[%s1 + $0x50] sm:$0xf]
      %v395 = vld [vmem:[%s1 + $0x54] sm:$0xf]
      %v396 = vld [vmem:[%s1 + $0x58] sm:$0xf]
      %v397 = vld [vmem:[%s1 + $0x5c] sm:$0xf]
      %v398 = vld [vmem:[%s1 + $0x60] sm:$0xf]
      %v399 = vld [vmem:[%s1 + $0x64] sm:$0xf]
      %v400 = vld [vmem:[%s1 + $0x68] sm:$0xf]
      %v401 = vld [vmem:[%s1 + $0x6c] sm:$0xf]
      %v402 = vld [vmem:[%s1 + $0x70] sm:$0xf]
      %v403 = vld [vmem:[%s1 + $0x74] sm:$0xf]
      %v404 = vld [vmem:[%s1 + $0x78] sm:$0xf]
      %v405 = vld [vmem:[%s1 + $0x7c] sm:$0xf]
      %v406 = vld [vmem:[%s1 + $0x80] sm:$0xf]
      %v407 = vld [vmem:[%s1 + $0x84] sm:$0xf]
      %v408 = vld [vmem:[%s1 + $0x88] sm:$0xf]
      %v409 = vld [vmem:[%s1 + $0x8c] sm:$0xf]
      %v410 = vld [vmem:[%s1 + $0x90] sm:$0xf]
      %v411 = vld [vmem:[%s1 + $0x94] sm:$0xf]
      %v412 = vld [vmem:[%s1 + $0x98] sm:$0xf]
      %v413 = vld [vmem:[%s1 + $0x9c] sm:$0xf]
      %v414 = vld [vmem:[%s1 + $0xa0] sm:$0xf]
      %v415 = vld [vmem:[%s1 + $0xa4] sm:$0xf]
      %v416 = vld [vmem:[%s1 + $0xa8] sm:$0xf]
      %v417 = vld [vmem:[%s1 + $0xac] sm:$0xf]
      %v418 = vld [vmem:[%s1 + $0xb0] sm:$0xf]
      %v419 = vld [vmem:[%s1 + $0xb4] sm:$0xf]
      %v420 = vld [vmem:[%s1 + $0xb8] sm:$0xf]
      %v421 = vld [vmem:[%s1 + $0xbc] sm:$0xf]
      %v422 = vld [vmem:[%s1 + $0xc0] sm:$0xf]
      %v423 = vld [vmem:[%s1 + $0xc4] sm:$0xf]
      %v424 = vld [vmem:[%s1 + $0xc8] sm:$0xf]
      %v425 = vld [vmem:[%s1 + $0xcc] sm:$0xf]
      %v426 = vld [vmem:[%s1 + $0xd0] sm:$0xf]
      %v427 = vld [vmem:[%s1 + $0xd4] sm:$0xf]
      %v428 = vld [vmem:[%s1 + $0xd8] sm:$0xf]
      %v429 = vld [vmem:[%s1 + $0xdc] sm:$0xf]
      %v430 = vld [vmem:[%s1 + $0xe0] sm:$0xf]
      %v431 = vld [vmem:[%s1 + $0xe4] sm:$0xf]
      %v432 = vld [vmem:[%s1 + $0xe8] sm:$0xf]
      %v433 = vld [vmem:[%s1 + $0xec] sm:$0xf]
      %v434 = vld [vmem:[%s1 + $0xf0] sm:$0xf]
      %v435 = vld [vmem:[%s1 + $0xf4] sm:$0xf]
      %v436 = vld [vmem:[%s1 + $0xf8] sm:$0xf]
      %v437 = vld [vmem:[%s1 + $0xfc] sm:$0xf]
      %v438 = vld [vmem:[%s1 + $0x100] sm:$0xf]
      %v439 = vld [vmem:[%s1 + $0x104] sm:$0xf]
      %v440 = vld [vmem:[%s1 + $0x108] sm:$0xf]
      %v441 = vld [vmem:[%s1 + $0x10c] sm:$0xf]
      %v442 = vld [vmem:[%s1 + $0x110] sm:$0xf]
      %v443 = vld [vmem:[%s1 + $0x114] sm:$0xf]
      %v444 = vld [vmem:[%s1 + $0x118] sm:$0xf]
      %v445 = vld [vmem:[%s1 + $0x11c] sm:$0xf]
      %v446 = vld [vmem:[%s1 + $0x120] sm:$0xf]
      %v447 = vld [vmem:[%s1 + $0x124] sm:$0xf]
      %v448 = vld [vmem:[%s1 + $0x128] sm:$0xf]
      %v449 = vld [vmem:[%s1 + $0x12c] sm:$0xf]
      %v450 = vld [vmem:[%s1 + $0x130] sm:$0xf]
      %v451 = vld [vmem:[%s1 + $0x134] sm:$0xf]
      %v452 = vld [vmem:[%s1 + $0x138] sm:$0xf]
      %v453 = vld [vmem:[%s1 + $0x13c] sm:$0xf]
      %v454 = vld [vmem:[%s1 + $0x140] sm:$0xf]
      %v455 = vld [vmem:[%s1 + $0x144] sm:$0xf]
      %v456 = vld [vmem:[%s1 + $0x148] sm:$0xf]
      %v457 = vld [vmem:[%s1 + $0x14c] sm:$0xf]
      %v458 = vld [vmem:[%s1 + $0x150] sm:$0xf]
      %v459 = vld [vmem:[%s1 + $0x154] sm:$0xf]
      %v460 = vld [vmem:[%s1 + $0x158] sm:$0xf]
      %v461 = vld [vmem:[%s1 + $0x15c] sm:$0xf]
      %v462 = vld [vmem:[%s1 + $0x160] sm:$0xf]
      %v463 = vld [vmem:[%s1 + $0x164] sm:$0xf]
      %v464 = vld [vmem:[%s1 + $0x168] sm:$0xf]
      %v465 = vld [vmem:[%s1 + $0x16c] sm:$0xf]
      %v466 = vld [vmem:[%s1 + $0x170] sm:$0xf]
      %v467 = vld [vmem:[%s1 + $0x174] sm:$0xf]
      %v468 = vld [vmem:[%s1 + $0x178] sm:$0xf]
      %v469 = vld [vmem:[%s1 + $0x17c] sm:$0xf]
      %v470 = vld [vmem:[%s1 + $0x180] sm:$0xf]
      %v471 = vld [vmem:[%s1 + $0x184] sm:$0xf]
      %v472 = vld [vmem:[%s1 + $0x188] sm:$0xf]
      %v473 = vld [vmem:[%s1 + $0x18c] sm:$0xf]
      %v474 = vld [vmem:[%s1 + $0x190] sm:$0xf]
      %v475 = vld [vmem:[%s1 + $0x194] sm:$0xf]
      %v476 = vld [vmem:[%s1 + $0x198] sm:$0xf]
      %v477 = vld [vmem:[%s1 + $0x19c] sm:$0xf]
      %v478 = vld [vmem:[%s1 + $0x1a0] sm:$0xf]
      %v479 = vld [vmem:[%s1 + $0x1a4] sm:$0xf]
      %v480 = vld [vmem:[%s1 + $0x1a8] sm:$0xf]
      %v481 = vld [vmem:[%s1 + $0x1ac] sm:$0xf]
      %v482 = vld [vmem:[%s2] sm:$0x1]
      %v484 = vlaneseq
      %v485 = vshrl.u32 %v484, 7
      %v486 = vsub.s32 0, %v485
      %v487 = vrot.slane %v482, %v486
      %v649 = vunpack.c.l.b16 %v214
      %v650 = vunpack.c.h.b16 %v214
      %v651 = vunpack.c.l.b16 %v215
      %v652 = vunpack.c.h.b16 %v215
      %v653 = vunpack.c.l.b16 %v216
      %v654 = vunpack.c.h.b16 %v216
      %v655 = vunpack.c.l.b16 %v217
      %v656 = vunpack.c.l.b16 %v218
      %v657 = vunpack.c.h.b16 %v218
      %v658 = vunpack.c.l.b16 %v219
      %v659 = vunpack.c.h.b16 %v219
      %v660 = vunpack.c.l.b16 %v220
      %v661 = vunpack.c.h.b16 %v220
      %v662 = vunpack.c.l.b16 %v221
      %v663 = vunpack.c.l.b16 %v222
      %v664 = vunpack.c.h.b16 %v222
      %v665 = vunpack.c.l.b16 %v223
      %v666 = vunpack.c.h.b16 %v223
      %v667 = vunpack.c.l.b16 %v224
      %v668 = vunpack.c.h.b16 %v224
      %v669 = vunpack.c.l.b16 %v225
      %v670 = vunpack.c.l.b16 %v226
      %v671 = vunpack.c.h.b16 %v226
      %v672 = vunpack.c.l.b16 %v227
      %v673 = vunpack.c.h.b16 %v227
      %v674 = vunpack.c.l.b16 %v228
      %v675 = vunpack.c.h.b16 %v228
      %v676 = vunpack.c.l.b16 %v229
      %v677 = vunpack.c.l.b16 %v230
      %v678 = vunpack.c.h.b16 %v230
      %v679 = vunpack.c.l.b16 %v231
      %v680 = vunpack.c.h.b16 %v231
      %v681 = vunpack.c.l.b16 %v232
      %v682 = vunpack.c.h.b16 %v232
      %v683 = vunpack.c.l.b16 %v233
      %v684 = vunpack.c.l.b16 %v234
      %v685 = vunpack.c.h.b16 %v234
      %v686 = vunpack.c.l.b16 %v235
      %v687 = vunpack.c.h.b16 %v235
      %v688 = vunpack.c.l.b16 %v236
      %v689 = vunpack.c.h.b16 %v236
      %v690 = vunpack.c.l.b16 %v237
      %v691 = vunpack.c.l.b16 %v238
      %v692 = vunpack.c.h.b16 %v238
      %v693 = vunpack.c.l.b16 %v239
      %v694 = vunpack.c.h.b16 %v239
      %v695 = vunpack.c.l.b16 %v240
      %v696 = vunpack.c.h.b16 %v240
      %v697 = vunpack.c.l.b16 %v241
      %v698 = vunpack.c.l.b16 %v242
      %v699 = vunpack.c.h.b16 %v242
      %v700 = vunpack.c.l.b16 %v243
      %v701 = vunpack.c.h.b16 %v243
      %v702 = vunpack.c.l.b16 %v244
      %v703 = vunpack.c.h.b16 %v244
      %v704 = vunpack.c.l.b16 %v245
      %v705 = vunpack.c.l.b16 %v246
      %v706 = vunpack.c.h.b16 %v246
      %v707 = vunpack.c.l.b16 %v247
      %v708 = vunpack.c.h.b16 %v247
      %v709 = vunpack.c.l.b16 %v248
      %v710 = vunpack.c.h.b16 %v248
      %v711 = vunpack.c.l.b16 %v249
      %v712 = vunpack.c.l.b16 %v250
      %v713 = vunpack.c.h.b16 %v250
      %v714 = vunpack.c.l.b16 %v251
      %v715 = vunpack.c.h.b16 %v251
      %v716 = vunpack.c.l.b16 %v252
      %v717 = vunpack.c.h.b16 %v252
      %v718 = vunpack.c.l.b16 %v253
      %v719 = vunpack.c.l.b16 %v254
      %v720 = vunpack.c.h.b16 %v254
      %v721 = vunpack.c.l.b16 %v255
      %v722 = vunpack.c.h.b16 %v255
      %v723 = vunpack.c.l.b16 %v256
      %v724 = vunpack.c.h.b16 %v256
      %v725 = vunpack.c.l.b16 %v257
      %v726 = vunpack.c.l.b16 %v258
      %v727 = vunpack.c.h.b16 %v258
      %v728 = vunpack.c.l.b16 %v259
      %v729 = vunpack.c.h.b16 %v259
      %v730 = vunpack.c.l.b16 %v260
      %v731 = vunpack.c.h.b16 %v260
      %v732 = vunpack.c.l.b16 %v261
      %v733 = vunpack.c.l.b16 %v262
      %v734 = vunpack.c.h.b16 %v262
      %v735 = vunpack.c.l.b16 %v263
      %v736 = vunpack.c.h.b16 %v263
      %v737 = vunpack.c.l.b16 %v264
      %v738 = vunpack.c.h.b16 %v264
      %v739 = vunpack.c.l.b16 %v265
      %v740 = vunpack.c.l.b16 %v266
      %v741 = vunpack.c.h.b16 %v266
      %v742 = vunpack.c.l.b16 %v267
      %v743 = vunpack.c.h.b16 %v267
      %v744 = vunpack.c.l.b16 %v268
      %v745 = vunpack.c.h.b16 %v268
      %v746 = vunpack.c.l.b16 %v269
      %v747 = vunpack.c.l.b16 %v270
      %v748 = vunpack.c.h.b16 %v270
      %v749 = vunpack.c.l.b16 %v271
      %v750 = vunpack.c.h.b16 %v271
      %v751 = vunpack.c.l.b16 %v272
      %v752 = vunpack.c.h.b16 %v272
      %v753 = vunpack.c.l.b16 %v273
      %v754 = vunpack.c.l.b16 %v274
      %v755 = vunpack.c.h.b16 %v274
      %v756 = vunpack.c.l.b16 %v275
      %v757 = vunpack.c.h.b16 %v275
      %v758 = vunpack.c.l.b16 %v276
      %v759 = vunpack.c.h.b16 %v276
      %v760 = vunpack.c.l.b16 %v277
      %v761 = vunpack.c.l.b16 %v278
      %v762 = vunpack.c.h.b16 %v278
      %v763 = vunpack.c.l.b16 %v279
      %v764 = vunpack.c.h.b16 %v279
      %v765 = vunpack.c.l.b16 %v280
      %v766 = vunpack.c.h.b16 %v280
      %v767 = vunpack.c.l.b16 %v281
      %v768 = vunpack.c.l.b16 %v282
      %v769 = vunpack.c.h.b16 %v282
      %v770 = vunpack.c.l.b16 %v283
      %v771 = vunpack.c.h.b16 %v283
      %v772 = vunpack.c.l.b16 %v284
      %v773 = vunpack.c.h.b16 %v284
      %v774 = vunpack.c.l.b16 %v285
      %v775 = vunpack.c.l.b16 %v286
      %v776 = vunpack.c.h.b16 %v286
      %v777 = vunpack.c.l.b16 %v287
      %v778 = vunpack.c.h.b16 %v287
      %v779 = vunpack.c.l.b16 %v288
      %v780 = vunpack.c.h.b16 %v288
      %v781 = vunpack.c.l.b16 %v289
      %v782 = vunpack.c.l.b16 %v290
      %v783 = vunpack.c.h.b16 %v290
      %v784 = vunpack.c.l.b16 %v291
      %v785 = vunpack.c.h.b16 %v291
      %v786 = vunpack.c.l.b16 %v292
      %v787 = vunpack.c.h.b16 %v292
      %v788 = vunpack.c.l.b16 %v293
      %v789 = vunpack.c.l.b16 %v294
      %v790 = vunpack.c.h.b16 %v294
      %v791 = vunpack.c.l.b16 %v295
      %v792 = vunpack.c.h.b16 %v295
      %v793 = vunpack.c.l.b16 %v296
      %v794 = vunpack.c.h.b16 %v296
      %v795 = vunpack.c.l.b16 %v297
      %v796 = vunpack.c.l.b16 %v298
      %v797 = vunpack.c.h.b16 %v298
      %v798 = vunpack.c.l.b16 %v299
      %v799 = vunpack.c.h.b16 %v299
      %v800 = vunpack.c.l.b16 %v300
      %v801 = vunpack.c.h.b16 %v300
      %v802 = vunpack.c.l.b16 %v301
      %v803 = vunpack.c.l.b16 %v302
      %v804 = vunpack.c.h.b16 %v302
      %v805 = vunpack.c.l.b16 %v303
      %v806 = vunpack.c.h.b16 %v303
      %v807 = vunpack.c.l.b16 %v304
      %v808 = vunpack.c.h.b16 %v304
      %v809 = vunpack.c.l.b16 %v305
      %v810 = vunpack.c.l.b16 %v306
      %v811 = vunpack.c.h.b16 %v306
      %v812 = vunpack.c.l.b16 %v307
      %v813 = vunpack.c.h.b16 %v307
      %v814 = vunpack.c.l.b16 %v308
      %v815 = vunpack.c.h.b16 %v308
      %v816 = vunpack.c.l.b16 %v309
      %v817 = vunpack.c.l.b16 %v310
      %v818 = vunpack.c.h.b16 %v310
      %v819 = vunpack.c.l.b16 %v311
      %v820 = vunpack.c.h.b16 %v311
      %v821 = vunpack.c.l.b16 %v312
      %v822 = vunpack.c.h.b16 %v312
      %v823 = vunpack.c.l.b16 %v313
      %v824 = vunpack.c.l.b16 %v314
      %v825 = vunpack.c.h.b16 %v314
      %v826 = vunpack.c.l.b16 %v315
      %v827 = vunpack.c.h.b16 %v315
      %v828 = vunpack.c.l.b16 %v316
      %v829 = vunpack.c.h.b16 %v316
      %v830 = vunpack.c.l.b16 %v317
      %v831 = vunpack.c.l.b16 %v318
      %v832 = vunpack.c.h.b16 %v318
      %v833 = vunpack.c.l.b16 %v319
      %v834 = vunpack.c.h.b16 %v319
      %v835 = vunpack.c.l.b16 %v320
      %v836 = vunpack.c.h.b16 %v320
      %v837 = vunpack.c.l.b16 %v321
      %v838 = vunpack.c.l.b16 %v322
      %v839 = vunpack.c.h.b16 %v322
      %v840 = vunpack.c.l.b16 %v323
      %v841 = vunpack.c.h.b16 %v323
      %v842 = vunpack.c.l.b16 %v324
      %v843 = vunpack.c.h.b16 %v324
      %v844 = vunpack.c.l.b16 %v325
      %v845 = vunpack.c.l.b16 %v326
      %v846 = vunpack.c.h.b16 %v326
      %v847 = vunpack.c.l.b16 %v327
      %v848 = vunpack.c.h.b16 %v327
      %v849 = vunpack.c.l.b16 %v328
      %v850 = vunpack.c.h.b16 %v328
      %v851 = vunpack.c.l.b16 %v329
      %v852 = vunpack.c.l.b16 %v330
      %v853 = vunpack.c.h.b16 %v330
      %v854 = vunpack.c.l.b16 %v331
      %v855 = vunpack.c.h.b16 %v331
      %v856 = vunpack.c.l.b16 %v332
      %v857 = vunpack.c.h.b16 %v332
      %v858 = vunpack.c.l.b16 %v333
      %v859 = vunpack.c.l.b16 %v334
      %v860 = vunpack.c.h.b16 %v334
      %v861 = vunpack.c.l.b16 %v335
      %v862 = vunpack.c.h.b16 %v335
      %v863 = vunpack.c.l.b16 %v336
      %v864 = vunpack.c.h.b16 %v336
      %v865 = vunpack.c.l.b16 %v337
      %v866 = vunpack.c.l.b16 %v338
      %v867 = vunpack.c.h.b16 %v338
      %v868 = vunpack.c.l.b16 %v339
      %v869 = vunpack.c.h.b16 %v339
      %v870 = vunpack.c.l.b16 %v340
      %v871 = vunpack.c.h.b16 %v340
      %v872 = vunpack.c.l.b16 %v341
      %v873 = vunpack.c.l.b16 %v342
      %v874 = vunpack.c.h.b16 %v342
      %v875 = vunpack.c.l.b16 %v343
      %v876 = vunpack.c.h.b16 %v343
      %v877 = vunpack.c.l.b16 %v344
      %v878 = vunpack.c.h.b16 %v344
      %v879 = vunpack.c.l.b16 %v345
      %v880 = vunpack.c.l.b16 %v346
      %v881 = vunpack.c.h.b16 %v346
      %v882 = vunpack.c.l.b16 %v347
      %v883 = vunpack.c.h.b16 %v347
      %v884 = vunpack.c.l.b16 %v348
      %v885 = vunpack.c.h.b16 %v348
      %v886 = vunpack.c.l.b16 %v349
      %v887 = vunpack.c.l.b16 %v350
      %v888 = vunpack.c.h.b16 %v350
      %v889 = vunpack.c.l.b16 %v351
      %v890 = vunpack.c.h.b16 %v351
      %v891 = vunpack.c.l.b16 %v352
      %v892 = vunpack.c.h.b16 %v352
      %v893 = vunpack.c.l.b16 %v353
      %v894 = vunpack.c.l.b16 %v354
      %v895 = vunpack.c.h.b16 %v354
      %v896 = vunpack.c.l.b16 %v355
      %v897 = vunpack.c.h.b16 %v355
      %v898 = vunpack.c.l.b16 %v356
      %v899 = vunpack.c.h.b16 %v356
      %v900 = vunpack.c.l.b16 %v357
      %v901 = vunpack.c.l.b16 %v358
      %v902 = vunpack.c.h.b16 %v358
      %v903 = vunpack.c.l.b16 %v359
      %v904 = vunpack.c.h.b16 %v359
      %v905 = vunpack.c.l.b16 %v360
      %v906 = vunpack.c.h.b16 %v360
      %v907 = vunpack.c.l.b16 %v361
      %v908 = vunpack.c.l.b16 %v362
      %v909 = vunpack.c.h.b16 %v362
      %v910 = vunpack.c.l.b16 %v363
      %v911 = vunpack.c.h.b16 %v363
      %v912 = vunpack.c.l.b16 %v364
      %v913 = vunpack.c.h.b16 %v364
      %v914 = vunpack.c.l.b16 %v365
      %v915 = vunpack.c.l.b16 %v366
      %v916 = vunpack.c.h.b16 %v366
      %v917 = vunpack.c.l.b16 %v367
      %v918 = vunpack.c.h.b16 %v367
      %v919 = vunpack.c.l.b16 %v368
      %v920 = vunpack.c.h.b16 %v368
      %v921 = vunpack.c.l.b16 %v369
      %v922 = vunpack.c.l.b16 %v370
      %v923 = vunpack.c.h.b16 %v370
      %v924 = vunpack.c.l.b16 %v371
      %v925 = vunpack.c.h.b16 %v371
      %v926 = vunpack.c.l.b16 %v372
      %v927 = vunpack.c.h.b16 %v372
      %v928 = vunpack.c.l.b16 %v373
      %v929 = vpack.c.b16 %v656, %v649
      %v930 = vpack.c.b16 %v657, %v650
      %v931 = vpack.c.b16 %v658, %v651
      %v932 = vpack.c.b16 %v659, %v652
      %v933 = vpack.c.b16 %v660, %v653
      %v934 = vpack.c.b16 %v661, %v654
      %v935 = vpack.c.b16 %v662, %v655
      %v936 = vpack.c.b16 %v670, %v663
      %v937 = vpack.c.b16 %v671, %v664
      %v938 = vpack.c.b16 %v672, %v665
      %v939 = vpack.c.b16 %v673, %v666
      %v940 = vpack.c.b16 %v674, %v667
      %v941 = vpack.c.b16 %v675, %v668
      %v942 = vpack.c.b16 %v676, %v669
      %v943 = vpack.c.b16 %v684, %v677
      %v944 = vpack.c.b16 %v685, %v678
      %v945 = vpack.c.b16 %v686, %v679
      %v946 = vpack.c.b16 %v687, %v680
      %v947 = vpack.c.b16 %v688, %v681
      %v948 = vpack.c.b16 %v689, %v682
      %v949 = vpack.c.b16 %v690, %v683
      %v950 = vpack.c.b16 %v698, %v691
      %v951 = vpack.c.b16 %v699, %v692
      %v952 = vpack.c.b16 %v700, %v693
      %v953 = vpack.c.b16 %v701, %v694
      %v954 = vpack.c.b16 %v702, %v695
      %v955 = vpack.c.b16 %v703, %v696
      %v956 = vpack.c.b16 %v704, %v697
      %v957 = vpack.c.b16 %v712, %v705
      %v958 = vpack.c.b16 %v713, %v706
      %v959 = vpack.c.b16 %v714, %v707
      %v960 = vpack.c.b16 %v715, %v708
      %v961 = vpack.c.b16 %v716, %v709
      %v962 = vpack.c.b16 %v717, %v710
      %v963 = vpack.c.b16 %v718, %v711
      %v964 = vpack.c.b16 %v726, %v719
      %v965 = vpack.c.b16 %v727, %v720
      %v966 = vpack.c.b16 %v728, %v721
      %v967 = vpack.c.b16 %v729, %v722
      %v968 = vpack.c.b16 %v730, %v723
      %v969 = vpack.c.b16 %v731, %v724
      %v970 = vpack.c.b16 %v732, %v725
      %v971 = vpack.c.b16 %v740, %v733
      %v972 = vpack.c.b16 %v741, %v734
      %v973 = vpack.c.b16 %v742, %v735
      %v974 = vpack.c.b16 %v743, %v736
      %v975 = vpack.c.b16 %v744, %v737
      %v976 = vpack.c.b16 %v745, %v738
      %v977 = vpack.c.b16 %v746, %v739
      %v978 = vpack.c.b16 %v754, %v747
      %v979 = vpack.c.b16 %v755, %v748
      %v980 = vpack.c.b16 %v756, %v749
      %v981 = vpack.c.b16 %v757, %v750
      %v982 = vpack.c.b16 %v758, %v751
      %v983 = vpack.c.b16 %v759, %v752
      %v984 = vpack.c.b16 %v760, %v753
      %v985 = vpack.c.b16 %v768, %v761
      %v986 = vpack.c.b16 %v769, %v762
      %v987 = vpack.c.b16 %v770, %v763
      %v988 = vpack.c.b16 %v771, %v764
      %v989 = vpack.c.b16 %v772, %v765
      %v990 = vpack.c.b16 %v773, %v766
      %v991 = vpack.c.b16 %v774, %v767
      %v992 = vpack.c.b16 %v782, %v775
      %v993 = vpack.c.b16 %v783, %v776
      %v994 = vpack.c.b16 %v784, %v777
      %v995 = vpack.c.b16 %v785, %v778
      %v996 = vpack.c.b16 %v786, %v779
      %v997 = vpack.c.b16 %v787, %v780
      %v998 = vpack.c.b16 %v788, %v781
      %v999 = vpack.c.b16 %v796, %v789
      %v1000 = vpack.c.b16 %v797, %v790
      %v1001 = vpack.c.b16 %v798, %v791
      %v1002 = vpack.c.b16 %v799, %v792
      %v1003 = vpack.c.b16 %v800, %v793
      %v1004 = vpack.c.b16 %v801, %v794
      %v1005 = vpack.c.b16 %v802, %v795
      %v1006 = vpack.c.b16 %v810, %v803
      %v1007 = vpack.c.b16 %v811, %v804
      %v1008 = vpack.c.b16 %v812, %v805
      %v1009 = vpack.c.b16 %v813, %v806
      %v1010 = vpack.c.b16 %v814, %v807
      %v1011 = vpack.c.b16 %v815, %v808
      %v1012 = vpack.c.b16 %v816, %v809
      %v1013 = vpack.c.b16 %v824, %v817
      %v1014 = vpack.c.b16 %v825, %v818
      %v1015 = vpack.c.b16 %v826, %v819
      %v1016 = vpack.c.b16 %v827, %v820
      %v1017 = vpack.c.b16 %v828, %v821
      %v1018 = vpack.c.b16 %v829, %v822
      %v1019 = vpack.c.b16 %v830, %v823
      %v1020 = vpack.c.b16 %v838, %v831
      %v1021 = vpack.c.b16 %v839, %v832
      %v1022 = vpack.c.b16 %v840, %v833
      %v1023 = vpack.c.b16 %v841, %v834
      %v1024 = vpack.c.b16 %v842, %v835
      %v1025 = vpack.c.b16 %v843, %v836
      %v1026 = vpack.c.b16 %v844, %v837
      %v1027 = vpack.c.b16 %v852, %v845
      %v1028 = vpack.c.b16 %v853, %v846
      %v1029 = vpack.c.b16 %v854, %v847
      %v1030 = vpack.c.b16 %v855, %v848
      %v1031 = vpack.c.b16 %v856, %v849
      %v1032 = vpack.c.b16 %v857, %v850
      %v1033 = vpack.c.b16 %v858, %v851
      %v1034 = vpack.c.b16 %v866, %v859
      %v1035 = vpack.c.b16 %v867, %v860
      %v1036 = vpack.c.b16 %v868, %v861
      %v1037 = vpack.c.b16 %v869, %v862
      %v1038 = vpack.c.b16 %v870, %v863
      %v1039 = vpack.c.b16 %v871, %v864
      %v1040 = vpack.c.b16 %v872, %v865
      %v1041 = vpack.c.b16 %v880, %v873
      %v1042 = vpack.c.b16 %v881, %v874
      %v1043 = vpack.c.b16 %v882, %v875
      %v1044 = vpack.c.b16 %v883, %v876
      %v1045 = vpack.c.b16 %v884, %v877
      %v1046 = vpack.c.b16 %v885, %v878
      %v1047 = vpack.c.b16 %v886, %v879
      %v1048 = vpack.c.b16 %v894, %v887
      %v1049 = vpack.c.b16 %v895, %v888
      %v1050 = vpack.c.b16 %v896, %v889
      %v1051 = vpack.c.b16 %v897, %v890
      %v1052 = vpack.c.b16 %v898, %v891
      %v1053 = vpack.c.b16 %v899, %v892
      %v1054 = vpack.c.b16 %v900, %v893
      %v1055 = vpack.c.b16 %v908, %v901
      %v1056 = vpack.c.b16 %v909, %v902
      %v1057 = vpack.c.b16 %v910, %v903
      %v1058 = vpack.c.b16 %v911, %v904
      %v1059 = vpack.c.b16 %v912, %v905
      %v1060 = vpack.c.b16 %v913, %v906
      %v1061 = vpack.c.b16 %v914, %v907
      %v1062 = vpack.c.b16 %v922, %v915
      %v1063 = vpack.c.b16 %v923, %v916
      %v1064 = vpack.c.b16 %v924, %v917
      %v1065 = vpack.c.b16 %v925, %v918
      %v1066 = vpack.c.b16 %v926, %v919
      %v1067 = vpack.c.b16 %v927, %v920
      %v1068 = vpack.c.b16 %v928, %v921
      %v1297 = vunpack.c.l.b16 %v374
      %v1298 = vunpack.c.l.b16 %v375
      %v1299 = vunpack.c.l.b16 %v376
      %v1300 = vunpack.c.l.b16 %v377
      %v1301 = vunpack.c.l.b16 %v378
      %v1302 = vunpack.c.l.b16 %v379
      %v1303 = vunpack.c.l.b16 %v380
      %v1304 = vunpack.c.l.b16 %v381
      %v1305 = vunpack.c.l.b16 %v382
      %v1306 = vunpack.c.l.b16 %v383
      %v1307 = vunpack.c.l.b16 %v384
      %v1308 = vunpack.c.l.b16 %v385
      %v1309 = vunpack.c.l.b16 %v386
      %v1310 = vunpack.c.l.b16 %v387
      %v1311 = vunpack.c.l.b16 %v388
      %v1312 = vunpack.c.l.b16 %v389
      %v1313 = vunpack.c.l.b16 %v390
      %v1314 = vunpack.c.l.b16 %v391
      %v1315 = vunpack.c.l.b16 %v392
      %v1316 = vunpack.c.l.b16 %v393
      %v1317 = vunpack.c.l.b16 %v394
      %v1318 = vunpack.c.l.b16 %v395
      %v1319 = vunpack.c.l.b16 %v396
      %v1320 = vunpack.c.l.b16 %v397
      %v1321 = vunpack.c.l.b16 %v398
      %v1322 = vunpack.c.l.b16 %v399
      %v1323 = vunpack.c.l.b16 %v400
      %v1324 = vunpack.c.l.b16 %v401
      %v1325 = vunpack.c.l.b16 %v402
      %v1326 = vunpack.c.l.b16 %v403
      %v1327 = vunpack.c.l.b16 %v404
      %v1328 = vunpack.c.l.b16 %v405
      %v1329 = vunpack.c.l.b16 %v406
      %v1330 = vunpack.c.l.b16 %v407
      %v1331 = vunpack.c.l.b16 %v408
      %v1332 = vunpack.c.l.b16 %v409
      %v1333 = vunpack.c.l.b16 %v410
      %v1334 = vunpack.c.l.b16 %v411
      %v1335 = vunpack.c.l.b16 %v412
      %v1336 = vunpack.c.l.b16 %v413
      %v1337 = vunpack.c.l.b16 %v414
      %v1338 = vunpack.c.l.b16 %v415
      %v1339 = vunpack.c.l.b16 %v416
      %v1340 = vunpack.c.l.b16 %v417
      %v1341 = vunpack.c.l.b16 %v418
      %v1342 = vunpack.c.l.b16 %v419
      %v1343 = vunpack.c.l.b16 %v420
      %v1344 = vunpack.c.l.b16 %v421
      %v1345 = vunpack.c.l.b16 %v422
      %v1346 = vunpack.c.l.b16 %v423
      %v1347 = vunpack.c.l.b16 %v424
      %v1348 = vunpack.c.l.b16 %v425
      %v1349 = vunpack.c.l.b16 %v426
      %v1350 = vunpack.c.l.b16 %v427
      %v1351 = vunpack.c.l.b16 %v428
      %v1352 = vunpack.c.l.b16 %v429
      %v1353 = vunpack.c.l.b16 %v430
      %v1354 = vunpack.c.l.b16 %v431
      %v1355 = vunpack.c.l.b16 %v432
      %v1356 = vunpack.c.l.b16 %v433
      %v1357 = vunpack.c.l.b16 %v434
      %v1358 = vunpack.c.l.b16 %v435
      %v1359 = vunpack.c.l.b16 %v436
      %v1360 = vunpack.c.l.b16 %v437
      %v1361 = vunpack.c.l.b16 %v438
      %v1362 = vunpack.c.l.b16 %v439
      %v1363 = vunpack.c.l.b16 %v440
      %v1364 = vunpack.c.l.b16 %v441
      %v1365 = vunpack.c.l.b16 %v442
      %v1366 = vunpack.c.l.b16 %v443
      %v1367 = vunpack.c.l.b16 %v444
      %v1368 = vunpack.c.l.b16 %v445
      %v1369 = vunpack.c.l.b16 %v446
      %v1370 = vunpack.c.l.b16 %v447
      %v1371 = vunpack.c.l.b16 %v448
      %v1372 = vunpack.c.l.b16 %v449
      %v1373 = vunpack.c.l.b16 %v450
      %v1374 = vunpack.c.l.b16 %v451
      %v1375 = vunpack.c.l.b16 %v452
      %v1376 = vunpack.c.l.b16 %v453
      %v1377 = vunpack.c.l.b16 %v454
      %v1378 = vunpack.c.l.b16 %v455
      %v1379 = vunpack.c.l.b16 %v456
      %v1380 = vunpack.c.l.b16 %v457
      %v1381 = vunpack.c.l.b16 %v458
      %v1382 = vunpack.c.l.b16 %v459
      %v1383 = vunpack.c.l.b16 %v460
      %v1384 = vunpack.c.l.b16 %v461
      %v1385 = vunpack.c.l.b16 %v462
      %v1386 = vunpack.c.l.b16 %v463
      %v1387 = vunpack.c.l.b16 %v464
      %v1388 = vunpack.c.l.b16 %v465
      %v1389 = vunpack.c.l.b16 %v466
      %v1390 = vunpack.c.l.b16 %v467
      %v1391 = vunpack.c.l.b16 %v468
      %v1392 = vunpack.c.l.b16 %v469
      %v1393 = vunpack.c.l.b16 %v470
      %v1394 = vunpack.c.l.b16 %v471
      %v1395 = vunpack.c.l.b16 %v472
      %v1396 = vunpack.c.l.b16 %v473
      %v1397 = vunpack.c.l.b16 %v474
      %v1398 = vunpack.c.l.b16 %v475
      %v1399 = vunpack.c.l.b16 %v476
      %v1400 = vunpack.c.l.b16 %v477
      %v1401 = vunpack.c.l.b16 %v478
      %v1402 = vunpack.c.l.b16 %v479
      %v1403 = vunpack.c.l.b16 %v480
      %v1404 = vunpack.c.l.b16 %v481
      %v1405 = vpack.c.b16 %v1298, %v1297
      %v1406 = vpack.c.b16 %v1300, %v1299
      %v1407 = vpack.c.b16 %v1302, %v1301
      %v1408 = vpack.c.b16 %v1304, %v1303
      %v1409 = vpack.c.b16 %v1306, %v1305
      %v1410 = vpack.c.b16 %v1308, %v1307
      %v1411 = vpack.c.b16 %v1310, %v1309
      %v1412 = vpack.c.b16 %v1312, %v1311
      %v1413 = vpack.c.b16 %v1314, %v1313
      %v1414 = vpack.c.b16 %v1316, %v1315
      %v1415 = vpack.c.b16 %v1318, %v1317
      %v1416 = vpack.c.b16 %v1320, %v1319
      %v1417 = vpack.c.b16 %v1322, %v1321
      %v1418 = vpack.c.b16 %v1324, %v1323
      %v1419 = vpack.c.b16 %v1326, %v1325
      %v1420 = vpack.c.b16 %v1328, %v1327
      %v1421 = vpack.c.b16 %v1330, %v1329
      %v1422 = vpack.c.b16 %v1332, %v1331
      %v1423 = vpack.c.b16 %v1334, %v1333
      %v1424 = vpack.c.b16 %v1336, %v1335
      %v1425 = vpack.c.b16 %v1338, %v1337
      %v1426 = vpack.c.b16 %v1340, %v1339
      %v1427 = vpack.c.b16 %v1342, %v1341
      %v1428 = vpack.c.b16 %v1344, %v1343
      %v1429 = vpack.c.b16 %v1346, %v1345
      %v1430 = vpack.c.b16 %v1348, %v1347
      %v1431 = vpack.c.b16 %v1350, %v1349
      %v1432 = vpack.c.b16 %v1352, %v1351
      %v1433 = vpack.c.b16 %v1354, %v1353
      %v1434 = vpack.c.b16 %v1356, %v1355
      %v1435 = vpack.c.b16 %v1358, %v1357
      %v1436 = vpack.c.b16 %v1360, %v1359
      %v1437 = vpack.c.b16 %v1362, %v1361
      %v1438 = vpack.c.b16 %v1364, %v1363
      %v1439 = vpack.c.b16 %v1366, %v1365
      %v1440 = vpack.c.b16 %v1368, %v1367
      %v1441 = vpack.c.b16 %v1370, %v1369
      %v1442 = vpack.c.b16 %v1372, %v1371
      %v1443 = vpack.c.b16 %v1374, %v1373
      %v1444 = vpack.c.b16 %v1376, %v1375
      %v1445 = vpack.c.b16 %v1378, %v1377
      %v1446 = vpack.c.b16 %v1380, %v1379
      %v1447 = vpack.c.b16 %v1382, %v1381
      %v1448 = vpack.c.b16 %v1384, %v1383
      %v1449 = vpack.c.b16 %v1386, %v1385
      %v1450 = vpack.c.b16 %v1388, %v1387
      %v1451 = vpack.c.b16 %v1390, %v1389
      %v1452 = vpack.c.b16 %v1392, %v1391
      %v1453 = vpack.c.b16 %v1394, %v1393
      %v1454 = vpack.c.b16 %v1396, %v1395
      %v1455 = vpack.c.b16 %v1398, %v1397
      %v1456 = vpack.c.b16 %v1400, %v1399
      %v1457 = vpack.c.b16 %v1402, %v1401
      %v1458 = vpack.c.b16 %v1404, %v1403
      %vm1513 = vcmask 785408
      %v1515 = vsel %vm1513, %v935, 0
      %v1518 = vsel %vm1513, %v942, 0
      %v1521 = vsel %vm1513, %v949, 0
      %v1524 = vsel %vm1513, %v956, 0
      %v1527 = vsel %vm1513, %v963, 0
      %v1530 = vsel %vm1513, %v970, 0
      %v1533 = vsel %vm1513, %v977, 0
      %v1536 = vsel %vm1513, %v984, 0
      %v1539 = vsel %vm1513, %v991, 0
      %v1542 = vsel %vm1513, %v998, 0
      %v1545 = vsel %vm1513, %v1005, 0
      %v1548 = vsel %vm1513, %v1012, 0
      %v1551 = vsel %vm1513, %v1019, 0
      %v1554 = vsel %vm1513, %v1026, 0
      %v1557 = vsel %vm1513, %v1033, 0
      %v1560 = vsel %vm1513, %v1040, 0
      %v1563 = vsel %vm1513, %v1047, 0
      %v1566 = vsel %vm1513, %v1054, 0
      %v1569 = vsel %vm1513, %v1061, 0
      %v1572 = vsel %vm1513, %v1068, 0
      %1574 = vmatprep.subr.bf16.mxu0 0
      %1575 = vmatpush1.bf16.msra.mxu0 %v1412
      %1576 = vmatprep.subr.bf16.mxu0 0
      %1577 = vmatpush1.bf16.msra.mxu0 %v1411
      %1578 = vmatprep.subr.bf16.mxu0 0
      %1579 = vmatpush1.bf16.msra.mxu0 %v1410
      %1580 = vmatprep.subr.bf16.mxu0 0
      %1581 = vmatpush1.bf16.msra.mxu0 %v1409
      %1582 = vmatprep.subr.bf16.mxu0 0
      %1583 = vmatpush1.bf16.msra.mxu0 %v1408
      %1584 = vmatprep.subr.bf16.mxu0 0
      %1585 = vmatpush1.bf16.msra.mxu0 %v1407
      %1586 = vmatprep.subr.bf16.mxu0 0
      %1587 = vmatpush1.bf16.msra.mxu0 %v1406
      %1588 = vmatprep.subr.bf16.mxu0 0
      %1589 = vmatpush1.bf16.msra.mxu0 %v1405
      %1590 = vmatprep.subr.bf16.mxu0 0
      %1591 = vmatpush2.bf16.msra.mxu0 %v1420
      %1592 = vmatprep.subr.bf16.mxu0 0
      %1593 = vmatpush2.bf16.msra.mxu0 %v1419
      %1594 = vmatprep.subr.bf16.mxu0 0
      %1595 = vmatpush2.bf16.msra.mxu0 %v1418
      %1596 = vmatprep.subr.bf16.mxu0 0
      %1597 = vmatpush2.bf16.msra.mxu0 %v1417
      %1598 = vmatprep.subr.bf16.mxu0 0
      %1599 = vmatpush2.bf16.msra.mxu0 %v1416
      %1600 = vmatprep.subr.bf16.mxu0 0
      %1601 = vmatpush2.bf16.msra.mxu0 %v1415
      %1602 = vmatprep.subr.bf16.mxu0 0
      %1603 = vmatpush2.bf16.msra.mxu0 %v1414
      %1604 = vmatprep.subr.bf16.mxu0 0
      %1605 = vmatpush2.bf16.msra.mxu0 %v1413
      %1606 = vmatprep.mubr.bf16.mxu0 %v930
      %1607 = vmatmul.mubr.bf16.gmra.mxu0 %v929
      %v1608 = vpop.f32.mrf.mxu0
      %v1609 = vadd.f32 %v487, %v1608
      %v1610 = vpop.f32.mrf.mxu0
      %v1611 = vpop.f32.mrf.mxu0
      %v1612 = vadd.f32 %v487, %v1611
      %v1613 = vpop.f32.mrf.mxu0
      %1614 = vmatprep.mubr.bf16.mxu0 %v937
      %1615 = vmatmul.mubr.bf16.gmra.mxu0 %v936
      %v1616 = vpop.f32.mrf.mxu0
      %v1617 = vadd.f32 %v487, %v1616
      %v1618 = vpop.f32.mrf.mxu0
      %v1619 = vpop.f32.mrf.mxu0
      %v1620 = vadd.f32 %v487, %v1619
      %v1621 = vpop.f32.mrf.mxu0
      %1622 = vmatprep.mubr.bf16.mxu0 %v944
      %1623 = vmatmul.mubr.bf16.gmra.mxu0 %v943
      %v1624 = vpop.f32.mrf.mxu0
      %v1625 = vadd.f32 %v487, %v1624
      %v1626 = vpop.f32.mrf.mxu0
      %v1627 = vpop.f32.mrf.mxu0
      %v1628 = vadd.f32 %v487, %v1627
      %v1629 = vpop.f32.mrf.mxu0
      %1630 = vmatprep.mubr.bf16.mxu0 %v951
      %1631 = vmatmul.mubr.bf16.gmra.mxu0 %v950
      %v1632 = vpop.f32.mrf.mxu0
      %v1633 = vadd.f32 %v487, %v1632
      %v1634 = vpop.f32.mrf.mxu0
      %v1635 = vpop.f32.mrf.mxu0
      %v1636 = vadd.f32 %v487, %v1635
      %v1637 = vpop.f32.mrf.mxu0
      %1638 = vmatprep.mubr.bf16.mxu0 %v958
      %1639 = vmatmul.mubr.bf16.gmra.mxu0 %v957
      %v1640 = vpop.f32.mrf.mxu0
      %v1641 = vadd.f32 %v487, %v1640
      %v1642 = vpop.f32.mrf.mxu0
      %v1643 = vpop.f32.mrf.mxu0
      %v1644 = vadd.f32 %v487, %v1643
      %v1645 = vpop.f32.mrf.mxu0
      %1646 = vmatprep.mubr.bf16.mxu0 %v965
      %1647 = vmatmul.mubr.bf16.gmra.mxu0 %v964
      %v1648 = vpop.f32.mrf.mxu0
      %v1649 = vadd.f32 %v487, %v1648
      %v1650 = vpop.f32.mrf.mxu0
      %v1651 = vpop.f32.mrf.mxu0
      %v1652 = vadd.f32 %v487, %v1651
      %v1653 = vpop.f32.mrf.mxu0
      %1654 = vmatprep.mubr.bf16.mxu0 %v972
      %1655 = vmatmul.mubr.bf16.gmra.mxu0 %v971
      %v1656 = vpop.f32.mrf.mxu0
      %v1657 = vadd.f32 %v487, %v1656
      %v1658 = vpop.f32.mrf.mxu0
      %v1659 = vpop.f32.mrf.mxu0
      %v1660 = vadd.f32 %v487, %v1659
      %v1661 = vpop.f32.mrf.mxu0
      %1662 = vmatprep.mubr.bf16.mxu0 %v979
      %1663 = vmatmul.mubr.bf16.gmra.mxu0 %v978
      %v1664 = vpop.f32.mrf.mxu0
      %v1665 = vadd.f32 %v487, %v1664
      %v1666 = vpop.f32.mrf.mxu0
      %v1667 = vpop.f32.mrf.mxu0
      %v1668 = vadd.f32 %v487, %v1667
      %v1669 = vpop.f32.mrf.mxu0
      %1670 = vmatprep.mubr.bf16.mxu0 %v986
      %1671 = vmatmul.mubr.bf16.gmra.mxu0 %v985
      %v1672 = vpop.f32.mrf.mxu0
      %v1673 = vadd.f32 %v487, %v1672
      %v1674 = vpop.f32.mrf.mxu0
      %v1675 = vpop.f32.mrf.mxu0
      %v1676 = vadd.f32 %v487, %v1675
      %v1677 = vpop.f32.mrf.mxu0
      %1678 = vmatprep.mubr.bf16.mxu0 %v993
      %1679 = vmatmul.mubr.bf16.gmra.mxu0 %v992
      %v1680 = vpop.f32.mrf.mxu0
      %v1681 = vadd.f32 %v487, %v1680
      %v1682 = vpop.f32.mrf.mxu0
      %v1683 = vpop.f32.mrf.mxu0
      %v1684 = vadd.f32 %v487, %v1683
      %v1685 = vpop.f32.mrf.mxu0
      %1686 = vmatprep.mubr.bf16.mxu0 %v1000
      %1687 = vmatmul.mubr.bf16.gmra.mxu0 %v999
      %v1688 = vpop.f32.mrf.mxu0
      %v1689 = vadd.f32 %v487, %v1688
      %v1690 = vpop.f32.mrf.mxu0
      %v1691 = vpop.f32.mrf.mxu0
      %v1692 = vadd.f32 %v487, %v1691
      %v1693 = vpop.f32.mrf.mxu0
      %1694 = vmatprep.mubr.bf16.mxu0 %v1007
      %1695 = vmatmul.mubr.bf16.gmra.mxu0 %v1006
      %v1696 = vpop.f32.mrf.mxu0
      %v1697 = vadd.f32 %v487, %v1696
      %v1698 = vpop.f32.mrf.mxu0
      %v1699 = vpop.f32.mrf.mxu0
      %v1700 = vadd.f32 %v487, %v1699
      %v1701 = vpop.f32.mrf.mxu0
      %1702 = vmatprep.mubr.bf16.mxu0 %v1014
      %1703 = vmatmul.mubr.bf16.gmra.mxu0 %v1013
      %v1704 = vpop.f32.mrf.mxu0
      %v1705 = vadd.f32 %v487, %v1704
      %v1706 = vpop.f32.mrf.mxu0
      %v1707 = vpop.f32.mrf.mxu0
      %v1708 = vadd.f32 %v487, %v1707
      %v1709 = vpop.f32.mrf.mxu0
      %1710 = vmatprep.mubr.bf16.mxu0 %v1021
      %1711 = vmatmul.mubr.bf16.gmra.mxu0 %v1020
      %v1712 = vpop.f32.mrf.mxu0
      %v1713 = vadd.f32 %v487, %v1712
      %v1714 = vpop.f32.mrf.mxu0
      %v1715 = vpop.f32.mrf.mxu0
      %v1716 = vadd.f32 %v487, %v1715
      %v1717 = vpop.f32.mrf.mxu0
      %1718 = vmatprep.mubr.bf16.mxu0 %v1028
      %1719 = vmatmul.mubr.bf16.gmra.mxu0 %v1027
      %v1720 = vpop.f32.mrf.mxu0
      %v1721 = vadd.f32 %v487, %v1720
      %v1722 = vpop.f32.mrf.mxu0
      %v1723 = vpop.f32.mrf.mxu0
      %v1724 = vadd.f32 %v487, %v1723
      %v1725 = vpop.f32.mrf.mxu0
      %1726 = vmatprep.mubr.bf16.mxu0 %v1035
      %1727 = vmatmul.mubr.bf16.gmra.mxu0 %v1034
      %v1728 = vpop.f32.mrf.mxu0
      %v1729 = vadd.f32 %v487, %v1728
      %v1730 = vpop.f32.mrf.mxu0
      %v1731 = vpop.f32.mrf.mxu0
      %v1732 = vadd.f32 %v487, %v1731
      %v1733 = vpop.f32.mrf.mxu0
      %1734 = vmatprep.mubr.bf16.mxu0 %v1042
      %1735 = vmatmul.mubr.bf16.gmra.mxu0 %v1041
      %v1736 = vpop.f32.mrf.mxu0
      %v1737 = vadd.f32 %v487, %v1736
      %v1738 = vpop.f32.mrf.mxu0
      %v1739 = vpop.f32.mrf.mxu0
      %v1740 = vadd.f32 %v487, %v1739
      %v1741 = vpop.f32.mrf.mxu0
      %1742 = vmatprep.mubr.bf16.mxu0 %v1049
      %1743 = vmatmul.mubr.bf16.gmra.mxu0 %v1048
      %v1744 = vpop.f32.mrf.mxu0
      %v1745 = vadd.f32 %v487, %v1744
      %v1746 = vpop.f32.mrf.mxu0
      %v1747 = vpop.f32.mrf.mxu0
      %v1748 = vadd.f32 %v487, %v1747
      %v1749 = vpop.f32.mrf.mxu0
      %1750 = vmatprep.mubr.bf16.mxu0 %v1056
      %1751 = vmatmul.mubr.bf16.gmra.mxu0 %v1055
      %v1752 = vpop.f32.mrf.mxu0
      %v1753 = vadd.f32 %v487, %v1752
      %v1754 = vpop.f32.mrf.mxu0
      %v1755 = vpop.f32.mrf.mxu0
      %v1756 = vadd.f32 %v487, %v1755
      %v1757 = vpop.f32.mrf.mxu0
      %1758 = vmatprep.mubr.bf16.mxu0 %v1063
      %1759 = vmatmul.mubr.bf16.gmra.mxu0 %v1062
      %v1760 = vpop.f32.mrf.mxu0
      %v1761 = vadd.f32 %v487, %v1760
      %v1762 = vpop.f32.mrf.mxu0
      %v1763 = vpop.f32.mrf.mxu0
      %v1764 = vadd.f32 %v487, %v1763
      %v1765 = vpop.f32.mrf.mxu0
      %1766 = vdwg.mxu0
      %1767 = vmatprep.subr.bf16.mxu0 0
      %1768 = vmatpush1.bf16.msra.mxu0 %v1428
      %1769 = vmatprep.subr.bf16.mxu0 0
      %1770 = vmatpush1.bf16.msra.mxu0 %v1427
      %1771 = vmatprep.subr.bf16.mxu0 0
      %1772 = vmatpush1.bf16.msra.mxu0 %v1426
      %1773 = vmatprep.subr.bf16.mxu0 0
      %1774 = vmatpush1.bf16.msra.mxu0 %v1425
      %1775 = vmatprep.subr.bf16.mxu0 0
      %1776 = vmatpush1.bf16.msra.mxu0 %v1424
      %1777 = vmatprep.subr.bf16.mxu0 0
      %1778 = vmatpush1.bf16.msra.mxu0 %v1423
      %1779 = vmatprep.subr.bf16.mxu0 0
      %1780 = vmatpush1.bf16.msra.mxu0 %v1422
      %1781 = vmatprep.subr.bf16.mxu0 0
      %1782 = vmatpush1.bf16.msra.mxu0 %v1421
      %1783 = vmatprep.subr.bf16.mxu0 0
      %1784 = vmatpush2.bf16.msra.mxu0 %v1436
      %1785 = vmatprep.subr.bf16.mxu0 0
      %1786 = vmatpush2.bf16.msra.mxu0 %v1435
      %1787 = vmatprep.subr.bf16.mxu0 0
      %1788 = vmatpush2.bf16.msra.mxu0 %v1434
      %1789 = vmatprep.subr.bf16.mxu0 0
      %1790 = vmatpush2.bf16.msra.mxu0 %v1433
      %1791 = vmatprep.subr.bf16.mxu0 0
      %1792 = vmatpush2.bf16.msra.mxu0 %v1432
      %1793 = vmatprep.subr.bf16.mxu0 0
      %1794 = vmatpush2.bf16.msra.mxu0 %v1431
      %1795 = vmatprep.subr.bf16.mxu0 0
      %1796 = vmatpush2.bf16.msra.mxu0 %v1430
      %1797 = vmatprep.subr.bf16.mxu0 0
      %1798 = vmatpush2.bf16.msra.mxu0 %v1429
      %1799 = vmatprep.mubr.bf16.mxu0 %v932
      %1800 = vmatmul.mubr.bf16.gmra.mxu0 %v931
      %v1801 = vpop.f32.mrf.mxu0
      %v1802 = vadd.f32 %v1609, %v1801
      %v1803 = vpop.f32.mrf.mxu0
      %v1804 = vpop.f32.mrf.mxu0
      %v1805 = vadd.f32 %v1612, %v1804
      %v1806 = vpop.f32.mrf.mxu0
      %1807 = vmatprep.mubr.bf16.mxu0 %v939
      %1808 = vmatmul.mubr.bf16.gmra.mxu0 %v938
      %v1809 = vpop.f32.mrf.mxu0
      %v1810 = vadd.f32 %v1617, %v1809
      %v1811 = vpop.f32.mrf.mxu0
      %v1812 = vpop.f32.mrf.mxu0
      %v1813 = vadd.f32 %v1620, %v1812
      %v1814 = vpop.f32.mrf.mxu0
      %1815 = vmatprep.mubr.bf16.mxu0 %v946
      %1816 = vmatmul.mubr.bf16.gmra.mxu0 %v945
      %v1817 = vpop.f32.mrf.mxu0
      %v1818 = vadd.f32 %v1625, %v1817
      %v1819 = vpop.f32.mrf.mxu0
      %v1820 = vpop.f32.mrf.mxu0
      %v1821 = vadd.f32 %v1628, %v1820
      %v1822 = vpop.f32.mrf.mxu0
      %1823 = vmatprep.mubr.bf16.mxu0 %v953
      %1824 = vmatmul.mubr.bf16.gmra.mxu0 %v952
      %v1825 = vpop.f32.mrf.mxu0
      %v1826 = vadd.f32 %v1633, %v1825
      %v1827 = vpop.f32.mrf.mxu0
      %v1828 = vpop.f32.mrf.mxu0
      %v1829 = vadd.f32 %v1636, %v1828
      %v1830 = vpop.f32.mrf.mxu0
      %1831 = vmatprep.mubr.bf16.mxu0 %v960
      %1832 = vmatmul.mubr.bf16.gmra.mxu0 %v959
      %v1833 = vpop.f32.mrf.mxu0
      %v1834 = vadd.f32 %v1641, %v1833
      %v1835 = vpop.f32.mrf.mxu0
      %v1836 = vpop.f32.mrf.mxu0
      %v1837 = vadd.f32 %v1644, %v1836
      %v1838 = vpop.f32.mrf.mxu0
      %1839 = vmatprep.mubr.bf16.mxu0 %v967
      %1840 = vmatmul.mubr.bf16.gmra.mxu0 %v966
      %v1841 = vpop.f32.mrf.mxu0
      %v1842 = vadd.f32 %v1649, %v1841
      %v1843 = vpop.f32.mrf.mxu0
      %v1844 = vpop.f32.mrf.mxu0
      %v1845 = vadd.f32 %v1652, %v1844
      %v1846 = vpop.f32.mrf.mxu0
      %1847 = vmatprep.mubr.bf16.mxu0 %v974
      %1848 = vmatmul.mubr.bf16.gmra.mxu0 %v973
      %v1849 = vpop.f32.mrf.mxu0
      %v1850 = vadd.f32 %v1657, %v1849
      %v1851 = vpop.f32.mrf.mxu0
      %v1852 = vpop.f32.mrf.mxu0
      %v1853 = vadd.f32 %v1660, %v1852
      %v1854 = vpop.f32.mrf.mxu0
      %1855 = vmatprep.mubr.bf16.mxu0 %v981
      %1856 = vmatmul.mubr.bf16.gmra.mxu0 %v980
      %v1857 = vpop.f32.mrf.mxu0
      %v1858 = vadd.f32 %v1665, %v1857
      %v1859 = vpop.f32.mrf.mxu0
      %v1860 = vpop.f32.mrf.mxu0
      %v1861 = vadd.f32 %v1668, %v1860
      %v1862 = vpop.f32.mrf.mxu0
      %1863 = vmatprep.mubr.bf16.mxu0 %v988
      %1864 = vmatmul.mubr.bf16.gmra.mxu0 %v987
      %v1865 = vpop.f32.mrf.mxu0
      %v1866 = vadd.f32 %v1673, %v1865
      %v1867 = vpop.f32.mrf.mxu0
      %v1868 = vpop.f32.mrf.mxu0
      %v1869 = vadd.f32 %v1676, %v1868
      %v1870 = vpop.f32.mrf.mxu0
      %1871 = vmatprep.mubr.bf16.mxu0 %v995
      %1872 = vmatmul.mubr.bf16.gmra.mxu0 %v994
      %v1873 = vpop.f32.mrf.mxu0
      %v1874 = vadd.f32 %v1681, %v1873
      %v1875 = vpop.f32.mrf.mxu0
      %v1876 = vpop.f32.mrf.mxu0
      %v1877 = vadd.f32 %v1684, %v1876
      %v1878 = vpop.f32.mrf.mxu0
      %1879 = vmatprep.mubr.bf16.mxu0 %v1002
      %1880 = vmatmul.mubr.bf16.gmra.mxu0 %v1001
      %v1881 = vpop.f32.mrf.mxu0
      %v1882 = vadd.f32 %v1689, %v1881
      %v1883 = vpop.f32.mrf.mxu0
      %v1884 = vpop.f32.mrf.mxu0
      %v1885 = vadd.f32 %v1692, %v1884
      %v1886 = vpop.f32.mrf.mxu0
      %1887 = vmatprep.mubr.bf16.mxu0 %v1009
      %1888 = vmatmul.mubr.bf16.gmra.mxu0 %v1008
      %v1889 = vpop.f32.mrf.mxu0
      %v1890 = vadd.f32 %v1697, %v1889
      %v1891 = vpop.f32.mrf.mxu0
      %v1892 = vpop.f32.mrf.mxu0
      %v1893 = vadd.f32 %v1700, %v1892
      %v1894 = vpop.f32.mrf.mxu0
      %1895 = vmatprep.mubr.bf16.mxu0 %v1016
      %1896 = vmatmul.mubr.bf16.gmra.mxu0 %v1015
      %v1897 = vpop.f32.mrf.mxu0
      %v1898 = vadd.f32 %v1705, %v1897
      %v1899 = vpop.f32.mrf.mxu0
      %v1900 = vpop.f32.mrf.mxu0
      %v1901 = vadd.f32 %v1708, %v1900
      %v1902 = vpop.f32.mrf.mxu0
      %1903 = vmatprep.mubr.bf16.mxu0 %v1023
      %1904 = vmatmul.mubr.bf16.gmra.mxu0 %v1022
      %v1905 = vpop.f32.mrf.mxu0
      %v1906 = vadd.f32 %v1713, %v1905
      %v1907 = vpop.f32.mrf.mxu0
      %v1908 = vpop.f32.mrf.mxu0
      %v1909 = vadd.f32 %v1716, %v1908
      %v1910 = vpop.f32.mrf.mxu0
      %1911 = vmatprep.mubr.bf16.mxu0 %v1030
      %1912 = vmatmul.mubr.bf16.gmra.mxu0 %v1029
      %v1913 = vpop.f32.mrf.mxu0
      %v1914 = vadd.f32 %v1721, %v1913
      %v1915 = vpop.f32.mrf.mxu0
      %v1916 = vpop.f32.mrf.mxu0
      %v1917 = vadd.f32 %v1724, %v1916
      %v1918 = vpop.f32.mrf.mxu0
      %1919 = vmatprep.mubr.bf16.mxu0 %v1037
      %1920 = vmatmul.mubr.bf16.gmra.mxu0 %v1036
      %v1921 = vpop.f32.mrf.mxu0
      %v1922 = vadd.f32 %v1729, %v1921
      %v1923 = vpop.f32.mrf.mxu0
      %v1924 = vpop.f32.mrf.mxu0
      %v1925 = vadd.f32 %v1732, %v1924
      %v1926 = vpop.f32.mrf.mxu0
      %1927 = vmatprep.mubr.bf16.mxu0 %v1044
      %1928 = vmatmul.mubr.bf16.gmra.mxu0 %v1043
      %v1929 = vpop.f32.mrf.mxu0
      %v1930 = vadd.f32 %v1737, %v1929
      %v1931 = vpop.f32.mrf.mxu0
      %v1932 = vpop.f32.mrf.mxu0
      %v1933 = vadd.f32 %v1740, %v1932
      %v1934 = vpop.f32.mrf.mxu0
      %1935 = vmatprep.mubr.bf16.mxu0 %v1051
      %1936 = vmatmul.mubr.bf16.gmra.mxu0 %v1050
      %v1937 = vpop.f32.mrf.mxu0
      %v1938 = vadd.f32 %v1745, %v1937
      %v1939 = vpop.f32.mrf.mxu0
      %v1940 = vpop.f32.mrf.mxu0
      %v1941 = vadd.f32 %v1748, %v1940
      %v1942 = vpop.f32.mrf.mxu0
      %1943 = vmatprep.mubr.bf16.mxu0 %v1058
      %1944 = vmatmul.mubr.bf16.gmra.mxu0 %v1057
      %v1945 = vpop.f32.mrf.mxu0
      %v1946 = vadd.f32 %v1753, %v1945
      %v1947 = vpop.f32.mrf.mxu0
      %v1948 = vpop.f32.mrf.mxu0
      %v1949 = vadd.f32 %v1756, %v1948
      %v1950 = vpop.f32.mrf.mxu0
      %1951 = vmatprep.mubr.bf16.mxu0 %v1065
      %1952 = vmatmul.mubr.bf16.gmra.mxu0 %v1064
      %v1953 = vpop.f32.mrf.mxu0
      %v1954 = vadd.f32 %v1761, %v1953
      %v1955 = vpop.f32.mrf.mxu0
      %v1956 = vpop.f32.mrf.mxu0
      %v1957 = vadd.f32 %v1764, %v1956
      %v1958 = vpop.f32.mrf.mxu0
      %1959 = vdwg.mxu0
      %1960 = vmatprep.subr.bf16.mxu0 0
      %1961 = vmatpush1.bf16.msra.mxu0 %v1444
      %1962 = vmatprep.subr.bf16.mxu0 0
      %1963 = vmatpush1.bf16.msra.mxu0 %v1443
      %1964 = vmatprep.subr.bf16.mxu0 0
      %1965 = vmatpush1.bf16.msra.mxu0 %v1442
      %1966 = vmatprep.subr.bf16.mxu0 0
      %1967 = vmatpush1.bf16.msra.mxu0 %v1441
      %1968 = vmatprep.subr.bf16.mxu0 0
      %1969 = vmatpush1.bf16.msra.mxu0 %v1440
      %1970 = vmatprep.subr.bf16.mxu0 0
      %1971 = vmatpush1.bf16.msra.mxu0 %v1439
      %1972 = vmatprep.subr.bf16.mxu0 0
      %1973 = vmatpush1.bf16.msra.mxu0 %v1438
      %1974 = vmatprep.subr.bf16.mxu0 0
      %1975 = vmatpush1.bf16.msra.mxu0 %v1437
      %1976 = vmatprep.subr.bf16.mxu0 0
      %1977 = vmatpush2.bf16.msra.mxu0 %v1452
      %1978 = vmatprep.subr.bf16.mxu0 0
      %1979 = vmatpush2.bf16.msra.mxu0 %v1451
      %1980 = vmatprep.subr.bf16.mxu0 0
      %1981 = vmatpush2.bf16.msra.mxu0 %v1450
      %1982 = vmatprep.subr.bf16.mxu0 0
      %1983 = vmatpush2.bf16.msra.mxu0 %v1449
      %1984 = vmatprep.subr.bf16.mxu0 0
      %1985 = vmatpush2.bf16.msra.mxu0 %v1448
      %1986 = vmatprep.subr.bf16.mxu0 0
      %1987 = vmatpush2.bf16.msra.mxu0 %v1447
      %1988 = vmatprep.subr.bf16.mxu0 0
      %1989 = vmatpush2.bf16.msra.mxu0 %v1446
      %1990 = vmatprep.subr.bf16.mxu0 0
      %1991 = vmatpush2.bf16.msra.mxu0 %v1445
      %1992 = vmatprep.mubr.bf16.mxu0 %v934
      %1993 = vmatmul.mubr.bf16.gmra.mxu0 %v933
      %v1994 = vpop.f32.mrf.mxu0
      %v1995 = vadd.f32 %v1802, %v1994
      %v1996 = vpop.f32.mrf.mxu0
      %v1997 = vpop.f32.mrf.mxu0
      %v1998 = vadd.f32 %v1805, %v1997
      %v1999 = vpop.f32.mrf.mxu0
      %2000 = vmatprep.mubr.bf16.mxu0 %v941
      %2001 = vmatmul.mubr.bf16.gmra.mxu0 %v940
      %v2002 = vpop.f32.mrf.mxu0
      %v2003 = vadd.f32 %v1810, %v2002
      %v2004 = vpop.f32.mrf.mxu0
      %v2005 = vpop.f32.mrf.mxu0
      %v2006 = vadd.f32 %v1813, %v2005
      %v2007 = vpop.f32.mrf.mxu0
      %2008 = vmatprep.mubr.bf16.mxu0 %v948
      %2009 = vmatmul.mubr.bf16.gmra.mxu0 %v947
      %v2010 = vpop.f32.mrf.mxu0
      %v2011 = vadd.f32 %v1818, %v2010
      %v2012 = vpop.f32.mrf.mxu0
      %v2013 = vpop.f32.mrf.mxu0
      %v2014 = vadd.f32 %v1821, %v2013
      %v2015 = vpop.f32.mrf.mxu0
      %2016 = vmatprep.mubr.bf16.mxu0 %v955
      %2017 = vmatmul.mubr.bf16.gmra.mxu0 %v954
      %v2018 = vpop.f32.mrf.mxu0
      %v2019 = vadd.f32 %v1826, %v2018
      %v2020 = vpop.f32.mrf.mxu0
      %v2021 = vpop.f32.mrf.mxu0
      %v2022 = vadd.f32 %v1829, %v2021
      %v2023 = vpop.f32.mrf.mxu0
      %2024 = vmatprep.mubr.bf16.mxu0 %v962
      %2025 = vmatmul.mubr.bf16.gmra.mxu0 %v961
      %v2026 = vpop.f32.mrf.mxu0
      %v2027 = vadd.f32 %v1834, %v2026
      %v2028 = vpop.f32.mrf.mxu0
      %v2029 = vpop.f32.mrf.mxu0
      %v2030 = vadd.f32 %v1837, %v2029
      %v2031 = vpop.f32.mrf.mxu0
      %2032 = vmatprep.mubr.bf16.mxu0 %v969
      %2033 = vmatmul.mubr.bf16.gmra.mxu0 %v968
      %v2034 = vpop.f32.mrf.mxu0
      %v2035 = vadd.f32 %v1842, %v2034
      %v2036 = vpop.f32.mrf.mxu0
      %v2037 = vpop.f32.mrf.mxu0
      %v2038 = vadd.f32 %v1845, %v2037
      %v2039 = vpop.f32.mrf.mxu0
      %2040 = vmatprep.mubr.bf16.mxu0 %v976
      %2041 = vmatmul.mubr.bf16.gmra.mxu0 %v975
      %v2042 = vpop.f32.mrf.mxu0
      %v2043 = vadd.f32 %v1850, %v2042
      %v2044 = vpop.f32.mrf.mxu0
      %v2045 = vpop.f32.mrf.mxu0
      %v2046 = vadd.f32 %v1853, %v2045
      %v2047 = vpop.f32.mrf.mxu0
      %2048 = vmatprep.mubr.bf16.mxu0 %v983
      %2049 = vmatmul.mubr.bf16.gmra.mxu0 %v982
      %v2050 = vpop.f32.mrf.mxu0
      %v2051 = vadd.f32 %v1858, %v2050
      %v2052 = vpop.f32.mrf.mxu0
      %v2053 = vpop.f32.mrf.mxu0
      %v2054 = vadd.f32 %v1861, %v2053
      %v2055 = vpop.f32.mrf.mxu0
      %2056 = vmatprep.mubr.bf16.mxu0 %v990
      %2057 = vmatmul.mubr.bf16.gmra.mxu0 %v989
      %v2058 = vpop.f32.mrf.mxu0
      %v2059 = vadd.f32 %v1866, %v2058
      %v2060 = vpop.f32.mrf.mxu0
      %v2061 = vpop.f32.mrf.mxu0
      %v2062 = vadd.f32 %v1869, %v2061
      %v2063 = vpop.f32.mrf.mxu0
      %2064 = vmatprep.mubr.bf16.mxu0 %v997
      %2065 = vmatmul.mubr.bf16.gmra.mxu0 %v996
      %v2066 = vpop.f32.mrf.mxu0
      %v2067 = vadd.f32 %v1874, %v2066
      %v2068 = vpop.f32.mrf.mxu0
      %v2069 = vpop.f32.mrf.mxu0
      %v2070 = vadd.f32 %v1877, %v2069
      %v2071 = vpop.f32.mrf.mxu0
      %2072 = vmatprep.mubr.bf16.mxu0 %v1004
      %2073 = vmatmul.mubr.bf16.gmra.mxu0 %v1003
      %v2074 = vpop.f32.mrf.mxu0
      %v2075 = vadd.f32 %v1882, %v2074
      %v2076 = vpop.f32.mrf.mxu0
      %v2077 = vpop.f32.mrf.mxu0
      %v2078 = vadd.f32 %v1885, %v2077
      %v2079 = vpop.f32.mrf.mxu0
      %2080 = vmatprep.mubr.bf16.mxu0 %v1011
      %2081 = vmatmul.mubr.bf16.gmra.mxu0 %v1010
      %v2082 = vpop.f32.mrf.mxu0
      %v2083 = vadd.f32 %v1890, %v2082
      %v2084 = vpop.f32.mrf.mxu0
      %v2085 = vpop.f32.mrf.mxu0
      %v2086 = vadd.f32 %v1893, %v2085
      %v2087 = vpop.f32.mrf.mxu0
      %2088 = vmatprep.mubr.bf16.mxu0 %v1018
      %2089 = vmatmul.mubr.bf16.gmra.mxu0 %v1017
      %v2090 = vpop.f32.mrf.mxu0
      %v2091 = vadd.f32 %v1898, %v2090
      %v2092 = vpop.f32.mrf.mxu0
      %v2093 = vpop.f32.mrf.mxu0
      %v2094 = vadd.f32 %v1901, %v2093
      %v2095 = vpop.f32.mrf.mxu0
      %2096 = vmatprep.mubr.bf16.mxu0 %v1025
      %2097 = vmatmul.mubr.bf16.gmra.mxu0 %v1024
      %v2098 = vpop.f32.mrf.mxu0
      %v2099 = vadd.f32 %v1906, %v2098
      %v2100 = vpop.f32.mrf.mxu0
      %v2101 = vpop.f32.mrf.mxu0
      %v2102 = vadd.f32 %v1909, %v2101
      %v2103 = vpop.f32.mrf.mxu0
      %2104 = vmatprep.mubr.bf16.mxu0 %v1032
      %2105 = vmatmul.mubr.bf16.gmra.mxu0 %v1031
      %v2106 = vpop.f32.mrf.mxu0
      %v2107 = vadd.f32 %v1914, %v2106
      %v2108 = vpop.f32.mrf.mxu0
      %v2109 = vpop.f32.mrf.mxu0
      %v2110 = vadd.f32 %v1917, %v2109
      %v2111 = vpop.f32.mrf.mxu0
      %2112 = vmatprep.mubr.bf16.mxu0 %v1039
      %2113 = vmatmul.mubr.bf16.gmra.mxu0 %v1038
      %v2114 = vpop.f32.mrf.mxu0
      %v2115 = vadd.f32 %v1922, %v2114
      %v2116 = vpop.f32.mrf.mxu0
      %v2117 = vpop.f32.mrf.mxu0
      %v2118 = vadd.f32 %v1925, %v2117
      %v2119 = vpop.f32.mrf.mxu0
      %2120 = vmatprep.mubr.bf16.mxu0 %v1046
      %2121 = vmatmul.mubr.bf16.gmra.mxu0 %v1045
      %v2122 = vpop.f32.mrf.mxu0
      %v2123 = vadd.f32 %v1930, %v2122
      %v2124 = vpop.f32.mrf.mxu0
      %v2125 = vpop.f32.mrf.mxu0
      %v2126 = vadd.f32 %v1933, %v2125
      %v2127 = vpop.f32.mrf.mxu0
      %2128 = vmatprep.mubr.bf16.mxu0 %v1053
      %2129 = vmatmul.mubr.bf16.gmra.mxu0 %v1052
      %v2130 = vpop.f32.mrf.mxu0
      %v2131 = vadd.f32 %v1938, %v2130
      %v2132 = vpop.f32.mrf.mxu0
      %v2133 = vpop.f32.mrf.mxu0
      %v2134 = vadd.f32 %v1941, %v2133
      %v2135 = vpop.f32.mrf.mxu0
      %2136 = vmatprep.mubr.bf16.mxu0 %v1060
      %2137 = vmatmul.mubr.bf16.gmra.mxu0 %v1059
      %v2138 = vpop.f32.mrf.mxu0
      %v2139 = vadd.f32 %v1946, %v2138
      %v2140 = vpop.f32.mrf.mxu0
      %v2141 = vpop.f32.mrf.mxu0
      %v2142 = vadd.f32 %v1949, %v2141
      %v2143 = vpop.f32.mrf.mxu0
      %2144 = vmatprep.mubr.bf16.mxu0 %v1067
      %2145 = vmatmul.mubr.bf16.gmra.mxu0 %v1066
      %v2146 = vpop.f32.mrf.mxu0
      %v2147 = vadd.f32 %v1954, %v2146
      %v2148 = vpop.f32.mrf.mxu0
      %v2149 = vpop.f32.mrf.mxu0
      %v2150 = vadd.f32 %v1957, %v2149
      %v2151 = vpop.f32.mrf.mxu0
      %2152 = vdwg.mxu0
      %2153 = vmatprep.subr.bf16.mxu0 0
      %2154 = vmatpush1.bf16.msra.mxu0 0
      %2155 = vmatprep.subr.bf16.mxu0 0
      %2156 = vmatpush1.bf16.msra.mxu0 0
      %2157 = vmatprep.subr.bf16.mxu0 0
      %2158 = vmatpush1.bf16.msra.mxu0 %v1458
      %2159 = vmatprep.subr.bf16.mxu0 0
      %2160 = vmatpush1.bf16.msra.mxu0 %v1457
      %2161 = vmatprep.subr.bf16.mxu0 0
      %2162 = vmatpush1.bf16.msra.mxu0 %v1456
      %2163 = vmatprep.subr.bf16.mxu0 0
      %2164 = vmatpush1.bf16.msra.mxu0 %v1455
      %2165 = vmatprep.subr.bf16.mxu0 0
      %2166 = vmatpush1.bf16.msra.mxu0 %v1454
      %2167 = vmatprep.subr.bf16.mxu0 0
      %2168 = vmatpush1.bf16.msra.mxu0 %v1453
      %2169 = vmatprep.subr.bf16.mxu0 0
      %2170 = vmatpush2.bf16.msra.mxu0 0
      %2171 = vmatprep.subr.bf16.mxu0 0
      %2172 = vmatpush2.bf16.msra.mxu0 0
      %2173 = vmatprep.subr.bf16.mxu0 0
      %2174 = vmatpush2.bf16.msra.mxu0 0
      %2175 = vmatprep.subr.bf16.mxu0 0
      %2176 = vmatpush2.bf16.msra.mxu0 0
      %2177 = vmatprep.subr.bf16.mxu0 0
      %2178 = vmatpush2.bf16.msra.mxu0 0
      %2179 = vmatprep.subr.bf16.mxu0 0
      %2180 = vmatpush2.bf16.msra.mxu0 0
      %2181 = vmatprep.subr.bf16.mxu0 0
      %2182 = vmatpush2.bf16.msra.mxu0 0
      %2183 = vmatprep.subr.bf16.mxu0 0
      %2184 = vmatpush2.bf16.msra.mxu0 0
      %2185 = vmatprep.mubr.bf16.mxu0 0
      %2186 = vmatmul.mubr.bf16.gmra.mxu0 %v1515
      %v2187 = vpop.f32.mrf.mxu0
      %v2188 = vadd.f32 %v1995, %v2187
      %v2189 = vpop.f32.mrf.mxu0
      %v2190 = vpop.f32.mrf.mxu0
      %v2191 = vadd.f32 %v1998, %v2190
      %v2192 = vpop.f32.mrf.mxu0
      %2193 = vmatprep.mubr.bf16.mxu0 0
      %2194 = vmatmul.mubr.bf16.gmra.mxu0 %v1518
      %v2195 = vpop.f32.mrf.mxu0
      %v2196 = vadd.f32 %v2003, %v2195
      %v2197 = vpop.f32.mrf.mxu0
      %v2198 = vpop.f32.mrf.mxu0
      %v2199 = vadd.f32 %v2006, %v2198
      %v2200 = vpop.f32.mrf.mxu0
      %2201 = vmatprep.mubr.bf16.mxu0 0
      %2202 = vmatmul.mubr.bf16.gmra.mxu0 %v1521
      %v2203 = vpop.f32.mrf.mxu0
      %v2204 = vadd.f32 %v2011, %v2203
      %v2205 = vpop.f32.mrf.mxu0
      %v2206 = vpop.f32.mrf.mxu0
      %v2207 = vadd.f32 %v2014, %v2206
      %v2208 = vpop.f32.mrf.mxu0
      %2209 = vmatprep.mubr.bf16.mxu0 0
      %2210 = vmatmul.mubr.bf16.gmra.mxu0 %v1524
      %v2211 = vpop.f32.mrf.mxu0
      %v2212 = vadd.f32 %v2019, %v2211
      %v2213 = vpop.f32.mrf.mxu0
      %v2214 = vpop.f32.mrf.mxu0
      %v2215 = vadd.f32 %v2022, %v2214
      %v2216 = vpop.f32.mrf.mxu0
      %2217 = vmatprep.mubr.bf16.mxu0 0
      %2218 = vmatmul.mubr.bf16.gmra.mxu0 %v1527
      %v2219 = vpop.f32.mrf.mxu0
      %v2220 = vadd.f32 %v2027, %v2219
      %v2221 = vpop.f32.mrf.mxu0
      %v2222 = vpop.f32.mrf.mxu0
      %v2223 = vadd.f32 %v2030, %v2222
      %v2224 = vpop.f32.mrf.mxu0
      %2225 = vmatprep.mubr.bf16.mxu0 0
      %2226 = vmatmul.mubr.bf16.gmra.mxu0 %v1530
      %v2227 = vpop.f32.mrf.mxu0
      %v2228 = vadd.f32 %v2035, %v2227
      %v2229 = vpop.f32.mrf.mxu0
      %v2230 = vpop.f32.mrf.mxu0
      %v2231 = vadd.f32 %v2038, %v2230
      %v2232 = vpop.f32.mrf.mxu0
      %2233 = vmatprep.mubr.bf16.mxu0 0
      %2234 = vmatmul.mubr.bf16.gmra.mxu0 %v1533
      %v2235 = vpop.f32.mrf.mxu0
      %v2236 = vadd.f32 %v2043, %v2235
      %v2237 = vpop.f32.mrf.mxu0
      %v2238 = vpop.f32.mrf.mxu0
      %v2239 = vadd.f32 %v2046, %v2238
      %v2240 = vpop.f32.mrf.mxu0
      %2241 = vmatprep.mubr.bf16.mxu0 0
      %2242 = vmatmul.mubr.bf16.gmra.mxu0 %v1536
      %v2243 = vpop.f32.mrf.mxu0
      %v2244 = vadd.f32 %v2051, %v2243
      %v2245 = vpop.f32.mrf.mxu0
      %v2246 = vpop.f32.mrf.mxu0
      %v2247 = vadd.f32 %v2054, %v2246
      %v2248 = vpop.f32.mrf.mxu0
      %2249 = vmatprep.mubr.bf16.mxu0 0
      %2250 = vmatmul.mubr.bf16.gmra.mxu0 %v1539
      %v2251 = vpop.f32.mrf.mxu0
      %v2252 = vadd.f32 %v2059, %v2251
      %v2253 = vpop.f32.mrf.mxu0
      %v2254 = vpop.f32.mrf.mxu0
      %v2255 = vadd.f32 %v2062, %v2254
      %v2256 = vpop.f32.mrf.mxu0
      %2257 = vmatprep.mubr.bf16.mxu0 0
      %2258 = vmatmul.mubr.bf16.gmra.mxu0 %v1542
      %v2259 = vpop.f32.mrf.mxu0
      %v2260 = vadd.f32 %v2067, %v2259
      %v2261 = vpop.f32.mrf.mxu0
      %v2262 = vpop.f32.mrf.mxu0
      %v2263 = vadd.f32 %v2070, %v2262
      %v2264 = vpop.f32.mrf.mxu0
      %2265 = vmatprep.mubr.bf16.mxu0 0
      %2266 = vmatmul.mubr.bf16.gmra.mxu0 %v1545
      %v2267 = vpop.f32.mrf.mxu0
      %v2268 = vadd.f32 %v2075, %v2267
      %v2269 = vpop.f32.mrf.mxu0
      %v2270 = vpop.f32.mrf.mxu0
      %v2271 = vadd.f32 %v2078, %v2270
      %v2272 = vpop.f32.mrf.mxu0
      %2273 = vmatprep.mubr.bf16.mxu0 0
      %2274 = vmatmul.mubr.bf16.gmra.mxu0 %v1548
      %v2275 = vpop.f32.mrf.mxu0
      %v2276 = vadd.f32 %v2083, %v2275
      %v2277 = vpop.f32.mrf.mxu0
      %v2278 = vpop.f32.mrf.mxu0
      %v2279 = vadd.f32 %v2086, %v2278
      %v2280 = vpop.f32.mrf.mxu0
      %2281 = vmatprep.mubr.bf16.mxu0 0
      %2282 = vmatmul.mubr.bf16.gmra.mxu0 %v1551
      %v2283 = vpop.f32.mrf.mxu0
      %v2284 = vadd.f32 %v2091, %v2283
      %v2285 = vpop.f32.mrf.mxu0
      %v2286 = vpop.f32.mrf.mxu0
      %v2287 = vadd.f32 %v2094, %v2286
      %v2288 = vpop.f32.mrf.mxu0
      %2289 = vmatprep.mubr.bf16.mxu0 0
      %2290 = vmatmul.mubr.bf16.gmra.mxu0 %v1554
      %v2291 = vpop.f32.mrf.mxu0
      %v2292 = vadd.f32 %v2099, %v2291
      %v2293 = vpop.f32.mrf.mxu0
      %v2294 = vpop.f32.mrf.mxu0
      %v2295 = vadd.f32 %v2102, %v2294
      %v2296 = vpop.f32.mrf.mxu0
      %2297 = vmatprep.mubr.bf16.mxu0 0
      %2298 = vmatmul.mubr.bf16.gmra.mxu0 %v1557
      %v2299 = vpop.f32.mrf.mxu0
      %v2300 = vadd.f32 %v2107, %v2299
      %v2301 = vpop.f32.mrf.mxu0
      %v2302 = vpop.f32.mrf.mxu0
      %v2303 = vadd.f32 %v2110, %v2302
      %v2304 = vpop.f32.mrf.mxu0
      %2305 = vmatprep.mubr.bf16.mxu0 0
      %2306 = vmatmul.mubr.bf16.gmra.mxu0 %v1560
      %v2307 = vpop.f32.mrf.mxu0
      %v2308 = vadd.f32 %v2115, %v2307
      %v2309 = vpop.f32.mrf.mxu0
      %v2310 = vpop.f32.mrf.mxu0
      %v2311 = vadd.f32 %v2118, %v2310
      %v2312 = vpop.f32.mrf.mxu0
      %2313 = vmatprep.mubr.bf16.mxu0 0
      %2314 = vmatmul.mubr.bf16.gmra.mxu0 %v1563
      %v2315 = vpop.f32.mrf.mxu0
      %v2316 = vadd.f32 %v2123, %v2315
      %v2317 = vpop.f32.mrf.mxu0
      %v2318 = vpop.f32.mrf.mxu0
      %v2319 = vadd.f32 %v2126, %v2318
      %v2320 = vpop.f32.mrf.mxu0
      %2321 = vmatprep.mubr.bf16.mxu0 0
      %2322 = vmatmul.mubr.bf16.gmra.mxu0 %v1566
      %v2323 = vpop.f32.mrf.mxu0
      %v2324 = vadd.f32 %v2131, %v2323
      %v2325 = vpop.f32.mrf.mxu0
      %v2326 = vpop.f32.mrf.mxu0
      %v2327 = vadd.f32 %v2134, %v2326
      %v2328 = vpop.f32.mrf.mxu0
      %2329 = vmatprep.mubr.bf16.mxu0 0
      %2330 = vmatmul.mubr.bf16.gmra.mxu0 %v1569
      %v2331 = vpop.f32.mrf.mxu0
      %v2332 = vadd.f32 %v2139, %v2331
      %v2333 = vpop.f32.mrf.mxu0
      %v2334 = vpop.f32.mrf.mxu0
      %v2335 = vadd.f32 %v2142, %v2334
      %v2336 = vpop.f32.mrf.mxu0
      %2337 = vmatprep.mubr.bf16.mxu0 0
      %2338 = vmatmul.mubr.bf16.gmra.mxu0 %v1572
      %v2339 = vpop.f32.mrf.mxu0
      %v2340 = vadd.f32 %v2147, %v2339
      %v2341 = vpop.f32.mrf.mxu0
      %v2342 = vpop.f32.mrf.mxu0
      %v2343 = vadd.f32 %v2150, %v2342
      %v2344 = vpop.f32.mrf.mxu0
      %2345 = vdwg.mxu0
      %v2346 = vmax.f32 %v2188, 0.0
      %v2347 = vmax.f32 %v2191, 0.0
      %v2348 = vmax.f32 %v2196, 0.0
      %v2349 = vmax.f32 %v2199, 0.0
      %v2350 = vmax.f32 %v2204, 0.0
      %v2351 = vmax.f32 %v2207, 0.0
      %v2352 = vmax.f32 %v2212, 0.0
      %v2353 = vmax.f32 %v2215, 0.0
      %v2354 = vmax.f32 %v2220, 0.0
      %v2355 = vmax.f32 %v2223, 0.0
      %v2356 = vmax.f32 %v2228, 0.0
      %v2357 = vmax.f32 %v2231, 0.0
      %v2358 = vmax.f32 %v2236, 0.0
      %v2359 = vmax.f32 %v2239, 0.0
      %v2360 = vmax.f32 %v2244, 0.0
      %v2361 = vmax.f32 %v2247, 0.0
      %v2362 = vmax.f32 %v2252, 0.0
      %v2363 = vmax.f32 %v2255, 0.0
      %v2364 = vmax.f32 %v2260, 0.0
      %v2365 = vmax.f32 %v2263, 0.0
      %v2366 = vmax.f32 %v2268, 0.0
      %v2367 = vmax.f32 %v2271, 0.0
      %v2368 = vmax.f32 %v2276, 0.0
      %v2369 = vmax.f32 %v2279, 0.0
      %v2370 = vmax.f32 %v2284, 0.0
      %v2371 = vmax.f32 %v2287, 0.0
      %v2372 = vmax.f32 %v2292, 0.0
      %v2373 = vmax.f32 %v2295, 0.0
      %v2374 = vmax.f32 %v2300, 0.0
      %v2375 = vmax.f32 %v2303, 0.0
      %v2376 = vmax.f32 %v2308, 0.0
      %v2377 = vmax.f32 %v2311, 0.0
      %v2378 = vmax.f32 %v2316, 0.0
      %v2379 = vmax.f32 %v2319, 0.0
      %v2380 = vmax.f32 %v2324, 0.0
      %v2381 = vmax.f32 %v2327, 0.0
      %v2382 = vmax.f32 %v2332, 0.0
      %v2383 = vmax.f32 %v2335, 0.0
      %v2384 = vmax.f32 %v2340, 0.0
      %v2385 = vmax.f32 %v2343, 0.0
      %v2386 = vrot.slane %v2346, 4
      %v2387 = vmax.f32 %v2346, %v2386
      %v2388 = vrot.slane %v2387, 2
      %v2389 = vmax.f32 %v2387, %v2388
      %v2390 = vrot.slane %v2389, 1
      %v2391 = vmax.f32 %v2389, %v2390
      %v2392 = vrot.slane %v2347, 4
      %v2393 = vmax.f32 %v2347, %v2392
      %v2394 = vrot.slane %v2393, 2
      %v2395 = vmax.f32 %v2393, %v2394
      %v2396 = vrot.slane %v2395, 1
      %v2397 = vmax.f32 %v2395, %v2396
      %v2398 = vrot.slane %v2348, 4
      %v2399 = vmax.f32 %v2348, %v2398
      %v2400 = vrot.slane %v2399, 2
      %v2401 = vmax.f32 %v2399, %v2400
      %v2402 = vrot.slane %v2401, 1
      %v2403 = vmax.f32 %v2401, %v2402
      %v2404 = vrot.slane %v2349, 4
      %v2405 = vmax.f32 %v2349, %v2404
      %v2406 = vrot.slane %v2405, 2
      %v2407 = vmax.f32 %v2405, %v2406
      %v2408 = vrot.slane %v2407, 1
      %v2409 = vmax.f32 %v2407, %v2408
      %v2410 = vrot.slane %v2350, 4
      %v2411 = vmax.f32 %v2350, %v2410
      %v2412 = vrot.slane %v2411, 2
      %v2413 = vmax.f32 %v2411, %v2412
      %v2414 = vrot.slane %v2413, 1
      %v2415 = vmax.f32 %v2413, %v2414
      %v2416 = vrot.slane %v2351, 4
      %v2417 = vmax.f32 %v2351, %v2416
      %v2418 = vrot.slane %v2417, 2
      %v2419 = vmax.f32 %v2417, %v2418
      %v2420 = vrot.slane %v2419, 1
      %v2421 = vmax.f32 %v2419, %v2420
      %v2422 = vrot.slane %v2352, 4
      %v2423 = vmax.f32 %v2352, %v2422
      %v2424 = vrot.slane %v2423, 2
      %v2425 = vmax.f32 %v2423, %v2424
      %v2426 = vrot.slane %v2425, 1
      %v2427 = vmax.f32 %v2425, %v2426
      %v2428 = vrot.slane %v2353, 4
      %v2429 = vmax.f32 %v2353, %v2428
      %v2430 = vrot.slane %v2429, 2
      %v2431 = vmax.f32 %v2429, %v2430
      %v2432 = vrot.slane %v2431, 1
      %v2433 = vmax.f32 %v2431, %v2432
      %v2434 = vrot.slane %v2354, 4
      %v2435 = vmax.f32 %v2354, %v2434
      %v2436 = vrot.slane %v2435, 2
      %v2437 = vmax.f32 %v2435, %v2436
      %v2438 = vrot.slane %v2437, 1
      %v2439 = vmax.f32 %v2437, %v2438
      %v2440 = vrot.slane %v2355, 4
      %v2441 = vmax.f32 %v2355, %v2440
      %v2442 = vrot.slane %v2441, 2
      %v2443 = vmax.f32 %v2441, %v2442
      %v2444 = vrot.slane %v2443, 1
      %v2445 = vmax.f32 %v2443, %v2444
      %v2446 = vrot.slane %v2356, 4
      %v2447 = vmax.f32 %v2356, %v2446
      %v2448 = vrot.slane %v2447, 2
      %v2449 = vmax.f32 %v2447, %v2448
      %v2450 = vrot.slane %v2449, 1
      %v2451 = vmax.f32 %v2449, %v2450
      %v2452 = vrot.slane %v2357, 4
      %v2453 = vmax.f32 %v2357, %v2452
      %v2454 = vrot.slane %v2453, 2
      %v2455 = vmax.f32 %v2453, %v2454
      %v2456 = vrot.slane %v2455, 1
      %v2457 = vmax.f32 %v2455, %v2456
      %v2458 = vrot.slane %v2358, 4
      %v2459 = vmax.f32 %v2358, %v2458
      %v2460 = vrot.slane %v2459, 2
      %v2461 = vmax.f32 %v2459, %v2460
      %v2462 = vrot.slane %v2461, 1
      %v2463 = vmax.f32 %v2461, %v2462
      %v2464 = vrot.slane %v2359, 4
      %v2465 = vmax.f32 %v2359, %v2464
      %v2466 = vrot.slane %v2465, 2
      %v2467 = vmax.f32 %v2465, %v2466
      %v2468 = vrot.slane %v2467, 1
      %v2469 = vmax.f32 %v2467, %v2468
      %v2470 = vrot.slane %v2360, 4
      %v2471 = vmax.f32 %v2360, %v2470
      %v2472 = vrot.slane %v2471, 2
      %v2473 = vmax.f32 %v2471, %v2472
      %v2474 = vrot.slane %v2473, 1
      %v2475 = vmax.f32 %v2473, %v2474
      %v2476 = vrot.slane %v2361, 4
      %v2477 = vmax.f32 %v2361, %v2476
      %v2478 = vrot.slane %v2477, 2
      %v2479 = vmax.f32 %v2477, %v2478
      %v2480 = vrot.slane %v2479, 1
      %v2481 = vmax.f32 %v2479, %v2480
      %v2482 = vrot.slane %v2362, 4
      %v2483 = vmax.f32 %v2362, %v2482
      %v2484 = vrot.slane %v2483, 2
      %v2485 = vmax.f32 %v2483, %v2484
      %v2486 = vrot.slane %v2485, 1
      %v2487 = vmax.f32 %v2485, %v2486
      %v2488 = vrot.slane %v2363, 4
      %v2489 = vmax.f32 %v2363, %v2488
      %v2490 = vrot.slane %v2489, 2
      %v2491 = vmax.f32 %v2489, %v2490
      %v2492 = vrot.slane %v2491, 1
      %v2493 = vmax.f32 %v2491, %v2492
      %v2494 = vrot.slane %v2364, 4
      %v2495 = vmax.f32 %v2364, %v2494
      %v2496 = vrot.slane %v2495, 2
      %v2497 = vmax.f32 %v2495, %v2496
      %v2498 = vrot.slane %v2497, 1
      %v2499 = vmax.f32 %v2497, %v2498
      %v2500 = vrot.slane %v2365, 4
      %v2501 = vmax.f32 %v2365, %v2500
      %v2502 = vrot.slane %v2501, 2
      %v2503 = vmax.f32 %v2501, %v2502
      %v2504 = vrot.slane %v2503, 1
      %v2505 = vmax.f32 %v2503, %v2504
      %v2506 = vrot.slane %v2366, 4
      %v2507 = vmax.f32 %v2366, %v2506
      %v2508 = vrot.slane %v2507, 2
      %v2509 = vmax.f32 %v2507, %v2508
      %v2510 = vrot.slane %v2509, 1
      %v2511 = vmax.f32 %v2509, %v2510
      %v2512 = vrot.slane %v2367, 4
      %v2513 = vmax.f32 %v2367, %v2512
      %v2514 = vrot.slane %v2513, 2
      %v2515 = vmax.f32 %v2513, %v2514
      %v2516 = vrot.slane %v2515, 1
      %v2517 = vmax.f32 %v2515, %v2516
      %v2518 = vrot.slane %v2368, 4
      %v2519 = vmax.f32 %v2368, %v2518
      %v2520 = vrot.slane %v2519, 2
      %v2521 = vmax.f32 %v2519, %v2520
      %v2522 = vrot.slane %v2521, 1
      %v2523 = vmax.f32 %v2521, %v2522
      %v2524 = vrot.slane %v2369, 4
      %v2525 = vmax.f32 %v2369, %v2524
      %v2526 = vrot.slane %v2525, 2
      %v2527 = vmax.f32 %v2525, %v2526
      %v2528 = vrot.slane %v2527, 1
      %v2529 = vmax.f32 %v2527, %v2528
      %v2530 = vrot.slane %v2370, 4
      %v2531 = vmax.f32 %v2370, %v2530
      %v2532 = vrot.slane %v2531, 2
      %v2533 = vmax.f32 %v2531, %v2532
      %v2534 = vrot.slane %v2533, 1
      %v2535 = vmax.f32 %v2533, %v2534
      %v2536 = vrot.slane %v2371, 4
      %v2537 = vmax.f32 %v2371, %v2536
      %v2538 = vrot.slane %v2537, 2
      %v2539 = vmax.f32 %v2537, %v2538
      %v2540 = vrot.slane %v2539, 1
      %v2541 = vmax.f32 %v2539, %v2540
      %v2542 = vrot.slane %v2372, 4
      %v2543 = vmax.f32 %v2372, %v2542
      %v2544 = vrot.slane %v2543, 2
      %v2545 = vmax.f32 %v2543, %v2544
      %v2546 = vrot.slane %v2545, 1
      %v2547 = vmax.f32 %v2545, %v2546
      %v2548 = vrot.slane %v2373, 4
      %v2549 = vmax.f32 %v2373, %v2548
      %v2550 = vrot.slane %v2549, 2
      %v2551 = vmax.f32 %v2549, %v2550
      %v2552 = vrot.slane %v2551, 1
      %v2553 = vmax.f32 %v2551, %v2552
      %v2554 = vrot.slane %v2374, 4
      %v2555 = vmax.f32 %v2374, %v2554
      %v2556 = vrot.slane %v2555, 2
      %v2557 = vmax.f32 %v2555, %v2556
      %v2558 = vrot.slane %v2557, 1
      %v2559 = vmax.f32 %v2557, %v2558
      %v2560 = vrot.slane %v2375, 4
      %v2561 = vmax.f32 %v2375, %v2560
      %v2562 = vrot.slane %v2561, 2
      %v2563 = vmax.f32 %v2561, %v2562
      %v2564 = vrot.slane %v2563, 1
      %v2565 = vmax.f32 %v2563, %v2564
      %v2566 = vrot.slane %v2376, 4
      %v2567 = vmax.f32 %v2376, %v2566
      %v2568 = vrot.slane %v2567, 2
      %v2569 = vmax.f32 %v2567, %v2568
      %v2570 = vrot.slane %v2569, 1
      %v2571 = vmax.f32 %v2569, %v2570
      %v2572 = vrot.slane %v2377, 4
      %v2573 = vmax.f32 %v2377, %v2572
      %v2574 = vrot.slane %v2573, 2
      %v2575 = vmax.f32 %v2573, %v2574
      %v2576 = vrot.slane %v2575, 1
      %v2577 = vmax.f32 %v2575, %v2576
      %v2578 = vrot.slane %v2378, 4
      %v2579 = vmax.f32 %v2378, %v2578
      %v2580 = vrot.slane %v2579, 2
      %v2581 = vmax.f32 %v2579, %v2580
      %v2582 = vrot.slane %v2581, 1
      %v2583 = vmax.f32 %v2581, %v2582
      %v2584 = vrot.slane %v2379, 4
      %v2585 = vmax.f32 %v2379, %v2584
      %v2586 = vrot.slane %v2585, 2
      %v2587 = vmax.f32 %v2585, %v2586
      %v2588 = vrot.slane %v2587, 1
      %v2589 = vmax.f32 %v2587, %v2588
      %v2590 = vrot.slane %v2380, 4
      %v2591 = vmax.f32 %v2380, %v2590
      %v2592 = vrot.slane %v2591, 2
      %v2593 = vmax.f32 %v2591, %v2592
      %v2594 = vrot.slane %v2593, 1
      %v2595 = vmax.f32 %v2593, %v2594
      %v2596 = vrot.slane %v2381, 4
      %v2597 = vmax.f32 %v2381, %v2596
      %v2598 = vrot.slane %v2597, 2
      %v2599 = vmax.f32 %v2597, %v2598
      %v2600 = vrot.slane %v2599, 1
      %v2601 = vmax.f32 %v2599, %v2600
      %v2602 = vrot.slane %v2382, 4
      %v2603 = vmax.f32 %v2382, %v2602
      %v2604 = vrot.slane %v2603, 2
      %v2605 = vmax.f32 %v2603, %v2604
      %v2606 = vrot.slane %v2605, 1
      %v2607 = vmax.f32 %v2605, %v2606
      %v2608 = vrot.slane %v2383, 4
      %v2609 = vmax.f32 %v2383, %v2608
      %v2610 = vrot.slane %v2609, 2
      %v2611 = vmax.f32 %v2609, %v2610
      %v2612 = vrot.slane %v2611, 1
      %v2613 = vmax.f32 %v2611, %v2612
      %v2614 = vrot.slane %v2384, 4
      %v2615 = vmax.f32 %v2384, %v2614
      %v2616 = vrot.slane %v2615, 2
      %v2617 = vmax.f32 %v2615, %v2616
      %v2618 = vrot.slane %v2617, 1
      %v2619 = vmax.f32 %v2617, %v2618
      %v2620 = vrot.slane %v2385, 4
      %v2621 = vmax.f32 %v2385, %v2620
      %v2622 = vrot.slane %v2621, 2
      %v2623 = vmax.f32 %v2621, %v2622
      %v2624 = vrot.slane %v2623, 1
      %v2625 = vmax.f32 %v2623, %v2624
      %v2626 = vpack.c.bf16 %v2391, %v2391
      %v2627 = vpack.c.bf16 %v2397, %v2397
      %v2628 = vpack.c.bf16 %v2403, %v2403
      %v2629 = vpack.c.bf16 %v2409, %v2409
      %v2630 = vpack.c.bf16 %v2415, %v2415
      %v2631 = vpack.c.bf16 %v2421, %v2421
      %v2632 = vpack.c.bf16 %v2427, %v2427
      %v2633 = vpack.c.bf16 %v2433, %v2433
      %v2634 = vpack.c.bf16 %v2439, %v2439
      %v2635 = vpack.c.bf16 %v2445, %v2445
      %v2636 = vpack.c.bf16 %v2451, %v2451
      %v2637 = vpack.c.bf16 %v2457, %v2457
      %v2638 = vpack.c.bf16 %v2463, %v2463
      %v2639 = vpack.c.bf16 %v2469, %v2469
      %v2640 = vpack.c.bf16 %v2475, %v2475
      %v2641 = vpack.c.bf16 %v2481, %v2481
      %v2642 = vpack.c.bf16 %v2487, %v2487
      %v2643 = vpack.c.bf16 %v2493, %v2493
      %v2644 = vpack.c.bf16 %v2499, %v2499
      %v2645 = vpack.c.bf16 %v2505, %v2505
      %v2646 = vpack.c.bf16 %v2511, %v2511
      %v2647 = vpack.c.bf16 %v2517, %v2517
      %v2648 = vpack.c.bf16 %v2523, %v2523
      %v2649 = vpack.c.bf16 %v2529, %v2529
      %v2650 = vpack.c.bf16 %v2535, %v2535
      %v2651 = vpack.c.bf16 %v2541, %v2541
      %v2652 = vpack.c.bf16 %v2547, %v2547
      %v2653 = vpack.c.bf16 %v2553, %v2553
      %v2654 = vpack.c.bf16 %v2559, %v2559
      %v2655 = vpack.c.bf16 %v2565, %v2565
      %v2656 = vpack.c.bf16 %v2571, %v2571
      %v2657 = vpack.c.bf16 %v2577, %v2577
      %v2658 = vpack.c.bf16 %v2583, %v2583
      %v2659 = vpack.c.bf16 %v2589, %v2589
      %v2660 = vpack.c.bf16 %v2595, %v2595
      %v2661 = vpack.c.bf16 %v2601, %v2601
      %v2662 = vpack.c.bf16 %v2607, %v2607
      %v2663 = vpack.c.bf16 %v2613, %v2613
      %v2664 = vpack.c.bf16 %v2619, %v2619
      %v2665 = vpack.c.bf16 %v2625, %v2625
      %v2706 = vunpack.c.l.b16 %v2626
      %v2707 = vunpack.c.l.b16 %v2627
      %v2708 = vunpack.c.l.b16 %v2628
      %v2709 = vunpack.c.l.b16 %v2629
      %v2710 = vunpack.c.l.b16 %v2630
      %v2711 = vunpack.c.l.b16 %v2631
      %v2712 = vunpack.c.l.b16 %v2632
      %v2713 = vunpack.c.l.b16 %v2633
      %v2714 = vunpack.c.l.b16 %v2634
      %v2715 = vunpack.c.l.b16 %v2635
      %v2716 = vunpack.c.l.b16 %v2636
      %v2717 = vunpack.c.l.b16 %v2637
      %v2718 = vunpack.c.l.b16 %v2638
      %v2719 = vunpack.c.l.b16 %v2639
      %v2720 = vunpack.c.l.b16 %v2640
      %v2721 = vunpack.c.l.b16 %v2641
      %v2722 = vunpack.c.l.b16 %v2642
      %v2723 = vunpack.c.l.b16 %v2643
      %v2724 = vunpack.c.l.b16 %v2644
      %v2725 = vunpack.c.l.b16 %v2645
      %v2726 = vunpack.c.l.b16 %v2646
      %v2727 = vunpack.c.l.b16 %v2647
      %v2728 = vunpack.c.l.b16 %v2648
      %v2729 = vunpack.c.l.b16 %v2649
      %v2730 = vunpack.c.l.b16 %v2650
      %v2731 = vunpack.c.l.b16 %v2651
      %v2732 = vunpack.c.l.b16 %v2652
      %v2733 = vunpack.c.l.b16 %v2653
      %v2734 = vunpack.c.l.b16 %v2654
      %v2735 = vunpack.c.l.b16 %v2655
      %v2736 = vunpack.c.l.b16 %v2656
      %v2737 = vunpack.c.l.b16 %v2657
      %v2738 = vunpack.c.l.b16 %v2658
      %v2739 = vunpack.c.l.b16 %v2659
      %v2740 = vunpack.c.l.b16 %v2660
      %v2741 = vunpack.c.l.b16 %v2661
      %v2742 = vunpack.c.l.b16 %v2662
      %v2743 = vunpack.c.l.b16 %v2663
      %v2744 = vunpack.c.l.b16 %v2664
      %v2745 = vunpack.c.l.b16 %v2665
      %v2746 = vpack.c.b16 %v2706, %v2706
      %v2747 = vpack.c.b16 %v2707, %v2707
      %v2748 = vpack.c.b16 %v2708, %v2708
      %v2749 = vpack.c.b16 %v2709, %v2709
      %v2750 = vpack.c.b16 %v2710, %v2710
      %v2751 = vpack.c.b16 %v2711, %v2711
      %v2752 = vpack.c.b16 %v2712, %v2712
      %v2753 = vpack.c.b16 %v2713, %v2713
      %v2754 = vpack.c.b16 %v2714, %v2714
      %v2755 = vpack.c.b16 %v2715, %v2715
      %v2756 = vpack.c.b16 %v2716, %v2716
      %v2757 = vpack.c.b16 %v2717, %v2717
      %v2758 = vpack.c.b16 %v2718, %v2718
      %v2759 = vpack.c.b16 %v2719, %v2719
      %v2760 = vpack.c.b16 %v2720, %v2720
      %v2761 = vpack.c.b16 %v2721, %v2721
      %v2762 = vpack.c.b16 %v2722, %v2722
      %v2763 = vpack.c.b16 %v2723, %v2723
      %v2764 = vpack.c.b16 %v2724, %v2724
      %v2765 = vpack.c.b16 %v2725, %v2725
      %v2766 = vpack.c.b16 %v2726, %v2726
      %v2767 = vpack.c.b16 %v2727, %v2727
      %v2768 = vpack.c.b16 %v2728, %v2728
      %v2769 = vpack.c.b16 %v2729, %v2729
      %v2770 = vpack.c.b16 %v2730, %v2730
      %v2771 = vpack.c.b16 %v2731, %v2731
      %v2772 = vpack.c.b16 %v2732, %v2732
      %v2773 = vpack.c.b16 %v2733, %v2733
      %v2774 = vpack.c.b16 %v2734, %v2734
      %v2775 = vpack.c.b16 %v2735, %v2735
      %v2776 = vpack.c.b16 %v2736, %v2736
      %v2777 = vpack.c.b16 %v2737, %v2737
      %v2778 = vpack.c.b16 %v2738, %v2738
      %v2779 = vpack.c.b16 %v2739, %v2739
      %v2780 = vpack.c.b16 %v2740, %v2740
      %v2781 = vpack.c.b16 %v2741, %v2741
      %v2782 = vpack.c.b16 %v2742, %v2742
      %v2783 = vpack.c.b16 %v2743, %v2743
      %v2784 = vpack.c.b16 %v2744, %v2744
      %v2785 = vpack.c.b16 %v2745, %v2745
      %v2786 = vunpack.c.l.b16 %v2746
      %v2787 = vunpack.c.l.b16 %v2747
      %v2788 = vunpack.c.l.b16 %v2748
      %v2789 = vunpack.c.l.b16 %v2749
      %v2790 = vunpack.c.l.b16 %v2750
      %v2791 = vunpack.c.l.b16 %v2751
      %v2792 = vunpack.c.l.b16 %v2752
      %v2793 = vunpack.c.l.b16 %v2753
      %v2794 = vunpack.c.l.b16 %v2754
      %v2795 = vunpack.c.l.b16 %v2755
      %v2796 = vunpack.c.l.b16 %v2756
      %v2797 = vunpack.c.l.b16 %v2757
      %v2798 = vunpack.c.l.b16 %v2758
      %v2799 = vunpack.c.l.b16 %v2759
      %v2800 = vunpack.c.l.b16 %v2760
      %v2801 = vunpack.c.l.b16 %v2761
      %v2802 = vunpack.c.l.b16 %v2762
      %v2803 = vunpack.c.l.b16 %v2763
      %v2804 = vunpack.c.l.b16 %v2764
      %v2805 = vunpack.c.l.b16 %v2765
      %v2806 = vunpack.c.l.b16 %v2766
      %v2807 = vunpack.c.l.b16 %v2767
      %v2808 = vunpack.c.l.b16 %v2768
      %v2809 = vunpack.c.l.b16 %v2769
      %v2810 = vunpack.c.l.b16 %v2770
      %v2811 = vunpack.c.l.b16 %v2771
      %v2812 = vunpack.c.l.b16 %v2772
      %v2813 = vunpack.c.l.b16 %v2773
      %v2814 = vunpack.c.l.b16 %v2774
      %v2815 = vunpack.c.l.b16 %v2775
      %v2816 = vunpack.c.l.b16 %v2776
      %v2817 = vunpack.c.l.b16 %v2777
      %v2818 = vunpack.c.l.b16 %v2778
      %v2819 = vunpack.c.l.b16 %v2779
      %v2820 = vunpack.c.l.b16 %v2780
      %v2821 = vunpack.c.l.b16 %v2781
      %v2822 = vunpack.c.l.b16 %v2782
      %v2823 = vunpack.c.l.b16 %v2783
      %v2824 = vunpack.c.l.b16 %v2784
      %v2825 = vunpack.c.l.b16 %v2785
      %vm2826 = vcmask 1041409
      %v2827 = vsel %vm2826, %v2787, %v2786
      %vm2828 = vcmask 1042434
      %v2829 = vsel %vm2828, %v2788, %v2827
      %vm2830 = vcmask 1043459
      %v2831 = vsel %vm2830, %v2789, %v2829
      %vm2832 = vcmask 1044484
      %v2833 = vsel %vm2832, %v2790, %v2831
      %vm2834 = vcmask 1045509
      %v2835 = vsel %vm2834, %v2791, %v2833
      %vm2836 = vcmask 1046534
      %v2837 = vsel %vm2836, %v2792, %v2835
      %vm2838 = vcmask 1047559
      %v2839 = vsel %vm2838, %v2793, %v2837
      %v2840 = vsel %vm2826, %v2795, %v2794
      %v2841 = vsel %vm2828, %v2796, %v2840
      %v2842 = vsel %vm2830, %v2797, %v2841
      %v2843 = vsel %vm2832, %v2798, %v2842
      %v2844 = vsel %vm2834, %v2799, %v2843
      %v2845 = vsel %vm2836, %v2800, %v2844
      %v2846 = vsel %vm2838, %v2801, %v2845
      %v2847 = vsel %vm2826, %v2803, %v2802
      %v2848 = vsel %vm2828, %v2804, %v2847
      %v2849 = vsel %vm2830, %v2805, %v2848
      %v2850 = vsel %vm2832, %v2806, %v2849
      %v2851 = vsel %vm2834, %v2807, %v2850
      %v2852 = vsel %vm2836, %v2808, %v2851
      %v2853 = vsel %vm2838, %v2809, %v2852
      %v2854 = vsel %vm2826, %v2811, %v2810
      %v2855 = vsel %vm2828, %v2812, %v2854
      %v2856 = vsel %vm2830, %v2813, %v2855
      %v2857 = vsel %vm2832, %v2814, %v2856
      %v2858 = vsel %vm2834, %v2815, %v2857
      %v2859 = vsel %vm2836, %v2816, %v2858
      %v2860 = vsel %vm2838, %v2817, %v2859
      %v2861 = vsel %vm2826, %v2819, %v2818
      %v2862 = vsel %vm2828, %v2820, %v2861
      %v2863 = vsel %vm2830, %v2821, %v2862
      %v2864 = vsel %vm2832, %v2822, %v2863
      %v2865 = vsel %vm2834, %v2823, %v2864
      %v2866 = vsel %vm2836, %v2824, %v2865
      %v2867 = vsel %vm2838, %v2825, %v2866
      %v2868 = vpack.c.b16 %v2839, %v2839
      %v2869 = vpack.c.b16 %v2846, %v2846
      %v2870 = vpack.c.b16 %v2853, %v2853
      %v2871 = vpack.c.b16 %v2860, %v2860
      %v2872 = vpack.c.b16 %v2867, %v2867
      %2878 = vst [vmem:[%s211] sm:$0xf] %v2868
      %2879 = vst [vmem:[%s211 + $0x4] sm:$0xf] %v2869
      %2880 = vst [vmem:[%s211 + $0x8] sm:$0xf] %v2870
      %2881 = vst [vmem:[%s211 + $0xc] sm:$0xf] %v2871
      %2882 = vst [vmem:[%s211 + $0x10] sm:$0xf] %v2872
      %s2883 = smul.u32 5, %s19
      %p2884 = scmp.lt.s32.totalorder %s18, 1
      %s2885 = scalar_select %p2884, %s18, 1
      %p2886 = scmp.lt.s32.totalorder %s2883, 4
      %s2887 = scalar_select %p2886, %s2883, 4
      %s2888 = smul.addr %s2885, 5
      %s2889 = sadd.s32 %s2887, %s2888
      %s2890 = smul.addr %s2889, 4
      %s2891 = scalar_lea.vmem %s3, %s2890
      // Predicated region
      $region33: #{forward.5} parent=31 // pred_check
        %p2892 = pneg %p116
      $region34: #{forward.5} parent=31 // pred_check_branch
        %2894 = sbr.rel (%p2892) target = $region36
      $region35: #{forward.5} parent=31 // pred_region
        %s2895 = smul.u32 5, %s19
      $region36: #{forward.5} parent=31 // pred_fallthru
        _
    $region32: #{forward.5} parent=5 // pred_fallthru
      _
    %p2896 = scmp.le.s32.totalorder 2, %s9
    // Predicated region
    $region37: #{forward.5} parent=5 // pred_check
      %p2897 = pneg %p2896
    $region38: #{forward.5} parent=5 // pred_check_branch
      %2899 = sbr.rel (%p2897) target = $region40
    $region39: #{forward.5} parent=5 // pred_region
      %s2900 = ssub.s32 %s9, 2
      // Predicated region
      $region41: #{forward.5} parent=39 // pred_check
        %p2901 = pneg %p122
      $region42: #{forward.5} parent=39 // pred_check_branch
        %2903 = sbr.rel (%p2901) target = $region44
      $region43: #{forward.5} parent=39 // pred_region
        %s2904 = smul.u32 5, %s21
        %p2905 = scmp.lt.s32.totalorder %s20, 1
        %s2906 = scalar_select %p2905, %s20, 1
        %p2907 = scmp.lt.s32.totalorder %s2904, 4
        %s2908 = scalar_select %p2907, %s2904, 4
        %s2909 = smul.addr %s2906, 5
        %s2910 = sadd.s32 %s2908, %s2909
        %s2911 = smul.addr %s2910, 4
        %s2912 = scalar_lea.vmem %s3, %s2911
      $region44: #{forward.5} parent=39 // pred_fallthru
        _
    $region40: #{forward.5} parent=5 // pred_fallthru
      _
  $region6: #{forward.5} parent=0 // loop_footer
    %s13 = sadd.s32 1, %s9
  $region7: #{forward.5} parent=0 // loop_footer_branch
    %8 = sbr.rel target = $region3
  $region8: #{forward.5} parent=0 // loop_exit
    _

// kernel: forward.6
$region0: #{forward.6}
  #allocation0 [shape = 'u32[]', space=smem, size = 0x4, offset = 0x4, fixed_abs, tag = 'smem constant byte address 0x4 - core index']
  #allocation1 [shape = 'u32[144,128]{1,0:T(1,128)}', space=vmem, size = 0x12000, scoped, tag = 'internal scratch']
  %s0 = inlined_call_operand.vmem [shape: bf16[2,32,1728], index: 0, kind: input, shape index: {}]
  %s1 = inlined_call_operand.vmem [shape: bf16[1728,128], index: 1, kind: input, shape index: {}]
  %s2 = inlined_call_operand.vmem [shape: f32[1,128], index: 2, kind: input, shape index: {}]
  %s3 = inlined_call_operand.vmem [shape: bf16[2,4,128], index: 3, kind: output, shape index: {}]
  %s4 = sld [smem:[#allocation0]]
  $region45: #{forward.6} parent=0
    _
  %s6 = ssub.s32 1, %s4
  %s7 = scalar_select 0, %s6, %s4
  loop: start=0, step=1, limit=4
  $region2: #{forward.6} parent=0 // loop_pre_header
    _
  $region3: #{forward.6} parent=0 // loop_header
    %s9 = sphi 0, %s13
    %p10 = scmp.ge.s32.totalorder %s9, 4
    %s16 = sphi 0, %s28
    %s17 = sphi 0, %s24
    %s18 = sphi 0, %s16
    %s19 = sphi 0, %s17
    %s20 = sphi 0, %s18
    %s21 = sphi 0, %s19
    %s33 = sphi 0, %s35
    %s36 = sphi 0, %s33
    %s37 = sphi 0, %s36
    %s53 = sphi 0, %s37
    %s57 = sphi 0, %s57
    %s59 = sphi 0, %s57
    %s60 = sphi 0, %s59
    %s74 = sphi 0, %s60
    %s78 = sphi 0, %s78
    %s80 = sphi 0, %s78
    %s81 = sphi 0, %s80
    %s95 = sphi 0, %s81
    %s103 = sphi 0, %s105
    %s106 = sphi 0, %s103
    %s107 = sphi 0, %s106
    %s123 = sphi 0, %s107
  $region4: #{forward.6} parent=0 // loop_header_branch
    %12 = sbr.rel (%p10) target = $region8
  $region5: #{forward.6} parent=0 // loop_body
    %s14 = ssub.s32 %s9, 1
    %s15 = ssub.s32 %s9, 2
    %s22 = sadd.s32 1, %s17
    %p23 = scmp.ge.s32.totalorder %s22, 1
    %s24 = scalar_select %p23, 0, %s22
    %s25 = sadd.s32 1, %s16
    %s26 = scalar_select %p23, %s25, %s16
    %p27 = scmp.ge.s32.totalorder %s26, 2
    %s28 = scalar_select %p27, 0, %s26
    %s29 = ssub.s32 %s16, %s28
    %s30 = ssub.s32 %s17, %s24
    %s31 = sor.u32 %s29, %s30
    %p32 = scmp.eq.s32.totalorder %s31, 0
    %s34 = sadd.s32 %s33, 1
    %s35 = scalar_select %p32, %s33, %s34
    %p38 = pneg %p32
    %p39 = scmp.eq.s32.totalorder %s9, 1
    %p40 = por %p38, %p39
    %p41 = scmp.ne.s32.totalorder %s33, %s36
    %p42 = scmp.eq.s32.totalorder %s9, 0
    %p43 = por %p41, %p42
    %p44 = scmp.ne.s32.totalorder %s33, %s36
    %p45 = scmp.eq.s32.totalorder %s14, 1
    %p46 = por %p44, %p45
    %p47 = scmp.ne.s32.totalorder %s36, %s37
    %p48 = scmp.eq.s32.totalorder %s14, 0
    %p49 = por %p47, %p48
    %p50 = scmp.ne.s32.totalorder %s36, %s37
    %p51 = scmp.eq.s32.totalorder %s15, 1
    %p52 = por %p50, %p51
    %p54 = scmp.ne.s32.totalorder %s37, %s53
    %p55 = scmp.eq.s32.totalorder %s15, 0
    %p56 = por %p54, %p55
    %s58 = sadd.s32 %s57, 1
    %p61 = scmp.eq.s32.totalorder %s9, 1
    %p62 = scmp.ne.s32.totalorder %s57, %s59
    %p63 = scmp.eq.s32.totalorder %s9, 0
    %p64 = por %p62, %p63
    %p65 = scmp.ne.s32.totalorder %s57, %s59
    %p66 = scmp.eq.s32.totalorder %s14, 1
    %p67 = por %p65, %p66
    %p68 = scmp.ne.s32.totalorder %s59, %s60
    %p69 = scmp.eq.s32.totalorder %s14, 0
    %p70 = por %p68, %p69
    %p71 = scmp.ne.s32.totalorder %s59, %s60
    %p72 = scmp.eq.s32.totalorder %s15, 1
    %p73 = por %p71, %p72
    %p75 = scmp.ne.s32.totalorder %s60, %s74
    %p76 = scmp.eq.s32.totalorder %s15, 0
    %p77 = por %p75, %p76
    %s79 = sadd.s32 %s78, 1
    %p82 = scmp.eq.s32.totalorder %s9, 1
    %p83 = scmp.ne.s32.totalorder %s78, %s80
    %p84 = scmp.eq.s32.totalorder %s9, 0
    %p85 = por %p83, %p84
    %p86 = scmp.ne.s32.totalorder %s78, %s80
    %p87 = scmp.eq.s32.totalorder %s14, 1
    %p88 = por %p86, %p87
    %p89 = scmp.ne.s32.totalorder %s80, %s81
    %p90 = scmp.eq.s32.totalorder %s14, 0
    %p91 = por %p89, %p90
    %p92 = scmp.ne.s32.totalorder %s80, %s81
    %p93 = scmp.eq.s32.totalorder %s15, 1
    %p94 = por %p92, %p93
    %p96 = scmp.ne.s32.totalorder %s81, %s95
    %p97 = scmp.eq.s32.totalorder %s15, 0
    %p98 = por %p96, %p97
    %s99 = ssub.s32 %s16, %s28
    %s100 = ssub.s32 %s17, %s24
    %s101 = sor.u32 %s99, %s100
    %p102 = scmp.eq.s32.totalorder %s101, 0
    %s104 = sadd.s32 %s103, 1
    %s105 = scalar_select %p102, %s103, %s104
    %p108 = pneg %p102
    %p109 = scmp.eq.s32.totalorder %s9, 1
    %p110 = por %p108, %p109
    %p111 = scmp.ne.s32.totalorder %s103, %s106
    %p112 = scmp.eq.s32.totalorder %s9, 0
    %p113 = por %p111, %p112
    %p114 = scmp.ne.s32.totalorder %s103, %s106
    %p115 = scmp.eq.s32.totalorder %s14, 1
    %p116 = por %p114, %p115
    %p117 = scmp.ne.s32.totalorder %s106, %s107
    %p118 = scmp.eq.s32.totalorder %s14, 0
    %p119 = por %p117, %p118
    %p120 = scmp.ne.s32.totalorder %s106, %s107
    %p121 = scmp.eq.s32.totalorder %s15, 1
    %p122 = por %p120, %p121
    %p124 = scmp.ne.s32.totalorder %s107, %s123
    %p125 = scmp.eq.s32.totalorder %s15, 0
    %p126 = por %p124, %p125
    %p127 = scmp.le.s32.totalorder 1, %s9
    %p128 = scmp.lt.s32.totalorder %s9, 3
    %p129 = pnand %p127, %p128
    %p130 = pneg %p129
    // Predicated region
    $region9: #{forward.6} parent=5 // pred_check
      _
    $region10: #{forward.6} parent=5 // pred_check_branch
      %132 = sbr.rel (%p129) target = $region12
    $region11: #{forward.6} parent=5 // pred_region
      %s133 = ssub.s32 %s9, 1
      // Predicated region
      $region13: #{forward.6} parent=11 // pred_check
        %p134 = pneg %p70
      $region14: #{forward.6} parent=11 // pred_check_branch
        %136 = sbr.rel (%p134) target = $region16
      $region15: #{forward.6} parent=11 // pred_region
        _
      $region16: #{forward.6} parent=11 // pred_fallthru
        _
      // Predicated region
      $region17: #{forward.6} parent=11 // pred_check
        %p137 = pneg %p91
      $region18: #{forward.6} parent=11 // pred_check_branch
        %139 = sbr.rel (%p137) target = $region20
      $region19: #{forward.6} parent=11 // pred_region
        _
      $region20: #{forward.6} parent=11 // pred_fallthru
        _
    $region12: #{forward.6} parent=5 // pred_fallthru
      _
    %p140 = scmp.lt.s32.totalorder %s9, 2
    // Predicated region
    $region21: #{forward.6} parent=5 // pred_check
      %p141 = pneg %p140
    $region22: #{forward.6} parent=5 // pred_check_branch
      %143 = sbr.rel (%p141) target = $region24
    $region23: #{forward.6} parent=5 // pred_region
      // Predicated region
      $region25: #{forward.6} parent=23 // pred_check
        %p144 = pneg %p43
      $region26: #{forward.6} parent=23 // pred_check_branch
        %146 = sbr.rel (%p144) target = $region28
      $region27: #{forward.6} parent=23 // pred_region
        %s147 = smul.u32 4, %s17
        %p148 = scmp.lt.s32.totalorder %s16, 1
        %s149 = scalar_select %p148, %s16, 1
        %p150 = scmp.lt.s32.totalorder %s147, 3
        %s151 = scalar_select %p150, %s147, 3
        %s152 = smul.addr %s151, 14
        %s153 = smul.addr %s149, 56
        %s154 = sadd.s32 %s152, %s153
        %s155 = smul.addr %s154, 4
        %s156 = scalar_lea.vmem %s0, %s155
        %s157 = smul.u32 4, %s17
      $region28: #{forward.6} parent=23 // pred_fallthru
        _
    $region24: #{forward.6} parent=5 // pred_fallthru
      _
    %p158 = scmp.le.s32.totalorder 1, %s9
    %p159 = scmp.lt.s32.totalorder %s9, 3
    %p160 = pnand %p158, %p159
    %p161 = pneg %p160
    // Predicated region
    $region29: #{forward.6} parent=5 // pred_check
      _
    $region30: #{forward.6} parent=5 // pred_check_branch
      %163 = sbr.rel (%p160) target = $region32
    $region31: #{forward.6} parent=5 // pred_region
      %s164 = ssub.s32 %s9, 1
      %s165 = smul.u32 4, %s19
      %p166 = scmp.lt.s32.totalorder %s18, 1
      %s167 = scalar_select %p166, %s18, 1
      %p168 = scmp.lt.s32.totalorder %s165, 3
      %s169 = scalar_select %p168, %s165, 3
      %s170 = smul.addr %s169, 14
      %s171 = smul.addr %s167, 56
      %s172 = sadd.s32 %s170, %s171
      %s173 = smul.addr %s172, 4
      %s174 = scalar_lea.vmem %s0, %s173
      %p175 = pneg %p49
      %p176 = pneg %p46
      %p177 = pneg %p70
      %p178 = pneg %p67
      %p179 = pneg %p91
      %p180 = pneg %p88
      %p181 = pneg %p119
      %p182 = pneg %p116
      %p183 = scmp.lt.s32.totalorder %s18, 1
      %s184 = scalar_select %p183, %s18, 1
      %p185 = scmp.lt.s32.totalorder %s19, 0
      %s186 = scalar_select %p185, %s19, 0
      %s187 = sadd.s32 %s186, %s184
      %s188 = smul.addr %s187, 2
      %s189 = scalar_lea.vmem %s3, %s188
      %s190 = smul.u32 4, %s19
      %p191 = scmp.lt.s32.totalorder %s18, 1
      %s192 = scalar_select %p191, %s18, 1
      %p193 = scmp.lt.s32.totalorder %s190, 3
      %s194 = scalar_select %p193, %s190, 3
      %s195 = smul.addr %s194, 14
      %s196 = smul.addr %s192, 56
      %s197 = sadd.s32 %s195, %s196
      %s198 = smul.addr %s197, 4
      %s199 = scalar_lea.vmem %s0, %s198
      %s200 = smul.u32 4, %s19
      %p201 = scmp.lt.s32.totalorder %s18, 1
      %s202 = scalar_select %p201, %s18, 1
      %p203 = scmp.lt.s32.totalorder %s19, 0
      %s204 = scalar_select %p203, %s19, 0
      %s205 = sadd.s32 %s204, %s202
      %s206 = smul.addr %s205, 2
      %s207 = scalar_lea.vmem %s3, %s206
      %v209 = vld [vmem:[%s199] sm:$0xff]
      %v210 = vld [vmem:[%s199 + $0x8] sm:$0xff]
      %v211 = vld [vmem:[%s199 + $0x10] sm:$0xff]
      %v212 = vld [vmem:[%s199 + $0x18] sm:$0xff]
      %v213 = vld [vmem:[%s199 + $0x20] sm:$0xff]
      %v214 = vld [vmem:[%s199 + $0x28] sm:$0xff]
      %v215 = vld [vmem:[%s199 + $0x30] sm:$0xff]
      %v216 = vld [vmem:[%s199 + $0x38] sm:$0xff]
      %v217 = vld [vmem:[%s199 + $0x40] sm:$0xff]
      %v218 = vld [vmem:[%s199 + $0x48] sm:$0xff]
      %v219 = vld [vmem:[%s199 + $0x50] sm:$0xff]
      %v220 = vld [vmem:[%s199 + $0x58] sm:$0xff]
      %v221 = vld [vmem:[%s199 + $0x60] sm:$0xff]
      %v222 = vld [vmem:[%s199 + $0x68] sm:$0xff]
      %v223 = vld [vmem:[%s199 + $0x70] sm:$0xff]
      %v224 = vld [vmem:[%s199 + $0x78] sm:$0xff]
      %v225 = vld [vmem:[%s199 + $0x80] sm:$0xff]
      %v226 = vld [vmem:[%s199 + $0x88] sm:$0xff]
      %v227 = vld [vmem:[%s199 + $0x90] sm:$0xff]
      %v228 = vld [vmem:[%s199 + $0x98] sm:$0xff]
      %v229 = vld [vmem:[%s199 + $0xa0] sm:$0xff]
      %v230 = vld [vmem:[%s199 + $0xa8] sm:$0xff]
      %v231 = vld [vmem:[%s199 + $0xb0] sm:$0xff]
      %v232 = vld [vmem:[%s199 + $0xb8] sm:$0xff]
      %v233 = vld [vmem:[%s199 + $0xc0] sm:$0xff]
      %v234 = vld [vmem:[%s199 + $0xc8] sm:$0xff]
      %v235 = vld [vmem:[%s199 + $0xd0] sm:$0xff]
      %v236 = vld [vmem:[%s199 + $0xd8] sm:$0xff]
      %v237 = vld [vmem:[%s1] sm:$0xf]
      %v238 = vld [vmem:[%s1 + $0x4] sm:$0xf]
      %v239 = vld [vmem:[%s1 + $0x8] sm:$0xf]
      %v240 = vld [vmem:[%s1 + $0xc] sm:$0xf]
      %v241 = vld [vmem:[%s1 + $0x10] sm:$0xf]
      %v242 = vld [vmem:[%s1 + $0x14] sm:$0xf]
      %v243 = vld [vmem:[%s1 + $0x18] sm:$0xf]
      %v244 = vld [vmem:[%s1 + $0x1c] sm:$0xf]
      %v245 = vld [vmem:[%s1 + $0x20] sm:$0xf]
      %v246 = vld [vmem:[%s1 + $0x24] sm:$0xf]
      %v247 = vld [vmem:[%s1 + $0x28] sm:$0xf]
      %v248 = vld [vmem:[%s1 + $0x2c] sm:$0xf]
      %v249 = vld [vmem:[%s1 + $0x30] sm:$0xf]
      %v250 = vld [vmem:[%s1 + $0x34] sm:$0xf]
      %v251 = vld [vmem:[%s1 + $0x38] sm:$0xf]
      %v252 = vld [vmem:[%s1 + $0x3c] sm:$0xf]
      %v253 = vld [vmem:[%s1 + $0x40] sm:$0xf]
      %v254 = vld [vmem:[%s1 + $0x44] sm:$0xf]
      %v255 = vld [vmem:[%s1 + $0x48] sm:$0xf]
      %v256 = vld [vmem:[%s1 + $0x4c] sm:$0xf]
      %v257 = vld [vmem:[%s1 + $0x50] sm:$0xf]
      %v258 = vld [vmem:[%s1 + $0x54] sm:$0xf]
      %v259 = vld [vmem:[%s1 + $0x58] sm:$0xf]
      %v260 = vld [vmem:[%s1 + $0x5c] sm:$0xf]
      %v261 = vld [vmem:[%s1 + $0x60] sm:$0xf]
      %v262 = vld [vmem:[%s1 + $0x64] sm:$0xf]
      %v263 = vld [vmem:[%s1 + $0x68] sm:$0xf]
      %v264 = vld [vmem:[%s1 + $0x6c] sm:$0xf]
      %v265 = vld [vmem:[%s1 + $0x70] sm:$0xf]
      %v266 = vld [vmem:[%s1 + $0x74] sm:$0xf]
      %v267 = vld [vmem:[%s1 + $0x78] sm:$0xf]
      %v268 = vld [vmem:[%s1 + $0x7c] sm:$0xf]
      %v269 = vld [vmem:[%s1 + $0x80] sm:$0xf]
      %v270 = vld [vmem:[%s1 + $0x84] sm:$0xf]
      %v271 = vld [vmem:[%s1 + $0x88] sm:$0xf]
      %v272 = vld [vmem:[%s1 + $0x8c] sm:$0xf]
      %v273 = vld [vmem:[%s1 + $0x90] sm:$0xf]
      %v274 = vld [vmem:[%s1 + $0x94] sm:$0xf]
      %v275 = vld [vmem:[%s1 + $0x98] sm:$0xf]
      %v276 = vld [vmem:[%s1 + $0x9c] sm:$0xf]
      %v277 = vld [vmem:[%s1 + $0xa0] sm:$0xf]
      %v278 = vld [vmem:[%s1 + $0xa4] sm:$0xf]
      %v279 = vld [vmem:[%s1 + $0xa8] sm:$0xf]
      %v280 = vld [vmem:[%s1 + $0xac] sm:$0xf]
      %v281 = vld [vmem:[%s1 + $0xb0] sm:$0xf]
      %v282 = vld [vmem:[%s1 + $0xb4] sm:$0xf]
      %v283 = vld [vmem:[%s1 + $0xb8] sm:$0xf]
      %v284 = vld [vmem:[%s1 + $0xbc] sm:$0xf]
      %v285 = vld [vmem:[%s1 + $0xc0] sm:$0xf]
      %v286 = vld [vmem:[%s1 + $0xc4] sm:$0xf]
      %v287 = vld [vmem:[%s1 + $0xc8] sm:$0xf]
      %v288 = vld [vmem:[%s1 + $0xcc] sm:$0xf]
      %v289 = vld [vmem:[%s1 + $0xd0] sm:$0xf]
      %v290 = vld [vmem:[%s1 + $0xd4] sm:$0xf]
      %v291 = vld [vmem:[%s1 + $0xd8] sm:$0xf]
      %v292 = vld [vmem:[%s1 + $0xdc] sm:$0xf]
      %v293 = vld [vmem:[%s1 + $0xe0] sm:$0xf]
      %v294 = vld [vmem:[%s1 + $0xe4] sm:$0xf]
      %v295 = vld [vmem:[%s1 + $0xe8] sm:$0xf]
      %v296 = vld [vmem:[%s1 + $0xec] sm:$0xf]
      %v297 = vld [vmem:[%s1 + $0xf0] sm:$0xf]
      %v298 = vld [vmem:[%s1 + $0xf4] sm:$0xf]
      %v299 = vld [vmem:[%s1 + $0xf8] sm:$0xf]
      %v300 = vld [vmem:[%s1 + $0xfc] sm:$0xf]
      %v301 = vld [vmem:[%s1 + $0x100] sm:$0xf]
      %v302 = vld [vmem:[%s1 + $0x104] sm:$0xf]
      %v303 = vld [vmem:[%s1 + $0x108] sm:$0xf]
      %v304 = vld [vmem:[%s1 + $0x10c] sm:$0xf]
      %v305 = vld [vmem:[%s1 + $0x110] sm:$0xf]
      %v306 = vld [vmem:[%s1 + $0x114] sm:$0xf]
      %v307 = vld [vmem:[%s1 + $0x118] sm:$0xf]
      %v308 = vld [vmem:[%s1 + $0x11c] sm:$0xf]
      %v309 = vld [vmem:[%s1 + $0x120] sm:$0xf]
      %v310 = vld [vmem:[%s1 + $0x124] sm:$0xf]
      %v311 = vld [vmem:[%s1 + $0x128] sm:$0xf]
      %v312 = vld [vmem:[%s1 + $0x12c] sm:$0xf]
      %v313 = vld [vmem:[%s1 + $0x130] sm:$0xf]
      %v314 = vld [vmem:[%s1 + $0x134] sm:$0xf]
      %v315 = vld [vmem:[%s1 + $0x138] sm:$0xf]
      %v316 = vld [vmem:[%s1 + $0x13c] sm:$0xf]
      %v317 = vld [vmem:[%s1 + $0x140] sm:$0xf]
      %v318 = vld [vmem:[%s1 + $0x144] sm:$0xf]
      %v319 = vld [vmem:[%s1 + $0x148] sm:$0xf]
      %v320 = vld [vmem:[%s1 + $0x14c] sm:$0xf]
      %v321 = vld [vmem:[%s1 + $0x150] sm:$0xf]
      %v322 = vld [vmem:[%s1 + $0x154] sm:$0xf]
      %v323 = vld [vmem:[%s1 + $0x158] sm:$0xf]
      %v324 = vld [vmem:[%s1 + $0x15c] sm:$0xf]
      %v325 = vld [vmem:[%s1 + $0x160] sm:$0xf]
      %v326 = vld [vmem:[%s1 + $0x164] sm:$0xf]
      %v327 = vld [vmem:[%s1 + $0x168] sm:$0xf]
      %v328 = vld [vmem:[%s1 + $0x16c] sm:$0xf]
      %v329 = vld [vmem:[%s1 + $0x170] sm:$0xf]
      %v330 = vld [vmem:[%s1 + $0x174] sm:$0xf]
      %v331 = vld [vmem:[%s1 + $0x178] sm:$0xf]
      %v332 = vld [vmem:[%s1 + $0x17c] sm:$0xf]
      %v333 = vld [vmem:[%s1 + $0x180] sm:$0xf]
      %v334 = vld [vmem:[%s1 + $0x184] sm:$0xf]
      %v335 = vld [vmem:[%s1 + $0x188] sm:$0xf]
      %v336 = vld [vmem:[%s1 + $0x18c] sm:$0xf]
      %v337 = vld [vmem:[%s1 + $0x190] sm:$0xf]
      %v338 = vld [vmem:[%s1 + $0x194] sm:$0xf]
      %v339 = vld [vmem:[%s1 + $0x198] sm:$0xf]
      %v340 = vld [vmem:[%s1 + $0x19c] sm:$0xf]
      %v341 = vld [vmem:[%s1 + $0x1a0] sm:$0xf]
      %v342 = vld [vmem:[%s1 + $0x1a4] sm:$0xf]
      %v343 = vld [vmem:[%s1 + $0x1a8] sm:$0xf]
      %v344 = vld [vmem:[%s1 + $0x1ac] sm:$0xf]
      %v345 = vld [vmem:[%s1 + $0x1b0] sm:$0xf]
      %v346 = vld [vmem:[%s1 + $0x1b4] sm:$0xf]
      %v347 = vld [vmem:[%s1 + $0x1b8] sm:$0xf]
      %v348 = vld [vmem:[%s1 + $0x1bc] sm:$0xf]
      %v349 = vld [vmem:[%s1 + $0x1c0] sm:$0xf]
      %v350 = vld [vmem:[%s1 + $0x1c4] sm:$0xf]
      %v351 = vld [vmem:[%s1 + $0x1c8] sm:$0xf]
      %v352 = vld [vmem:[%s1 + $0x1cc] sm:$0xf]
      %v353 = vld [vmem:[%s1 + $0x1d0] sm:$0xf]
      %v354 = vld [vmem:[%s1 + $0x1d4] sm:$0xf]
      %v355 = vld [vmem:[%s1 + $0x1d8] sm:$0xf]
      %v356 = vld [vmem:[%s1 + $0x1dc] sm:$0xf]
      %v357 = vld [vmem:[%s1 + $0x1e0] sm:$0xf]
      %v358 = vld [vmem:[%s1 + $0x1e4] sm:$0xf]
      %v359 = vld [vmem:[%s1 + $0x1e8] sm:$0xf]
      %v360 = vld [vmem:[%s1 + $0x1ec] sm:$0xf]
      %v361 = vld [vmem:[%s1 + $0x1f0] sm:$0xf]
      %v362 = vld [vmem:[%s1 + $0x1f4] sm:$0xf]
      %v363 = vld [vmem:[%s1 + $0x1f8] sm:$0xf]
      %v364 = vld [vmem:[%s1 + $0x1fc] sm:$0xf]
      %v365 = vld [vmem:[%s1 + $0x200] sm:$0xf]
      %v366 = vld [vmem:[%s1 + $0x204] sm:$0xf]
      %v367 = vld [vmem:[%s1 + $0x208] sm:$0xf]
      %v368 = vld [vmem:[%s1 + $0x20c] sm:$0xf]
      %v369 = vld [vmem:[%s1 + $0x210] sm:$0xf]
      %v370 = vld [vmem:[%s1 + $0x214] sm:$0xf]
      %v371 = vld [vmem:[%s1 + $0x218] sm:$0xf]
      %v372 = vld [vmem:[%s1 + $0x21c] sm:$0xf]
      %v373 = vld [vmem:[%s1 + $0x220] sm:$0xf]
      %v374 = vld [vmem:[%s1 + $0x224] sm:$0xf]
      %v375 = vld [vmem:[%s1 + $0x228] sm:$0xf]
      %v376 = vld [vmem:[%s1 + $0x22c] sm:$0xf]
      %v377 = vld [vmem:[%s1 + $0x230] sm:$0xf]
      %v378 = vld [vmem:[%s1 + $0x234] sm:$0xf]
      %v379 = vld [vmem:[%s1 + $0x238] sm:$0xf]
      %v380 = vld [vmem:[%s1 + $0x23c] sm:$0xf]
      %v381 = vld [vmem:[%s1 + $0x240] sm:$0xf]
      %v382 = vld [vmem:[%s1 + $0x244] sm:$0xf]
      %v383 = vld [vmem:[%s1 + $0x248] sm:$0xf]
      %v384 = vld [vmem:[%s1 + $0x24c] sm:$0xf]
      %v385 = vld [vmem:[%s1 + $0x250] sm:$0xf]
      %v386 = vld [vmem:[%s1 + $0x254] sm:$0xf]
      %v387 = vld [vmem:[%s1 + $0x258] sm:$0xf]
      %v388 = vld [vmem:[%s1 + $0x25c] sm:$0xf]
      %v389 = vld [vmem:[%s1 + $0x260] sm:$0xf]
      %v390 = vld [vmem:[%s1 + $0x264] sm:$0xf]
      %v391 = vld [vmem:[%s1 + $0x268] sm:$0xf]
      %v392 = vld [vmem:[%s1 + $0x26c] sm:$0xf]
      %v393 = vld [vmem:[%s1 + $0x270] sm:$0xf]
      %v394 = vld [vmem:[%s1 + $0x274] sm:$0xf]
      %v395 = vld [vmem:[%s1 + $0x278] sm:$0xf]
      %v396 = vld [vmem:[%s1 + $0x27c] sm:$0xf]
      %v397 = vld [vmem:[%s1 + $0x280] sm:$0xf]
      %v398 = vld [vmem:[%s1 + $0x284] sm:$0xf]
      %v399 = vld [vmem:[%s1 + $0x288] sm:$0xf]
      %v400 = vld [vmem:[%s1 + $0x28c] sm:$0xf]
      %v401 = vld [vmem:[%s1 + $0x290] sm:$0xf]
      %v402 = vld [vmem:[%s1 + $0x294] sm:$0xf]
      %v403 = vld [vmem:[%s1 + $0x298] sm:$0xf]
      %v404 = vld [vmem:[%s1 + $0x29c] sm:$0xf]
      %v405 = vld [vmem:[%s1 + $0x2a0] sm:$0xf]
      %v406 = vld [vmem:[%s1 + $0x2a4] sm:$0xf]
      %v407 = vld [vmem:[%s1 + $0x2a8] sm:$0xf]
      %v408 = vld [vmem:[%s1 + $0x2ac] sm:$0xf]
      %v409 = vld [vmem:[%s1 + $0x2b0] sm:$0xf]
      %v410 = vld [vmem:[%s1 + $0x2b4] sm:$0xf]
      %v411 = vld [vmem:[%s1 + $0x2b8] sm:$0xf]
      %v412 = vld [vmem:[%s1 + $0x2bc] sm:$0xf]
      %v413 = vld [vmem:[%s1 + $0x2c0] sm:$0xf]
      %v414 = vld [vmem:[%s1 + $0x2c4] sm:$0xf]
      %v415 = vld [vmem:[%s1 + $0x2c8] sm:$0xf]
      %v416 = vld [vmem:[%s1 + $0x2cc] sm:$0xf]
      %v417 = vld [vmem:[%s1 + $0x2d0] sm:$0xf]
      %v418 = vld [vmem:[%s1 + $0x2d4] sm:$0xf]
      %v419 = vld [vmem:[%s1 + $0x2d8] sm:$0xf]
      %v420 = vld [vmem:[%s1 + $0x2dc] sm:$0xf]
      %v421 = vld [vmem:[%s1 + $0x2e0] sm:$0xf]
      %v422 = vld [vmem:[%s1 + $0x2e4] sm:$0xf]
      %v423 = vld [vmem:[%s1 + $0x2e8] sm:$0xf]
      %v424 = vld [vmem:[%s1 + $0x2ec] sm:$0xf]
      %v425 = vld [vmem:[%s1 + $0x2f0] sm:$0xf]
      %v426 = vld [vmem:[%s1 + $0x2f4] sm:$0xf]
      %v427 = vld [vmem:[%s1 + $0x2f8] sm:$0xf]
      %v428 = vld [vmem:[%s1 + $0x2fc] sm:$0xf]
      %v429 = vld [vmem:[%s1 + $0x300] sm:$0xf]
      %v430 = vld [vmem:[%s1 + $0x304] sm:$0xf]
      %v431 = vld [vmem:[%s1 + $0x308] sm:$0xf]
      %v432 = vld [vmem:[%s1 + $0x30c] sm:$0xf]
      %v433 = vld [vmem:[%s1 + $0x310] sm:$0xf]
      %v434 = vld [vmem:[%s1 + $0x314] sm:$0xf]
      %v435 = vld [vmem:[%s1 + $0x318] sm:$0xf]
      %v436 = vld [vmem:[%s1 + $0x31c] sm:$0xf]
      %v437 = vld [vmem:[%s1 + $0x320] sm:$0xf]
      %v438 = vld [vmem:[%s1 + $0x324] sm:$0xf]
      %v439 = vld [vmem:[%s1 + $0x328] sm:$0xf]
      %v440 = vld [vmem:[%s1 + $0x32c] sm:$0xf]
      %v441 = vld [vmem:[%s1 + $0x330] sm:$0xf]
      %v442 = vld [vmem:[%s1 + $0x334] sm:$0xf]
      %v443 = vld [vmem:[%s1 + $0x338] sm:$0xf]
      %v444 = vld [vmem:[%s1 + $0x33c] sm:$0xf]
      %v445 = vld [vmem:[%s1 + $0x340] sm:$0xf]
      %v446 = vld [vmem:[%s1 + $0x344] sm:$0xf]
      %v447 = vld [vmem:[%s1 + $0x348] sm:$0xf]
      %v448 = vld [vmem:[%s1 + $0x34c] sm:$0xf]
      %v449 = vld [vmem:[%s1 + $0x350] sm:$0xf]
      %v450 = vld [vmem:[%s1 + $0x354] sm:$0xf]
      %v451 = vld [vmem:[%s1 + $0x358] sm:$0xf]
      %v452 = vld [vmem:[%s1 + $0x35c] sm:$0xf]
      %v453 = vld [vmem:[%s2] sm:$0x1]
      %v455 = vlaneseq
      %v456 = vshrl.u32 %v455, 7
      %v457 = vsub.s32 0, %v456
      %v458 = vrot.slane %v453, %v457
      %v488 = vunpack.c.l.b16 %v209
      %v489 = vunpack.c.h.b16 %v209
      %v490 = vunpack.c.l.b16 %v210
      %v491 = vunpack.c.h.b16 %v210
      %v492 = vunpack.c.l.b16 %v211
      %v493 = vunpack.c.h.b16 %v211
      %v494 = vunpack.c.l.b16 %v212
      %v495 = vunpack.c.h.b16 %v212
      %v496 = vunpack.c.l.b16 %v213
      %v497 = vunpack.c.h.b16 %v213
      %v498 = vunpack.c.l.b16 %v214
      %v499 = vunpack.c.h.b16 %v214
      %v500 = vunpack.c.l.b16 %v215
      %v501 = vunpack.c.h.b16 %v215
      %v502 = vunpack.c.l.b16 %v216
      %v503 = vunpack.c.h.b16 %v216
      %v504 = vunpack.c.l.b16 %v217
      %v505 = vunpack.c.h.b16 %v217
      %v506 = vunpack.c.l.b16 %v218
      %v507 = vunpack.c.h.b16 %v218
      %v508 = vunpack.c.l.b16 %v219
      %v509 = vunpack.c.h.b16 %v219
      %v510 = vunpack.c.l.b16 %v220
      %v511 = vunpack.c.h.b16 %v220
      %v512 = vunpack.c.l.b16 %v221
      %v513 = vunpack.c.h.b16 %v221
      %v514 = vunpack.c.l.b16 %v222
      %v515 = vunpack.c.h.b16 %v222
      %v516 = vunpack.c.l.b16 %v223
      %v517 = vunpack.c.h.b16 %v223
      %v518 = vunpack.c.l.b16 %v224
      %v519 = vunpack.c.h.b16 %v224
      %v520 = vunpack.c.l.b16 %v225
      %v521 = vunpack.c.h.b16 %v225
      %v522 = vunpack.c.l.b16 %v226
      %v523 = vunpack.c.h.b16 %v226
      %v524 = vunpack.c.l.b16 %v227
      %v525 = vunpack.c.h.b16 %v227
      %v526 = vunpack.c.l.b16 %v228
      %v527 = vunpack.c.h.b16 %v228
      %v528 = vunpack.c.l.b16 %v229
      %v529 = vunpack.c.h.b16 %v229
      %v530 = vunpack.c.l.b16 %v230
      %v531 = vunpack.c.h.b16 %v230
      %v532 = vunpack.c.l.b16 %v231
      %v533 = vunpack.c.h.b16 %v231
      %v534 = vunpack.c.l.b16 %v232
      %v535 = vunpack.c.h.b16 %v232
      %v536 = vunpack.c.l.b16 %v233
      %v537 = vunpack.c.h.b16 %v233
      %v538 = vunpack.c.l.b16 %v234
      %v539 = vunpack.c.h.b16 %v234
      %v540 = vunpack.c.l.b16 %v235
      %v541 = vunpack.c.h.b16 %v235
      %v542 = vunpack.c.l.b16 %v236
      %v543 = vunpack.c.h.b16 %v236
      %v544 = vpack.c.b16 %v502, %v488
      %v545 = vpack.c.b16 %v503, %v489
      %v546 = vpack.c.b16 %v504, %v490
      %v547 = vpack.c.b16 %v505, %v491
      %v548 = vpack.c.b16 %v506, %v492
      %v549 = vpack.c.b16 %v507, %v493
      %v550 = vpack.c.b16 %v508, %v494
      %v551 = vpack.c.b16 %v509, %v495
      %v552 = vpack.c.b16 %v510, %v496
      %v553 = vpack.c.b16 %v511, %v497
      %v554 = vpack.c.b16 %v512, %v498
      %v555 = vpack.c.b16 %v513, %v499
      %v556 = vpack.c.b16 %v514, %v500
      %v557 = vpack.c.b16 %v515, %v501
      %v558 = vpack.c.b16 %v530, %v516
      %v559 = vpack.c.b16 %v531, %v517
      %v560 = vpack.c.b16 %v532, %v518
      %v561 = vpack.c.b16 %v533, %v519
      %v562 = vpack.c.b16 %v534, %v520
      %v563 = vpack.c.b16 %v535, %v521
      %v564 = vpack.c.b16 %v536, %v522
      %v565 = vpack.c.b16 %v537, %v523
      %v566 = vpack.c.b16 %v538, %v524
      %v567 = vpack.c.b16 %v539, %v525
      %v568 = vpack.c.b16 %v540, %v526
      %v569 = vpack.c.b16 %v541, %v527
      %v570 = vpack.c.b16 %v542, %v528
      %v571 = vpack.c.b16 %v543, %v529
      %v814 = vunpack.c.l.b16 %v237
      %v815 = vunpack.c.l.b16 %v238
      %v816 = vunpack.c.l.b16 %v239
      %v817 = vunpack.c.l.b16 %v240
      %v818 = vunpack.c.l.b16 %v241
      %v819 = vunpack.c.l.b16 %v242
      %v820 = vunpack.c.l.b16 %v243
      %v821 = vunpack.c.l.b16 %v244
      %v822 = vunpack.c.l.b16 %v245
      %v823 = vunpack.c.l.b16 %v246
      %v824 = vunpack.c.l.b16 %v247
      %v825 = vunpack.c.l.b16 %v248
      %v826 = vunpack.c.l.b16 %v249
      %v827 = vunpack.c.l.b16 %v250
      %v828 = vunpack.c.l.b16 %v251
      %v829 = vunpack.c.l.b16 %v252
      %v830 = vunpack.c.l.b16 %v253
      %v831 = vunpack.c.l.b16 %v254
      %v832 = vunpack.c.l.b16 %v255
      %v833 = vunpack.c.l.b16 %v256
      %v834 = vunpack.c.l.b16 %v257
      %v835 = vunpack.c.l.b16 %v258
      %v836 = vunpack.c.l.b16 %v259
      %v837 = vunpack.c.l.b16 %v260
      %v838 = vunpack.c.l.b16 %v261
      %v839 = vunpack.c.l.b16 %v262
      %v840 = vunpack.c.l.b16 %v263
      %v841 = vunpack.c.l.b16 %v264
      %v842 = vunpack.c.l.b16 %v265
      %v843 = vunpack.c.l.b16 %v266
      %v844 = vunpack.c.l.b16 %v267
      %v845 = vunpack.c.l.b16 %v268
      %v846 = vunpack.c.l.b16 %v269
      %v847 = vunpack.c.l.b16 %v270
      %v848 = vunpack.c.l.b16 %v271
      %v849 = vunpack.c.l.b16 %v272
      %v850 = vunpack.c.l.b16 %v273
      %v851 = vunpack.c.l.b16 %v274
      %v852 = vunpack.c.l.b16 %v275
      %v853 = vunpack.c.l.b16 %v276
      %v854 = vunpack.c.l.b16 %v277
      %v855 = vunpack.c.l.b16 %v278
      %v856 = vunpack.c.l.b16 %v279
      %v857 = vunpack.c.l.b16 %v280
      %v858 = vunpack.c.l.b16 %v281
      %v859 = vunpack.c.l.b16 %v282
      %v860 = vunpack.c.l.b16 %v283
      %v861 = vunpack.c.l.b16 %v284
      %v862 = vunpack.c.l.b16 %v285
      %v863 = vunpack.c.l.b16 %v286
      %v864 = vunpack.c.l.b16 %v287
      %v865 = vunpack.c.l.b16 %v288
      %v866 = vunpack.c.l.b16 %v289
      %v867 = vunpack.c.l.b16 %v290
      %v868 = vunpack.c.l.b16 %v291
      %v869 = vunpack.c.l.b16 %v292
      %v870 = vunpack.c.l.b16 %v293
      %v871 = vunpack.c.l.b16 %v294
      %v872 = vunpack.c.l.b16 %v295
      %v873 = vunpack.c.l.b16 %v296
      %v874 = vunpack.c.l.b16 %v297
      %v875 = vunpack.c.l.b16 %v298
      %v876 = vunpack.c.l.b16 %v299
      %v877 = vunpack.c.l.b16 %v300
      %v878 = vunpack.c.l.b16 %v301
      %v879 = vunpack.c.l.b16 %v302
      %v880 = vunpack.c.l.b16 %v303
      %v881 = vunpack.c.l.b16 %v304
      %v882 = vunpack.c.l.b16 %v305
      %v883 = vunpack.c.l.b16 %v306
      %v884 = vunpack.c.l.b16 %v307
      %v885 = vunpack.c.l.b16 %v308
      %v886 = vunpack.c.l.b16 %v309
      %v887 = vunpack.c.l.b16 %v310
      %v888 = vunpack.c.l.b16 %v311
      %v889 = vunpack.c.l.b16 %v312
      %v890 = vunpack.c.l.b16 %v313
      %v891 = vunpack.c.l.b16 %v314
      %v892 = vunpack.c.l.b16 %v315
      %v893 = vunpack.c.l.b16 %v316
      %v894 = vunpack.c.l.b16 %v317
      %v895 = vunpack.c.l.b16 %v318
      %v896 = vunpack.c.l.b16 %v319
      %v897 = vunpack.c.l.b16 %v320
      %v898 = vunpack.c.l.b16 %v321
      %v899 = vunpack.c.l.b16 %v322
      %v900 = vunpack.c.l.b16 %v323
      %v901 = vunpack.c.l.b16 %v324
      %v902 = vunpack.c.l.b16 %v325
      %v903 = vunpack.c.l.b16 %v326
      %v904 = vunpack.c.l.b16 %v327
      %v905 = vunpack.c.l.b16 %v328
      %v906 = vunpack.c.l.b16 %v329
      %v907 = vunpack.c.l.b16 %v330
      %v908 = vunpack.c.l.b16 %v331
      %v909 = vunpack.c.l.b16 %v332
      %v910 = vunpack.c.l.b16 %v333
      %v911 = vunpack.c.l.b16 %v334
      %v912 = vunpack.c.l.b16 %v335
      %v913 = vunpack.c.l.b16 %v336
      %v914 = vunpack.c.l.b16 %v337
      %v915 = vunpack.c.l.b16 %v338
      %v916 = vunpack.c.l.b16 %v339
      %v917 = vunpack.c.l.b16 %v340
      %v918 = vunpack.c.l.b16 %v341
      %v919 = vunpack.c.l.b16 %v342
      %v920 = vunpack.c.l.b16 %v343
      %v921 = vunpack.c.l.b16 %v344
      %v922 = vunpack.c.l.b16 %v345
      %v923 = vunpack.c.l.b16 %v346
      %v924 = vunpack.c.l.b16 %v347
      %v925 = vunpack.c.l.b16 %v348
      %v926 = vunpack.c.l.b16 %v349
      %v927 = vunpack.c.l.b16 %v350
      %v928 = vunpack.c.l.b16 %v351
      %v929 = vunpack.c.l.b16 %v352
      %v930 = vunpack.c.l.b16 %v353
      %v931 = vunpack.c.l.b16 %v354
      %v932 = vunpack.c.l.b16 %v355
      %v933 = vunpack.c.l.b16 %v356
      %v934 = vunpack.c.l.b16 %v357
      %v935 = vunpack.c.l.b16 %v358
      %v936 = vunpack.c.l.b16 %v359
      %v937 = vunpack.c.l.b16 %v360
      %v938 = vunpack.c.l.b16 %v361
      %v939 = vunpack.c.l.b16 %v362
      %v940 = vunpack.c.l.b16 %v363
      %v941 = vunpack.c.l.b16 %v364
      %v942 = vunpack.c.l.b16 %v365
      %v943 = vunpack.c.l.b16 %v366
      %v944 = vunpack.c.l.b16 %v367
      %v945 = vunpack.c.l.b16 %v368
      %v946 = vunpack.c.l.b16 %v369
      %v947 = vunpack.c.l.b16 %v370
      %v948 = vunpack.c.l.b16 %v371
      %v949 = vunpack.c.l.b16 %v372
      %v950 = vunpack.c.l.b16 %v373
      %v951 = vunpack.c.l.b16 %v374
      %v952 = vunpack.c.l.b16 %v375
      %v953 = vunpack.c.l.b16 %v376
      %v954 = vunpack.c.l.b16 %v377
      %v955 = vunpack.c.l.b16 %v378
      %v956 = vunpack.c.l.b16 %v379
      %v957 = vunpack.c.l.b16 %v380
      %v958 = vunpack.c.l.b16 %v381
      %v959 = vunpack.c.l.b16 %v382
      %v960 = vunpack.c.l.b16 %v383
      %v961 = vunpack.c.l.b16 %v384
      %v962 = vunpack.c.l.b16 %v385
      %v963 = vunpack.c.l.b16 %v386
      %v964 = vunpack.c.l.b16 %v387
      %v965 = vunpack.c.l.b16 %v388
      %v966 = vunpack.c.l.b16 %v389
      %v967 = vunpack.c.l.b16 %v390
      %v968 = vunpack.c.l.b16 %v391
      %v969 = vunpack.c.l.b16 %v392
      %v970 = vunpack.c.l.b16 %v393
      %v971 = vunpack.c.l.b16 %v394
      %v972 = vunpack.c.l.b16 %v395
      %v973 = vunpack.c.l.b16 %v396
      %v974 = vunpack.c.l.b16 %v397
      %v975 = vunpack.c.l.b16 %v398
      %v976 = vunpack.c.l.b16 %v399
      %v977 = vunpack.c.l.b16 %v400
      %v978 = vunpack.c.l.b16 %v401
      %v979 = vunpack.c.l.b16 %v402
      %v980 = vunpack.c.l.b16 %v403
      %v981 = vunpack.c.l.b16 %v404
      %v982 = vunpack.c.l.b16 %v405
      %v983 = vunpack.c.l.b16 %v406
      %v984 = vunpack.c.l.b16 %v407
      %v985 = vunpack.c.l.b16 %v408
      %v986 = vunpack.c.l.b16 %v409
      %v987 = vunpack.c.l.b16 %v410
      %v988 = vunpack.c.l.b16 %v411
      %v989 = vunpack.c.l.b16 %v412
      %v990 = vunpack.c.l.b16 %v413
      %v991 = vunpack.c.l.b16 %v414
      %v992 = vunpack.c.l.b16 %v415
      %v993 = vunpack.c.l.b16 %v416
      %v994 = vunpack.c.l.b16 %v417
      %v995 = vunpack.c.l.b16 %v418
      %v996 = vunpack.c.l.b16 %v419
      %v997 = vunpack.c.l.b16 %v420
      %v998 = vunpack.c.l.b16 %v421
      %v999 = vunpack.c.l.b16 %v422
      %v1000 = vunpack.c.l.b16 %v423
      %v1001 = vunpack.c.l.b16 %v424
      %v1002 = vunpack.c.l.b16 %v425
      %v1003 = vunpack.c.l.b16 %v426
      %v1004 = vunpack.c.l.b16 %v427
      %v1005 = vunpack.c.l.b16 %v428
      %v1006 = vunpack.c.l.b16 %v429
      %v1007 = vunpack.c.l.b16 %v430
      %v1008 = vunpack.c.l.b16 %v431
      %v1009 = vunpack.c.l.b16 %v432
      %v1010 = vunpack.c.l.b16 %v433
      %v1011 = vunpack.c.l.b16 %v434
      %v1012 = vunpack.c.l.b16 %v435
      %v1013 = vunpack.c.l.b16 %v436
      %v1014 = vunpack.c.l.b16 %v437
      %v1015 = vunpack.c.l.b16 %v438
      %v1016 = vunpack.c.l.b16 %v439
      %v1017 = vunpack.c.l.b16 %v440
      %v1018 = vunpack.c.l.b16 %v441
      %v1019 = vunpack.c.l.b16 %v442
      %v1020 = vunpack.c.l.b16 %v443
      %v1021 = vunpack.c.l.b16 %v444
      %v1022 = vunpack.c.l.b16 %v445
      %v1023 = vunpack.c.l.b16 %v446
      %v1024 = vunpack.c.l.b16 %v447
      %v1025 = vunpack.c.l.b16 %v448
      %v1026 = vunpack.c.l.b16 %v449
      %v1027 = vunpack.c.l.b16 %v450
      %v1028 = vunpack.c.l.b16 %v451
      %v1029 = vunpack.c.l.b16 %v452
      %v1030 = vpack.c.b16 %v815, %v814
      %v1031 = vpack.c.b16 %v817, %v816
      %v1032 = vpack.c.b16 %v819, %v818
      %v1033 = vpack.c.b16 %v821, %v820
      %v1034 = vpack.c.b16 %v823, %v822
      %v1035 = vpack.c.b16 %v825, %v824
      %v1036 = vpack.c.b16 %v827, %v826
      %v1037 = vpack.c.b16 %v829, %v828
      %v1038 = vpack.c.b16 %v831, %v830
      %v1039 = vpack.c.b16 %v833, %v832
      %v1040 = vpack.c.b16 %v835, %v834
      %v1041 = vpack.c.b16 %v837, %v836
      %v1042 = vpack.c.b16 %v839, %v838
      %v1043 = vpack.c.b16 %v841, %v840
      %v1044 = vpack.c.b16 %v843, %v842
      %v1045 = vpack.c.b16 %v845, %v844
      %v1046 = vpack.c.b16 %v847, %v846
      %v1047 = vpack.c.b16 %v849, %v848
      %v1048 = vpack.c.b16 %v851, %v850
      %v1049 = vpack.c.b16 %v853, %v852
      %v1050 = vpack.c.b16 %v855, %v854
      %v1051 = vpack.c.b16 %v857, %v856
      %v1052 = vpack.c.b16 %v859, %v858
      %v1053 = vpack.c.b16 %v861, %v860
      %v1054 = vpack.c.b16 %v863, %v862
      %v1055 = vpack.c.b16 %v865, %v864
      %v1056 = vpack.c.b16 %v867, %v866
      %v1057 = vpack.c.b16 %v869, %v868
      %v1058 = vpack.c.b16 %v871, %v870
      %v1059 = vpack.c.b16 %v873, %v872
      %v1060 = vpack.c.b16 %v875, %v874
      %v1061 = vpack.c.b16 %v877, %v876
      %v1062 = vpack.c.b16 %v879, %v878
      %v1063 = vpack.c.b16 %v881, %v880
      %v1064 = vpack.c.b16 %v883, %v882
      %v1065 = vpack.c.b16 %v885, %v884
      %v1066 = vpack.c.b16 %v887, %v886
      %v1067 = vpack.c.b16 %v889, %v888
      %v1068 = vpack.c.b16 %v891, %v890
      %v1069 = vpack.c.b16 %v893, %v892
      %v1070 = vpack.c.b16 %v895, %v894
      %v1071 = vpack.c.b16 %v897, %v896
      %v1072 = vpack.c.b16 %v899, %v898
      %v1073 = vpack.c.b16 %v901, %v900
      %v1074 = vpack.c.b16 %v903, %v902
      %v1075 = vpack.c.b16 %v905, %v904
      %v1076 = vpack.c.b16 %v907, %v906
      %v1077 = vpack.c.b16 %v909, %v908
      %v1078 = vpack.c.b16 %v911, %v910
      %v1079 = vpack.c.b16 %v913, %v912
      %v1080 = vpack.c.b16 %v915, %v914
      %v1081 = vpack.c.b16 %v917, %v916
      %v1082 = vpack.c.b16 %v919, %v918
      %v1083 = vpack.c.b16 %v921, %v920
      %v1084 = vpack.c.b16 %v923, %v922
      %v1085 = vpack.c.b16 %v925, %v924
      %v1086 = vpack.c.b16 %v927, %v926
      %v1087 = vpack.c.b16 %v929, %v928
      %v1088 = vpack.c.b16 %v931, %v930
      %v1089 = vpack.c.b16 %v933, %v932
      %v1090 = vpack.c.b16 %v935, %v934
      %v1091 = vpack.c.b16 %v937, %v936
      %v1092 = vpack.c.b16 %v939, %v938
      %v1093 = vpack.c.b16 %v941, %v940
      %v1094 = vpack.c.b16 %v943, %v942
      %v1095 = vpack.c.b16 %v945, %v944
      %v1096 = vpack.c.b16 %v947, %v946
      %v1097 = vpack.c.b16 %v949, %v948
      %v1098 = vpack.c.b16 %v951, %v950
      %v1099 = vpack.c.b16 %v953, %v952
      %v1100 = vpack.c.b16 %v955, %v954
      %v1101 = vpack.c.b16 %v957, %v956
      %v1102 = vpack.c.b16 %v959, %v958
      %v1103 = vpack.c.b16 %v961, %v960
      %v1104 = vpack.c.b16 %v963, %v962
      %v1105 = vpack.c.b16 %v965, %v964
      %v1106 = vpack.c.b16 %v967, %v966
      %v1107 = vpack.c.b16 %v969, %v968
      %v1108 = vpack.c.b16 %v971, %v970
      %v1109 = vpack.c.b16 %v973, %v972
      %v1110 = vpack.c.b16 %v975, %v974
      %v1111 = vpack.c.b16 %v977, %v976
      %v1112 = vpack.c.b16 %v979, %v978
      %v1113 = vpack.c.b16 %v981, %v980
      %v1114 = vpack.c.b16 %v983, %v982
      %v1115 = vpack.c.b16 %v985, %v984
      %v1116 = vpack.c.b16 %v987, %v986
      %v1117 = vpack.c.b16 %v989, %v988
      %v1118 = vpack.c.b16 %v991, %v990
      %v1119 = vpack.c.b16 %v993, %v992
      %v1120 = vpack.c.b16 %v995, %v994
      %v1121 = vpack.c.b16 %v997, %v996
      %v1122 = vpack.c.b16 %v999, %v998
      %v1123 = vpack.c.b16 %v1001, %v1000
      %v1124 = vpack.c.b16 %v1003, %v1002
      %v1125 = vpack.c.b16 %v1005, %v1004
      %v1126 = vpack.c.b16 %v1007, %v1006
      %v1127 = vpack.c.b16 %v1009, %v1008
      %v1128 = vpack.c.b16 %v1011, %v1010
      %v1129 = vpack.c.b16 %v1013, %v1012
      %v1130 = vpack.c.b16 %v1015, %v1014
      %v1131 = vpack.c.b16 %v1017, %v1016
      %v1132 = vpack.c.b16 %v1019, %v1018
      %v1133 = vpack.c.b16 %v1021, %v1020
      %v1134 = vpack.c.b16 %v1023, %v1022
      %v1135 = vpack.c.b16 %v1025, %v1024
      %v1136 = vpack.c.b16 %v1027, %v1026
      %v1137 = vpack.c.b16 %v1029, %v1028
      %vm1246 = vcmask 523264
      %v1248 = vsel %vm1246, %v557, 0
      %v1251 = vsel %vm1246, %v571, 0
      %1253 = vmatprep.subr.bf16.mxu0 0
      %1254 = vmatpush1.bf16.msra.mxu0 %v1037
      %1255 = vmatprep.subr.bf16.mxu0 0
      %1256 = vmatpush1.bf16.msra.mxu0 %v1036
      %1257 = vmatprep.subr.bf16.mxu0 0
      %1258 = vmatpush1.bf16.msra.mxu0 %v1035
      %1259 = vmatprep.subr.bf16.mxu0 0
      %1260 = vmatpush1.bf16.msra.mxu0 %v1034
      %1261 = vmatprep.subr.bf16.mxu0 0
      %1262 = vmatpush1.bf16.msra.mxu0 %v1033
      %1263 = vmatprep.subr.bf16.mxu0 0
      %1264 = vmatpush1.bf16.msra.mxu0 %v1032
      %1265 = vmatprep.subr.bf16.mxu0 0
      %1266 = vmatpush1.bf16.msra.mxu0 %v1031
      %1267 = vmatprep.subr.bf16.mxu0 0
      %1268 = vmatpush1.bf16.msra.mxu0 %v1030
      %1269 = vmatprep.subr.bf16.mxu0 0
      %1270 = vmatpush2.bf16.msra.mxu0 %v1045
      %1271 = vmatprep.subr.bf16.mxu0 0
      %1272 = vmatpush2.bf16.msra.mxu0 %v1044
      %1273 = vmatprep.subr.bf16.mxu0 0
      %1274 = vmatpush2.bf16.msra.mxu0 %v1043
      %1275 = vmatprep.subr.bf16.mxu0 0
      %1276 = vmatpush2.bf16.msra.mxu0 %v1042
      %1277 = vmatprep.subr.bf16.mxu0 0
      %1278 = vmatpush2.bf16.msra.mxu0 %v1041
      %1279 = vmatprep.subr.bf16.mxu0 0
      %1280 = vmatpush2.bf16.msra.mxu0 %v1040
      %1281 = vmatprep.subr.bf16.mxu0 0
      %1282 = vmatpush2.bf16.msra.mxu0 %v1039
      %1283 = vmatprep.subr.bf16.mxu0 0
      %1284 = vmatpush2.bf16.msra.mxu0 %v1038
      %1285 = vmatprep.mubr.bf16.mxu0 %v545
      %1286 = vmatmul.mubr.bf16.gmra.mxu0 %v544
      %v1287 = vpop.f32.mrf.mxu0
      %v1288 = vadd.f32 %v458, %v1287
      %v1289 = vpop.f32.mrf.mxu0
      %v1290 = vpop.f32.mrf.mxu0
      %v1291 = vadd.f32 %v458, %v1290
      %v1292 = vpop.f32.mrf.mxu0
      %1293 = vmatprep.mubr.bf16.mxu0 %v559
      %1294 = vmatmul.mubr.bf16.gmra.mxu0 %v558
      %v1295 = vpop.f32.mrf.mxu0
      %v1296 = vadd.f32 %v458, %v1295
      %v1297 = vpop.f32.mrf.mxu0
      %v1298 = vpop.f32.mrf.mxu0
      %v1299 = vadd.f32 %v458, %v1298
      %v1300 = vpop.f32.mrf.mxu0
      %1301 = vdwg.mxu0
      %1302 = vmatprep.subr.bf16.mxu0 0
      %1303 = vmatpush1.bf16.msra.mxu0 %v1053
      %1304 = vmatprep.subr.bf16.mxu0 0
      %1305 = vmatpush1.bf16.msra.mxu0 %v1052
      %1306 = vmatprep.subr.bf16.mxu0 0
      %1307 = vmatpush1.bf16.msra.mxu0 %v1051
      %1308 = vmatprep.subr.bf16.mxu0 0
      %1309 = vmatpush1.bf16.msra.mxu0 %v1050
      %1310 = vmatprep.subr.bf16.mxu0 0
      %1311 = vmatpush1.bf16.msra.mxu0 %v1049
      %1312 = vmatprep.subr.bf16.mxu0 0
      %1313 = vmatpush1.bf16.msra.mxu0 %v1048
      %1314 = vmatprep.subr.bf16.mxu0 0
      %1315 = vmatpush1.bf16.msra.mxu0 %v1047
      %1316 = vmatprep.subr.bf16.mxu0 0
      %1317 = vmatpush1.bf16.msra.mxu0 %v1046
      %1318 = vmatprep.subr.bf16.mxu0 0
      %1319 = vmatpush2.bf16.msra.mxu0 %v1061
      %1320 = vmatprep.subr.bf16.mxu0 0
      %1321 = vmatpush2.bf16.msra.mxu0 %v1060
      %1322 = vmatprep.subr.bf16.mxu0 0
      %1323 = vmatpush2.bf16.msra.mxu0 %v1059
      %1324 = vmatprep.subr.bf16.mxu0 0
      %1325 = vmatpush2.bf16.msra.mxu0 %v1058
      %1326 = vmatprep.subr.bf16.mxu0 0
      %1327 = vmatpush2.bf16.msra.mxu0 %v1057
      %1328 = vmatprep.subr.bf16.mxu0 0
      %1329 = vmatpush2.bf16.msra.mxu0 %v1056
      %1330 = vmatprep.subr.bf16.mxu0 0
      %1331 = vmatpush2.bf16.msra.mxu0 %v1055
      %1332 = vmatprep.subr.bf16.mxu0 0
      %1333 = vmatpush2.bf16.msra.mxu0 %v1054
      %1334 = vmatprep.mubr.bf16.mxu0 %v547
      %1335 = vmatmul.mubr.bf16.gmra.mxu0 %v546
      %v1336 = vpop.f32.mrf.mxu0
      %v1337 = vadd.f32 %v1288, %v1336
      %v1338 = vpop.f32.mrf.mxu0
      %v1339 = vpop.f32.mrf.mxu0
      %v1340 = vadd.f32 %v1291, %v1339
      %v1341 = vpop.f32.mrf.mxu0
      %1342 = vmatprep.mubr.bf16.mxu0 %v561
      %1343 = vmatmul.mubr.bf16.gmra.mxu0 %v560
      %v1344 = vpop.f32.mrf.mxu0
      %v1345 = vadd.f32 %v1296, %v1344
      %v1346 = vpop.f32.mrf.mxu0
      %v1347 = vpop.f32.mrf.mxu0
      %v1348 = vadd.f32 %v1299, %v1347
      %v1349 = vpop.f32.mrf.mxu0
      %1350 = vdwg.mxu0
      %1351 = vmatprep.subr.bf16.mxu0 0
      %1352 = vmatpush1.bf16.msra.mxu0 %v1069
      %1353 = vmatprep.subr.bf16.mxu0 0
      %1354 = vmatpush1.bf16.msra.mxu0 %v1068
      %1355 = vmatprep.subr.bf16.mxu0 0
      %1356 = vmatpush1.bf16.msra.mxu0 %v1067
      %1357 = vmatprep.subr.bf16.mxu0 0
      %1358 = vmatpush1.bf16.msra.mxu0 %v1066
      %1359 = vmatprep.subr.bf16.mxu0 0
      %1360 = vmatpush1.bf16.msra.mxu0 %v1065
      %1361 = vmatprep.subr.bf16.mxu0 0
      %1362 = vmatpush1.bf16.msra.mxu0 %v1064
      %1363 = vmatprep.subr.bf16.mxu0 0
      %1364 = vmatpush1.bf16.msra.mxu0 %v1063
      %1365 = vmatprep.subr.bf16.mxu0 0
      %1366 = vmatpush1.bf16.msra.mxu0 %v1062
      %1367 = vmatprep.subr.bf16.mxu0 0
      %1368 = vmatpush2.bf16.msra.mxu0 %v1077
      %1369 = vmatprep.subr.bf16.mxu0 0
      %1370 = vmatpush2.bf16.msra.mxu0 %v1076
      %1371 = vmatprep.subr.bf16.mxu0 0
      %1372 = vmatpush2.bf16.msra.mxu0 %v1075
      %1373 = vmatprep.subr.bf16.mxu0 0
      %1374 = vmatpush2.bf16.msra.mxu0 %v1074
      %1375 = vmatprep.subr.bf16.mxu0 0
      %1376 = vmatpush2.bf16.msra.mxu0 %v1073
      %1377 = vmatprep.subr.bf16.mxu0 0
      %1378 = vmatpush2.bf16.msra.mxu0 %v1072
      %1379 = vmatprep.subr.bf16.mxu0 0
      %1380 = vmatpush2.bf16.msra.mxu0 %v1071
      %1381 = vmatprep.subr.bf16.mxu0 0
      %1382 = vmatpush2.bf16.msra.mxu0 %v1070
      %1383 = vmatprep.mubr.bf16.mxu0 %v549
      %1384 = vmatmul.mubr.bf16.gmra.mxu0 %v548
      %v1385 = vpop.f32.mrf.mxu0
      %v1386 = vadd.f32 %v1337, %v1385
      %v1387 = vpop.f32.mrf.mxu0
      %v1388 = vpop.f32.mrf.mxu0
      %v1389 = vadd.f32 %v1340, %v1388
      %v1390 = vpop.f32.mrf.mxu0
      %1391 = vmatprep.mubr.bf16.mxu0 %v563
      %1392 = vmatmul.mubr.bf16.gmra.mxu0 %v562
      %v1393 = vpop.f32.mrf.mxu0
      %v1394 = vadd.f32 %v1345, %v1393
      %v1395 = vpop.f32.mrf.mxu0
      %v1396 = vpop.f32.mrf.mxu0
      %v1397 = vadd.f32 %v1348, %v1396
      %v1398 = vpop.f32.mrf.mxu0
      %1399 = vdwg.mxu0
      %1400 = vmatprep.subr.bf16.mxu0 0
      %1401 = vmatpush1.bf16.msra.mxu0 %v1085
      %1402 = vmatprep.subr.bf16.mxu0 0
      %1403 = vmatpush1.bf16.msra.mxu0 %v1084
      %1404 = vmatprep.subr.bf16.mxu0 0
      %1405 = vmatpush1.bf16.msra.mxu0 %v1083
      %1406 = vmatprep.subr.bf16.mxu0 0
      %1407 = vmatpush1.bf16.msra.mxu0 %v1082
      %1408 = vmatprep.subr.bf16.mxu0 0
      %1409 = vmatpush1.bf16.msra.mxu0 %v1081
      %1410 = vmatprep.subr.bf16.mxu0 0
      %1411 = vmatpush1.bf16.msra.mxu0 %v1080
      %1412 = vmatprep.subr.bf16.mxu0 0
      %1413 = vmatpush1.bf16.msra.mxu0 %v1079
      %1414 = vmatprep.subr.bf16.mxu0 0
      %1415 = vmatpush1.bf16.msra.mxu0 %v1078
      %1416 = vmatprep.subr.bf16.mxu0 0
      %1417 = vmatpush2.bf16.msra.mxu0 %v1093
      %1418 = vmatprep.subr.bf16.mxu0 0
      %1419 = vmatpush2.bf16.msra.mxu0 %v1092
      %1420 = vmatprep.subr.bf16.mxu0 0
      %1421 = vmatpush2.bf16.msra.mxu0 %v1091
      %1422 = vmatprep.subr.bf16.mxu0 0
      %1423 = vmatpush2.bf16.msra.mxu0 %v1090
      %1424 = vmatprep.subr.bf16.mxu0 0
      %1425 = vmatpush2.bf16.msra.mxu0 %v1089
      %1426 = vmatprep.subr.bf16.mxu0 0
      %1427 = vmatpush2.bf16.msra.mxu0 %v1088
      %1428 = vmatprep.subr.bf16.mxu0 0
      %1429 = vmatpush2.bf16.msra.mxu0 %v1087
      %1430 = vmatprep.subr.bf16.mxu0 0
      %1431 = vmatpush2.bf16.msra.mxu0 %v1086
      %1432 = vmatprep.mubr.bf16.mxu0 %v551
      %1433 = vmatmul.mubr.bf16.gmra.mxu0 %v550
      %v1434 = vpop.f32.mrf.mxu0
      %v1435 = vadd.f32 %v1386, %v1434
      %v1436 = vpop.f32.mrf.mxu0
      %v1437 = vpop.f32.mrf.mxu0
      %v1438 = vadd.f32 %v1389, %v1437
      %v1439 = vpop.f32.mrf.mxu0
      %1440 = vmatprep.mubr.bf16.mxu0 %v565
      %1441 = vmatmul.mubr.bf16.gmra.mxu0 %v564
      %v1442 = vpop.f32.mrf.mxu0
      %v1443 = vadd.f32 %v1394, %v1442
      %v1444 = vpop.f32.mrf.mxu0
      %v1445 = vpop.f32.mrf.mxu0
      %v1446 = vadd.f32 %v1397, %v1445
      %v1447 = vpop.f32.mrf.mxu0
      %1448 = vdwg.mxu0
      %1449 = vmatprep.subr.bf16.mxu0 0
      %1450 = vmatpush1.bf16.msra.mxu0 %v1101
      %1451 = vmatprep.subr.bf16.mxu0 0
      %1452 = vmatpush1.bf16.msra.mxu0 %v1100
      %1453 = vmatprep.subr.bf16.mxu0 0
      %1454 = vmatpush1.bf16.msra.mxu0 %v1099
      %1455 = vmatprep.subr.bf16.mxu0 0
      %1456 = vmatpush1.bf16.msra.mxu0 %v1098
      %1457 = vmatprep.subr.bf16.mxu0 0
      %1458 = vmatpush1.bf16.msra.mxu0 %v1097
      %1459 = vmatprep.subr.bf16.mxu0 0
      %1460 = vmatpush1.bf16.msra.mxu0 %v1096
      %1461 = vmatprep.subr.bf16.mxu0 0
      %1462 = vmatpush1.bf16.msra.mxu0 %v1095
      %1463 = vmatprep.subr.bf16.mxu0 0
      %1464 = vmatpush1.bf16.msra.mxu0 %v1094
      %1465 = vmatprep.subr.bf16.mxu0 0
      %1466 = vmatpush2.bf16.msra.mxu0 %v1109
      %1467 = vmatprep.subr.bf16.mxu0 0
      %1468 = vmatpush2.bf16.msra.mxu0 %v1108
      %1469 = vmatprep.subr.bf16.mxu0 0
      %1470 = vmatpush2.bf16.msra.mxu0 %v1107
      %1471 = vmatprep.subr.bf16.mxu0 0
      %1472 = vmatpush2.bf16.msra.mxu0 %v1106
      %1473 = vmatprep.subr.bf16.mxu0 0
      %1474 = vmatpush2.bf16.msra.mxu0 %v1105
      %1475 = vmatprep.subr.bf16.mxu0 0
      %1476 = vmatpush2.bf16.msra.mxu0 %v1104
      %1477 = vmatprep.subr.bf16.mxu0 0
      %1478 = vmatpush2.bf16.msra.mxu0 %v1103
      %1479 = vmatprep.subr.bf16.mxu0 0
      %1480 = vmatpush2.bf16.msra.mxu0 %v1102
      %1481 = vmatprep.mubr.bf16.mxu0 %v553
      %1482 = vmatmul.mubr.bf16.gmra.mxu0 %v552
      %v1483 = vpop.f32.mrf.mxu0
      %v1484 = vadd.f32 %v1435, %v1483
      %v1485 = vpop.f32.mrf.mxu0
      %v1486 = vpop.f32.mrf.mxu0
      %v1487 = vadd.f32 %v1438, %v1486
      %v1488 = vpop.f32.mrf.mxu0
      %1489 = vmatprep.mubr.bf16.mxu0 %v567
      %1490 = vmatmul.mubr.bf16.gmra.mxu0 %v566
      %v1491 = vpop.f32.mrf.mxu0
      %v1492 = vadd.f32 %v1443, %v1491
      %v1493 = vpop.f32.mrf.mxu0
      %v1494 = vpop.f32.mrf.mxu0
      %v1495 = vadd.f32 %v1446, %v1494
      %v1496 = vpop.f32.mrf.mxu0
      %1497 = vdwg.mxu0
      %1498 = vmatprep.subr.bf16.mxu0 0
      %1499 = vmatpush1.bf16.msra.mxu0 %v1117
      %1500 = vmatprep.subr.bf16.mxu0 0
      %1501 = vmatpush1.bf16.msra.mxu0 %v1116
      %1502 = vmatprep.subr.bf16.mxu0 0
      %1503 = vmatpush1.bf16.msra.mxu0 %v1115
      %1504 = vmatprep.subr.bf16.mxu0 0
      %1505 = vmatpush1.bf16.msra.mxu0 %v1114
      %1506 = vmatprep.subr.bf16.mxu0 0
      %1507 = vmatpush1.bf16.msra.mxu0 %v1113
      %1508 = vmatprep.subr.bf16.mxu0 0
      %1509 = vmatpush1.bf16.msra.mxu0 %v1112
      %1510 = vmatprep.subr.bf16.mxu0 0
      %1511 = vmatpush1.bf16.msra.mxu0 %v1111
      %1512 = vmatprep.subr.bf16.mxu0 0
      %1513 = vmatpush1.bf16.msra.mxu0 %v1110
      %1514 = vmatprep.subr.bf16.mxu0 0
      %1515 = vmatpush2.bf16.msra.mxu0 %v1125
      %1516 = vmatprep.subr.bf16.mxu0 0
      %1517 = vmatpush2.bf16.msra.mxu0 %v1124
      %1518 = vmatprep.subr.bf16.mxu0 0
      %1519 = vmatpush2.bf16.msra.mxu0 %v1123
      %1520 = vmatprep.subr.bf16.mxu0 0
      %1521 = vmatpush2.bf16.msra.mxu0 %v1122
      %1522 = vmatprep.subr.bf16.mxu0 0
      %1523 = vmatpush2.bf16.msra.mxu0 %v1121
      %1524 = vmatprep.subr.bf16.mxu0 0
      %1525 = vmatpush2.bf16.msra.mxu0 %v1120
      %1526 = vmatprep.subr.bf16.mxu0 0
      %1527 = vmatpush2.bf16.msra.mxu0 %v1119
      %1528 = vmatprep.subr.bf16.mxu0 0
      %1529 = vmatpush2.bf16.msra.mxu0 %v1118
      %1530 = vmatprep.mubr.bf16.mxu0 %v555
      %1531 = vmatmul.mubr.bf16.gmra.mxu0 %v554
      %v1532 = vpop.f32.mrf.mxu0
      %v1533 = vadd.f32 %v1484, %v1532
      %v1534 = vpop.f32.mrf.mxu0
      %v1535 = vpop.f32.mrf.mxu0
      %v1536 = vadd.f32 %v1487, %v1535
      %v1537 = vpop.f32.mrf.mxu0
      %1538 = vmatprep.mubr.bf16.mxu0 %v569
      %1539 = vmatmul.mubr.bf16.gmra.mxu0 %v568
      %v1540 = vpop.f32.mrf.mxu0
      %v1541 = vadd.f32 %v1492, %v1540
      %v1542 = vpop.f32.mrf.mxu0
      %v1543 = vpop.f32.mrf.mxu0
      %v1544 = vadd.f32 %v1495, %v1543
      %v1545 = vpop.f32.mrf.mxu0
      %1546 = vdwg.mxu0
      %1547 = vmatprep.subr.bf16.mxu0 0
      %1548 = vmatpush1.bf16.msra.mxu0 %v1133
      %1549 = vmatprep.subr.bf16.mxu0 0
      %1550 = vmatpush1.bf16.msra.mxu0 %v1132
      %1551 = vmatprep.subr.bf16.mxu0 0
      %1552 = vmatpush1.bf16.msra.mxu0 %v1131
      %1553 = vmatprep.subr.bf16.mxu0 0
      %1554 = vmatpush1.bf16.msra.mxu0 %v1130
      %1555 = vmatprep.subr.bf16.mxu0 0
      %1556 = vmatpush1.bf16.msra.mxu0 %v1129
      %1557 = vmatprep.subr.bf16.mxu0 0
      %1558 = vmatpush1.bf16.msra.mxu0 %v1128
      %1559 = vmatprep.subr.bf16.mxu0 0
      %1560 = vmatpush1.bf16.msra.mxu0 %v1127
      %1561 = vmatprep.subr.bf16.mxu0 0
      %1562 = vmatpush1.bf16.msra.mxu0 %v1126
      %1563 = vmatprep.subr.bf16.mxu0 0
      %1564 = vmatpush2.bf16.msra.mxu0 0
      %1565 = vmatprep.subr.bf16.mxu0 0
      %1566 = vmatpush2.bf16.msra.mxu0 0
      %1567 = vmatprep.subr.bf16.mxu0 0
      %1568 = vmatpush2.bf16.msra.mxu0 0
      %1569 = vmatprep.subr.bf16.mxu0 0
      %1570 = vmatpush2.bf16.msra.mxu0 0
      %1571 = vmatprep.subr.bf16.mxu0 0
      %1572 = vmatpush2.bf16.msra.mxu0 %v1137
      %1573 = vmatprep.subr.bf16.mxu0 0
      %1574 = vmatpush2.bf16.msra.mxu0 %v1136
      %1575 = vmatprep.subr.bf16.mxu0 0
      %1576 = vmatpush2.bf16.msra.mxu0 %v1135
      %1577 = vmatprep.subr.bf16.mxu0 0
      %1578 = vmatpush2.bf16.msra.mxu0 %v1134
      %1579 = vmatprep.mubr.bf16.mxu0 %v1248
      %1580 = vmatmul.mubr.bf16.gmra.mxu0 %v556
      %v1581 = vpop.f32.mrf.mxu0
      %v1582 = vadd.f32 %v1533, %v1581
      %v1583 = vpop.f32.mrf.mxu0
      %v1584 = vpop.f32.mrf.mxu0
      %v1585 = vadd.f32 %v1536, %v1584
      %v1586 = vpop.f32.mrf.mxu0
      %1587 = vmatprep.mubr.bf16.mxu0 %v1251
      %1588 = vmatmul.mubr.bf16.gmra.mxu0 %v570
      %v1589 = vpop.f32.mrf.mxu0
      %v1590 = vadd.f32 %v1541, %v1589
      %v1591 = vpop.f32.mrf.mxu0
      %v1592 = vpop.f32.mrf.mxu0
      %v1593 = vadd.f32 %v1544, %v1592
      %v1594 = vpop.f32.mrf.mxu0
      %1595 = vdwg.mxu0
      %v1596 = vmax.f32 %v1582, 0.0
      %v1597 = vmax.f32 %v1585, 0.0
      %v1598 = vmax.f32 %v1590, 0.0
      %v1599 = vmax.f32 %v1593, 0.0
      %v1600 = vrot.slane %v1596, 4
      %v1601 = vmax.f32 %v1596, %v1600
      %v1602 = vrot.slane %v1601, 2
      %v1603 = vmax.f32 %v1601, %v1602
      %v1604 = vrot.slane %v1603, 1
      %v1605 = vmax.f32 %v1603, %v1604
      %v1606 = vrot.slane %v1597, 4
      %v1607 = vmax.f32 %v1597, %v1606
      %v1608 = vrot.slane %v1607, 2
      %v1609 = vmax.f32 %v1607, %v1608
      %v1610 = vrot.slane %v1609, 1
      %v1611 = vmax.f32 %v1609, %v1610
      %v1612 = vrot.slane %v1598, 4
      %v1613 = vmax.f32 %v1598, %v1612
      %v1614 = vrot.slane %v1613, 2
      %v1615 = vmax.f32 %v1613, %v1614
      %v1616 = vrot.slane %v1615, 1
      %v1617 = vmax.f32 %v1615, %v1616
      %v1618 = vrot.slane %v1599, 4
      %v1619 = vmax.f32 %v1599, %v1618
      %v1620 = vrot.slane %v1619, 2
      %v1621 = vmax.f32 %v1619, %v1620
      %v1622 = vrot.slane %v1621, 1
      %v1623 = vmax.f32 %v1621, %v1622
      %v1624 = vpack.c.bf16 %v1605, %v1605
      %v1625 = vpack.c.bf16 %v1611, %v1611
      %v1626 = vpack.c.bf16 %v1617, %v1617
      %v1627 = vpack.c.bf16 %v1623, %v1623
      %v1633 = vunpack.c.l.s4 1983009808
      %v1634 = vunpack.c.0.s8 %v1633
      %v1635 = vlaneseq
      %v1636 = vshrl.u32 %v1635, 7
      %v1637 = vsub.s32 %v1634, %v1636
      %v1638 = vrot.slane %v1624, %v1637
      %v1640 = vunpack.c.l.s4 1983009808
      %v1641 = vunpack.c.0.s8 %v1640
      %v1642 = vlaneseq
      %v1643 = vshrl.u32 %v1642, 7
      %v1644 = vsub.s32 %v1641, %v1643
      %v1645 = vrot.slane %v1625, %v1644
      %v1647 = vunpack.c.l.s4 1983009808
      %v1648 = vunpack.c.0.s8 %v1647
      %v1649 = vlaneseq
      %v1650 = vshrl.u32 %v1649, 7
      %v1651 = vsub.s32 %v1648, %v1650
      %v1652 = vrot.slane %v1626, %v1651
      %v1654 = vunpack.c.l.s4 1983009808
      %v1655 = vunpack.c.0.s8 %v1654
      %v1656 = vlaneseq
      %v1657 = vshrl.u32 %v1656, 7
      %v1658 = vsub.s32 %v1655, %v1657
      %v1659 = vrot.slane %v1627, %v1658
      %v1661 = vunpack.c.l.s4 1983009808
      %v1662 = vunpack.c.0.s8 %v1661
      %v1663 = vlaneseq
      %v1664 = vshrl.u32 %v1663, 7
      %v1665 = vsub.s32 %v1662, %v1664
      %v1666 = vrot.slane %v1638, %v1665
      %v1668 = vunpack.c.l.s4 1983009808
      %v1669 = vunpack.c.0.s8 %v1668
      %v1670 = vlaneseq
      %v1671 = vshrl.u32 %v1670, 7
      %v1672 = vsub.s32 %v1669, %v1671
      %v1673 = vrot.slane %v1645, %v1672
      %v1675 = vunpack.c.l.s4 1983009808
      %v1676 = vunpack.c.0.s8 %v1675
      %v1677 = vlaneseq
      %v1678 = vshrl.u32 %v1677, 7
      %v1679 = vsub.s32 %v1676, %v1678
      %v1680 = vrot.slane %v1652, %v1679
      %v1682 = vunpack.c.l.s4 1983009808
      %v1683 = vunpack.c.0.s8 %v1682
      %v1684 = vlaneseq
      %v1685 = vshrl.u32 %v1684, 7
      %v1686 = vsub.s32 %v1683, %v1685
      %v1687 = vrot.slane %v1659, %v1686
      %v1688 = vunpack.c.l.b16 %v1666
      %v1689 = vunpack.c.l.b16 %v1673
      %v1690 = vunpack.c.l.b16 %v1680
      %v1691 = vunpack.c.l.b16 %v1687
      %v1692 = vrot.slane %v1689, 7
      %vm1693 = vcmask 1041409
      %v1694 = vsel %vm1693, %v1692, %v1688
      %v1695 = vrot.slane %v1690, 6
      %vm1696 = vcmask 1042434
      %v1697 = vsel %vm1696, %v1695, %v1694
      %v1698 = vrot.slane %v1691, 5
      %vm1699 = vcmask 1043459
      %v1700 = vsel %vm1699, %v1698, %v1697
      %v1701 = vpack.c.b16 %v1700, %v1700
      %v1703 = vunpack.c.l.s4 1983009808
      %v1704 = vunpack.c.0.s8 %v1703
      %v1705 = vlaneseq
      %v1706 = vshrl.u32 %v1705, 7
      %v1707 = vsub.s32 %v1704, %v1706
      %v1708 = vrot.slane %v1701, %v1707
      %1710 = vst [vmem:[%s207] sm:$0x3] %v1708
      %p1711 = scmp.lt.s32.totalorder %s18, 1
      %s1712 = scalar_select %p1711, %s18, 1
      %p1713 = scmp.lt.s32.totalorder %s19, 0
      %s1714 = scalar_select %p1713, %s19, 0
      %s1715 = sadd.s32 %s1714, %s1712
      %s1716 = smul.addr %s1715, 2
      %s1717 = scalar_lea.vmem %s3, %s1716
      // Predicated region
      $region33: #{forward.6} parent=31 // pred_check
        %p1718 = pneg %p116
      $region34: #{forward.6} parent=31 // pred_check_branch
        %1720 = sbr.rel (%p1718) target = $region36
      $region35: #{forward.6} parent=31 // pred_region
        _
      $region36: #{forward.6} parent=31 // pred_fallthru
        _
    $region32: #{forward.6} parent=5 // pred_fallthru
      _
    %p1721 = scmp.le.s32.totalorder 2, %s9
    // Predicated region
    $region37: #{forward.6} parent=5 // pred_check
      %p1722 = pneg %p1721
    $region38: #{forward.6} parent=5 // pred_check_branch
      %1724 = sbr.rel (%p1722) target = $region40
    $region39: #{forward.6} parent=5 // pred_region
      %s1725 = ssub.s32 %s9, 2
      // Predicated region
      $region41: #{forward.6} parent=39 // pred_check
        %p1726 = pneg %p122
      $region42: #{forward.6} parent=39 // pred_check_branch
        %1728 = sbr.rel (%p1726) target = $region44
      $region43: #{forward.6} parent=39 // pred_region
        %p1729 = scmp.lt.s32.totalorder %s20, 1
        %s1730 = scalar_select %p1729, %s20, 1
        %p1731 = scmp.lt.s32.totalorder %s21, 0
        %s1732 = scalar_select %p1731, %s21, 0
        %s1733 = sadd.s32 %s1732, %s1730
        %s1734 = smul.addr %s1733, 2
        %s1735 = scalar_lea.vmem %s3, %s1734
      $region44: #{forward.6} parent=39 // pred_fallthru
        _
    $region40: #{forward.6} parent=5 // pred_fallthru
      _
  $region6: #{forward.6} parent=0 // loop_footer
    %s13 = sadd.s32 1, %s9
  $region7: #{forward.6} parent=0 // loop_footer_branch
    %8 = sbr.rel target = $region3
  $region8: #{forward.6} parent=0 // loop_exit
    _

// kernel: forward.7
$region0: #{forward.7}
  #allocation0 [shape = 'u32[]', space=smem, size = 0x4, offset = 0x4, fixed_abs, tag = 'smem constant byte address 0x4 - core index']
  #allocation1 [shape = 'u32[144,128]{1,0:T(1,128)}', space=vmem, size = 0x12000, scoped, tag = 'internal scratch']
  %s0 = inlined_call_operand.vmem [shape: bf16[2,512], index: 0, kind: input, shape index: {}]
  %s1 = inlined_call_operand.vmem [shape: bf16[512,1024], index: 1, kind: input, shape index: {}]
  %s2 = inlined_call_operand.vmem [shape: f32[1,1024], index: 2, kind: input, shape index: {}]
  %s3 = inlined_call_operand.vmem [shape: bf16[1024,512], index: 3, kind: input, shape index: {}]
  %s4 = inlined_call_operand.vmem [shape: f32[1,512], index: 4, kind: input, shape index: {}]
  %s5 = inlined_call_operand.vmem [shape: bf16[512,10], index: 5, kind: input, shape index: {}]
  %s6 = inlined_call_operand.vmem [shape: f32[1,10], index: 6, kind: input, shape index: {}]
  %s7 = inlined_call_operand.hbm [shape: f32[2,10], index: 7, kind: output, shape index: {}]
  %s8 = sld [smem:[#allocation0]]
  $region38: #{forward.7} parent=0
    _
  %s10 = ssub.s32 1, %s8
  %s11 = scalar_select 0, %s10, %s8
  $region1: #{forward.7} parent=0
    #allocation2 [shape = 'u8[1024]{0}', space=vmem, size = 0x400, scoped, tag = 'output window, operand 0, single buffered']
    #allocation3 [shape = 's32[1]{0}', space=sflag, size = 0x4, scoped, tag = 'scoped memory for forward.7']
    %12 = vsyncpa [#allocation3], 0
    // Predicated region
    $region2: #{forward.7} parent=1 // pred_check
      _
    $region3: #{forward.7} parent=1 // pred_check_branch
      %14 = sbr.rel (0) target = $region5
    $region4: #{forward.7} parent=1 // pred_region
      _
    $region5: #{forward.7} parent=1 // pred_fallthru
      _
    // Predicated region
    $region6: #{forward.7} parent=1 // pred_check
      _
    $region7: #{forward.7} parent=1 // pred_check_branch
      %16 = sbr.rel (0) target = $region9
    $region8: #{forward.7} parent=1 // pred_region
      _
    $region9: #{forward.7} parent=1 // pred_fallthru
      _
    // Predicated region
    $region10: #{forward.7} parent=1 // pred_check
      _
    $region11: #{forward.7} parent=1 // pred_check_branch
      %18 = sbr.rel (0) target = $region13
    $region12: #{forward.7} parent=1 // pred_region
      _
    $region13: #{forward.7} parent=1 // pred_fallthru
      _
    // Predicated region
    $region14: #{forward.7} parent=1 // pred_check
      _
    $region15: #{forward.7} parent=1 // pred_check_branch
      %20 = sbr.rel (0) target = $region17
    $region16: #{forward.7} parent=1 // pred_region
      _
    $region17: #{forward.7} parent=1 // pred_fallthru
      _
    // Predicated region
    $region18: #{forward.7} parent=1 // pred_check
      _
    $region19: #{forward.7} parent=1 // pred_check_branch
      %22 = sbr.rel (0) target = $region21
    $region20: #{forward.7} parent=1 // pred_region
      _
    $region21: #{forward.7} parent=1 // pred_fallthru
      _
    // Predicated region
    $region22: #{forward.7} parent=1 // pred_check
      _
    $region23: #{forward.7} parent=1 // pred_check_branch
      %24 = sbr.rel (0) target = $region25
    $region24: #{forward.7} parent=1 // pred_region
      _
    $region25: #{forward.7} parent=1 // pred_fallthru
      _
    // Predicated region
    $region26: #{forward.7} parent=1 // pred_check
      _
    $region27: #{forward.7} parent=1 // pred_check_branch
      %26 = sbr.rel (0) target = $region29
    $region28: #{forward.7} parent=1 // pred_region
      _
    $region29: #{forward.7} parent=1 // pred_fallthru
      _
    %v28 = vld [vmem:[%s0] sm:$0xf]
    %v29 = vld [vmem:[%s1] sm:$0xff]
    %v30 = vld [vmem:[%s1 + $0x8] sm:$0xff]
    %v31 = vld [vmem:[%s1 + $0x10] sm:$0xff]
    %v32 = vld [vmem:[%s1 + $0x18] sm:$0xff]
    %v33 = vld [vmem:[%s1 + $0x20] sm:$0xff]
    %v34 = vld [vmem:[%s1 + $0x28] sm:$0xff]
    %v35 = vld [vmem:[%s1 + $0x30] sm:$0xff]
    %v36 = vld [vmem:[%s1 + $0x38] sm:$0xff]
    %v37 = vld [vmem:[%s1 + $0x40] sm:$0xff]
    %v38 = vld [vmem:[%s1 + $0x48] sm:$0xff]
    %v39 = vld [vmem:[%s1 + $0x50] sm:$0xff]
    %v40 = vld [vmem:[%s1 + $0x58] sm:$0xff]
    %v41 = vld [vmem:[%s1 + $0x60] sm:$0xff]
    %v42 = vld [vmem:[%s1 + $0x68] sm:$0xff]
    %v43 = vld [vmem:[%s1 + $0x70] sm:$0xff]
    %v44 = vld [vmem:[%s1 + $0x78] sm:$0xff]
    %v45 = vld [vmem:[%s1 + $0x80] sm:$0xff]
    %v46 = vld [vmem:[%s1 + $0x88] sm:$0xff]
    %v47 = vld [vmem:[%s1 + $0x90] sm:$0xff]
    %v48 = vld [vmem:[%s1 + $0x98] sm:$0xff]
    %v49 = vld [vmem:[%s1 + $0xa0] sm:$0xff]
    %v50 = vld [vmem:[%s1 + $0xa8] sm:$0xff]
    %v51 = vld [vmem:[%s1 + $0xb0] sm:$0xff]
    %v52 = vld [vmem:[%s1 + $0xb8] sm:$0xff]
    %v53 = vld [vmem:[%s1 + $0xc0] sm:$0xff]
    %v54 = vld [vmem:[%s1 + $0xc8] sm:$0xff]
    %v55 = vld [vmem:[%s1 + $0xd0] sm:$0xff]
    %v56 = vld [vmem:[%s1 + $0xd8] sm:$0xff]
    %v57 = vld [vmem:[%s1 + $0xe0] sm:$0xff]
    %v58 = vld [vmem:[%s1 + $0xe8] sm:$0xff]
    %v59 = vld [vmem:[%s1 + $0xf0] sm:$0xff]
    %v60 = vld [vmem:[%s1 + $0xf8] sm:$0xff]
    %v61 = vld [vmem:[%s1 + $0x100] sm:$0xff]
    %v62 = vld [vmem:[%s1 + $0x108] sm:$0xff]
    %v63 = vld [vmem:[%s1 + $0x110] sm:$0xff]
    %v64 = vld [vmem:[%s1 + $0x118] sm:$0xff]
    %v65 = vld [vmem:[%s1 + $0x120] sm:$0xff]
    %v66 = vld [vmem:[%s1 + $0x128] sm:$0xff]
    %v67 = vld [vmem:[%s1 + $0x130] sm:$0xff]
    %v68 = vld [vmem:[%s1 + $0x138] sm:$0xff]
    %v69 = vld [vmem:[%s1 + $0x140] sm:$0xff]
    %v70 = vld [vmem:[%s1 + $0x148] sm:$0xff]
    %v71 = vld [vmem:[%s1 + $0x150] sm:$0xff]
    %v72 = vld [vmem:[%s1 + $0x158] sm:$0xff]
    %v73 = vld [vmem:[%s1 + $0x160] sm:$0xff]
    %v74 = vld [vmem:[%s1 + $0x168] sm:$0xff]
    %v75 = vld [vmem:[%s1 + $0x170] sm:$0xff]
    %v76 = vld [vmem:[%s1 + $0x178] sm:$0xff]
    %v77 = vld [vmem:[%s1 + $0x180] sm:$0xff]
    %v78 = vld [vmem:[%s1 + $0x188] sm:$0xff]
    %v79 = vld [vmem:[%s1 + $0x190] sm:$0xff]
    %v80 = vld [vmem:[%s1 + $0x198] sm:$0xff]
    %v81 = vld [vmem:[%s1 + $0x1a0] sm:$0xff]
    %v82 = vld [vmem:[%s1 + $0x1a8] sm:$0xff]
    %v83 = vld [vmem:[%s1 + $0x1b0] sm:$0xff]
    %v84 = vld [vmem:[%s1 + $0x1b8] sm:$0xff]
    %v85 = vld [vmem:[%s1 + $0x1c0] sm:$0xff]
    %v86 = vld [vmem:[%s1 + $0x1c8] sm:$0xff]
    %v87 = vld [vmem:[%s1 + $0x1d0] sm:$0xff]
    %v88 = vld [vmem:[%s1 + $0x1d8] sm:$0xff]
    %v89 = vld [vmem:[%s1 + $0x1e0] sm:$0xff]
    %v90 = vld [vmem:[%s1 + $0x1e8] sm:$0xff]
    %v91 = vld [vmem:[%s1 + $0x1f0] sm:$0xff]
    %v92 = vld [vmem:[%s1 + $0x1f8] sm:$0xff]
    %v93 = vld [vmem:[%s1 + $0x200] sm:$0xff]
    %v94 = vld [vmem:[%s1 + $0x208] sm:$0xff]
    %v95 = vld [vmem:[%s1 + $0x210] sm:$0xff]
    %v96 = vld [vmem:[%s1 + $0x218] sm:$0xff]
    %v97 = vld [vmem:[%s1 + $0x220] sm:$0xff]
    %v98 = vld [vmem:[%s1 + $0x228] sm:$0xff]
    %v99 = vld [vmem:[%s1 + $0x230] sm:$0xff]
    %v100 = vld [vmem:[%s1 + $0x238] sm:$0xff]
    %v101 = vld [vmem:[%s1 + $0x240] sm:$0xff]
    %v102 = vld [vmem:[%s1 + $0x248] sm:$0xff]
    %v103 = vld [vmem:[%s1 + $0x250] sm:$0xff]
    %v104 = vld [vmem:[%s1 + $0x258] sm:$0xff]
    %v105 = vld [vmem:[%s1 + $0x260] sm:$0xff]
    %v106 = vld [vmem:[%s1 + $0x268] sm:$0xff]
    %v107 = vld [vmem:[%s1 + $0x270] sm:$0xff]
    %v108 = vld [vmem:[%s1 + $0x278] sm:$0xff]
    %v109 = vld [vmem:[%s1 + $0x280] sm:$0xff]
    %v110 = vld [vmem:[%s1 + $0x288] sm:$0xff]
    %v111 = vld [vmem:[%s1 + $0x290] sm:$0xff]
    %v112 = vld [vmem:[%s1 + $0x298] sm:$0xff]
    %v113 = vld [vmem:[%s1 + $0x2a0] sm:$0xff]
    %v114 = vld [vmem:[%s1 + $0x2a8] sm:$0xff]
    %v115 = vld [vmem:[%s1 + $0x2b0] sm:$0xff]
    %v116 = vld [vmem:[%s1 + $0x2b8] sm:$0xff]
    %v117 = vld [vmem:[%s1 + $0x2c0] sm:$0xff]
    %v118 = vld [vmem:[%s1 + $0x2c8] sm:$0xff]
    %v119 = vld [vmem:[%s1 + $0x2d0] sm:$0xff]
    %v120 = vld [vmem:[%s1 + $0x2d8] sm:$0xff]
    %v121 = vld [vmem:[%s1 + $0x2e0] sm:$0xff]
    %v122 = vld [vmem:[%s1 + $0x2e8] sm:$0xff]
    %v123 = vld [vmem:[%s1 + $0x2f0] sm:$0xff]
    %v124 = vld [vmem:[%s1 + $0x2f8] sm:$0xff]
    %v125 = vld [vmem:[%s1 + $0x300] sm:$0xff]
    %v126 = vld [vmem:[%s1 + $0x308] sm:$0xff]
    %v127 = vld [vmem:[%s1 + $0x310] sm:$0xff]
    %v128 = vld [vmem:[%s1 + $0x318] sm:$0xff]
    %v129 = vld [vmem:[%s1 + $0x320] sm:$0xff]
    %v130 = vld [vmem:[%s1 + $0x328] sm:$0xff]
    %v131 = vld [vmem:[%s1 + $0x330] sm:$0xff]
    %v132 = vld [vmem:[%s1 + $0x338] sm:$0xff]
    %v133 = vld [vmem:[%s1 + $0x340] sm:$0xff]
    %v134 = vld [vmem:[%s1 + $0x348] sm:$0xff]
    %v135 = vld [vmem:[%s1 + $0x350] sm:$0xff]
    %v136 = vld [vmem:[%s1 + $0x358] sm:$0xff]
    %v137 = vld [vmem:[%s1 + $0x360] sm:$0xff]
    %v138 = vld [vmem:[%s1 + $0x368] sm:$0xff]
    %v139 = vld [vmem:[%s1 + $0x370] sm:$0xff]
    %v140 = vld [vmem:[%s1 + $0x378] sm:$0xff]
    %v141 = vld [vmem:[%s1 + $0x380] sm:$0xff]
    %v142 = vld [vmem:[%s1 + $0x388] sm:$0xff]
    %v143 = vld [vmem:[%s1 + $0x390] sm:$0xff]
    %v144 = vld [vmem:[%s1 + $0x398] sm:$0xff]
    %v145 = vld [vmem:[%s1 + $0x3a0] sm:$0xff]
    %v146 = vld [vmem:[%s1 + $0x3a8] sm:$0xff]
    %v147 = vld [vmem:[%s1 + $0x3b0] sm:$0xff]
    %v148 = vld [vmem:[%s1 + $0x3b8] sm:$0xff]
    %v149 = vld [vmem:[%s1 + $0x3c0] sm:$0xff]
    %v150 = vld [vmem:[%s1 + $0x3c8] sm:$0xff]
    %v151 = vld [vmem:[%s1 + $0x3d0] sm:$0xff]
    %v152 = vld [vmem:[%s1 + $0x3d8] sm:$0xff]
    %v153 = vld [vmem:[%s1 + $0x3e0] sm:$0xff]
    %v154 = vld [vmem:[%s1 + $0x3e8] sm:$0xff]
    %v155 = vld [vmem:[%s1 + $0x3f0] sm:$0xff]
    %v156 = vld [vmem:[%s1 + $0x3f8] sm:$0xff]
    %v157 = vld [vmem:[%s1 + $0x400] sm:$0xff]
    %v158 = vld [vmem:[%s1 + $0x408] sm:$0xff]
    %v159 = vld [vmem:[%s1 + $0x410] sm:$0xff]
    %v160 = vld [vmem:[%s1 + $0x418] sm:$0xff]
    %v161 = vld [vmem:[%s1 + $0x420] sm:$0xff]
    %v162 = vld [vmem:[%s1 + $0x428] sm:$0xff]
    %v163 = vld [vmem:[%s1 + $0x430] sm:$0xff]
    %v164 = vld [vmem:[%s1 + $0x438] sm:$0xff]
    %v165 = vld [vmem:[%s1 + $0x440] sm:$0xff]
    %v166 = vld [vmem:[%s1 + $0x448] sm:$0xff]
    %v167 = vld [vmem:[%s1 + $0x450] sm:$0xff]
    %v168 = vld [vmem:[%s1 + $0x458] sm:$0xff]
    %v169 = vld [vmem:[%s1 + $0x460] sm:$0xff]
    %v170 = vld [vmem:[%s1 + $0x468] sm:$0xff]
    %v171 = vld [vmem:[%s1 + $0x470] sm:$0xff]
    %v172 = vld [vmem:[%s1 + $0x478] sm:$0xff]
    %v173 = vld [vmem:[%s1 + $0x480] sm:$0xff]
    %v174 = vld [vmem:[%s1 + $0x488] sm:$0xff]
    %v175 = vld [vmem:[%s1 + $0x490] sm:$0xff]
    %v176 = vld [vmem:[%s1 + $0x498] sm:$0xff]
    %v177 = vld [vmem:[%s1 + $0x4a0] sm:$0xff]
    %v178 = vld [vmem:[%s1 + $0x4a8] sm:$0xff]
    %v179 = vld [vmem:[%s1 + $0x4b0] sm:$0xff]
    %v180 = vld [vmem:[%s1 + $0x4b8] sm:$0xff]
    %v181 = vld [vmem:[%s1 + $0x4c0] sm:$0xff]
    %v182 = vld [vmem:[%s1 + $0x4c8] sm:$0xff]
    %v183 = vld [vmem:[%s1 + $0x4d0] sm:$0xff]
    %v184 = vld [vmem:[%s1 + $0x4d8] sm:$0xff]
    %v185 = vld [vmem:[%s1 + $0x4e0] sm:$0xff]
    %v186 = vld [vmem:[%s1 + $0x4e8] sm:$0xff]
    %v187 = vld [vmem:[%s1 + $0x4f0] sm:$0xff]
    %v188 = vld [vmem:[%s1 + $0x4f8] sm:$0xff]
    %v189 = vld [vmem:[%s1 + $0x500] sm:$0xff]
    %v190 = vld [vmem:[%s1 + $0x508] sm:$0xff]
    %v191 = vld [vmem:[%s1 + $0x510] sm:$0xff]
    %v192 = vld [vmem:[%s1 + $0x518] sm:$0xff]
    %v193 = vld [vmem:[%s1 + $0x520] sm:$0xff]
    %v194 = vld [vmem:[%s1 + $0x528] sm:$0xff]
    %v195 = vld [vmem:[%s1 + $0x530] sm:$0xff]
    %v196 = vld [vmem:[%s1 + $0x538] sm:$0xff]
    %v197 = vld [vmem:[%s1 + $0x540] sm:$0xff]
    %v198 = vld [vmem:[%s1 + $0x548] sm:$0xff]
    %v199 = vld [vmem:[%s1 + $0x550] sm:$0xff]
    %v200 = vld [vmem:[%s1 + $0x558] sm:$0xff]
    %v201 = vld [vmem:[%s1 + $0x560] sm:$0xff]
    %v202 = vld [vmem:[%s1 + $0x568] sm:$0xff]
    %v203 = vld [vmem:[%s1 + $0x570] sm:$0xff]
    %v204 = vld [vmem:[%s1 + $0x578] sm:$0xff]
    %v205 = vld [vmem:[%s1 + $0x580] sm:$0xff]
    %v206 = vld [vmem:[%s1 + $0x588] sm:$0xff]
    %v207 = vld [vmem:[%s1 + $0x590] sm:$0xff]
    %v208 = vld [vmem:[%s1 + $0x598] sm:$0xff]
    %v209 = vld [vmem:[%s1 + $0x5a0] sm:$0xff]
    %v210 = vld [vmem:[%s1 + $0x5a8] sm:$0xff]
    %v211 = vld [vmem:[%s1 + $0x5b0] sm:$0xff]
    %v212 = vld [vmem:[%s1 + $0x5b8] sm:$0xff]
    %v213 = vld [vmem:[%s1 + $0x5c0] sm:$0xff]
    %v214 = vld [vmem:[%s1 + $0x5c8] sm:$0xff]
    %v215 = vld [vmem:[%s1 + $0x5d0] sm:$0xff]
    %v216 = vld [vmem:[%s1 + $0x5d8] sm:$0xff]
    %v217 = vld [vmem:[%s1 + $0x5e0] sm:$0xff]
    %v218 = vld [vmem:[%s1 + $0x5e8] sm:$0xff]
    %v219 = vld [vmem:[%s1 + $0x5f0] sm:$0xff]
    %v220 = vld [vmem:[%s1 + $0x5f8] sm:$0xff]
    %v221 = vld [vmem:[%s1 + $0x600] sm:$0xff]
    %v222 = vld [vmem:[%s1 + $0x608] sm:$0xff]
    %v223 = vld [vmem:[%s1 + $0x610] sm:$0xff]
    %v224 = vld [vmem:[%s1 + $0x618] sm:$0xff]
    %v225 = vld [vmem:[%s1 + $0x620] sm:$0xff]
    %v226 = vld [vmem:[%s1 + $0x628] sm:$0xff]
    %v227 = vld [vmem:[%s1 + $0x630] sm:$0xff]
    %v228 = vld [vmem:[%s1 + $0x638] sm:$0xff]
    %v229 = vld [vmem:[%s1 + $0x640] sm:$0xff]
    %v230 = vld [vmem:[%s1 + $0x648] sm:$0xff]
    %v231 = vld [vmem:[%s1 + $0x650] sm:$0xff]
    %v232 = vld [vmem:[%s1 + $0x658] sm:$0xff]
    %v233 = vld [vmem:[%s1 + $0x660] sm:$0xff]
    %v234 = vld [vmem:[%s1 + $0x668] sm:$0xff]
    %v235 = vld [vmem:[%s1 + $0x670] sm:$0xff]
    %v236 = vld [vmem:[%s1 + $0x678] sm:$0xff]
    %v237 = vld [vmem:[%s1 + $0x680] sm:$0xff]
    %v238 = vld [vmem:[%s1 + $0x688] sm:$0xff]
    %v239 = vld [vmem:[%s1 + $0x690] sm:$0xff]
    %v240 = vld [vmem:[%s1 + $0x698] sm:$0xff]
    %v241 = vld [vmem:[%s1 + $0x6a0] sm:$0xff]
    %v242 = vld [vmem:[%s1 + $0x6a8] sm:$0xff]
    %v243 = vld [vmem:[%s1 + $0x6b0] sm:$0xff]
    %v244 = vld [vmem:[%s1 + $0x6b8] sm:$0xff]
    %v245 = vld [vmem:[%s1 + $0x6c0] sm:$0xff]
    %v246 = vld [vmem:[%s1 + $0x6c8] sm:$0xff]
    %v247 = vld [vmem:[%s1 + $0x6d0] sm:$0xff]
    %v248 = vld [vmem:[%s1 + $0x6d8] sm:$0xff]
    %v249 = vld [vmem:[%s1 + $0x6e0] sm:$0xff]
    %v250 = vld [vmem:[%s1 + $0x6e8] sm:$0xff]
    %v251 = vld [vmem:[%s1 + $0x6f0] sm:$0xff]
    %v252 = vld [vmem:[%s1 + $0x6f8] sm:$0xff]
    %v253 = vld [vmem:[%s1 + $0x700] sm:$0xff]
    %v254 = vld [vmem:[%s1 + $0x708] sm:$0xff]
    %v255 = vld [vmem:[%s1 + $0x710] sm:$0xff]
    %v256 = vld [vmem:[%s1 + $0x718] sm:$0xff]
    %v257 = vld [vmem:[%s1 + $0x720] sm:$0xff]
    %v258 = vld [vmem:[%s1 + $0x728] sm:$0xff]
    %v259 = vld [vmem:[%s1 + $0x730] sm:$0xff]
    %v260 = vld [vmem:[%s1 + $0x738] sm:$0xff]
    %v261 = vld [vmem:[%s1 + $0x740] sm:$0xff]
    %v262 = vld [vmem:[%s1 + $0x748] sm:$0xff]
    %v263 = vld [vmem:[%s1 + $0x750] sm:$0xff]
    %v264 = vld [vmem:[%s1 + $0x758] sm:$0xff]
    %v265 = vld [vmem:[%s1 + $0x760] sm:$0xff]
    %v266 = vld [vmem:[%s1 + $0x768] sm:$0xff]
    %v267 = vld [vmem:[%s1 + $0x770] sm:$0xff]
    %v268 = vld [vmem:[%s1 + $0x778] sm:$0xff]
    %v269 = vld [vmem:[%s1 + $0x780] sm:$0xff]
    %v270 = vld [vmem:[%s1 + $0x788] sm:$0xff]
    %v271 = vld [vmem:[%s1 + $0x790] sm:$0xff]
    %v272 = vld [vmem:[%s1 + $0x798] sm:$0xff]
    %v273 = vld [vmem:[%s1 + $0x7a0] sm:$0xff]
    %v274 = vld [vmem:[%s1 + $0x7a8] sm:$0xff]
    %v275 = vld [vmem:[%s1 + $0x7b0] sm:$0xff]
    %v276 = vld [vmem:[%s1 + $0x7b8] sm:$0xff]
    %v277 = vld [vmem:[%s1 + $0x7c0] sm:$0xff]
    %v278 = vld [vmem:[%s1 + $0x7c8] sm:$0xff]
    %v279 = vld [vmem:[%s1 + $0x7d0] sm:$0xff]
    %v280 = vld [vmem:[%s1 + $0x7d8] sm:$0xff]
    %v281 = vld [vmem:[%s1 + $0x7e0] sm:$0xff]
    %v282 = vld [vmem:[%s1 + $0x7e8] sm:$0xff]
    %v283 = vld [vmem:[%s1 + $0x7f0] sm:$0xff]
    %v284 = vld [vmem:[%s1 + $0x7f8] sm:$0xff]
    %v285 = vld [vmem:[%s2] sm:$0xff]
    %v287 = vlaneseq
    %v288 = vshrl.u32 %v287, 7
    %v289 = vsub.s32 0, %v288
    %v290 = vrot.slane %v285, %v289
    %v291 = vlaneseq
    %v292 = vshrl.u32 %v291, 7
    %v293 = vsub.s32 1, %v292
    %v294 = vrot.slane %v285, %v293
    %v295 = vlaneseq
    %v296 = vshrl.u32 %v295, 7
    %v297 = vsub.s32 2, %v296
    %v298 = vrot.slane %v285, %v297
    %v299 = vlaneseq
    %v300 = vshrl.u32 %v299, 7
    %v301 = vsub.s32 3, %v300
    %v302 = vrot.slane %v285, %v301
    %v303 = vlaneseq
    %v304 = vshrl.u32 %v303, 7
    %v305 = vsub.s32 4, %v304
    %v306 = vrot.slane %v285, %v305
    %v307 = vlaneseq
    %v308 = vshrl.u32 %v307, 7
    %v309 = vsub.s32 5, %v308
    %v310 = vrot.slane %v285, %v309
    %v311 = vlaneseq
    %v312 = vshrl.u32 %v311, 7
    %v313 = vsub.s32 6, %v312
    %v314 = vrot.slane %v285, %v313
    %v315 = vlaneseq
    %v316 = vshrl.u32 %v315, 7
    %v317 = vsub.s32 7, %v316
    %v318 = vrot.slane %v285, %v317
    %v329 = vunpack.c.l.s4 1966171168
    %v330 = vunpack.c.0.s8 %v329
    %v331 = vlaneseq
    %v332 = vshrl.u32 %v331, 7
    %v333 = vsub.s32 %v330, %v332
    %v334 = vrot.slane %v28, %v333
    %v335 = vcombine.high %v334, %v334
    %v337 = vunpack.c.l.s4 1966171168
    %v338 = vunpack.c.0.s8 %v337
    %v339 = vlaneseq
    %v340 = vshrl.u32 %v339, 7
    %v341 = vsub.s32 %v338, %v340
    %v342 = vrot.slane %v334, %v341
    %v344 = vunpack.c.l.s4 1966171168
    %v345 = vunpack.c.0.s8 %v344
    %v346 = vlaneseq
    %v347 = vshrl.u32 %v346, 7
    %v348 = vsub.s32 %v345, %v347
    %v349 = vrot.slane %v335, %v348
    %v350 = vcombine.high %v342, %v342
    %v351 = vcombine.high %v349, %v349
    %v612 = vunpack.c.l.b16 %v29
    %v613 = vunpack.c.h.b16 %v29
    %v614 = vunpack.c.l.b16 %v30
    %v615 = vunpack.c.h.b16 %v30
    %v616 = vunpack.c.l.b16 %v31
    %v617 = vunpack.c.h.b16 %v31
    %v618 = vunpack.c.l.b16 %v32
    %v619 = vunpack.c.h.b16 %v32
    %v620 = vunpack.c.l.b16 %v33
    %v621 = vunpack.c.h.b16 %v33
    %v622 = vunpack.c.l.b16 %v34
    %v623 = vunpack.c.h.b16 %v34
    %v624 = vunpack.c.l.b16 %v35
    %v625 = vunpack.c.h.b16 %v35
    %v626 = vunpack.c.l.b16 %v36
    %v627 = vunpack.c.h.b16 %v36
    %v628 = vunpack.c.l.b16 %v37
    %v629 = vunpack.c.h.b16 %v37
    %v630 = vunpack.c.l.b16 %v38
    %v631 = vunpack.c.h.b16 %v38
    %v632 = vunpack.c.l.b16 %v39
    %v633 = vunpack.c.h.b16 %v39
    %v634 = vunpack.c.l.b16 %v40
    %v635 = vunpack.c.h.b16 %v40
    %v636 = vunpack.c.l.b16 %v41
    %v637 = vunpack.c.h.b16 %v41
    %v638 = vunpack.c.l.b16 %v42
    %v639 = vunpack.c.h.b16 %v42
    %v640 = vunpack.c.l.b16 %v43
    %v641 = vunpack.c.h.b16 %v43
    %v642 = vunpack.c.l.b16 %v44
    %v643 = vunpack.c.h.b16 %v44
    %v644 = vunpack.c.l.b16 %v45
    %v645 = vunpack.c.h.b16 %v45
    %v646 = vunpack.c.l.b16 %v46
    %v647 = vunpack.c.h.b16 %v46
    %v648 = vunpack.c.l.b16 %v47
    %v649 = vunpack.c.h.b16 %v47
    %v650 = vunpack.c.l.b16 %v48
    %v651 = vunpack.c.h.b16 %v48
    %v652 = vunpack.c.l.b16 %v49
    %v653 = vunpack.c.h.b16 %v49
    %v654 = vunpack.c.l.b16 %v50
    %v655 = vunpack.c.h.b16 %v50
    %v656 = vunpack.c.l.b16 %v51
    %v657 = vunpack.c.h.b16 %v51
    %v658 = vunpack.c.l.b16 %v52
    %v659 = vunpack.c.h.b16 %v52
    %v660 = vunpack.c.l.b16 %v53
    %v661 = vunpack.c.h.b16 %v53
    %v662 = vunpack.c.l.b16 %v54
    %v663 = vunpack.c.h.b16 %v54
    %v664 = vunpack.c.l.b16 %v55
    %v665 = vunpack.c.h.b16 %v55
    %v666 = vunpack.c.l.b16 %v56
    %v667 = vunpack.c.h.b16 %v56
    %v668 = vunpack.c.l.b16 %v57
    %v669 = vunpack.c.h.b16 %v57
    %v670 = vunpack.c.l.b16 %v58
    %v671 = vunpack.c.h.b16 %v58
    %v672 = vunpack.c.l.b16 %v59
    %v673 = vunpack.c.h.b16 %v59
    %v674 = vunpack.c.l.b16 %v60
    %v675 = vunpack.c.h.b16 %v60
    %v676 = vunpack.c.l.b16 %v61
    %v677 = vunpack.c.h.b16 %v61
    %v678 = vunpack.c.l.b16 %v62
    %v679 = vunpack.c.h.b16 %v62
    %v680 = vunpack.c.l.b16 %v63
    %v681 = vunpack.c.h.b16 %v63
    %v682 = vunpack.c.l.b16 %v64
    %v683 = vunpack.c.h.b16 %v64
    %v684 = vunpack.c.l.b16 %v65
    %v685 = vunpack.c.h.b16 %v65
    %v686 = vunpack.c.l.b16 %v66
    %v687 = vunpack.c.h.b16 %v66
    %v688 = vunpack.c.l.b16 %v67
    %v689 = vunpack.c.h.b16 %v67
    %v690 = vunpack.c.l.b16 %v68
    %v691 = vunpack.c.h.b16 %v68
    %v692 = vunpack.c.l.b16 %v69
    %v693 = vunpack.c.h.b16 %v69
    %v694 = vunpack.c.l.b16 %v70
    %v695 = vunpack.c.h.b16 %v70
    %v696 = vunpack.c.l.b16 %v71
    %v697 = vunpack.c.h.b16 %v71
    %v698 = vunpack.c.l.b16 %v72
    %v699 = vunpack.c.h.b16 %v72
    %v700 = vunpack.c.l.b16 %v73
    %v701 = vunpack.c.h.b16 %v73
    %v702 = vunpack.c.l.b16 %v74
    %v703 = vunpack.c.h.b16 %v74
    %v704 = vunpack.c.l.b16 %v75
    %v705 = vunpack.c.h.b16 %v75
    %v706 = vunpack.c.l.b16 %v76
    %v707 = vunpack.c.h.b16 %v76
    %v708 = vunpack.c.l.b16 %v77
    %v709 = vunpack.c.h.b16 %v77
    %v710 = vunpack.c.l.b16 %v78
    %v711 = vunpack.c.h.b16 %v78
    %v712 = vunpack.c.l.b16 %v79
    %v713 = vunpack.c.h.b16 %v79
    %v714 = vunpack.c.l.b16 %v80
    %v715 = vunpack.c.h.b16 %v80
    %v716 = vunpack.c.l.b16 %v81
    %v717 = vunpack.c.h.b16 %v81
    %v718 = vunpack.c.l.b16 %v82
    %v719 = vunpack.c.h.b16 %v82
    %v720 = vunpack.c.l.b16 %v83
    %v721 = vunpack.c.h.b16 %v83
    %v722 = vunpack.c.l.b16 %v84
    %v723 = vunpack.c.h.b16 %v84
    %v724 = vunpack.c.l.b16 %v85
    %v725 = vunpack.c.h.b16 %v85
    %v726 = vunpack.c.l.b16 %v86
    %v727 = vunpack.c.h.b16 %v86
    %v728 = vunpack.c.l.b16 %v87
    %v729 = vunpack.c.h.b16 %v87
    %v730 = vunpack.c.l.b16 %v88
    %v731 = vunpack.c.h.b16 %v88
    %v732 = vunpack.c.l.b16 %v89
    %v733 = vunpack.c.h.b16 %v89
    %v734 = vunpack.c.l.b16 %v90
    %v735 = vunpack.c.h.b16 %v90
    %v736 = vunpack.c.l.b16 %v91
    %v737 = vunpack.c.h.b16 %v91
    %v738 = vunpack.c.l.b16 %v92
    %v739 = vunpack.c.h.b16 %v92
    %v740 = vunpack.c.l.b16 %v93
    %v741 = vunpack.c.h.b16 %v93
    %v742 = vunpack.c.l.b16 %v94
    %v743 = vunpack.c.h.b16 %v94
    %v744 = vunpack.c.l.b16 %v95
    %v745 = vunpack.c.h.b16 %v95
    %v746 = vunpack.c.l.b16 %v96
    %v747 = vunpack.c.h.b16 %v96
    %v748 = vunpack.c.l.b16 %v97
    %v749 = vunpack.c.h.b16 %v97
    %v750 = vunpack.c.l.b16 %v98
    %v751 = vunpack.c.h.b16 %v98
    %v752 = vunpack.c.l.b16 %v99
    %v753 = vunpack.c.h.b16 %v99
    %v754 = vunpack.c.l.b16 %v100
    %v755 = vunpack.c.h.b16 %v100
    %v756 = vunpack.c.l.b16 %v101
    %v757 = vunpack.c.h.b16 %v101
    %v758 = vunpack.c.l.b16 %v102
    %v759 = vunpack.c.h.b16 %v102
    %v760 = vunpack.c.l.b16 %v103
    %v761 = vunpack.c.h.b16 %v103
    %v762 = vunpack.c.l.b16 %v104
    %v763 = vunpack.c.h.b16 %v104
    %v764 = vunpack.c.l.b16 %v105
    %v765 = vunpack.c.h.b16 %v105
    %v766 = vunpack.c.l.b16 %v106
    %v767 = vunpack.c.h.b16 %v106
    %v768 = vunpack.c.l.b16 %v107
    %v769 = vunpack.c.h.b16 %v107
    %v770 = vunpack.c.l.b16 %v108
    %v771 = vunpack.c.h.b16 %v108
    %v772 = vunpack.c.l.b16 %v109
    %v773 = vunpack.c.h.b16 %v109
    %v774 = vunpack.c.l.b16 %v110
    %v775 = vunpack.c.h.b16 %v110
    %v776 = vunpack.c.l.b16 %v111
    %v777 = vunpack.c.h.b16 %v111
    %v778 = vunpack.c.l.b16 %v112
    %v779 = vunpack.c.h.b16 %v112
    %v780 = vunpack.c.l.b16 %v113
    %v781 = vunpack.c.h.b16 %v113
    %v782 = vunpack.c.l.b16 %v114
    %v783 = vunpack.c.h.b16 %v114
    %v784 = vunpack.c.l.b16 %v115
    %v785 = vunpack.c.h.b16 %v115
    %v786 = vunpack.c.l.b16 %v116
    %v787 = vunpack.c.h.b16 %v116
    %v788 = vunpack.c.l.b16 %v117
    %v789 = vunpack.c.h.b16 %v117
    %v790 = vunpack.c.l.b16 %v118
    %v791 = vunpack.c.h.b16 %v118
    %v792 = vunpack.c.l.b16 %v119
    %v793 = vunpack.c.h.b16 %v119
    %v794 = vunpack.c.l.b16 %v120
    %v795 = vunpack.c.h.b16 %v120
    %v796 = vunpack.c.l.b16 %v121
    %v797 = vunpack.c.h.b16 %v121
    %v798 = vunpack.c.l.b16 %v122
    %v799 = vunpack.c.h.b16 %v122
    %v800 = vunpack.c.l.b16 %v123
    %v801 = vunpack.c.h.b16 %v123
    %v802 = vunpack.c.l.b16 %v124
    %v803 = vunpack.c.h.b16 %v124
    %v804 = vunpack.c.l.b16 %v125
    %v805 = vunpack.c.h.b16 %v125
    %v806 = vunpack.c.l.b16 %v126
    %v807 = vunpack.c.h.b16 %v126
    %v808 = vunpack.c.l.b16 %v127
    %v809 = vunpack.c.h.b16 %v127
    %v810 = vunpack.c.l.b16 %v128
    %v811 = vunpack.c.h.b16 %v128
    %v812 = vunpack.c.l.b16 %v129
    %v813 = vunpack.c.h.b16 %v129
    %v814 = vunpack.c.l.b16 %v130
    %v815 = vunpack.c.h.b16 %v130
    %v816 = vunpack.c.l.b16 %v131
    %v817 = vunpack.c.h.b16 %v131
    %v818 = vunpack.c.l.b16 %v132
    %v819 = vunpack.c.h.b16 %v132
    %v820 = vunpack.c.l.b16 %v133
    %v821 = vunpack.c.h.b16 %v133
    %v822 = vunpack.c.l.b16 %v134
    %v823 = vunpack.c.h.b16 %v134
    %v824 = vunpack.c.l.b16 %v135
    %v825 = vunpack.c.h.b16 %v135
    %v826 = vunpack.c.l.b16 %v136
    %v827 = vunpack.c.h.b16 %v136
    %v828 = vunpack.c.l.b16 %v137
    %v829 = vunpack.c.h.b16 %v137
    %v830 = vunpack.c.l.b16 %v138
    %v831 = vunpack.c.h.b16 %v138
    %v832 = vunpack.c.l.b16 %v139
    %v833 = vunpack.c.h.b16 %v139
    %v834 = vunpack.c.l.b16 %v140
    %v835 = vunpack.c.h.b16 %v140
    %v836 = vunpack.c.l.b16 %v141
    %v837 = vunpack.c.h.b16 %v141
    %v838 = vunpack.c.l.b16 %v142
    %v839 = vunpack.c.h.b16 %v142
    %v840 = vunpack.c.l.b16 %v143
    %v841 = vunpack.c.h.b16 %v143
    %v842 = vunpack.c.l.b16 %v144
    %v843 = vunpack.c.h.b16 %v144
    %v844 = vunpack.c.l.b16 %v145
    %v845 = vunpack.c.h.b16 %v145
    %v846 = vunpack.c.l.b16 %v146
    %v847 = vunpack.c.h.b16 %v146
    %v848 = vunpack.c.l.b16 %v147
    %v849 = vunpack.c.h.b16 %v147
    %v850 = vunpack.c.l.b16 %v148
    %v851 = vunpack.c.h.b16 %v148
    %v852 = vunpack.c.l.b16 %v149
    %v853 = vunpack.c.h.b16 %v149
    %v854 = vunpack.c.l.b16 %v150
    %v855 = vunpack.c.h.b16 %v150
    %v856 = vunpack.c.l.b16 %v151
    %v857 = vunpack.c.h.b16 %v151
    %v858 = vunpack.c.l.b16 %v152
    %v859 = vunpack.c.h.b16 %v152
    %v860 = vunpack.c.l.b16 %v153
    %v861 = vunpack.c.h.b16 %v153
    %v862 = vunpack.c.l.b16 %v154
    %v863 = vunpack.c.h.b16 %v154
    %v864 = vunpack.c.l.b16 %v155
    %v865 = vunpack.c.h.b16 %v155
    %v866 = vunpack.c.l.b16 %v156
    %v867 = vunpack.c.h.b16 %v156
    %v868 = vunpack.c.l.b16 %v157
    %v869 = vunpack.c.h.b16 %v157
    %v870 = vunpack.c.l.b16 %v158
    %v871 = vunpack.c.h.b16 %v158
    %v872 = vunpack.c.l.b16 %v159
    %v873 = vunpack.c.h.b16 %v159
    %v874 = vunpack.c.l.b16 %v160
    %v875 = vunpack.c.h.b16 %v160
    %v876 = vunpack.c.l.b16 %v161
    %v877 = vunpack.c.h.b16 %v161
    %v878 = vunpack.c.l.b16 %v162
    %v879 = vunpack.c.h.b16 %v162
    %v880 = vunpack.c.l.b16 %v163
    %v881 = vunpack.c.h.b16 %v163
    %v882 = vunpack.c.l.b16 %v164
    %v883 = vunpack.c.h.b16 %v164
    %v884 = vunpack.c.l.b16 %v165
    %v885 = vunpack.c.h.b16 %v165
    %v886 = vunpack.c.l.b16 %v166
    %v887 = vunpack.c.h.b16 %v166
    %v888 = vunpack.c.l.b16 %v167
    %v889 = vunpack.c.h.b16 %v167
    %v890 = vunpack.c.l.b16 %v168
    %v891 = vunpack.c.h.b16 %v168
    %v892 = vunpack.c.l.b16 %v169
    %v893 = vunpack.c.h.b16 %v169
    %v894 = vunpack.c.l.b16 %v170
    %v895 = vunpack.c.h.b16 %v170
    %v896 = vunpack.c.l.b16 %v171
    %v897 = vunpack.c.h.b16 %v171
    %v898 = vunpack.c.l.b16 %v172
    %v899 = vunpack.c.h.b16 %v172
    %v900 = vunpack.c.l.b16 %v173
    %v901 = vunpack.c.h.b16 %v173
    %v902 = vunpack.c.l.b16 %v174
    %v903 = vunpack.c.h.b16 %v174
    %v904 = vunpack.c.l.b16 %v175
    %v905 = vunpack.c.h.b16 %v175
    %v906 = vunpack.c.l.b16 %v176
    %v907 = vunpack.c.h.b16 %v176
    %v908 = vunpack.c.l.b16 %v177
    %v909 = vunpack.c.h.b16 %v177
    %v910 = vunpack.c.l.b16 %v178
    %v911 = vunpack.c.h.b16 %v178
    %v912 = vunpack.c.l.b16 %v179
    %v913 = vunpack.c.h.b16 %v179
    %v914 = vunpack.c.l.b16 %v180
    %v915 = vunpack.c.h.b16 %v180
    %v916 = vunpack.c.l.b16 %v181
    %v917 = vunpack.c.h.b16 %v181
    %v918 = vunpack.c.l.b16 %v182
    %v919 = vunpack.c.h.b16 %v182
    %v920 = vunpack.c.l.b16 %v183
    %v921 = vunpack.c.h.b16 %v183
    %v922 = vunpack.c.l.b16 %v184
    %v923 = vunpack.c.h.b16 %v184
    %v924 = vunpack.c.l.b16 %v185
    %v925 = vunpack.c.h.b16 %v185
    %v926 = vunpack.c.l.b16 %v186
    %v927 = vunpack.c.h.b16 %v186
    %v928 = vunpack.c.l.b16 %v187
    %v929 = vunpack.c.h.b16 %v187
    %v930 = vunpack.c.l.b16 %v188
    %v931 = vunpack.c.h.b16 %v188
    %v932 = vunpack.c.l.b16 %v189
    %v933 = vunpack.c.h.b16 %v189
    %v934 = vunpack.c.l.b16 %v190
    %v935 = vunpack.c.h.b16 %v190
    %v936 = vunpack.c.l.b16 %v191
    %v937 = vunpack.c.h.b16 %v191
    %v938 = vunpack.c.l.b16 %v192
    %v939 = vunpack.c.h.b16 %v192
    %v940 = vunpack.c.l.b16 %v193
    %v941 = vunpack.c.h.b16 %v193
    %v942 = vunpack.c.l.b16 %v194
    %v943 = vunpack.c.h.b16 %v194
    %v944 = vunpack.c.l.b16 %v195
    %v945 = vunpack.c.h.b16 %v195
    %v946 = vunpack.c.l.b16 %v196
    %v947 = vunpack.c.h.b16 %v196
    %v948 = vunpack.c.l.b16 %v197
    %v949 = vunpack.c.h.b16 %v197
    %v950 = vunpack.c.l.b16 %v198
    %v951 = vunpack.c.h.b16 %v198
    %v952 = vunpack.c.l.b16 %v199
    %v953 = vunpack.c.h.b16 %v199
    %v954 = vunpack.c.l.b16 %v200
    %v955 = vunpack.c.h.b16 %v200
    %v956 = vunpack.c.l.b16 %v201
    %v957 = vunpack.c.h.b16 %v201
    %v958 = vunpack.c.l.b16 %v202
    %v959 = vunpack.c.h.b16 %v202
    %v960 = vunpack.c.l.b16 %v203
    %v961 = vunpack.c.h.b16 %v203
    %v962 = vunpack.c.l.b16 %v204
    %v963 = vunpack.c.h.b16 %v204
    %v964 = vunpack.c.l.b16 %v205
    %v965 = vunpack.c.h.b16 %v205
    %v966 = vunpack.c.l.b16 %v206
    %v967 = vunpack.c.h.b16 %v206
    %v968 = vunpack.c.l.b16 %v207
    %v969 = vunpack.c.h.b16 %v207
    %v970 = vunpack.c.l.b16 %v208
    %v971 = vunpack.c.h.b16 %v208
    %v972 = vunpack.c.l.b16 %v209
    %v973 = vunpack.c.h.b16 %v209
    %v974 = vunpack.c.l.b16 %v210
    %v975 = vunpack.c.h.b16 %v210
    %v976 = vunpack.c.l.b16 %v211
    %v977 = vunpack.c.h.b16 %v211
    %v978 = vunpack.c.l.b16 %v212
    %v979 = vunpack.c.h.b16 %v212
    %v980 = vunpack.c.l.b16 %v213
    %v981 = vunpack.c.h.b16 %v213
    %v982 = vunpack.c.l.b16 %v214
    %v983 = vunpack.c.h.b16 %v214
    %v984 = vunpack.c.l.b16 %v215
    %v985 = vunpack.c.h.b16 %v215
    %v986 = vunpack.c.l.b16 %v216
    %v987 = vunpack.c.h.b16 %v216
    %v988 = vunpack.c.l.b16 %v217
    %v989 = vunpack.c.h.b16 %v217
    %v990 = vunpack.c.l.b16 %v218
    %v991 = vunpack.c.h.b16 %v218
    %v992 = vunpack.c.l.b16 %v219
    %v993 = vunpack.c.h.b16 %v219
    %v994 = vunpack.c.l.b16 %v220
    %v995 = vunpack.c.h.b16 %v220
    %v996 = vunpack.c.l.b16 %v221
    %v997 = vunpack.c.h.b16 %v221
    %v998 = vunpack.c.l.b16 %v222
    %v999 = vunpack.c.h.b16 %v222
    %v1000 = vunpack.c.l.b16 %v223
    %v1001 = vunpack.c.h.b16 %v223
    %v1002 = vunpack.c.l.b16 %v224
    %v1003 = vunpack.c.h.b16 %v224
    %v1004 = vunpack.c.l.b16 %v225
    %v1005 = vunpack.c.h.b16 %v225
    %v1006 = vunpack.c.l.b16 %v226
    %v1007 = vunpack.c.h.b16 %v226
    %v1008 = vunpack.c.l.b16 %v227
    %v1009 = vunpack.c.h.b16 %v227
    %v1010 = vunpack.c.l.b16 %v228
    %v1011 = vunpack.c.h.b16 %v228
    %v1012 = vunpack.c.l.b16 %v229
    %v1013 = vunpack.c.h.b16 %v229
    %v1014 = vunpack.c.l.b16 %v230
    %v1015 = vunpack.c.h.b16 %v230
    %v1016 = vunpack.c.l.b16 %v231
    %v1017 = vunpack.c.h.b16 %v231
    %v1018 = vunpack.c.l.b16 %v232
    %v1019 = vunpack.c.h.b16 %v232
    %v1020 = vunpack.c.l.b16 %v233
    %v1021 = vunpack.c.h.b16 %v233
    %v1022 = vunpack.c.l.b16 %v234
    %v1023 = vunpack.c.h.b16 %v234
    %v1024 = vunpack.c.l.b16 %v235
    %v1025 = vunpack.c.h.b16 %v235
    %v1026 = vunpack.c.l.b16 %v236
    %v1027 = vunpack.c.h.b16 %v236
    %v1028 = vunpack.c.l.b16 %v237
    %v1029 = vunpack.c.h.b16 %v237
    %v1030 = vunpack.c.l.b16 %v238
    %v1031 = vunpack.c.h.b16 %v238
    %v1032 = vunpack.c.l.b16 %v239
    %v1033 = vunpack.c.h.b16 %v239
    %v1034 = vunpack.c.l.b16 %v240
    %v1035 = vunpack.c.h.b16 %v240
    %v1036 = vunpack.c.l.b16 %v241
    %v1037 = vunpack.c.h.b16 %v241
    %v1038 = vunpack.c.l.b16 %v242
    %v1039 = vunpack.c.h.b16 %v242
    %v1040 = vunpack.c.l.b16 %v243
    %v1041 = vunpack.c.h.b16 %v243
    %v1042 = vunpack.c.l.b16 %v244
    %v1043 = vunpack.c.h.b16 %v244
    %v1044 = vunpack.c.l.b16 %v245
    %v1045 = vunpack.c.h.b16 %v245
    %v1046 = vunpack.c.l.b16 %v246
    %v1047 = vunpack.c.h.b16 %v246
    %v1048 = vunpack.c.l.b16 %v247
    %v1049 = vunpack.c.h.b16 %v247
    %v1050 = vunpack.c.l.b16 %v248
    %v1051 = vunpack.c.h.b16 %v248
    %v1052 = vunpack.c.l.b16 %v249
    %v1053 = vunpack.c.h.b16 %v249
    %v1054 = vunpack.c.l.b16 %v250
    %v1055 = vunpack.c.h.b16 %v250
    %v1056 = vunpack.c.l.b16 %v251
    %v1057 = vunpack.c.h.b16 %v251
    %v1058 = vunpack.c.l.b16 %v252
    %v1059 = vunpack.c.h.b16 %v252
    %v1060 = vunpack.c.l.b16 %v253
    %v1061 = vunpack.c.h.b16 %v253
    %v1062 = vunpack.c.l.b16 %v254
    %v1063 = vunpack.c.h.b16 %v254
    %v1064 = vunpack.c.l.b16 %v255
    %v1065 = vunpack.c.h.b16 %v255
    %v1066 = vunpack.c.l.b16 %v256
    %v1067 = vunpack.c.h.b16 %v256
    %v1068 = vunpack.c.l.b16 %v257
    %v1069 = vunpack.c.h.b16 %v257
    %v1070 = vunpack.c.l.b16 %v258
    %v1071 = vunpack.c.h.b16 %v258
    %v1072 = vunpack.c.l.b16 %v259
    %v1073 = vunpack.c.h.b16 %v259
    %v1074 = vunpack.c.l.b16 %v260
    %v1075 = vunpack.c.h.b16 %v260
    %v1076 = vunpack.c.l.b16 %v261
    %v1077 = vunpack.c.h.b16 %v261
    %v1078 = vunpack.c.l.b16 %v262
    %v1079 = vunpack.c.h.b16 %v262
    %v1080 = vunpack.c.l.b16 %v263
    %v1081 = vunpack.c.h.b16 %v263
    %v1082 = vunpack.c.l.b16 %v264
    %v1083 = vunpack.c.h.b16 %v264
    %v1084 = vunpack.c.l.b16 %v265
    %v1085 = vunpack.c.h.b16 %v265
    %v1086 = vunpack.c.l.b16 %v266
    %v1087 = vunpack.c.h.b16 %v266
    %v1088 = vunpack.c.l.b16 %v267
    %v1089 = vunpack.c.h.b16 %v267
    %v1090 = vunpack.c.l.b16 %v268
    %v1091 = vunpack.c.h.b16 %v268
    %v1092 = vunpack.c.l.b16 %v269
    %v1093 = vunpack.c.h.b16 %v269
    %v1094 = vunpack.c.l.b16 %v270
    %v1095 = vunpack.c.h.b16 %v270
    %v1096 = vunpack.c.l.b16 %v271
    %v1097 = vunpack.c.h.b16 %v271
    %v1098 = vunpack.c.l.b16 %v272
    %v1099 = vunpack.c.h.b16 %v272
    %v1100 = vunpack.c.l.b16 %v273
    %v1101 = vunpack.c.h.b16 %v273
    %v1102 = vunpack.c.l.b16 %v274
    %v1103 = vunpack.c.h.b16 %v274
    %v1104 = vunpack.c.l.b16 %v275
    %v1105 = vunpack.c.h.b16 %v275
    %v1106 = vunpack.c.l.b16 %v276
    %v1107 = vunpack.c.h.b16 %v276
    %v1108 = vunpack.c.l.b16 %v277
    %v1109 = vunpack.c.h.b16 %v277
    %v1110 = vunpack.c.l.b16 %v278
    %v1111 = vunpack.c.h.b16 %v278
    %v1112 = vunpack.c.l.b16 %v279
    %v1113 = vunpack.c.h.b16 %v279
    %v1114 = vunpack.c.l.b16 %v280
    %v1115 = vunpack.c.h.b16 %v280
    %v1116 = vunpack.c.l.b16 %v281
    %v1117 = vunpack.c.h.b16 %v281
    %v1118 = vunpack.c.l.b16 %v282
    %v1119 = vunpack.c.h.b16 %v282
    %v1120 = vunpack.c.l.b16 %v283
    %v1121 = vunpack.c.h.b16 %v283
    %v1122 = vunpack.c.l.b16 %v284
    %v1123 = vunpack.c.h.b16 %v284
    %v1124 = vpack.c.b16 %v620, %v612
    %v1125 = vpack.c.b16 %v621, %v613
    %v1126 = vpack.c.b16 %v622, %v614
    %v1127 = vpack.c.b16 %v623, %v615
    %v1128 = vpack.c.b16 %v624, %v616
    %v1129 = vpack.c.b16 %v625, %v617
    %v1130 = vpack.c.b16 %v626, %v618
    %v1131 = vpack.c.b16 %v627, %v619
    %v1132 = vpack.c.b16 %v636, %v628
    %v1133 = vpack.c.b16 %v637, %v629
    %v1134 = vpack.c.b16 %v638, %v630
    %v1135 = vpack.c.b16 %v639, %v631
    %v1136 = vpack.c.b16 %v640, %v632
    %v1137 = vpack.c.b16 %v641, %v633
    %v1138 = vpack.c.b16 %v642, %v634
    %v1139 = vpack.c.b16 %v643, %v635
    %v1140 = vpack.c.b16 %v652, %v644
    %v1141 = vpack.c.b16 %v653, %v645
    %v1142 = vpack.c.b16 %v654, %v646
    %v1143 = vpack.c.b16 %v655, %v647
    %v1144 = vpack.c.b16 %v656, %v648
    %v1145 = vpack.c.b16 %v657, %v649
    %v1146 = vpack.c.b16 %v658, %v650
    %v1147 = vpack.c.b16 %v659, %v651
    %v1148 = vpack.c.b16 %v668, %v660
    %v1149 = vpack.c.b16 %v669, %v661
    %v1150 = vpack.c.b16 %v670, %v662
    %v1151 = vpack.c.b16 %v671, %v663
    %v1152 = vpack.c.b16 %v672, %v664
    %v1153 = vpack.c.b16 %v673, %v665
    %v1154 = vpack.c.b16 %v674, %v666
    %v1155 = vpack.c.b16 %v675, %v667
    %v1156 = vpack.c.b16 %v684, %v676
    %v1157 = vpack.c.b16 %v685, %v677
    %v1158 = vpack.c.b16 %v686, %v678
    %v1159 = vpack.c.b16 %v687, %v679
    %v1160 = vpack.c.b16 %v688, %v680
    %v1161 = vpack.c.b16 %v689, %v681
    %v1162 = vpack.c.b16 %v690, %v682
    %v1163 = vpack.c.b16 %v691, %v683
    %v1164 = vpack.c.b16 %v700, %v692
    %v1165 = vpack.c.b16 %v701, %v693
    %v1166 = vpack.c.b16 %v702, %v694
    %v1167 = vpack.c.b16 %v703, %v695
    %v1168 = vpack.c.b16 %v704, %v696
    %v1169 = vpack.c.b16 %v705, %v697
    %v1170 = vpack.c.b16 %v706, %v698
    %v1171 = vpack.c.b16 %v707, %v699
    %v1172 = vpack.c.b16 %v716, %v708
    %v1173 = vpack.c.b16 %v717, %v709
    %v1174 = vpack.c.b16 %v718, %v710
    %v1175 = vpack.c.b16 %v719, %v711
    %v1176 = vpack.c.b16 %v720, %v712
    %v1177 = vpack.c.b16 %v721, %v713
    %v1178 = vpack.c.b16 %v722, %v714
    %v1179 = vpack.c.b16 %v723, %v715
    %v1180 = vpack.c.b16 %v732, %v724
    %v1181 = vpack.c.b16 %v733, %v725
    %v1182 = vpack.c.b16 %v734, %v726
    %v1183 = vpack.c.b16 %v735, %v727
    %v1184 = vpack.c.b16 %v736, %v728
    %v1185 = vpack.c.b16 %v737, %v729
    %v1186 = vpack.c.b16 %v738, %v730
    %v1187 = vpack.c.b16 %v739, %v731
    %v1188 = vpack.c.b16 %v748, %v740
    %v1189 = vpack.c.b16 %v749, %v741
    %v1190 = vpack.c.b16 %v750, %v742
    %v1191 = vpack.c.b16 %v751, %v743
    %v1192 = vpack.c.b16 %v752, %v744
    %v1193 = vpack.c.b16 %v753, %v745
    %v1194 = vpack.c.b16 %v754, %v746
    %v1195 = vpack.c.b16 %v755, %v747
    %v1196 = vpack.c.b16 %v764, %v756
    %v1197 = vpack.c.b16 %v765, %v757
    %v1198 = vpack.c.b16 %v766, %v758
    %v1199 = vpack.c.b16 %v767, %v759
    %v1200 = vpack.c.b16 %v768, %v760
    %v1201 = vpack.c.b16 %v769, %v761
    %v1202 = vpack.c.b16 %v770, %v762
    %v1203 = vpack.c.b16 %v771, %v763
    %v1204 = vpack.c.b16 %v780, %v772
    %v1205 = vpack.c.b16 %v781, %v773
    %v1206 = vpack.c.b16 %v782, %v774
    %v1207 = vpack.c.b16 %v783, %v775
    %v1208 = vpack.c.b16 %v784, %v776
    %v1209 = vpack.c.b16 %v785, %v777
    %v1210 = vpack.c.b16 %v786, %v778
    %v1211 = vpack.c.b16 %v787, %v779
    %v1212 = vpack.c.b16 %v796, %v788
    %v1213 = vpack.c.b16 %v797, %v789
    %v1214 = vpack.c.b16 %v798, %v790
    %v1215 = vpack.c.b16 %v799, %v791
    %v1216 = vpack.c.b16 %v800, %v792
    %v1217 = vpack.c.b16 %v801, %v793
    %v1218 = vpack.c.b16 %v802, %v794
    %v1219 = vpack.c.b16 %v803, %v795
    %v1220 = vpack.c.b16 %v812, %v804
    %v1221 = vpack.c.b16 %v813, %v805
    %v1222 = vpack.c.b16 %v814, %v806
    %v1223 = vpack.c.b16 %v815, %v807
    %v1224 = vpack.c.b16 %v816, %v808
    %v1225 = vpack.c.b16 %v817, %v809
    %v1226 = vpack.c.b16 %v818, %v810
    %v1227 = vpack.c.b16 %v819, %v811
    %v1228 = vpack.c.b16 %v828, %v820
    %v1229 = vpack.c.b16 %v829, %v821
    %v1230 = vpack.c.b16 %v830, %v822
    %v1231 = vpack.c.b16 %v831, %v823
    %v1232 = vpack.c.b16 %v832, %v824
    %v1233 = vpack.c.b16 %v833, %v825
    %v1234 = vpack.c.b16 %v834, %v826
    %v1235 = vpack.c.b16 %v835, %v827
    %v1236 = vpack.c.b16 %v844, %v836
    %v1237 = vpack.c.b16 %v845, %v837
    %v1238 = vpack.c.b16 %v846, %v838
    %v1239 = vpack.c.b16 %v847, %v839
    %v1240 = vpack.c.b16 %v848, %v840
    %v1241 = vpack.c.b16 %v849, %v841
    %v1242 = vpack.c.b16 %v850, %v842
    %v1243 = vpack.c.b16 %v851, %v843
    %v1244 = vpack.c.b16 %v860, %v852
    %v1245 = vpack.c.b16 %v861, %v853
    %v1246 = vpack.c.b16 %v862, %v854
    %v1247 = vpack.c.b16 %v863, %v855
    %v1248 = vpack.c.b16 %v864, %v856
    %v1249 = vpack.c.b16 %v865, %v857
    %v1250 = vpack.c.b16 %v866, %v858
    %v1251 = vpack.c.b16 %v867, %v859
    %v1252 = vpack.c.b16 %v876, %v868
    %v1253 = vpack.c.b16 %v877, %v869
    %v1254 = vpack.c.b16 %v878, %v870
    %v1255 = vpack.c.b16 %v879, %v871
    %v1256 = vpack.c.b16 %v880, %v872
    %v1257 = vpack.c.b16 %v881, %v873
    %v1258 = vpack.c.b16 %v882, %v874
    %v1259 = vpack.c.b16 %v883, %v875
    %v1260 = vpack.c.b16 %v892, %v884
    %v1261 = vpack.c.b16 %v893, %v885
    %v1262 = vpack.c.b16 %v894, %v886
    %v1263 = vpack.c.b16 %v895, %v887
    %v1264 = vpack.c.b16 %v896, %v888
    %v1265 = vpack.c.b16 %v897, %v889
    %v1266 = vpack.c.b16 %v898, %v890
    %v1267 = vpack.c.b16 %v899, %v891
    %v1268 = vpack.c.b16 %v908, %v900
    %v1269 = vpack.c.b16 %v909, %v901
    %v1270 = vpack.c.b16 %v910, %v902
    %v1271 = vpack.c.b16 %v911, %v903
    %v1272 = vpack.c.b16 %v912, %v904
    %v1273 = vpack.c.b16 %v913, %v905
    %v1274 = vpack.c.b16 %v914, %v906
    %v1275 = vpack.c.b16 %v915, %v907
    %v1276 = vpack.c.b16 %v924, %v916
    %v1277 = vpack.c.b16 %v925, %v917
    %v1278 = vpack.c.b16 %v926, %v918
    %v1279 = vpack.c.b16 %v927, %v919
    %v1280 = vpack.c.b16 %v928, %v920
    %v1281 = vpack.c.b16 %v929, %v921
    %v1282 = vpack.c.b16 %v930, %v922
    %v1283 = vpack.c.b16 %v931, %v923
    %v1284 = vpack.c.b16 %v940, %v932
    %v1285 = vpack.c.b16 %v941, %v933
    %v1286 = vpack.c.b16 %v942, %v934
    %v1287 = vpack.c.b16 %v943, %v935
    %v1288 = vpack.c.b16 %v944, %v936
    %v1289 = vpack.c.b16 %v945, %v937
    %v1290 = vpack.c.b16 %v946, %v938
    %v1291 = vpack.c.b16 %v947, %v939
    %v1292 = vpack.c.b16 %v956, %v948
    %v1293 = vpack.c.b16 %v957, %v949
    %v1294 = vpack.c.b16 %v958, %v950
    %v1295 = vpack.c.b16 %v959, %v951
    %v1296 = vpack.c.b16 %v960, %v952
    %v1297 = vpack.c.b16 %v961, %v953
    %v1298 = vpack.c.b16 %v962, %v954
    %v1299 = vpack.c.b16 %v963, %v955
    %v1300 = vpack.c.b16 %v972, %v964
    %v1301 = vpack.c.b16 %v973, %v965
    %v1302 = vpack.c.b16 %v974, %v966
    %v1303 = vpack.c.b16 %v975, %v967
    %v1304 = vpack.c.b16 %v976, %v968
    %v1305 = vpack.c.b16 %v977, %v969
    %v1306 = vpack.c.b16 %v978, %v970
    %v1307 = vpack.c.b16 %v979, %v971
    %v1308 = vpack.c.b16 %v988, %v980
    %v1309 = vpack.c.b16 %v989, %v981
    %v1310 = vpack.c.b16 %v990, %v982
    %v1311 = vpack.c.b16 %v991, %v983
    %v1312 = vpack.c.b16 %v992, %v984
    %v1313 = vpack.c.b16 %v993, %v985
    %v1314 = vpack.c.b16 %v994, %v986
    %v1315 = vpack.c.b16 %v995, %v987
    %v1316 = vpack.c.b16 %v1004, %v996
    %v1317 = vpack.c.b16 %v1005, %v997
    %v1318 = vpack.c.b16 %v1006, %v998
    %v1319 = vpack.c.b16 %v1007, %v999
    %v1320 = vpack.c.b16 %v1008, %v1000
    %v1321 = vpack.c.b16 %v1009, %v1001
    %v1322 = vpack.c.b16 %v1010, %v1002
    %v1323 = vpack.c.b16 %v1011, %v1003
    %v1324 = vpack.c.b16 %v1020, %v1012
    %v1325 = vpack.c.b16 %v1021, %v1013
    %v1326 = vpack.c.b16 %v1022, %v1014
    %v1327 = vpack.c.b16 %v1023, %v1015
    %v1328 = vpack.c.b16 %v1024, %v1016
    %v1329 = vpack.c.b16 %v1025, %v1017
    %v1330 = vpack.c.b16 %v1026, %v1018
    %v1331 = vpack.c.b16 %v1027, %v1019
    %v1332 = vpack.c.b16 %v1036, %v1028
    %v1333 = vpack.c.b16 %v1037, %v1029
    %v1334 = vpack.c.b16 %v1038, %v1030
    %v1335 = vpack.c.b16 %v1039, %v1031
    %v1336 = vpack.c.b16 %v1040, %v1032
    %v1337 = vpack.c.b16 %v1041, %v1033
    %v1338 = vpack.c.b16 %v1042, %v1034
    %v1339 = vpack.c.b16 %v1043, %v1035
    %v1340 = vpack.c.b16 %v1052, %v1044
    %v1341 = vpack.c.b16 %v1053, %v1045
    %v1342 = vpack.c.b16 %v1054, %v1046
    %v1343 = vpack.c.b16 %v1055, %v1047
    %v1344 = vpack.c.b16 %v1056, %v1048
    %v1345 = vpack.c.b16 %v1057, %v1049
    %v1346 = vpack.c.b16 %v1058, %v1050
    %v1347 = vpack.c.b16 %v1059, %v1051
    %v1348 = vpack.c.b16 %v1068, %v1060
    %v1349 = vpack.c.b16 %v1069, %v1061
    %v1350 = vpack.c.b16 %v1070, %v1062
    %v1351 = vpack.c.b16 %v1071, %v1063
    %v1352 = vpack.c.b16 %v1072, %v1064
    %v1353 = vpack.c.b16 %v1073, %v1065
    %v1354 = vpack.c.b16 %v1074, %v1066
    %v1355 = vpack.c.b16 %v1075, %v1067
    %v1356 = vpack.c.b16 %v1084, %v1076
    %v1357 = vpack.c.b16 %v1085, %v1077
    %v1358 = vpack.c.b16 %v1086, %v1078
    %v1359 = vpack.c.b16 %v1087, %v1079
    %v1360 = vpack.c.b16 %v1088, %v1080
    %v1361 = vpack.c.b16 %v1089, %v1081
    %v1362 = vpack.c.b16 %v1090, %v1082
    %v1363 = vpack.c.b16 %v1091, %v1083
    %v1364 = vpack.c.b16 %v1100, %v1092
    %v1365 = vpack.c.b16 %v1101, %v1093
    %v1366 = vpack.c.b16 %v1102, %v1094
    %v1367 = vpack.c.b16 %v1103, %v1095
    %v1368 = vpack.c.b16 %v1104, %v1096
    %v1369 = vpack.c.b16 %v1105, %v1097
    %v1370 = vpack.c.b16 %v1106, %v1098
    %v1371 = vpack.c.b16 %v1107, %v1099
    %v1372 = vpack.c.b16 %v1116, %v1108
    %v1373 = vpack.c.b16 %v1117, %v1109
    %v1374 = vpack.c.b16 %v1118, %v1110
    %v1375 = vpack.c.b16 %v1119, %v1111
    %v1376 = vpack.c.b16 %v1120, %v1112
    %v1377 = vpack.c.b16 %v1121, %v1113
    %v1378 = vpack.c.b16 %v1122, %v1114
    %v1379 = vpack.c.b16 %v1123, %v1115
    %1636 = vmatprep.subr.bf16.mxu0 %v1181
    %1637 = vmatpush1.bf16.msra.mxu0 %v1180
    %1638 = vmatprep.subr.bf16.mxu0 %v1173
    %1639 = vmatpush1.bf16.msra.mxu0 %v1172
    %1640 = vmatprep.subr.bf16.mxu0 %v1165
    %1641 = vmatpush1.bf16.msra.mxu0 %v1164
    %1642 = vmatprep.subr.bf16.mxu0 %v1157
    %1643 = vmatpush1.bf16.msra.mxu0 %v1156
    %1644 = vmatprep.subr.bf16.mxu0 %v1149
    %1645 = vmatpush1.bf16.msra.mxu0 %v1148
    %1646 = vmatprep.subr.bf16.mxu0 %v1141
    %1647 = vmatpush1.bf16.msra.mxu0 %v1140
    %1648 = vmatprep.subr.bf16.mxu0 %v1133
    %1649 = vmatpush1.bf16.msra.mxu0 %v1132
    %1650 = vmatprep.subr.bf16.mxu0 %v1125
    %1651 = vmatpush1.bf16.msra.mxu0 %v1124
    %1652 = vmatprep.subr.bf16.mxu0 %v1245
    %1653 = vmatpush2.bf16.msra.mxu0 %v1244
    %1654 = vmatprep.subr.bf16.mxu0 %v1237
    %1655 = vmatpush2.bf16.msra.mxu0 %v1236
    %1656 = vmatprep.subr.bf16.mxu0 %v1229
    %1657 = vmatpush2.bf16.msra.mxu0 %v1228
    %1658 = vmatprep.subr.bf16.mxu0 %v1221
    %1659 = vmatpush2.bf16.msra.mxu0 %v1220
    %1660 = vmatprep.subr.bf16.mxu0 %v1213
    %1661 = vmatpush2.bf16.msra.mxu0 %v1212
    %1662 = vmatprep.subr.bf16.mxu0 %v1205
    %1663 = vmatpush2.bf16.msra.mxu0 %v1204
    %1664 = vmatprep.subr.bf16.mxu0 %v1197
    %1665 = vmatpush2.bf16.msra.mxu0 %v1196
    %1666 = vmatprep.subr.bf16.mxu0 %v1189
    %1667 = vmatpush2.bf16.msra.mxu0 %v1188
    %1668 = vmatprep.mubr.bf16.mxu0 %v349
    %1669 = vmatmul.mubr.bf16.gmra.mxu0 %v342
    %v1670 = vpop.f32.mrf.mxu0
    %v1671 = vadd.f32 %v290, %v1670
    %v1672 = vpop.f32.mrf.mxu0
    %v1673 = vadd.f32 %v294, %v1672
    %v1674 = vpop.f32.mrf.mxu0
    %v1675 = vpop.f32.mrf.mxu0
    %1676 = vdwg.mxu0
    %1677 = vmatprep.subr.bf16.mxu0 %v1309
    %1678 = vmatpush1.bf16.msra.mxu0 %v1308
    %1679 = vmatprep.subr.bf16.mxu0 %v1301
    %1680 = vmatpush1.bf16.msra.mxu0 %v1300
    %1681 = vmatprep.subr.bf16.mxu0 %v1293
    %1682 = vmatpush1.bf16.msra.mxu0 %v1292
    %1683 = vmatprep.subr.bf16.mxu0 %v1285
    %1684 = vmatpush1.bf16.msra.mxu0 %v1284
    %1685 = vmatprep.subr.bf16.mxu0 %v1277
    %1686 = vmatpush1.bf16.msra.mxu0 %v1276
    %1687 = vmatprep.subr.bf16.mxu0 %v1269
    %1688 = vmatpush1.bf16.msra.mxu0 %v1268
    %1689 = vmatprep.subr.bf16.mxu0 %v1261
    %1690 = vmatpush1.bf16.msra.mxu0 %v1260
    %1691 = vmatprep.subr.bf16.mxu0 %v1253
    %1692 = vmatpush1.bf16.msra.mxu0 %v1252
    %1693 = vmatprep.subr.bf16.mxu0 %v1373
    %1694 = vmatpush2.bf16.msra.mxu0 %v1372
    %1695 = vmatprep.subr.bf16.mxu0 %v1365
    %1696 = vmatpush2.bf16.msra.mxu0 %v1364
    %1697 = vmatprep.subr.bf16.mxu0 %v1357
    %1698 = vmatpush2.bf16.msra.mxu0 %v1356
    %1699 = vmatprep.subr.bf16.mxu0 %v1349
    %1700 = vmatpush2.bf16.msra.mxu0 %v1348
    %1701 = vmatprep.subr.bf16.mxu0 %v1341
    %1702 = vmatpush2.bf16.msra.mxu0 %v1340
    %1703 = vmatprep.subr.bf16.mxu0 %v1333
    %1704 = vmatpush2.bf16.msra.mxu0 %v1332
    %1705 = vmatprep.subr.bf16.mxu0 %v1325
    %1706 = vmatpush2.bf16.msra.mxu0 %v1324
    %1707 = vmatprep.subr.bf16.mxu0 %v1317
    %1708 = vmatpush2.bf16.msra.mxu0 %v1316
    %1709 = vmatprep.mubr.bf16.mxu0 %v351
    %1710 = vmatmul.mubr.bf16.gmra.mxu0 %v350
    %v1711 = vpop.f32.mrf.mxu0
    %v1712 = vadd.f32 %v1671, %v1711
    %v1713 = vpop.f32.mrf.mxu0
    %v1714 = vadd.f32 %v1673, %v1713
    %v1715 = vpop.f32.mrf.mxu0
    %v1716 = vpop.f32.mrf.mxu0
    %1717 = vdwg.mxu0
    %1718 = vmatprep.subr.bf16.mxu0 %v1183
    %1719 = vmatpush1.bf16.msra.mxu0 %v1182
    %1720 = vmatprep.subr.bf16.mxu0 %v1175
    %1721 = vmatpush1.bf16.msra.mxu0 %v1174
    %1722 = vmatprep.subr.bf16.mxu0 %v1167
    %1723 = vmatpush1.bf16.msra.mxu0 %v1166
    %1724 = vmatprep.subr.bf16.mxu0 %v1159
    %1725 = vmatpush1.bf16.msra.mxu0 %v1158
    %1726 = vmatprep.subr.bf16.mxu0 %v1151
    %1727 = vmatpush1.bf16.msra.mxu0 %v1150
    %1728 = vmatprep.subr.bf16.mxu0 %v1143
    %1729 = vmatpush1.bf16.msra.mxu0 %v1142
    %1730 = vmatprep.subr.bf16.mxu0 %v1135
    %1731 = vmatpush1.bf16.msra.mxu0 %v1134
    %1732 = vmatprep.subr.bf16.mxu0 %v1127
    %1733 = vmatpush1.bf16.msra.mxu0 %v1126
    %1734 = vmatprep.subr.bf16.mxu0 %v1247
    %1735 = vmatpush2.bf16.msra.mxu0 %v1246
    %1736 = vmatprep.subr.bf16.mxu0 %v1239
    %1737 = vmatpush2.bf16.msra.mxu0 %v1238
    %1738 = vmatprep.subr.bf16.mxu0 %v1231
    %1739 = vmatpush2.bf16.msra.mxu0 %v1230
    %1740 = vmatprep.subr.bf16.mxu0 %v1223
    %1741 = vmatpush2.bf16.msra.mxu0 %v1222
    %1742 = vmatprep.subr.bf16.mxu0 %v1215
    %1743 = vmatpush2.bf16.msra.mxu0 %v1214
    %1744 = vmatprep.subr.bf16.mxu0 %v1207
    %1745 = vmatpush2.bf16.msra.mxu0 %v1206
    %1746 = vmatprep.subr.bf16.mxu0 %v1199
    %1747 = vmatpush2.bf16.msra.mxu0 %v1198
    %1748 = vmatprep.subr.bf16.mxu0 %v1191
    %1749 = vmatpush2.bf16.msra.mxu0 %v1190
    %1750 = vmatprep.mubr.bf16.mxu0 %v349
    %1751 = vmatmul.mubr.bf16.gmra.mxu0 %v342
    %v1752 = vpop.f32.mrf.mxu0
    %v1753 = vadd.f32 %v298, %v1752
    %v1754 = vpop.f32.mrf.mxu0
    %v1755 = vadd.f32 %v302, %v1754
    %v1756 = vpop.f32.mrf.mxu0
    %v1757 = vpop.f32.mrf.mxu0
    %1758 = vdwg.mxu0
    %1759 = vmatprep.subr.bf16.mxu0 %v1311
    %1760 = vmatpush1.bf16.msra.mxu0 %v1310
    %1761 = vmatprep.subr.bf16.mxu0 %v1303
    %1762 = vmatpush1.bf16.msra.mxu0 %v1302
    %1763 = vmatprep.subr.bf16.mxu0 %v1295
    %1764 = vmatpush1.bf16.msra.mxu0 %v1294
    %1765 = vmatprep.subr.bf16.mxu0 %v1287
    %1766 = vmatpush1.bf16.msra.mxu0 %v1286
    %1767 = vmatprep.subr.bf16.mxu0 %v1279
    %1768 = vmatpush1.bf16.msra.mxu0 %v1278
    %1769 = vmatprep.subr.bf16.mxu0 %v1271
    %1770 = vmatpush1.bf16.msra.mxu0 %v1270
    %1771 = vmatprep.subr.bf16.mxu0 %v1263
    %1772 = vmatpush1.bf16.msra.mxu0 %v1262
    %1773 = vmatprep.subr.bf16.mxu0 %v1255
    %1774 = vmatpush1.bf16.msra.mxu0 %v1254
    %1775 = vmatprep.subr.bf16.mxu0 %v1375
    %1776 = vmatpush2.bf16.msra.mxu0 %v1374
    %1777 = vmatprep.subr.bf16.mxu0 %v1367
    %1778 = vmatpush2.bf16.msra.mxu0 %v1366
    %1779 = vmatprep.subr.bf16.mxu0 %v1359
    %1780 = vmatpush2.bf16.msra.mxu0 %v1358
    %1781 = vmatprep.subr.bf16.mxu0 %v1351
    %1782 = vmatpush2.bf16.msra.mxu0 %v1350
    %1783 = vmatprep.subr.bf16.mxu0 %v1343
    %1784 = vmatpush2.bf16.msra.mxu0 %v1342
    %1785 = vmatprep.subr.bf16.mxu0 %v1335
    %1786 = vmatpush2.bf16.msra.mxu0 %v1334
    %1787 = vmatprep.subr.bf16.mxu0 %v1327
    %1788 = vmatpush2.bf16.msra.mxu0 %v1326
    %1789 = vmatprep.subr.bf16.mxu0 %v1319
    %1790 = vmatpush2.bf16.msra.mxu0 %v1318
    %1791 = vmatprep.mubr.bf16.mxu0 %v351
    %1792 = vmatmul.mubr.bf16.gmra.mxu0 %v350
    %v1793 = vpop.f32.mrf.mxu0
    %v1794 = vadd.f32 %v1753, %v1793
    %v1795 = vpop.f32.mrf.mxu0
    %v1796 = vadd.f32 %v1755, %v1795
    %v1797 = vpop.f32.mrf.mxu0
    %v1798 = vpop.f32.mrf.mxu0
    %1799 = vdwg.mxu0
    %1800 = vmatprep.subr.bf16.mxu0 %v1185
    %1801 = vmatpush1.bf16.msra.mxu0 %v1184
    %1802 = vmatprep.subr.bf16.mxu0 %v1177
    %1803 = vmatpush1.bf16.msra.mxu0 %v1176
    %1804 = vmatprep.subr.bf16.mxu0 %v1169
    %1805 = vmatpush1.bf16.msra.mxu0 %v1168
    %1806 = vmatprep.subr.bf16.mxu0 %v1161
    %1807 = vmatpush1.bf16.msra.mxu0 %v1160
    %1808 = vmatprep.subr.bf16.mxu0 %v1153
    %1809 = vmatpush1.bf16.msra.mxu0 %v1152
    %1810 = vmatprep.subr.bf16.mxu0 %v1145
    %1811 = vmatpush1.bf16.msra.mxu0 %v1144
    %1812 = vmatprep.subr.bf16.mxu0 %v1137
    %1813 = vmatpush1.bf16.msra.mxu0 %v1136
    %1814 = vmatprep.subr.bf16.mxu0 %v1129
    %1815 = vmatpush1.bf16.msra.mxu0 %v1128
    %1816 = vmatprep.subr.bf16.mxu0 %v1249
    %1817 = vmatpush2.bf16.msra.mxu0 %v1248
    %1818 = vmatprep.subr.bf16.mxu0 %v1241
    %1819 = vmatpush2.bf16.msra.mxu0 %v1240
    %1820 = vmatprep.subr.bf16.mxu0 %v1233
    %1821 = vmatpush2.bf16.msra.mxu0 %v1232
    %1822 = vmatprep.subr.bf16.mxu0 %v1225
    %1823 = vmatpush2.bf16.msra.mxu0 %v1224
    %1824 = vmatprep.subr.bf16.mxu0 %v1217
    %1825 = vmatpush2.bf16.msra.mxu0 %v1216
    %1826 = vmatprep.subr.bf16.mxu0 %v1209
    %1827 = vmatpush2.bf16.msra.mxu0 %v1208
    %1828 = vmatprep.subr.bf16.mxu0 %v1201
    %1829 = vmatpush2.bf16.msra.mxu0 %v1200
    %1830 = vmatprep.subr.bf16.mxu0 %v1193
    %1831 = vmatpush2.bf16.msra.mxu0 %v1192
    %1832 = vmatprep.mubr.bf16.mxu0 %v349
    %1833 = vmatmul.mubr.bf16.gmra.mxu0 %v342
    %v1834 = vpop.f32.mrf.mxu0
    %v1835 = vadd.f32 %v306, %v1834
    %v1836 = vpop.f32.mrf.mxu0
    %v1837 = vadd.f32 %v310, %v1836
    %v1838 = vpop.f32.mrf.mxu0
    %v1839 = vpop.f32.mrf.mxu0
    %1840 = vdwg.mxu0
    %1841 = vmatprep.subr.bf16.mxu0 %v1313
    %1842 = vmatpush1.bf16.msra.mxu0 %v1312
    %1843 = vmatprep.subr.bf16.mxu0 %v1305
    %1844 = vmatpush1.bf16.msra.mxu0 %v1304
    %1845 = vmatprep.subr.bf16.mxu0 %v1297
    %1846 = vmatpush1.bf16.msra.mxu0 %v1296
    %1847 = vmatprep.subr.bf16.mxu0 %v1289
    %1848 = vmatpush1.bf16.msra.mxu0 %v1288
    %1849 = vmatprep.subr.bf16.mxu0 %v1281
    %1850 = vmatpush1.bf16.msra.mxu0 %v1280
    %1851 = vmatprep.subr.bf16.mxu0 %v1273
    %1852 = vmatpush1.bf16.msra.mxu0 %v1272
    %1853 = vmatprep.subr.bf16.mxu0 %v1265
    %1854 = vmatpush1.bf16.msra.mxu0 %v1264
    %1855 = vmatprep.subr.bf16.mxu0 %v1257
    %1856 = vmatpush1.bf16.msra.mxu0 %v1256
    %1857 = vmatprep.subr.bf16.mxu0 %v1377
    %1858 = vmatpush2.bf16.msra.mxu0 %v1376
    %1859 = vmatprep.subr.bf16.mxu0 %v1369
    %1860 = vmatpush2.bf16.msra.mxu0 %v1368
    %1861 = vmatprep.subr.bf16.mxu0 %v1361
    %1862 = vmatpush2.bf16.msra.mxu0 %v1360
    %1863 = vmatprep.subr.bf16.mxu0 %v1353
    %1864 = vmatpush2.bf16.msra.mxu0 %v1352
    %1865 = vmatprep.subr.bf16.mxu0 %v1345
    %1866 = vmatpush2.bf16.msra.mxu0 %v1344
    %1867 = vmatprep.subr.bf16.mxu0 %v1337
    %1868 = vmatpush2.bf16.msra.mxu0 %v1336
    %1869 = vmatprep.subr.bf16.mxu0 %v1329
    %1870 = vmatpush2.bf16.msra.mxu0 %v1328
    %1871 = vmatprep.subr.bf16.mxu0 %v1321
    %1872 = vmatpush2.bf16.msra.mxu0 %v1320
    %1873 = vmatprep.mubr.bf16.mxu0 %v351
    %1874 = vmatmul.mubr.bf16.gmra.mxu0 %v350
    %v1875 = vpop.f32.mrf.mxu0
    %v1876 = vadd.f32 %v1835, %v1875
    %v1877 = vpop.f32.mrf.mxu0
    %v1878 = vadd.f32 %v1837, %v1877
    %v1879 = vpop.f32.mrf.mxu0
    %v1880 = vpop.f32.mrf.mxu0
    %1881 = vdwg.mxu0
    %1882 = vmatprep.subr.bf16.mxu0 %v1187
    %1883 = vmatpush1.bf16.msra.mxu0 %v1186
    %1884 = vmatprep.subr.bf16.mxu0 %v1179
    %1885 = vmatpush1.bf16.msra.mxu0 %v1178
    %1886 = vmatprep.subr.bf16.mxu0 %v1171
    %1887 = vmatpush1.bf16.msra.mxu0 %v1170
    %1888 = vmatprep.subr.bf16.mxu0 %v1163
    %1889 = vmatpush1.bf16.msra.mxu0 %v1162
    %1890 = vmatprep.subr.bf16.mxu0 %v1155
    %1891 = vmatpush1.bf16.msra.mxu0 %v1154
    %1892 = vmatprep.subr.bf16.mxu0 %v1147
    %1893 = vmatpush1.bf16.msra.mxu0 %v1146
    %1894 = vmatprep.subr.bf16.mxu0 %v1139
    %1895 = vmatpush1.bf16.msra.mxu0 %v1138
    %1896 = vmatprep.subr.bf16.mxu0 %v1131
    %1897 = vmatpush1.bf16.msra.mxu0 %v1130
    %1898 = vmatprep.subr.bf16.mxu0 %v1251
    %1899 = vmatpush2.bf16.msra.mxu0 %v1250
    %1900 = vmatprep.subr.bf16.mxu0 %v1243
    %1901 = vmatpush2.bf16.msra.mxu0 %v1242
    %1902 = vmatprep.subr.bf16.mxu0 %v1235
    %1903 = vmatpush2.bf16.msra.mxu0 %v1234
    %1904 = vmatprep.subr.bf16.mxu0 %v1227
    %1905 = vmatpush2.bf16.msra.mxu0 %v1226
    %1906 = vmatprep.subr.bf16.mxu0 %v1219
    %1907 = vmatpush2.bf16.msra.mxu0 %v1218
    %1908 = vmatprep.subr.bf16.mxu0 %v1211
    %1909 = vmatpush2.bf16.msra.mxu0 %v1210
    %1910 = vmatprep.subr.bf16.mxu0 %v1203
    %1911 = vmatpush2.bf16.msra.mxu0 %v1202
    %1912 = vmatprep.subr.bf16.mxu0 %v1195
    %1913 = vmatpush2.bf16.msra.mxu0 %v1194
    %1914 = vmatprep.mubr.bf16.mxu0 %v349
    %1915 = vmatmul.mubr.bf16.gmra.mxu0 %v342
    %v1916 = vpop.f32.mrf.mxu0
    %v1917 = vadd.f32 %v314, %v1916
    %v1918 = vpop.f32.mrf.mxu0
    %v1919 = vadd.f32 %v318, %v1918
    %v1920 = vpop.f32.mrf.mxu0
    %v1921 = vpop.f32.mrf.mxu0
    %1922 = vdwg.mxu0
    %1923 = vmatprep.subr.bf16.mxu0 %v1315
    %1924 = vmatpush1.bf16.msra.mxu0 %v1314
    %1925 = vmatprep.subr.bf16.mxu0 %v1307
    %1926 = vmatpush1.bf16.msra.mxu0 %v1306
    %1927 = vmatprep.subr.bf16.mxu0 %v1299
    %1928 = vmatpush1.bf16.msra.mxu0 %v1298
    %1929 = vmatprep.subr.bf16.mxu0 %v1291
    %1930 = vmatpush1.bf16.msra.mxu0 %v1290
    %1931 = vmatprep.subr.bf16.mxu0 %v1283
    %1932 = vmatpush1.bf16.msra.mxu0 %v1282
    %1933 = vmatprep.subr.bf16.mxu0 %v1275
    %1934 = vmatpush1.bf16.msra.mxu0 %v1274
    %1935 = vmatprep.subr.bf16.mxu0 %v1267
    %1936 = vmatpush1.bf16.msra.mxu0 %v1266
    %1937 = vmatprep.subr.bf16.mxu0 %v1259
    %1938 = vmatpush1.bf16.msra.mxu0 %v1258
    %1939 = vmatprep.subr.bf16.mxu0 %v1379
    %1940 = vmatpush2.bf16.msra.mxu0 %v1378
    %1941 = vmatprep.subr.bf16.mxu0 %v1371
    %1942 = vmatpush2.bf16.msra.mxu0 %v1370
    %1943 = vmatprep.subr.bf16.mxu0 %v1363
    %1944 = vmatpush2.bf16.msra.mxu0 %v1362
    %1945 = vmatprep.subr.bf16.mxu0 %v1355
    %1946 = vmatpush2.bf16.msra.mxu0 %v1354
    %1947 = vmatprep.subr.bf16.mxu0 %v1347
    %1948 = vmatpush2.bf16.msra.mxu0 %v1346
    %1949 = vmatprep.subr.bf16.mxu0 %v1339
    %1950 = vmatpush2.bf16.msra.mxu0 %v1338
    %1951 = vmatprep.subr.bf16.mxu0 %v1331
    %1952 = vmatpush2.bf16.msra.mxu0 %v1330
    %1953 = vmatprep.subr.bf16.mxu0 %v1323
    %1954 = vmatpush2.bf16.msra.mxu0 %v1322
    %1955 = vmatprep.mubr.bf16.mxu0 %v351
    %1956 = vmatmul.mubr.bf16.gmra.mxu0 %v350
    %v1957 = vpop.f32.mrf.mxu0
    %v1958 = vadd.f32 %v1917, %v1957
    %v1959 = vpop.f32.mrf.mxu0
    %v1960 = vadd.f32 %v1919, %v1959
    %v1961 = vpop.f32.mrf.mxu0
    %v1962 = vpop.f32.mrf.mxu0
    %1963 = vdwg.mxu0
    %v1964 = vmax.f32 %v1712, 0.0
    %v1965 = vmax.f32 %v1714, 0.0
    %v1966 = vmax.f32 %v1794, 0.0
    %v1967 = vmax.f32 %v1796, 0.0
    %v1968 = vmax.f32 %v1876, 0.0
    %v1969 = vmax.f32 %v1878, 0.0
    %v1970 = vmax.f32 %v1958, 0.0
    %v1971 = vmax.f32 %v1960, 0.0
    %v1972 = vpack.c.bf16 %v1964, %v1964
    %v1973 = vpack.c.bf16 %v1965, %v1965
    %v1974 = vpack.c.bf16 %v1966, %v1966
    %v1975 = vpack.c.bf16 %v1967, %v1967
    %v1976 = vpack.c.bf16 %v1968, %v1968
    %v1977 = vpack.c.bf16 %v1969, %v1969
    %v1978 = vpack.c.bf16 %v1970, %v1970
    %v1979 = vpack.c.bf16 %v1971, %v1971
    %v1980 = vld [vmem:[%s3] sm:$0xff]
    %v1981 = vld [vmem:[%s3 + $0x8] sm:$0xff]
    %v1982 = vld [vmem:[%s3 + $0x10] sm:$0xff]
    %v1983 = vld [vmem:[%s3 + $0x18] sm:$0xff]
    %v1984 = vld [vmem:[%s3 + $0x20] sm:$0xff]
    %v1985 = vld [vmem:[%s3 + $0x28] sm:$0xff]
    %v1986 = vld [vmem:[%s3 + $0x30] sm:$0xff]
    %v1987 = vld [vmem:[%s3 + $0x38] sm:$0xff]
    %v1988 = vld [vmem:[%s3 + $0x40] sm:$0xff]
    %v1989 = vld [vmem:[%s3 + $0x48] sm:$0xff]
    %v1990 = vld [vmem:[%s3 + $0x50] sm:$0xff]
    %v1991 = vld [vmem:[%s3 + $0x58] sm:$0xff]
    %v1992 = vld [vmem:[%s3 + $0x60] sm:$0xff]
    %v1993 = vld [vmem:[%s3 + $0x68] sm:$0xff]
    %v1994 = vld [vmem:[%s3 + $0x70] sm:$0xff]
    %v1995 = vld [vmem:[%s3 + $0x78] sm:$0xff]
    %v1996 = vld [vmem:[%s3 + $0x80] sm:$0xff]
    %v1997 = vld [vmem:[%s3 + $0x88] sm:$0xff]
    %v1998 = vld [vmem:[%s3 + $0x90] sm:$0xff]
    %v1999 = vld [vmem:[%s3 + $0x98] sm:$0xff]
    %v2000 = vld [vmem:[%s3 + $0xa0] sm:$0xff]
    %v2001 = vld [vmem:[%s3 + $0xa8] sm:$0xff]
    %v2002 = vld [vmem:[%s3 + $0xb0] sm:$0xff]
    %v2003 = vld [vmem:[%s3 + $0xb8] sm:$0xff]
    %v2004 = vld [vmem:[%s3 + $0xc0] sm:$0xff]
    %v2005 = vld [vmem:[%s3 + $0xc8] sm:$0xff]
    %v2006 = vld [vmem:[%s3 + $0xd0] sm:$0xff]
    %v2007 = vld [vmem:[%s3 + $0xd8] sm:$0xff]
    %v2008 = vld [vmem:[%s3 + $0xe0] sm:$0xff]
    %v2009 = vld [vmem:[%s3 + $0xe8] sm:$0xff]
    %v2010 = vld [vmem:[%s3 + $0xf0] sm:$0xff]
    %v2011 = vld [vmem:[%s3 + $0xf8] sm:$0xff]
    %v2012 = vld [vmem:[%s3 + $0x100] sm:$0xff]
    %v2013 = vld [vmem:[%s3 + $0x108] sm:$0xff]
    %v2014 = vld [vmem:[%s3 + $0x110] sm:$0xff]
    %v2015 = vld [vmem:[%s3 + $0x118] sm:$0xff]
    %v2016 = vld [vmem:[%s3 + $0x120] sm:$0xff]
    %v2017 = vld [vmem:[%s3 + $0x128] sm:$0xff]
    %v2018 = vld [vmem:[%s3 + $0x130] sm:$0xff]
    %v2019 = vld [vmem:[%s3 + $0x138] sm:$0xff]
    %v2020 = vld [vmem:[%s3 + $0x140] sm:$0xff]
    %v2021 = vld [vmem:[%s3 + $0x148] sm:$0xff]
    %v2022 = vld [vmem:[%s3 + $0x150] sm:$0xff]
    %v2023 = vld [vmem:[%s3 + $0x158] sm:$0xff]
    %v2024 = vld [vmem:[%s3 + $0x160] sm:$0xff]
    %v2025 = vld [vmem:[%s3 + $0x168] sm:$0xff]
    %v2026 = vld [vmem:[%s3 + $0x170] sm:$0xff]
    %v2027 = vld [vmem:[%s3 + $0x178] sm:$0xff]
    %v2028 = vld [vmem:[%s3 + $0x180] sm:$0xff]
    %v2029 = vld [vmem:[%s3 + $0x188] sm:$0xff]
    %v2030 = vld [vmem:[%s3 + $0x190] sm:$0xff]
    %v2031 = vld [vmem:[%s3 + $0x198] sm:$0xff]
    %v2032 = vld [vmem:[%s3 + $0x1a0] sm:$0xff]
    %v2033 = vld [vmem:[%s3 + $0x1a8] sm:$0xff]
    %v2034 = vld [vmem:[%s3 + $0x1b0] sm:$0xff]
    %v2035 = vld [vmem:[%s3 + $0x1b8] sm:$0xff]
    %v2036 = vld [vmem:[%s3 + $0x1c0] sm:$0xff]
    %v2037 = vld [vmem:[%s3 + $0x1c8] sm:$0xff]
    %v2038 = vld [vmem:[%s3 + $0x1d0] sm:$0xff]
    %v2039 = vld [vmem:[%s3 + $0x1d8] sm:$0xff]
    %v2040 = vld [vmem:[%s3 + $0x1e0] sm:$0xff]
    %v2041 = vld [vmem:[%s3 + $0x1e8] sm:$0xff]
    %v2042 = vld [vmem:[%s3 + $0x1f0] sm:$0xff]
    %v2043 = vld [vmem:[%s3 + $0x1f8] sm:$0xff]
    %v2044 = vld [vmem:[%s3 + $0x200] sm:$0xff]
    %v2045 = vld [vmem:[%s3 + $0x208] sm:$0xff]
    %v2046 = vld [vmem:[%s3 + $0x210] sm:$0xff]
    %v2047 = vld [vmem:[%s3 + $0x218] sm:$0xff]
    %v2048 = vld [vmem:[%s3 + $0x220] sm:$0xff]
    %v2049 = vld [vmem:[%s3 + $0x228] sm:$0xff]
    %v2050 = vld [vmem:[%s3 + $0x230] sm:$0xff]
    %v2051 = vld [vmem:[%s3 + $0x238] sm:$0xff]
    %v2052 = vld [vmem:[%s3 + $0x240] sm:$0xff]
    %v2053 = vld [vmem:[%s3 + $0x248] sm:$0xff]
    %v2054 = vld [vmem:[%s3 + $0x250] sm:$0xff]
    %v2055 = vld [vmem:[%s3 + $0x258] sm:$0xff]
    %v2056 = vld [vmem:[%s3 + $0x260] sm:$0xff]
    %v2057 = vld [vmem:[%s3 + $0x268] sm:$0xff]
    %v2058 = vld [vmem:[%s3 + $0x270] sm:$0xff]
    %v2059 = vld [vmem:[%s3 + $0x278] sm:$0xff]
    %v2060 = vld [vmem:[%s3 + $0x280] sm:$0xff]
    %v2061 = vld [vmem:[%s3 + $0x288] sm:$0xff]
    %v2062 = vld [vmem:[%s3 + $0x290] sm:$0xff]
    %v2063 = vld [vmem:[%s3 + $0x298] sm:$0xff]
    %v2064 = vld [vmem:[%s3 + $0x2a0] sm:$0xff]
    %v2065 = vld [vmem:[%s3 + $0x2a8] sm:$0xff]
    %v2066 = vld [vmem:[%s3 + $0x2b0] sm:$0xff]
    %v2067 = vld [vmem:[%s3 + $0x2b8] sm:$0xff]
    %v2068 = vld [vmem:[%s3 + $0x2c0] sm:$0xff]
    %v2069 = vld [vmem:[%s3 + $0x2c8] sm:$0xff]
    %v2070 = vld [vmem:[%s3 + $0x2d0] sm:$0xff]
    %v2071 = vld [vmem:[%s3 + $0x2d8] sm:$0xff]
    %v2072 = vld [vmem:[%s3 + $0x2e0] sm:$0xff]
    %v2073 = vld [vmem:[%s3 + $0x2e8] sm:$0xff]
    %v2074 = vld [vmem:[%s3 + $0x2f0] sm:$0xff]
    %v2075 = vld [vmem:[%s3 + $0x2f8] sm:$0xff]
    %v2076 = vld [vmem:[%s3 + $0x300] sm:$0xff]
    %v2077 = vld [vmem:[%s3 + $0x308] sm:$0xff]
    %v2078 = vld [vmem:[%s3 + $0x310] sm:$0xff]
    %v2079 = vld [vmem:[%s3 + $0x318] sm:$0xff]
    %v2080 = vld [vmem:[%s3 + $0x320] sm:$0xff]
    %v2081 = vld [vmem:[%s3 + $0x328] sm:$0xff]
    %v2082 = vld [vmem:[%s3 + $0x330] sm:$0xff]
    %v2083 = vld [vmem:[%s3 + $0x338] sm:$0xff]
    %v2084 = vld [vmem:[%s3 + $0x340] sm:$0xff]
    %v2085 = vld [vmem:[%s3 + $0x348] sm:$0xff]
    %v2086 = vld [vmem:[%s3 + $0x350] sm:$0xff]
    %v2087 = vld [vmem:[%s3 + $0x358] sm:$0xff]
    %v2088 = vld [vmem:[%s3 + $0x360] sm:$0xff]
    %v2089 = vld [vmem:[%s3 + $0x368] sm:$0xff]
    %v2090 = vld [vmem:[%s3 + $0x370] sm:$0xff]
    %v2091 = vld [vmem:[%s3 + $0x378] sm:$0xff]
    %v2092 = vld [vmem:[%s3 + $0x380] sm:$0xff]
    %v2093 = vld [vmem:[%s3 + $0x388] sm:$0xff]
    %v2094 = vld [vmem:[%s3 + $0x390] sm:$0xff]
    %v2095 = vld [vmem:[%s3 + $0x398] sm:$0xff]
    %v2096 = vld [vmem:[%s3 + $0x3a0] sm:$0xff]
    %v2097 = vld [vmem:[%s3 + $0x3a8] sm:$0xff]
    %v2098 = vld [vmem:[%s3 + $0x3b0] sm:$0xff]
    %v2099 = vld [vmem:[%s3 + $0x3b8] sm:$0xff]
    %v2100 = vld [vmem:[%s3 + $0x3c0] sm:$0xff]
    %v2101 = vld [vmem:[%s3 + $0x3c8] sm:$0xff]
    %v2102 = vld [vmem:[%s3 + $0x3d0] sm:$0xff]
    %v2103 = vld [vmem:[%s3 + $0x3d8] sm:$0xff]
    %v2104 = vld [vmem:[%s3 + $0x3e0] sm:$0xff]
    %v2105 = vld [vmem:[%s3 + $0x3e8] sm:$0xff]
    %v2106 = vld [vmem:[%s3 + $0x3f0] sm:$0xff]
    %v2107 = vld [vmem:[%s3 + $0x3f8] sm:$0xff]
    %v2108 = vld [vmem:[%s3 + $0x400] sm:$0xff]
    %v2109 = vld [vmem:[%s3 + $0x408] sm:$0xff]
    %v2110 = vld [vmem:[%s3 + $0x410] sm:$0xff]
    %v2111 = vld [vmem:[%s3 + $0x418] sm:$0xff]
    %v2112 = vld [vmem:[%s3 + $0x420] sm:$0xff]
    %v2113 = vld [vmem:[%s3 + $0x428] sm:$0xff]
    %v2114 = vld [vmem:[%s3 + $0x430] sm:$0xff]
    %v2115 = vld [vmem:[%s3 + $0x438] sm:$0xff]
    %v2116 = vld [vmem:[%s3 + $0x440] sm:$0xff]
    %v2117 = vld [vmem:[%s3 + $0x448] sm:$0xff]
    %v2118 = vld [vmem:[%s3 + $0x450] sm:$0xff]
    %v2119 = vld [vmem:[%s3 + $0x458] sm:$0xff]
    %v2120 = vld [vmem:[%s3 + $0x460] sm:$0xff]
    %v2121 = vld [vmem:[%s3 + $0x468] sm:$0xff]
    %v2122 = vld [vmem:[%s3 + $0x470] sm:$0xff]
    %v2123 = vld [vmem:[%s3 + $0x478] sm:$0xff]
    %v2124 = vld [vmem:[%s3 + $0x480] sm:$0xff]
    %v2125 = vld [vmem:[%s3 + $0x488] sm:$0xff]
    %v2126 = vld [vmem:[%s3 + $0x490] sm:$0xff]
    %v2127 = vld [vmem:[%s3 + $0x498] sm:$0xff]
    %v2128 = vld [vmem:[%s3 + $0x4a0] sm:$0xff]
    %v2129 = vld [vmem:[%s3 + $0x4a8] sm:$0xff]
    %v2130 = vld [vmem:[%s3 + $0x4b0] sm:$0xff]
    %v2131 = vld [vmem:[%s3 + $0x4b8] sm:$0xff]
    %v2132 = vld [vmem:[%s3 + $0x4c0] sm:$0xff]
    %v2133 = vld [vmem:[%s3 + $0x4c8] sm:$0xff]
    %v2134 = vld [vmem:[%s3 + $0x4d0] sm:$0xff]
    %v2135 = vld [vmem:[%s3 + $0x4d8] sm:$0xff]
    %v2136 = vld [vmem:[%s3 + $0x4e0] sm:$0xff]
    %v2137 = vld [vmem:[%s3 + $0x4e8] sm:$0xff]
    %v2138 = vld [vmem:[%s3 + $0x4f0] sm:$0xff]
    %v2139 = vld [vmem:[%s3 + $0x4f8] sm:$0xff]
    %v2140 = vld [vmem:[%s3 + $0x500] sm:$0xff]
    %v2141 = vld [vmem:[%s3 + $0x508] sm:$0xff]
    %v2142 = vld [vmem:[%s3 + $0x510] sm:$0xff]
    %v2143 = vld [vmem:[%s3 + $0x518] sm:$0xff]
    %v2144 = vld [vmem:[%s3 + $0x520] sm:$0xff]
    %v2145 = vld [vmem:[%s3 + $0x528] sm:$0xff]
    %v2146 = vld [vmem:[%s3 + $0x530] sm:$0xff]
    %v2147 = vld [vmem:[%s3 + $0x538] sm:$0xff]
    %v2148 = vld [vmem:[%s3 + $0x540] sm:$0xff]
    %v2149 = vld [vmem:[%s3 + $0x548] sm:$0xff]
    %v2150 = vld [vmem:[%s3 + $0x550] sm:$0xff]
    %v2151 = vld [vmem:[%s3 + $0x558] sm:$0xff]
    %v2152 = vld [vmem:[%s3 + $0x560] sm:$0xff]
    %v2153 = vld [vmem:[%s3 + $0x568] sm:$0xff]
    %v2154 = vld [vmem:[%s3 + $0x570] sm:$0xff]
    %v2155 = vld [vmem:[%s3 + $0x578] sm:$0xff]
    %v2156 = vld [vmem:[%s3 + $0x580] sm:$0xff]
    %v2157 = vld [vmem:[%s3 + $0x588] sm:$0xff]
    %v2158 = vld [vmem:[%s3 + $0x590] sm:$0xff]
    %v2159 = vld [vmem:[%s3 + $0x598] sm:$0xff]
    %v2160 = vld [vmem:[%s3 + $0x5a0] sm:$0xff]
    %v2161 = vld [vmem:[%s3 + $0x5a8] sm:$0xff]
    %v2162 = vld [vmem:[%s3 + $0x5b0] sm:$0xff]
    %v2163 = vld [vmem:[%s3 + $0x5b8] sm:$0xff]
    %v2164 = vld [vmem:[%s3 + $0x5c0] sm:$0xff]
    %v2165 = vld [vmem:[%s3 + $0x5c8] sm:$0xff]
    %v2166 = vld [vmem:[%s3 + $0x5d0] sm:$0xff]
    %v2167 = vld [vmem:[%s3 + $0x5d8] sm:$0xff]
    %v2168 = vld [vmem:[%s3 + $0x5e0] sm:$0xff]
    %v2169 = vld [vmem:[%s3 + $0x5e8] sm:$0xff]
    %v2170 = vld [vmem:[%s3 + $0x5f0] sm:$0xff]
    %v2171 = vld [vmem:[%s3 + $0x5f8] sm:$0xff]
    %v2172 = vld [vmem:[%s3 + $0x600] sm:$0xff]
    %v2173 = vld [vmem:[%s3 + $0x608] sm:$0xff]
    %v2174 = vld [vmem:[%s3 + $0x610] sm:$0xff]
    %v2175 = vld [vmem:[%s3 + $0x618] sm:$0xff]
    %v2176 = vld [vmem:[%s3 + $0x620] sm:$0xff]
    %v2177 = vld [vmem:[%s3 + $0x628] sm:$0xff]
    %v2178 = vld [vmem:[%s3 + $0x630] sm:$0xff]
    %v2179 = vld [vmem:[%s3 + $0x638] sm:$0xff]
    %v2180 = vld [vmem:[%s3 + $0x640] sm:$0xff]
    %v2181 = vld [vmem:[%s3 + $0x648] sm:$0xff]
    %v2182 = vld [vmem:[%s3 + $0x650] sm:$0xff]
    %v2183 = vld [vmem:[%s3 + $0x658] sm:$0xff]
    %v2184 = vld [vmem:[%s3 + $0x660] sm:$0xff]
    %v2185 = vld [vmem:[%s3 + $0x668] sm:$0xff]
    %v2186 = vld [vmem:[%s3 + $0x670] sm:$0xff]
    %v2187 = vld [vmem:[%s3 + $0x678] sm:$0xff]
    %v2188 = vld [vmem:[%s3 + $0x680] sm:$0xff]
    %v2189 = vld [vmem:[%s3 + $0x688] sm:$0xff]
    %v2190 = vld [vmem:[%s3 + $0x690] sm:$0xff]
    %v2191 = vld [vmem:[%s3 + $0x698] sm:$0xff]
    %v2192 = vld [vmem:[%s3 + $0x6a0] sm:$0xff]
    %v2193 = vld [vmem:[%s3 + $0x6a8] sm:$0xff]
    %v2194 = vld [vmem:[%s3 + $0x6b0] sm:$0xff]
    %v2195 = vld [vmem:[%s3 + $0x6b8] sm:$0xff]
    %v2196 = vld [vmem:[%s3 + $0x6c0] sm:$0xff]
    %v2197 = vld [vmem:[%s3 + $0x6c8] sm:$0xff]
    %v2198 = vld [vmem:[%s3 + $0x6d0] sm:$0xff]
    %v2199 = vld [vmem:[%s3 + $0x6d8] sm:$0xff]
    %v2200 = vld [vmem:[%s3 + $0x6e0] sm:$0xff]
    %v2201 = vld [vmem:[%s3 + $0x6e8] sm:$0xff]
    %v2202 = vld [vmem:[%s3 + $0x6f0] sm:$0xff]
    %v2203 = vld [vmem:[%s3 + $0x6f8] sm:$0xff]
    %v2204 = vld [vmem:[%s3 + $0x700] sm:$0xff]
    %v2205 = vld [vmem:[%s3 + $0x708] sm:$0xff]
    %v2206 = vld [vmem:[%s3 + $0x710] sm:$0xff]
    %v2207 = vld [vmem:[%s3 + $0x718] sm:$0xff]
    %v2208 = vld [vmem:[%s3 + $0x720] sm:$0xff]
    %v2209 = vld [vmem:[%s3 + $0x728] sm:$0xff]
    %v2210 = vld [vmem:[%s3 + $0x730] sm:$0xff]
    %v2211 = vld [vmem:[%s3 + $0x738] sm:$0xff]
    %v2212 = vld [vmem:[%s3 + $0x740] sm:$0xff]
    %v2213 = vld [vmem:[%s3 + $0x748] sm:$0xff]
    %v2214 = vld [vmem:[%s3 + $0x750] sm:$0xff]
    %v2215 = vld [vmem:[%s3 + $0x758] sm:$0xff]
    %v2216 = vld [vmem:[%s3 + $0x760] sm:$0xff]
    %v2217 = vld [vmem:[%s3 + $0x768] sm:$0xff]
    %v2218 = vld [vmem:[%s3 + $0x770] sm:$0xff]
    %v2219 = vld [vmem:[%s3 + $0x778] sm:$0xff]
    %v2220 = vld [vmem:[%s3 + $0x780] sm:$0xff]
    %v2221 = vld [vmem:[%s3 + $0x788] sm:$0xff]
    %v2222 = vld [vmem:[%s3 + $0x790] sm:$0xff]
    %v2223 = vld [vmem:[%s3 + $0x798] sm:$0xff]
    %v2224 = vld [vmem:[%s3 + $0x7a0] sm:$0xff]
    %v2225 = vld [vmem:[%s3 + $0x7a8] sm:$0xff]
    %v2226 = vld [vmem:[%s3 + $0x7b0] sm:$0xff]
    %v2227 = vld [vmem:[%s3 + $0x7b8] sm:$0xff]
    %v2228 = vld [vmem:[%s3 + $0x7c0] sm:$0xff]
    %v2229 = vld [vmem:[%s3 + $0x7c8] sm:$0xff]
    %v2230 = vld [vmem:[%s3 + $0x7d0] sm:$0xff]
    %v2231 = vld [vmem:[%s3 + $0x7d8] sm:$0xff]
    %v2232 = vld [vmem:[%s3 + $0x7e0] sm:$0xff]
    %v2233 = vld [vmem:[%s3 + $0x7e8] sm:$0xff]
    %v2234 = vld [vmem:[%s3 + $0x7f0] sm:$0xff]
    %v2235 = vld [vmem:[%s3 + $0x7f8] sm:$0xff]
    %v2236 = vld [vmem:[%s4] sm:$0xf]
    %v2238 = vlaneseq
    %v2239 = vshrl.u32 %v2238, 7
    %v2240 = vsub.s32 0, %v2239
    %v2241 = vrot.slane %v2236, %v2240
    %v2242 = vlaneseq
    %v2243 = vshrl.u32 %v2242, 7
    %v2244 = vsub.s32 1, %v2243
    %v2245 = vrot.slane %v2236, %v2244
    %v2246 = vlaneseq
    %v2247 = vshrl.u32 %v2246, 7
    %v2248 = vsub.s32 2, %v2247
    %v2249 = vrot.slane %v2236, %v2248
    %v2250 = vlaneseq
    %v2251 = vshrl.u32 %v2250, 7
    %v2252 = vsub.s32 3, %v2251
    %v2253 = vrot.slane %v2236, %v2252
    %v2514 = vunpack.c.l.b16 %v1980
    %v2515 = vunpack.c.h.b16 %v1980
    %v2516 = vunpack.c.l.b16 %v1981
    %v2517 = vunpack.c.h.b16 %v1981
    %v2518 = vunpack.c.l.b16 %v1982
    %v2519 = vunpack.c.h.b16 %v1982
    %v2520 = vunpack.c.l.b16 %v1983
    %v2521 = vunpack.c.h.b16 %v1983
    %v2522 = vunpack.c.l.b16 %v1984
    %v2523 = vunpack.c.h.b16 %v1984
    %v2524 = vunpack.c.l.b16 %v1985
    %v2525 = vunpack.c.h.b16 %v1985
    %v2526 = vunpack.c.l.b16 %v1986
    %v2527 = vunpack.c.h.b16 %v1986
    %v2528 = vunpack.c.l.b16 %v1987
    %v2529 = vunpack.c.h.b16 %v1987
    %v2530 = vunpack.c.l.b16 %v1988
    %v2531 = vunpack.c.h.b16 %v1988
    %v2532 = vunpack.c.l.b16 %v1989
    %v2533 = vunpack.c.h.b16 %v1989
    %v2534 = vunpack.c.l.b16 %v1990
    %v2535 = vunpack.c.h.b16 %v1990
    %v2536 = vunpack.c.l.b16 %v1991
    %v2537 = vunpack.c.h.b16 %v1991
    %v2538 = vunpack.c.l.b16 %v1992
    %v2539 = vunpack.c.h.b16 %v1992
    %v2540 = vunpack.c.l.b16 %v1993
    %v2541 = vunpack.c.h.b16 %v1993
    %v2542 = vunpack.c.l.b16 %v1994
    %v2543 = vunpack.c.h.b16 %v1994
    %v2544 = vunpack.c.l.b16 %v1995
    %v2545 = vunpack.c.h.b16 %v1995
    %v2546 = vunpack.c.l.b16 %v1996
    %v2547 = vunpack.c.h.b16 %v1996
    %v2548 = vunpack.c.l.b16 %v1997
    %v2549 = vunpack.c.h.b16 %v1997
    %v2550 = vunpack.c.l.b16 %v1998
    %v2551 = vunpack.c.h.b16 %v1998
    %v2552 = vunpack.c.l.b16 %v1999
    %v2553 = vunpack.c.h.b16 %v1999
    %v2554 = vunpack.c.l.b16 %v2000
    %v2555 = vunpack.c.h.b16 %v2000
    %v2556 = vunpack.c.l.b16 %v2001
    %v2557 = vunpack.c.h.b16 %v2001
    %v2558 = vunpack.c.l.b16 %v2002
    %v2559 = vunpack.c.h.b16 %v2002
    %v2560 = vunpack.c.l.b16 %v2003
    %v2561 = vunpack.c.h.b16 %v2003
    %v2562 = vunpack.c.l.b16 %v2004
    %v2563 = vunpack.c.h.b16 %v2004
    %v2564 = vunpack.c.l.b16 %v2005
    %v2565 = vunpack.c.h.b16 %v2005
    %v2566 = vunpack.c.l.b16 %v2006
    %v2567 = vunpack.c.h.b16 %v2006
    %v2568 = vunpack.c.l.b16 %v2007
    %v2569 = vunpack.c.h.b16 %v2007
    %v2570 = vunpack.c.l.b16 %v2008
    %v2571 = vunpack.c.h.b16 %v2008
    %v2572 = vunpack.c.l.b16 %v2009
    %v2573 = vunpack.c.h.b16 %v2009
    %v2574 = vunpack.c.l.b16 %v2010
    %v2575 = vunpack.c.h.b16 %v2010
    %v2576 = vunpack.c.l.b16 %v2011
    %v2577 = vunpack.c.h.b16 %v2011
    %v2578 = vunpack.c.l.b16 %v2012
    %v2579 = vunpack.c.h.b16 %v2012
    %v2580 = vunpack.c.l.b16 %v2013
    %v2581 = vunpack.c.h.b16 %v2013
    %v2582 = vunpack.c.l.b16 %v2014
    %v2583 = vunpack.c.h.b16 %v2014
    %v2584 = vunpack.c.l.b16 %v2015
    %v2585 = vunpack.c.h.b16 %v2015
    %v2586 = vunpack.c.l.b16 %v2016
    %v2587 = vunpack.c.h.b16 %v2016
    %v2588 = vunpack.c.l.b16 %v2017
    %v2589 = vunpack.c.h.b16 %v2017
    %v2590 = vunpack.c.l.b16 %v2018
    %v2591 = vunpack.c.h.b16 %v2018
    %v2592 = vunpack.c.l.b16 %v2019
    %v2593 = vunpack.c.h.b16 %v2019
    %v2594 = vunpack.c.l.b16 %v2020
    %v2595 = vunpack.c.h.b16 %v2020
    %v2596 = vunpack.c.l.b16 %v2021
    %v2597 = vunpack.c.h.b16 %v2021
    %v2598 = vunpack.c.l.b16 %v2022
    %v2599 = vunpack.c.h.b16 %v2022
    %v2600 = vunpack.c.l.b16 %v2023
    %v2601 = vunpack.c.h.b16 %v2023
    %v2602 = vunpack.c.l.b16 %v2024
    %v2603 = vunpack.c.h.b16 %v2024
    %v2604 = vunpack.c.l.b16 %v2025
    %v2605 = vunpack.c.h.b16 %v2025
    %v2606 = vunpack.c.l.b16 %v2026
    %v2607 = vunpack.c.h.b16 %v2026
    %v2608 = vunpack.c.l.b16 %v2027
    %v2609 = vunpack.c.h.b16 %v2027
    %v2610 = vunpack.c.l.b16 %v2028
    %v2611 = vunpack.c.h.b16 %v2028
    %v2612 = vunpack.c.l.b16 %v2029
    %v2613 = vunpack.c.h.b16 %v2029
    %v2614 = vunpack.c.l.b16 %v2030
    %v2615 = vunpack.c.h.b16 %v2030
    %v2616 = vunpack.c.l.b16 %v2031
    %v2617 = vunpack.c.h.b16 %v2031
    %v2618 = vunpack.c.l.b16 %v2032
    %v2619 = vunpack.c.h.b16 %v2032
    %v2620 = vunpack.c.l.b16 %v2033
    %v2621 = vunpack.c.h.b16 %v2033
    %v2622 = vunpack.c.l.b16 %v2034
    %v2623 = vunpack.c.h.b16 %v2034
    %v2624 = vunpack.c.l.b16 %v2035
    %v2625 = vunpack.c.h.b16 %v2035
    %v2626 = vunpack.c.l.b16 %v2036
    %v2627 = vunpack.c.h.b16 %v2036
    %v2628 = vunpack.c.l.b16 %v2037
    %v2629 = vunpack.c.h.b16 %v2037
    %v2630 = vunpack.c.l.b16 %v2038
    %v2631 = vunpack.c.h.b16 %v2038
    %v2632 = vunpack.c.l.b16 %v2039
    %v2633 = vunpack.c.h.b16 %v2039
    %v2634 = vunpack.c.l.b16 %v2040
    %v2635 = vunpack.c.h.b16 %v2040
    %v2636 = vunpack.c.l.b16 %v2041
    %v2637 = vunpack.c.h.b16 %v2041
    %v2638 = vunpack.c.l.b16 %v2042
    %v2639 = vunpack.c.h.b16 %v2042
    %v2640 = vunpack.c.l.b16 %v2043
    %v2641 = vunpack.c.h.b16 %v2043
    %v2642 = vunpack.c.l.b16 %v2044
    %v2643 = vunpack.c.h.b16 %v2044
    %v2644 = vunpack.c.l.b16 %v2045
    %v2645 = vunpack.c.h.b16 %v2045
    %v2646 = vunpack.c.l.b16 %v2046
    %v2647 = vunpack.c.h.b16 %v2046
    %v2648 = vunpack.c.l.b16 %v2047
    %v2649 = vunpack.c.h.b16 %v2047
    %v2650 = vunpack.c.l.b16 %v2048
    %v2651 = vunpack.c.h.b16 %v2048
    %v2652 = vunpack.c.l.b16 %v2049
    %v2653 = vunpack.c.h.b16 %v2049
    %v2654 = vunpack.c.l.b16 %v2050
    %v2655 = vunpack.c.h.b16 %v2050
    %v2656 = vunpack.c.l.b16 %v2051
    %v2657 = vunpack.c.h.b16 %v2051
    %v2658 = vunpack.c.l.b16 %v2052
    %v2659 = vunpack.c.h.b16 %v2052
    %v2660 = vunpack.c.l.b16 %v2053
    %v2661 = vunpack.c.h.b16 %v2053
    %v2662 = vunpack.c.l.b16 %v2054
    %v2663 = vunpack.c.h.b16 %v2054
    %v2664 = vunpack.c.l.b16 %v2055
    %v2665 = vunpack.c.h.b16 %v2055
    %v2666 = vunpack.c.l.b16 %v2056
    %v2667 = vunpack.c.h.b16 %v2056
    %v2668 = vunpack.c.l.b16 %v2057
    %v2669 = vunpack.c.h.b16 %v2057
    %v2670 = vunpack.c.l.b16 %v2058
    %v2671 = vunpack.c.h.b16 %v2058
    %v2672 = vunpack.c.l.b16 %v2059
    %v2673 = vunpack.c.h.b16 %v2059
    %v2674 = vunpack.c.l.b16 %v2060
    %v2675 = vunpack.c.h.b16 %v2060
    %v2676 = vunpack.c.l.b16 %v2061
    %v2677 = vunpack.c.h.b16 %v2061
    %v2678 = vunpack.c.l.b16 %v2062
    %v2679 = vunpack.c.h.b16 %v2062
    %v2680 = vunpack.c.l.b16 %v2063
    %v2681 = vunpack.c.h.b16 %v2063
    %v2682 = vunpack.c.l.b16 %v2064
    %v2683 = vunpack.c.h.b16 %v2064
    %v2684 = vunpack.c.l.b16 %v2065
    %v2685 = vunpack.c.h.b16 %v2065
    %v2686 = vunpack.c.l.b16 %v2066
    %v2687 = vunpack.c.h.b16 %v2066
    %v2688 = vunpack.c.l.b16 %v2067
    %v2689 = vunpack.c.h.b16 %v2067
    %v2690 = vunpack.c.l.b16 %v2068
    %v2691 = vunpack.c.h.b16 %v2068
    %v2692 = vunpack.c.l.b16 %v2069
    %v2693 = vunpack.c.h.b16 %v2069
    %v2694 = vunpack.c.l.b16 %v2070
    %v2695 = vunpack.c.h.b16 %v2070
    %v2696 = vunpack.c.l.b16 %v2071
    %v2697 = vunpack.c.h.b16 %v2071
    %v2698 = vunpack.c.l.b16 %v2072
    %v2699 = vunpack.c.h.b16 %v2072
    %v2700 = vunpack.c.l.b16 %v2073
    %v2701 = vunpack.c.h.b16 %v2073
    %v2702 = vunpack.c.l.b16 %v2074
    %v2703 = vunpack.c.h.b16 %v2074
    %v2704 = vunpack.c.l.b16 %v2075
    %v2705 = vunpack.c.h.b16 %v2075
    %v2706 = vunpack.c.l.b16 %v2076
    %v2707 = vunpack.c.h.b16 %v2076
    %v2708 = vunpack.c.l.b16 %v2077
    %v2709 = vunpack.c.h.b16 %v2077
    %v2710 = vunpack.c.l.b16 %v2078
    %v2711 = vunpack.c.h.b16 %v2078
    %v2712 = vunpack.c.l.b16 %v2079
    %v2713 = vunpack.c.h.b16 %v2079
    %v2714 = vunpack.c.l.b16 %v2080
    %v2715 = vunpack.c.h.b16 %v2080
    %v2716 = vunpack.c.l.b16 %v2081
    %v2717 = vunpack.c.h.b16 %v2081
    %v2718 = vunpack.c.l.b16 %v2082
    %v2719 = vunpack.c.h.b16 %v2082
    %v2720 = vunpack.c.l.b16 %v2083
    %v2721 = vunpack.c.h.b16 %v2083
    %v2722 = vunpack.c.l.b16 %v2084
    %v2723 = vunpack.c.h.b16 %v2084
    %v2724 = vunpack.c.l.b16 %v2085
    %v2725 = vunpack.c.h.b16 %v2085
    %v2726 = vunpack.c.l.b16 %v2086
    %v2727 = vunpack.c.h.b16 %v2086
    %v2728 = vunpack.c.l.b16 %v2087
    %v2729 = vunpack.c.h.b16 %v2087
    %v2730 = vunpack.c.l.b16 %v2088
    %v2731 = vunpack.c.h.b16 %v2088
    %v2732 = vunpack.c.l.b16 %v2089
    %v2733 = vunpack.c.h.b16 %v2089
    %v2734 = vunpack.c.l.b16 %v2090
    %v2735 = vunpack.c.h.b16 %v2090
    %v2736 = vunpack.c.l.b16 %v2091
    %v2737 = vunpack.c.h.b16 %v2091
    %v2738 = vunpack.c.l.b16 %v2092
    %v2739 = vunpack.c.h.b16 %v2092
    %v2740 = vunpack.c.l.b16 %v2093
    %v2741 = vunpack.c.h.b16 %v2093
    %v2742 = vunpack.c.l.b16 %v2094
    %v2743 = vunpack.c.h.b16 %v2094
    %v2744 = vunpack.c.l.b16 %v2095
    %v2745 = vunpack.c.h.b16 %v2095
    %v2746 = vunpack.c.l.b16 %v2096
    %v2747 = vunpack.c.h.b16 %v2096
    %v2748 = vunpack.c.l.b16 %v2097
    %v2749 = vunpack.c.h.b16 %v2097
    %v2750 = vunpack.c.l.b16 %v2098
    %v2751 = vunpack.c.h.b16 %v2098
    %v2752 = vunpack.c.l.b16 %v2099
    %v2753 = vunpack.c.h.b16 %v2099
    %v2754 = vunpack.c.l.b16 %v2100
    %v2755 = vunpack.c.h.b16 %v2100
    %v2756 = vunpack.c.l.b16 %v2101
    %v2757 = vunpack.c.h.b16 %v2101
    %v2758 = vunpack.c.l.b16 %v2102
    %v2759 = vunpack.c.h.b16 %v2102
    %v2760 = vunpack.c.l.b16 %v2103
    %v2761 = vunpack.c.h.b16 %v2103
    %v2762 = vunpack.c.l.b16 %v2104
    %v2763 = vunpack.c.h.b16 %v2104
    %v2764 = vunpack.c.l.b16 %v2105
    %v2765 = vunpack.c.h.b16 %v2105
    %v2766 = vunpack.c.l.b16 %v2106
    %v2767 = vunpack.c.h.b16 %v2106
    %v2768 = vunpack.c.l.b16 %v2107
    %v2769 = vunpack.c.h.b16 %v2107
    %v2770 = vunpack.c.l.b16 %v2108
    %v2771 = vunpack.c.h.b16 %v2108
    %v2772 = vunpack.c.l.b16 %v2109
    %v2773 = vunpack.c.h.b16 %v2109
    %v2774 = vunpack.c.l.b16 %v2110
    %v2775 = vunpack.c.h.b16 %v2110
    %v2776 = vunpack.c.l.b16 %v2111
    %v2777 = vunpack.c.h.b16 %v2111
    %v2778 = vunpack.c.l.b16 %v2112
    %v2779 = vunpack.c.h.b16 %v2112
    %v2780 = vunpack.c.l.b16 %v2113
    %v2781 = vunpack.c.h.b16 %v2113
    %v2782 = vunpack.c.l.b16 %v2114
    %v2783 = vunpack.c.h.b16 %v2114
    %v2784 = vunpack.c.l.b16 %v2115
    %v2785 = vunpack.c.h.b16 %v2115
    %v2786 = vunpack.c.l.b16 %v2116
    %v2787 = vunpack.c.h.b16 %v2116
    %v2788 = vunpack.c.l.b16 %v2117
    %v2789 = vunpack.c.h.b16 %v2117
    %v2790 = vunpack.c.l.b16 %v2118
    %v2791 = vunpack.c.h.b16 %v2118
    %v2792 = vunpack.c.l.b16 %v2119
    %v2793 = vunpack.c.h.b16 %v2119
    %v2794 = vunpack.c.l.b16 %v2120
    %v2795 = vunpack.c.h.b16 %v2120
    %v2796 = vunpack.c.l.b16 %v2121
    %v2797 = vunpack.c.h.b16 %v2121
    %v2798 = vunpack.c.l.b16 %v2122
    %v2799 = vunpack.c.h.b16 %v2122
    %v2800 = vunpack.c.l.b16 %v2123
    %v2801 = vunpack.c.h.b16 %v2123
    %v2802 = vunpack.c.l.b16 %v2124
    %v2803 = vunpack.c.h.b16 %v2124
    %v2804 = vunpack.c.l.b16 %v2125
    %v2805 = vunpack.c.h.b16 %v2125
    %v2806 = vunpack.c.l.b16 %v2126
    %v2807 = vunpack.c.h.b16 %v2126
    %v2808 = vunpack.c.l.b16 %v2127
    %v2809 = vunpack.c.h.b16 %v2127
    %v2810 = vunpack.c.l.b16 %v2128
    %v2811 = vunpack.c.h.b16 %v2128
    %v2812 = vunpack.c.l.b16 %v2129
    %v2813 = vunpack.c.h.b16 %v2129
    %v2814 = vunpack.c.l.b16 %v2130
    %v2815 = vunpack.c.h.b16 %v2130
    %v2816 = vunpack.c.l.b16 %v2131
    %v2817 = vunpack.c.h.b16 %v2131
    %v2818 = vunpack.c.l.b16 %v2132
    %v2819 = vunpack.c.h.b16 %v2132
    %v2820 = vunpack.c.l.b16 %v2133
    %v2821 = vunpack.c.h.b16 %v2133
    %v2822 = vunpack.c.l.b16 %v2134
    %v2823 = vunpack.c.h.b16 %v2134
    %v2824 = vunpack.c.l.b16 %v2135
    %v2825 = vunpack.c.h.b16 %v2135
    %v2826 = vunpack.c.l.b16 %v2136
    %v2827 = vunpack.c.h.b16 %v2136
    %v2828 = vunpack.c.l.b16 %v2137
    %v2829 = vunpack.c.h.b16 %v2137
    %v2830 = vunpack.c.l.b16 %v2138
    %v2831 = vunpack.c.h.b16 %v2138
    %v2832 = vunpack.c.l.b16 %v2139
    %v2833 = vunpack.c.h.b16 %v2139
    %v2834 = vunpack.c.l.b16 %v2140
    %v2835 = vunpack.c.h.b16 %v2140
    %v2836 = vunpack.c.l.b16 %v2141
    %v2837 = vunpack.c.h.b16 %v2141
    %v2838 = vunpack.c.l.b16 %v2142
    %v2839 = vunpack.c.h.b16 %v2142
    %v2840 = vunpack.c.l.b16 %v2143
    %v2841 = vunpack.c.h.b16 %v2143
    %v2842 = vunpack.c.l.b16 %v2144
    %v2843 = vunpack.c.h.b16 %v2144
    %v2844 = vunpack.c.l.b16 %v2145
    %v2845 = vunpack.c.h.b16 %v2145
    %v2846 = vunpack.c.l.b16 %v2146
    %v2847 = vunpack.c.h.b16 %v2146
    %v2848 = vunpack.c.l.b16 %v2147
    %v2849 = vunpack.c.h.b16 %v2147
    %v2850 = vunpack.c.l.b16 %v2148
    %v2851 = vunpack.c.h.b16 %v2148
    %v2852 = vunpack.c.l.b16 %v2149
    %v2853 = vunpack.c.h.b16 %v2149
    %v2854 = vunpack.c.l.b16 %v2150
    %v2855 = vunpack.c.h.b16 %v2150
    %v2856 = vunpack.c.l.b16 %v2151
    %v2857 = vunpack.c.h.b16 %v2151
    %v2858 = vunpack.c.l.b16 %v2152
    %v2859 = vunpack.c.h.b16 %v2152
    %v2860 = vunpack.c.l.b16 %v2153
    %v2861 = vunpack.c.h.b16 %v2153
    %v2862 = vunpack.c.l.b16 %v2154
    %v2863 = vunpack.c.h.b16 %v2154
    %v2864 = vunpack.c.l.b16 %v2155
    %v2865 = vunpack.c.h.b16 %v2155
    %v2866 = vunpack.c.l.b16 %v2156
    %v2867 = vunpack.c.h.b16 %v2156
    %v2868 = vunpack.c.l.b16 %v2157
    %v2869 = vunpack.c.h.b16 %v2157
    %v2870 = vunpack.c.l.b16 %v2158
    %v2871 = vunpack.c.h.b16 %v2158
    %v2872 = vunpack.c.l.b16 %v2159
    %v2873 = vunpack.c.h.b16 %v2159
    %v2874 = vunpack.c.l.b16 %v2160
    %v2875 = vunpack.c.h.b16 %v2160
    %v2876 = vunpack.c.l.b16 %v2161
    %v2877 = vunpack.c.h.b16 %v2161
    %v2878 = vunpack.c.l.b16 %v2162
    %v2879 = vunpack.c.h.b16 %v2162
    %v2880 = vunpack.c.l.b16 %v2163
    %v2881 = vunpack.c.h.b16 %v2163
    %v2882 = vunpack.c.l.b16 %v2164
    %v2883 = vunpack.c.h.b16 %v2164
    %v2884 = vunpack.c.l.b16 %v2165
    %v2885 = vunpack.c.h.b16 %v2165
    %v2886 = vunpack.c.l.b16 %v2166
    %v2887 = vunpack.c.h.b16 %v2166
    %v2888 = vunpack.c.l.b16 %v2167
    %v2889 = vunpack.c.h.b16 %v2167
    %v2890 = vunpack.c.l.b16 %v2168
    %v2891 = vunpack.c.h.b16 %v2168
    %v2892 = vunpack.c.l.b16 %v2169
    %v2893 = vunpack.c.h.b16 %v2169
    %v2894 = vunpack.c.l.b16 %v2170
    %v2895 = vunpack.c.h.b16 %v2170
    %v2896 = vunpack.c.l.b16 %v2171
    %v2897 = vunpack.c.h.b16 %v2171
    %v2898 = vunpack.c.l.b16 %v2172
    %v2899 = vunpack.c.h.b16 %v2172
    %v2900 = vunpack.c.l.b16 %v2173
    %v2901 = vunpack.c.h.b16 %v2173
    %v2902 = vunpack.c.l.b16 %v2174
    %v2903 = vunpack.c.h.b16 %v2174
    %v2904 = vunpack.c.l.b16 %v2175
    %v2905 = vunpack.c.h.b16 %v2175
    %v2906 = vunpack.c.l.b16 %v2176
    %v2907 = vunpack.c.h.b16 %v2176
    %v2908 = vunpack.c.l.b16 %v2177
    %v2909 = vunpack.c.h.b16 %v2177
    %v2910 = vunpack.c.l.b16 %v2178
    %v2911 = vunpack.c.h.b16 %v2178
    %v2912 = vunpack.c.l.b16 %v2179
    %v2913 = vunpack.c.h.b16 %v2179
    %v2914 = vunpack.c.l.b16 %v2180
    %v2915 = vunpack.c.h.b16 %v2180
    %v2916 = vunpack.c.l.b16 %v2181
    %v2917 = vunpack.c.h.b16 %v2181
    %v2918 = vunpack.c.l.b16 %v2182
    %v2919 = vunpack.c.h.b16 %v2182
    %v2920 = vunpack.c.l.b16 %v2183
    %v2921 = vunpack.c.h.b16 %v2183
    %v2922 = vunpack.c.l.b16 %v2184
    %v2923 = vunpack.c.h.b16 %v2184
    %v2924 = vunpack.c.l.b16 %v2185
    %v2925 = vunpack.c.h.b16 %v2185
    %v2926 = vunpack.c.l.b16 %v2186
    %v2927 = vunpack.c.h.b16 %v2186
    %v2928 = vunpack.c.l.b16 %v2187
    %v2929 = vunpack.c.h.b16 %v2187
    %v2930 = vunpack.c.l.b16 %v2188
    %v2931 = vunpack.c.h.b16 %v2188
    %v2932 = vunpack.c.l.b16 %v2189
    %v2933 = vunpack.c.h.b16 %v2189
    %v2934 = vunpack.c.l.b16 %v2190
    %v2935 = vunpack.c.h.b16 %v2190
    %v2936 = vunpack.c.l.b16 %v2191
    %v2937 = vunpack.c.h.b16 %v2191
    %v2938 = vunpack.c.l.b16 %v2192
    %v2939 = vunpack.c.h.b16 %v2192
    %v2940 = vunpack.c.l.b16 %v2193
    %v2941 = vunpack.c.h.b16 %v2193
    %v2942 = vunpack.c.l.b16 %v2194
    %v2943 = vunpack.c.h.b16 %v2194
    %v2944 = vunpack.c.l.b16 %v2195
    %v2945 = vunpack.c.h.b16 %v2195
    %v2946 = vunpack.c.l.b16 %v2196
    %v2947 = vunpack.c.h.b16 %v2196
    %v2948 = vunpack.c.l.b16 %v2197
    %v2949 = vunpack.c.h.b16 %v2197
    %v2950 = vunpack.c.l.b16 %v2198
    %v2951 = vunpack.c.h.b16 %v2198
    %v2952 = vunpack.c.l.b16 %v2199
    %v2953 = vunpack.c.h.b16 %v2199
    %v2954 = vunpack.c.l.b16 %v2200
    %v2955 = vunpack.c.h.b16 %v2200
    %v2956 = vunpack.c.l.b16 %v2201
    %v2957 = vunpack.c.h.b16 %v2201
    %v2958 = vunpack.c.l.b16 %v2202
    %v2959 = vunpack.c.h.b16 %v2202
    %v2960 = vunpack.c.l.b16 %v2203
    %v2961 = vunpack.c.h.b16 %v2203
    %v2962 = vunpack.c.l.b16 %v2204
    %v2963 = vunpack.c.h.b16 %v2204
    %v2964 = vunpack.c.l.b16 %v2205
    %v2965 = vunpack.c.h.b16 %v2205
    %v2966 = vunpack.c.l.b16 %v2206
    %v2967 = vunpack.c.h.b16 %v2206
    %v2968 = vunpack.c.l.b16 %v2207
    %v2969 = vunpack.c.h.b16 %v2207
    %v2970 = vunpack.c.l.b16 %v2208
    %v2971 = vunpack.c.h.b16 %v2208
    %v2972 = vunpack.c.l.b16 %v2209
    %v2973 = vunpack.c.h.b16 %v2209
    %v2974 = vunpack.c.l.b16 %v2210
    %v2975 = vunpack.c.h.b16 %v2210
    %v2976 = vunpack.c.l.b16 %v2211
    %v2977 = vunpack.c.h.b16 %v2211
    %v2978 = vunpack.c.l.b16 %v2212
    %v2979 = vunpack.c.h.b16 %v2212
    %v2980 = vunpack.c.l.b16 %v2213
    %v2981 = vunpack.c.h.b16 %v2213
    %v2982 = vunpack.c.l.b16 %v2214
    %v2983 = vunpack.c.h.b16 %v2214
    %v2984 = vunpack.c.l.b16 %v2215
    %v2985 = vunpack.c.h.b16 %v2215
    %v2986 = vunpack.c.l.b16 %v2216
    %v2987 = vunpack.c.h.b16 %v2216
    %v2988 = vunpack.c.l.b16 %v2217
    %v2989 = vunpack.c.h.b16 %v2217
    %v2990 = vunpack.c.l.b16 %v2218
    %v2991 = vunpack.c.h.b16 %v2218
    %v2992 = vunpack.c.l.b16 %v2219
    %v2993 = vunpack.c.h.b16 %v2219
    %v2994 = vunpack.c.l.b16 %v2220
    %v2995 = vunpack.c.h.b16 %v2220
    %v2996 = vunpack.c.l.b16 %v2221
    %v2997 = vunpack.c.h.b16 %v2221
    %v2998 = vunpack.c.l.b16 %v2222
    %v2999 = vunpack.c.h.b16 %v2222
    %v3000 = vunpack.c.l.b16 %v2223
    %v3001 = vunpack.c.h.b16 %v2223
    %v3002 = vunpack.c.l.b16 %v2224
    %v3003 = vunpack.c.h.b16 %v2224
    %v3004 = vunpack.c.l.b16 %v2225
    %v3005 = vunpack.c.h.b16 %v2225
    %v3006 = vunpack.c.l.b16 %v2226
    %v3007 = vunpack.c.h.b16 %v2226
    %v3008 = vunpack.c.l.b16 %v2227
    %v3009 = vunpack.c.h.b16 %v2227
    %v3010 = vunpack.c.l.b16 %v2228
    %v3011 = vunpack.c.h.b16 %v2228
    %v3012 = vunpack.c.l.b16 %v2229
    %v3013 = vunpack.c.h.b16 %v2229
    %v3014 = vunpack.c.l.b16 %v2230
    %v3015 = vunpack.c.h.b16 %v2230
    %v3016 = vunpack.c.l.b16 %v2231
    %v3017 = vunpack.c.h.b16 %v2231
    %v3018 = vunpack.c.l.b16 %v2232
    %v3019 = vunpack.c.h.b16 %v2232
    %v3020 = vunpack.c.l.b16 %v2233
    %v3021 = vunpack.c.h.b16 %v2233
    %v3022 = vunpack.c.l.b16 %v2234
    %v3023 = vunpack.c.h.b16 %v2234
    %v3024 = vunpack.c.l.b16 %v2235
    %v3025 = vunpack.c.h.b16 %v2235
    %v3026 = vpack.c.b16 %v2518, %v2514
    %v3027 = vpack.c.b16 %v2519, %v2515
    %v3028 = vpack.c.b16 %v2520, %v2516
    %v3029 = vpack.c.b16 %v2521, %v2517
    %v3030 = vpack.c.b16 %v2526, %v2522
    %v3031 = vpack.c.b16 %v2527, %v2523
    %v3032 = vpack.c.b16 %v2528, %v2524
    %v3033 = vpack.c.b16 %v2529, %v2525
    %v3034 = vpack.c.b16 %v2534, %v2530
    %v3035 = vpack.c.b16 %v2535, %v2531
    %v3036 = vpack.c.b16 %v2536, %v2532
    %v3037 = vpack.c.b16 %v2537, %v2533
    %v3038 = vpack.c.b16 %v2542, %v2538
    %v3039 = vpack.c.b16 %v2543, %v2539
    %v3040 = vpack.c.b16 %v2544, %v2540
    %v3041 = vpack.c.b16 %v2545, %v2541
    %v3042 = vpack.c.b16 %v2550, %v2546
    %v3043 = vpack.c.b16 %v2551, %v2547
    %v3044 = vpack.c.b16 %v2552, %v2548
    %v3045 = vpack.c.b16 %v2553, %v2549
    %v3046 = vpack.c.b16 %v2558, %v2554
    %v3047 = vpack.c.b16 %v2559, %v2555
    %v3048 = vpack.c.b16 %v2560, %v2556
    %v3049 = vpack.c.b16 %v2561, %v2557
    %v3050 = vpack.c.b16 %v2566, %v2562
    %v3051 = vpack.c.b16 %v2567, %v2563
    %v3052 = vpack.c.b16 %v2568, %v2564
    %v3053 = vpack.c.b16 %v2569, %v2565
    %v3054 = vpack.c.b16 %v2574, %v2570
    %v3055 = vpack.c.b16 %v2575, %v2571
    %v3056 = vpack.c.b16 %v2576, %v2572
    %v3057 = vpack.c.b16 %v2577, %v2573
    %v3058 = vpack.c.b16 %v2582, %v2578
    %v3059 = vpack.c.b16 %v2583, %v2579
    %v3060 = vpack.c.b16 %v2584, %v2580
    %v3061 = vpack.c.b16 %v2585, %v2581
    %v3062 = vpack.c.b16 %v2590, %v2586
    %v3063 = vpack.c.b16 %v2591, %v2587
    %v3064 = vpack.c.b16 %v2592, %v2588
    %v3065 = vpack.c.b16 %v2593, %v2589
    %v3066 = vpack.c.b16 %v2598, %v2594
    %v3067 = vpack.c.b16 %v2599, %v2595
    %v3068 = vpack.c.b16 %v2600, %v2596
    %v3069 = vpack.c.b16 %v2601, %v2597
    %v3070 = vpack.c.b16 %v2606, %v2602
    %v3071 = vpack.c.b16 %v2607, %v2603
    %v3072 = vpack.c.b16 %v2608, %v2604
    %v3073 = vpack.c.b16 %v2609, %v2605
    %v3074 = vpack.c.b16 %v2614, %v2610
    %v3075 = vpack.c.b16 %v2615, %v2611
    %v3076 = vpack.c.b16 %v2616, %v2612
    %v3077 = vpack.c.b16 %v2617, %v2613
    %v3078 = vpack.c.b16 %v2622, %v2618
    %v3079 = vpack.c.b16 %v2623, %v2619
    %v3080 = vpack.c.b16 %v2624, %v2620
    %v3081 = vpack.c.b16 %v2625, %v2621
    %v3082 = vpack.c.b16 %v2630, %v2626
    %v3083 = vpack.c.b16 %v2631, %v2627
    %v3084 = vpack.c.b16 %v2632, %v2628
    %v3085 = vpack.c.b16 %v2633, %v2629
    %v3086 = vpack.c.b16 %v2638, %v2634
    %v3087 = vpack.c.b16 %v2639, %v2635
    %v3088 = vpack.c.b16 %v2640, %v2636
    %v3089 = vpack.c.b16 %v2641, %v2637
    %v3090 = vpack.c.b16 %v2646, %v2642
    %v3091 = vpack.c.b16 %v2647, %v2643
    %v3092 = vpack.c.b16 %v2648, %v2644
    %v3093 = vpack.c.b16 %v2649, %v2645
    %v3094 = vpack.c.b16 %v2654, %v2650
    %v3095 = vpack.c.b16 %v2655, %v2651
    %v3096 = vpack.c.b16 %v2656, %v2652
    %v3097 = vpack.c.b16 %v2657, %v2653
    %v3098 = vpack.c.b16 %v2662, %v2658
    %v3099 = vpack.c.b16 %v2663, %v2659
    %v3100 = vpack.c.b16 %v2664, %v2660
    %v3101 = vpack.c.b16 %v2665, %v2661
    %v3102 = vpack.c.b16 %v2670, %v2666
    %v3103 = vpack.c.b16 %v2671, %v2667
    %v3104 = vpack.c.b16 %v2672, %v2668
    %v3105 = vpack.c.b16 %v2673, %v2669
    %v3106 = vpack.c.b16 %v2678, %v2674
    %v3107 = vpack.c.b16 %v2679, %v2675
    %v3108 = vpack.c.b16 %v2680, %v2676
    %v3109 = vpack.c.b16 %v2681, %v2677
    %v3110 = vpack.c.b16 %v2686, %v2682
    %v3111 = vpack.c.b16 %v2687, %v2683
    %v3112 = vpack.c.b16 %v2688, %v2684
    %v3113 = vpack.c.b16 %v2689, %v2685
    %v3114 = vpack.c.b16 %v2694, %v2690
    %v3115 = vpack.c.b16 %v2695, %v2691
    %v3116 = vpack.c.b16 %v2696, %v2692
    %v3117 = vpack.c.b16 %v2697, %v2693
    %v3118 = vpack.c.b16 %v2702, %v2698
    %v3119 = vpack.c.b16 %v2703, %v2699
    %v3120 = vpack.c.b16 %v2704, %v2700
    %v3121 = vpack.c.b16 %v2705, %v2701
    %v3122 = vpack.c.b16 %v2710, %v2706
    %v3123 = vpack.c.b16 %v2711, %v2707
    %v3124 = vpack.c.b16 %v2712, %v2708
    %v3125 = vpack.c.b16 %v2713, %v2709
    %v3126 = vpack.c.b16 %v2718, %v2714
    %v3127 = vpack.c.b16 %v2719, %v2715
    %v3128 = vpack.c.b16 %v2720, %v2716
    %v3129 = vpack.c.b16 %v2721, %v2717
    %v3130 = vpack.c.b16 %v2726, %v2722
    %v3131 = vpack.c.b16 %v2727, %v2723
    %v3132 = vpack.c.b16 %v2728, %v2724
    %v3133 = vpack.c.b16 %v2729, %v2725
    %v3134 = vpack.c.b16 %v2734, %v2730
    %v3135 = vpack.c.b16 %v2735, %v2731
    %v3136 = vpack.c.b16 %v2736, %v2732
    %v3137 = vpack.c.b16 %v2737, %v2733
    %v3138 = vpack.c.b16 %v2742, %v2738
    %v3139 = vpack.c.b16 %v2743, %v2739
    %v3140 = vpack.c.b16 %v2744, %v2740
    %v3141 = vpack.c.b16 %v2745, %v2741
    %v3142 = vpack.c.b16 %v2750, %v2746
    %v3143 = vpack.c.b16 %v2751, %v2747
    %v3144 = vpack.c.b16 %v2752, %v2748
    %v3145 = vpack.c.b16 %v2753, %v2749
    %v3146 = vpack.c.b16 %v2758, %v2754
    %v3147 = vpack.c.b16 %v2759, %v2755
    %v3148 = vpack.c.b16 %v2760, %v2756
    %v3149 = vpack.c.b16 %v2761, %v2757
    %v3150 = vpack.c.b16 %v2766, %v2762
    %v3151 = vpack.c.b16 %v2767, %v2763
    %v3152 = vpack.c.b16 %v2768, %v2764
    %v3153 = vpack.c.b16 %v2769, %v2765
    %v3154 = vpack.c.b16 %v2774, %v2770
    %v3155 = vpack.c.b16 %v2775, %v2771
    %v3156 = vpack.c.b16 %v2776, %v2772
    %v3157 = vpack.c.b16 %v2777, %v2773
    %v3158 = vpack.c.b16 %v2782, %v2778
    %v3159 = vpack.c.b16 %v2783, %v2779
    %v3160 = vpack.c.b16 %v2784, %v2780
    %v3161 = vpack.c.b16 %v2785, %v2781
    %v3162 = vpack.c.b16 %v2790, %v2786
    %v3163 = vpack.c.b16 %v2791, %v2787
    %v3164 = vpack.c.b16 %v2792, %v2788
    %v3165 = vpack.c.b16 %v2793, %v2789
    %v3166 = vpack.c.b16 %v2798, %v2794
    %v3167 = vpack.c.b16 %v2799, %v2795
    %v3168 = vpack.c.b16 %v2800, %v2796
    %v3169 = vpack.c.b16 %v2801, %v2797
    %v3170 = vpack.c.b16 %v2806, %v2802
    %v3171 = vpack.c.b16 %v2807, %v2803
    %v3172 = vpack.c.b16 %v2808, %v2804
    %v3173 = vpack.c.b16 %v2809, %v2805
    %v3174 = vpack.c.b16 %v2814, %v2810
    %v3175 = vpack.c.b16 %v2815, %v2811
    %v3176 = vpack.c.b16 %v2816, %v2812
    %v3177 = vpack.c.b16 %v2817, %v2813
    %v3178 = vpack.c.b16 %v2822, %v2818
    %v3179 = vpack.c.b16 %v2823, %v2819
    %v3180 = vpack.c.b16 %v2824, %v2820
    %v3181 = vpack.c.b16 %v2825, %v2821
    %v3182 = vpack.c.b16 %v2830, %v2826
    %v3183 = vpack.c.b16 %v2831, %v2827
    %v3184 = vpack.c.b16 %v2832, %v2828
    %v3185 = vpack.c.b16 %v2833, %v2829
    %v3186 = vpack.c.b16 %v2838, %v2834
    %v3187 = vpack.c.b16 %v2839, %v2835
    %v3188 = vpack.c.b16 %v2840, %v2836
    %v3189 = vpack.c.b16 %v2841, %v2837
    %v3190 = vpack.c.b16 %v2846, %v2842
    %v3191 = vpack.c.b16 %v2847, %v2843
    %v3192 = vpack.c.b16 %v2848, %v2844
    %v3193 = vpack.c.b16 %v2849, %v2845
    %v3194 = vpack.c.b16 %v2854, %v2850
    %v3195 = vpack.c.b16 %v2855, %v2851
    %v3196 = vpack.c.b16 %v2856, %v2852
    %v3197 = vpack.c.b16 %v2857, %v2853
    %v3198 = vpack.c.b16 %v2862, %v2858
    %v3199 = vpack.c.b16 %v2863, %v2859
    %v3200 = vpack.c.b16 %v2864, %v2860
    %v3201 = vpack.c.b16 %v2865, %v2861
    %v3202 = vpack.c.b16 %v2870, %v2866
    %v3203 = vpack.c.b16 %v2871, %v2867
    %v3204 = vpack.c.b16 %v2872, %v2868
    %v3205 = vpack.c.b16 %v2873, %v2869
    %v3206 = vpack.c.b16 %v2878, %v2874
    %v3207 = vpack.c.b16 %v2879, %v2875
    %v3208 = vpack.c.b16 %v2880, %v2876
    %v3209 = vpack.c.b16 %v2881, %v2877
    %v3210 = vpack.c.b16 %v2886, %v2882
    %v3211 = vpack.c.b16 %v2887, %v2883
    %v3212 = vpack.c.b16 %v2888, %v2884
    %v3213 = vpack.c.b16 %v2889, %v2885
    %v3214 = vpack.c.b16 %v2894, %v2890
    %v3215 = vpack.c.b16 %v2895, %v2891
    %v3216 = vpack.c.b16 %v2896, %v2892
    %v3217 = vpack.c.b16 %v2897, %v2893
    %v3218 = vpack.c.b16 %v2902, %v2898
    %v3219 = vpack.c.b16 %v2903, %v2899
    %v3220 = vpack.c.b16 %v2904, %v2900
    %v3221 = vpack.c.b16 %v2905, %v2901
    %v3222 = vpack.c.b16 %v2910, %v2906
    %v3223 = vpack.c.b16 %v2911, %v2907
    %v3224 = vpack.c.b16 %v2912, %v2908
    %v3225 = vpack.c.b16 %v2913, %v2909
    %v3226 = vpack.c.b16 %v2918, %v2914
    %v3227 = vpack.c.b16 %v2919, %v2915
    %v3228 = vpack.c.b16 %v2920, %v2916
    %v3229 = vpack.c.b16 %v2921, %v2917
    %v3230 = vpack.c.b16 %v2926, %v2922
    %v3231 = vpack.c.b16 %v2927, %v2923
    %v3232 = vpack.c.b16 %v2928, %v2924
    %v3233 = vpack.c.b16 %v2929, %v2925
    %v3234 = vpack.c.b16 %v2934, %v2930
    %v3235 = vpack.c.b16 %v2935, %v2931
    %v3236 = vpack.c.b16 %v2936, %v2932
    %v3237 = vpack.c.b16 %v2937, %v2933
    %v3238 = vpack.c.b16 %v2942, %v2938
    %v3239 = vpack.c.b16 %v2943, %v2939
    %v3240 = vpack.c.b16 %v2944, %v2940
    %v3241 = vpack.c.b16 %v2945, %v2941
    %v3242 = vpack.c.b16 %v2950, %v2946
    %v3243 = vpack.c.b16 %v2951, %v2947
    %v3244 = vpack.c.b16 %v2952, %v2948
    %v3245 = vpack.c.b16 %v2953, %v2949
    %v3246 = vpack.c.b16 %v2958, %v2954
    %v3247 = vpack.c.b16 %v2959, %v2955
    %v3248 = vpack.c.b16 %v2960, %v2956
    %v3249 = vpack.c.b16 %v2961, %v2957
    %v3250 = vpack.c.b16 %v2966, %v2962
    %v3251 = vpack.c.b16 %v2967, %v2963
    %v3252 = vpack.c.b16 %v2968, %v2964
    %v3253 = vpack.c.b16 %v2969, %v2965
    %v3254 = vpack.c.b16 %v2974, %v2970
    %v3255 = vpack.c.b16 %v2975, %v2971
    %v3256 = vpack.c.b16 %v2976, %v2972
    %v3257 = vpack.c.b16 %v2977, %v2973
    %v3258 = vpack.c.b16 %v2982, %v2978
    %v3259 = vpack.c.b16 %v2983, %v2979
    %v3260 = vpack.c.b16 %v2984, %v2980
    %v3261 = vpack.c.b16 %v2985, %v2981
    %v3262 = vpack.c.b16 %v2990, %v2986
    %v3263 = vpack.c.b16 %v2991, %v2987
    %v3264 = vpack.c.b16 %v2992, %v2988
    %v3265 = vpack.c.b16 %v2993, %v2989
    %v3266 = vpack.c.b16 %v2998, %v2994
    %v3267 = vpack.c.b16 %v2999, %v2995
    %v3268 = vpack.c.b16 %v3000, %v2996
    %v3269 = vpack.c.b16 %v3001, %v2997
    %v3270 = vpack.c.b16 %v3006, %v3002
    %v3271 = vpack.c.b16 %v3007, %v3003
    %v3272 = vpack.c.b16 %v3008, %v3004
    %v3273 = vpack.c.b16 %v3009, %v3005
    %v3274 = vpack.c.b16 %v3014, %v3010
    %v3275 = vpack.c.b16 %v3015, %v3011
    %v3276 = vpack.c.b16 %v3016, %v3012
    %v3277 = vpack.c.b16 %v3017, %v3013
    %v3278 = vpack.c.b16 %v3022, %v3018
    %v3279 = vpack.c.b16 %v3023, %v3019
    %v3280 = vpack.c.b16 %v3024, %v3020
    %v3281 = vpack.c.b16 %v3025, %v3021
    %3538 = vmatprep.subr.bf16.mxu0 %v3055
    %3539 = vmatpush1.bf16.msra.mxu0 %v3054
    %3540 = vmatprep.subr.bf16.mxu0 %v3051
    %3541 = vmatpush1.bf16.msra.mxu0 %v3050
    %3542 = vmatprep.subr.bf16.mxu0 %v3047
    %3543 = vmatpush1.bf16.msra.mxu0 %v3046
    %3544 = vmatprep.subr.bf16.mxu0 %v3043
    %3545 = vmatpush1.bf16.msra.mxu0 %v3042
    %3546 = vmatprep.subr.bf16.mxu0 %v3039
    %3547 = vmatpush1.bf16.msra.mxu0 %v3038
    %3548 = vmatprep.subr.bf16.mxu0 %v3035
    %3549 = vmatpush1.bf16.msra.mxu0 %v3034
    %3550 = vmatprep.subr.bf16.mxu0 %v3031
    %3551 = vmatpush1.bf16.msra.mxu0 %v3030
    %3552 = vmatprep.subr.bf16.mxu0 %v3027
    %3553 = vmatpush1.bf16.msra.mxu0 %v3026
    %3554 = vmatprep.subr.bf16.mxu0 %v3087
    %3555 = vmatpush2.bf16.msra.mxu0 %v3086
    %3556 = vmatprep.subr.bf16.mxu0 %v3083
    %3557 = vmatpush2.bf16.msra.mxu0 %v3082
    %3558 = vmatprep.subr.bf16.mxu0 %v3079
    %3559 = vmatpush2.bf16.msra.mxu0 %v3078
    %3560 = vmatprep.subr.bf16.mxu0 %v3075
    %3561 = vmatpush2.bf16.msra.mxu0 %v3074
    %3562 = vmatprep.subr.bf16.mxu0 %v3071
    %3563 = vmatpush2.bf16.msra.mxu0 %v3070
    %3564 = vmatprep.subr.bf16.mxu0 %v3067
    %3565 = vmatpush2.bf16.msra.mxu0 %v3066
    %3566 = vmatprep.subr.bf16.mxu0 %v3063
    %3567 = vmatpush2.bf16.msra.mxu0 %v3062
    %3568 = vmatprep.subr.bf16.mxu0 %v3059
    %3569 = vmatpush2.bf16.msra.mxu0 %v3058
    %3570 = vmatprep.mubr.bf16.mxu0 %v1973
    %3571 = vmatmul.mubr.bf16.gmra.mxu0 %v1972
    %v3572 = vpop.f32.mrf.mxu0
    %v3573 = vadd.f32 %v2241, %v3572
    %v3574 = vpop.f32.mrf.mxu0
    %v3575 = vadd.f32 %v2245, %v3574
    %v3576 = vpop.f32.mrf.mxu0
    %v3577 = vpop.f32.mrf.mxu0
    %3578 = vdwg.mxu0
    %3579 = vmatprep.subr.bf16.mxu0 %v3119
    %3580 = vmatpush1.bf16.msra.mxu0 %v3118
    %3581 = vmatprep.subr.bf16.mxu0 %v3115
    %3582 = vmatpush1.bf16.msra.mxu0 %v3114
    %3583 = vmatprep.subr.bf16.mxu0 %v3111
    %3584 = vmatpush1.bf16.msra.mxu0 %v3110
    %3585 = vmatprep.subr.bf16.mxu0 %v3107
    %3586 = vmatpush1.bf16.msra.mxu0 %v3106
    %3587 = vmatprep.subr.bf16.mxu0 %v3103
    %3588 = vmatpush1.bf16.msra.mxu0 %v3102
    %3589 = vmatprep.subr.bf16.mxu0 %v3099
    %3590 = vmatpush1.bf16.msra.mxu0 %v3098
    %3591 = vmatprep.subr.bf16.mxu0 %v3095
    %3592 = vmatpush1.bf16.msra.mxu0 %v3094
    %3593 = vmatprep.subr.bf16.mxu0 %v3091
    %3594 = vmatpush1.bf16.msra.mxu0 %v3090
    %3595 = vmatprep.subr.bf16.mxu0 %v3151
    %3596 = vmatpush2.bf16.msra.mxu0 %v3150
    %3597 = vmatprep.subr.bf16.mxu0 %v3147
    %3598 = vmatpush2.bf16.msra.mxu0 %v3146
    %3599 = vmatprep.subr.bf16.mxu0 %v3143
    %3600 = vmatpush2.bf16.msra.mxu0 %v3142
    %3601 = vmatprep.subr.bf16.mxu0 %v3139
    %3602 = vmatpush2.bf16.msra.mxu0 %v3138
    %3603 = vmatprep.subr.bf16.mxu0 %v3135
    %3604 = vmatpush2.bf16.msra.mxu0 %v3134
    %3605 = vmatprep.subr.bf16.mxu0 %v3131
    %3606 = vmatpush2.bf16.msra.mxu0 %v3130
    %3607 = vmatprep.subr.bf16.mxu0 %v3127
    %3608 = vmatpush2.bf16.msra.mxu0 %v3126
    %3609 = vmatprep.subr.bf16.mxu0 %v3123
    %3610 = vmatpush2.bf16.msra.mxu0 %v3122
    %3611 = vmatprep.mubr.bf16.mxu0 %v1975
    %3612 = vmatmul.mubr.bf16.gmra.mxu0 %v1974
    %v3613 = vpop.f32.mrf.mxu0
    %v3614 = vadd.f32 %v3573, %v3613
    %v3615 = vpop.f32.mrf.mxu0
    %v3616 = vadd.f32 %v3575, %v3615
    %v3617 = vpop.f32.mrf.mxu0
    %v3618 = vpop.f32.mrf.mxu0
    %3619 = vdwg.mxu0
    %3620 = vmatprep.subr.bf16.mxu0 %v3183
    %3621 = vmatpush1.bf16.msra.mxu0 %v3182
    %3622 = vmatprep.subr.bf16.mxu0 %v3179
    %3623 = vmatpush1.bf16.msra.mxu0 %v3178
    %3624 = vmatprep.subr.bf16.mxu0 %v3175
    %3625 = vmatpush1.bf16.msra.mxu0 %v3174
    %3626 = vmatprep.subr.bf16.mxu0 %v3171
    %3627 = vmatpush1.bf16.msra.mxu0 %v3170
    %3628 = vmatprep.subr.bf16.mxu0 %v3167
    %3629 = vmatpush1.bf16.msra.mxu0 %v3166
    %3630 = vmatprep.subr.bf16.mxu0 %v3163
    %3631 = vmatpush1.bf16.msra.mxu0 %v3162
    %3632 = vmatprep.subr.bf16.mxu0 %v3159
    %3633 = vmatpush1.bf16.msra.mxu0 %v3158
    %3634 = vmatprep.subr.bf16.mxu0 %v3155
    %3635 = vmatpush1.bf16.msra.mxu0 %v3154
    %3636 = vmatprep.subr.bf16.mxu0 %v3215
    %3637 = vmatpush2.bf16.msra.mxu0 %v3214
    %3638 = vmatprep.subr.bf16.mxu0 %v3211
    %3639 = vmatpush2.bf16.msra.mxu0 %v3210
    %3640 = vmatprep.subr.bf16.mxu0 %v3207
    %3641 = vmatpush2.bf16.msra.mxu0 %v3206
    %3642 = vmatprep.subr.bf16.mxu0 %v3203
    %3643 = vmatpush2.bf16.msra.mxu0 %v3202
    %3644 = vmatprep.subr.bf16.mxu0 %v3199
    %3645 = vmatpush2.bf16.msra.mxu0 %v3198
    %3646 = vmatprep.subr.bf16.mxu0 %v3195
    %3647 = vmatpush2.bf16.msra.mxu0 %v3194
    %3648 = vmatprep.subr.bf16.mxu0 %v3191
    %3649 = vmatpush2.bf16.msra.mxu0 %v3190
    %3650 = vmatprep.subr.bf16.mxu0 %v3187
    %3651 = vmatpush2.bf16.msra.mxu0 %v3186
    %3652 = vmatprep.mubr.bf16.mxu0 %v1977
    %3653 = vmatmul.mubr.bf16.gmra.mxu0 %v1976
    %v3654 = vpop.f32.mrf.mxu0
    %v3655 = vadd.f32 %v3614, %v3654
    %v3656 = vpop.f32.mrf.mxu0
    %v3657 = vadd.f32 %v3616, %v3656
    %v3658 = vpop.f32.mrf.mxu0
    %v3659 = vpop.f32.mrf.mxu0
    %3660 = vdwg.mxu0
    %3661 = vmatprep.subr.bf16.mxu0 %v3247
    %3662 = vmatpush1.bf16.msra.mxu0 %v3246
    %3663 = vmatprep.subr.bf16.mxu0 %v3243
    %3664 = vmatpush1.bf16.msra.mxu0 %v3242
    %3665 = vmatprep.subr.bf16.mxu0 %v3239
    %3666 = vmatpush1.bf16.msra.mxu0 %v3238
    %3667 = vmatprep.subr.bf16.mxu0 %v3235
    %3668 = vmatpush1.bf16.msra.mxu0 %v3234
    %3669 = vmatprep.subr.bf16.mxu0 %v3231
    %3670 = vmatpush1.bf16.msra.mxu0 %v3230
    %3671 = vmatprep.subr.bf16.mxu0 %v3227
    %3672 = vmatpush1.bf16.msra.mxu0 %v3226
    %3673 = vmatprep.subr.bf16.mxu0 %v3223
    %3674 = vmatpush1.bf16.msra.mxu0 %v3222
    %3675 = vmatprep.subr.bf16.mxu0 %v3219
    %3676 = vmatpush1.bf16.msra.mxu0 %v3218
    %3677 = vmatprep.subr.bf16.mxu0 %v3279
    %3678 = vmatpush2.bf16.msra.mxu0 %v3278
    %3679 = vmatprep.subr.bf16.mxu0 %v3275
    %3680 = vmatpush2.bf16.msra.mxu0 %v3274
    %3681 = vmatprep.subr.bf16.mxu0 %v3271
    %3682 = vmatpush2.bf16.msra.mxu0 %v3270
    %3683 = vmatprep.subr.bf16.mxu0 %v3267
    %3684 = vmatpush2.bf16.msra.mxu0 %v3266
    %3685 = vmatprep.subr.bf16.mxu0 %v3263
    %3686 = vmatpush2.bf16.msra.mxu0 %v3262
    %3687 = vmatprep.subr.bf16.mxu0 %v3259
    %3688 = vmatpush2.bf16.msra.mxu0 %v3258
    %3689 = vmatprep.subr.bf16.mxu0 %v3255
    %3690 = vmatpush2.bf16.msra.mxu0 %v3254
    %3691 = vmatprep.subr.bf16.mxu0 %v3251
    %3692 = vmatpush2.bf16.msra.mxu0 %v3250
    %3693 = vmatprep.mubr.bf16.mxu0 %v1979
    %3694 = vmatmul.mubr.bf16.gmra.mxu0 %v1978
    %v3695 = vpop.f32.mrf.mxu0
    %v3696 = vadd.f32 %v3655, %v3695
    %v3697 = vpop.f32.mrf.mxu0
    %v3698 = vadd.f32 %v3657, %v3697
    %v3699 = vpop.f32.mrf.mxu0
    %v3700 = vpop.f32.mrf.mxu0
    %3701 = vdwg.mxu0
    %3702 = vmatprep.subr.bf16.mxu0 %v3057
    %3703 = vmatpush1.bf16.msra.mxu0 %v3056
    %3704 = vmatprep.subr.bf16.mxu0 %v3053
    %3705 = vmatpush1.bf16.msra.mxu0 %v3052
    %3706 = vmatprep.subr.bf16.mxu0 %v3049
    %3707 = vmatpush1.bf16.msra.mxu0 %v3048
    %3708 = vmatprep.subr.bf16.mxu0 %v3045
    %3709 = vmatpush1.bf16.msra.mxu0 %v3044
    %3710 = vmatprep.subr.bf16.mxu0 %v3041
    %3711 = vmatpush1.bf16.msra.mxu0 %v3040
    %3712 = vmatprep.subr.bf16.mxu0 %v3037
    %3713 = vmatpush1.bf16.msra.mxu0 %v3036
    %3714 = vmatprep.subr.bf16.mxu0 %v3033
    %3715 = vmatpush1.bf16.msra.mxu0 %v3032
    %3716 = vmatprep.subr.bf16.mxu0 %v3029
    %3717 = vmatpush1.bf16.msra.mxu0 %v3028
    %3718 = vmatprep.subr.bf16.mxu0 %v3089
    %3719 = vmatpush2.bf16.msra.mxu0 %v3088
    %3720 = vmatprep.subr.bf16.mxu0 %v3085
    %3721 = vmatpush2.bf16.msra.mxu0 %v3084
    %3722 = vmatprep.subr.bf16.mxu0 %v3081
    %3723 = vmatpush2.bf16.msra.mxu0 %v3080
    %3724 = vmatprep.subr.bf16.mxu0 %v3077
    %3725 = vmatpush2.bf16.msra.mxu0 %v3076
    %3726 = vmatprep.subr.bf16.mxu0 %v3073
    %3727 = vmatpush2.bf16.msra.mxu0 %v3072
    %3728 = vmatprep.subr.bf16.mxu0 %v3069
    %3729 = vmatpush2.bf16.msra.mxu0 %v3068
    %3730 = vmatprep.subr.bf16.mxu0 %v3065
    %3731 = vmatpush2.bf16.msra.mxu0 %v3064
    %3732 = vmatprep.subr.bf16.mxu0 %v3061
    %3733 = vmatpush2.bf16.msra.mxu0 %v3060
    %3734 = vmatprep.mubr.bf16.mxu0 %v1973
    %3735 = vmatmul.mubr.bf16.gmra.mxu0 %v1972
    %v3736 = vpop.f32.mrf.mxu0
    %v3737 = vadd.f32 %v2249, %v3736
    %v3738 = vpop.f32.mrf.mxu0
    %v3739 = vadd.f32 %v2253, %v3738
    %v3740 = vpop.f32.mrf.mxu0
    %v3741 = vpop.f32.mrf.mxu0
    %3742 = vdwg.mxu0
    %3743 = vmatprep.subr.bf16.mxu0 %v3121
    %3744 = vmatpush1.bf16.msra.mxu0 %v3120
    %3745 = vmatprep.subr.bf16.mxu0 %v3117
    %3746 = vmatpush1.bf16.msra.mxu0 %v3116
    %3747 = vmatprep.subr.bf16.mxu0 %v3113
    %3748 = vmatpush1.bf16.msra.mxu0 %v3112
    %3749 = vmatprep.subr.bf16.mxu0 %v3109
    %3750 = vmatpush1.bf16.msra.mxu0 %v3108
    %3751 = vmatprep.subr.bf16.mxu0 %v3105
    %3752 = vmatpush1.bf16.msra.mxu0 %v3104
    %3753 = vmatprep.subr.bf16.mxu0 %v3101
    %3754 = vmatpush1.bf16.msra.mxu0 %v3100
    %3755 = vmatprep.subr.bf16.mxu0 %v3097
    %3756 = vmatpush1.bf16.msra.mxu0 %v3096
    %3757 = vmatprep.subr.bf16.mxu0 %v3093
    %3758 = vmatpush1.bf16.msra.mxu0 %v3092
    %3759 = vmatprep.subr.bf16.mxu0 %v3153
    %3760 = vmatpush2.bf16.msra.mxu0 %v3152
    %3761 = vmatprep.subr.bf16.mxu0 %v3149
    %3762 = vmatpush2.bf16.msra.mxu0 %v3148
    %3763 = vmatprep.subr.bf16.mxu0 %v3145
    %3764 = vmatpush2.bf16.msra.mxu0 %v3144
    %3765 = vmatprep.subr.bf16.mxu0 %v3141
    %3766 = vmatpush2.bf16.msra.mxu0 %v3140
    %3767 = vmatprep.subr.bf16.mxu0 %v3137
    %3768 = vmatpush2.bf16.msra.mxu0 %v3136
    %3769 = vmatprep.subr.bf16.mxu0 %v3133
    %3770 = vmatpush2.bf16.msra.mxu0 %v3132
    %3771 = vmatprep.subr.bf16.mxu0 %v3129
    %3772 = vmatpush2.bf16.msra.mxu0 %v3128
    %3773 = vmatprep.subr.bf16.mxu0 %v3125
    %3774 = vmatpush2.bf16.msra.mxu0 %v3124
    %3775 = vmatprep.mubr.bf16.mxu0 %v1975
    %3776 = vmatmul.mubr.bf16.gmra.mxu0 %v1974
    %v3777 = vpop.f32.mrf.mxu0
    %v3778 = vadd.f32 %v3737, %v3777
    %v3779 = vpop.f32.mrf.mxu0
    %v3780 = vadd.f32 %v3739, %v3779
    %v3781 = vpop.f32.mrf.mxu0
    %v3782 = vpop.f32.mrf.mxu0
    %3783 = vdwg.mxu0
    %3784 = vmatprep.subr.bf16.mxu0 %v3185
    %3785 = vmatpush1.bf16.msra.mxu0 %v3184
    %3786 = vmatprep.subr.bf16.mxu0 %v3181
    %3787 = vmatpush1.bf16.msra.mxu0 %v3180
    %3788 = vmatprep.subr.bf16.mxu0 %v3177
    %3789 = vmatpush1.bf16.msra.mxu0 %v3176
    %3790 = vmatprep.subr.bf16.mxu0 %v3173
    %3791 = vmatpush1.bf16.msra.mxu0 %v3172
    %3792 = vmatprep.subr.bf16.mxu0 %v3169
    %3793 = vmatpush1.bf16.msra.mxu0 %v3168
    %3794 = vmatprep.subr.bf16.mxu0 %v3165
    %3795 = vmatpush1.bf16.msra.mxu0 %v3164
    %3796 = vmatprep.subr.bf16.mxu0 %v3161
    %3797 = vmatpush1.bf16.msra.mxu0 %v3160
    %3798 = vmatprep.subr.bf16.mxu0 %v3157
    %3799 = vmatpush1.bf16.msra.mxu0 %v3156
    %3800 = vmatprep.subr.bf16.mxu0 %v3217
    %3801 = vmatpush2.bf16.msra.mxu0 %v3216
    %3802 = vmatprep.subr.bf16.mxu0 %v3213
    %3803 = vmatpush2.bf16.msra.mxu0 %v3212
    %3804 = vmatprep.subr.bf16.mxu0 %v3209
    %3805 = vmatpush2.bf16.msra.mxu0 %v3208
    %3806 = vmatprep.subr.bf16.mxu0 %v3205
    %3807 = vmatpush2.bf16.msra.mxu0 %v3204
    %3808 = vmatprep.subr.bf16.mxu0 %v3201
    %3809 = vmatpush2.bf16.msra.mxu0 %v3200
    %3810 = vmatprep.subr.bf16.mxu0 %v3197
    %3811 = vmatpush2.bf16.msra.mxu0 %v3196
    %3812 = vmatprep.subr.bf16.mxu0 %v3193
    %3813 = vmatpush2.bf16.msra.mxu0 %v3192
    %3814 = vmatprep.subr.bf16.mxu0 %v3189
    %3815 = vmatpush2.bf16.msra.mxu0 %v3188
    %3816 = vmatprep.mubr.bf16.mxu0 %v1977
    %3817 = vmatmul.mubr.bf16.gmra.mxu0 %v1976
    %v3818 = vpop.f32.mrf.mxu0
    %v3819 = vadd.f32 %v3778, %v3818
    %v3820 = vpop.f32.mrf.mxu0
    %v3821 = vadd.f32 %v3780, %v3820
    %v3822 = vpop.f32.mrf.mxu0
    %v3823 = vpop.f32.mrf.mxu0
    %3824 = vdwg.mxu0
    %3825 = vmatprep.subr.bf16.mxu0 %v3249
    %3826 = vmatpush1.bf16.msra.mxu0 %v3248
    %3827 = vmatprep.subr.bf16.mxu0 %v3245
    %3828 = vmatpush1.bf16.msra.mxu0 %v3244
    %3829 = vmatprep.subr.bf16.mxu0 %v3241
    %3830 = vmatpush1.bf16.msra.mxu0 %v3240
    %3831 = vmatprep.subr.bf16.mxu0 %v3237
    %3832 = vmatpush1.bf16.msra.mxu0 %v3236
    %3833 = vmatprep.subr.bf16.mxu0 %v3233
    %3834 = vmatpush1.bf16.msra.mxu0 %v3232
    %3835 = vmatprep.subr.bf16.mxu0 %v3229
    %3836 = vmatpush1.bf16.msra.mxu0 %v3228
    %3837 = vmatprep.subr.bf16.mxu0 %v3225
    %3838 = vmatpush1.bf16.msra.mxu0 %v3224
    %3839 = vmatprep.subr.bf16.mxu0 %v3221
    %3840 = vmatpush1.bf16.msra.mxu0 %v3220
    %3841 = vmatprep.subr.bf16.mxu0 %v3281
    %3842 = vmatpush2.bf16.msra.mxu0 %v3280
    %3843 = vmatprep.subr.bf16.mxu0 %v3277
    %3844 = vmatpush2.bf16.msra.mxu0 %v3276
    %3845 = vmatprep.subr.bf16.mxu0 %v3273
    %3846 = vmatpush2.bf16.msra.mxu0 %v3272
    %3847 = vmatprep.subr.bf16.mxu0 %v3269
    %3848 = vmatpush2.bf16.msra.mxu0 %v3268
    %3849 = vmatprep.subr.bf16.mxu0 %v3265
    %3850 = vmatpush2.bf16.msra.mxu0 %v3264
    %3851 = vmatprep.subr.bf16.mxu0 %v3261
    %3852 = vmatpush2.bf16.msra.mxu0 %v3260
    %3853 = vmatprep.subr.bf16.mxu0 %v3257
    %3854 = vmatpush2.bf16.msra.mxu0 %v3256
    %3855 = vmatprep.subr.bf16.mxu0 %v3253
    %3856 = vmatpush2.bf16.msra.mxu0 %v3252
    %3857 = vmatprep.mubr.bf16.mxu0 %v1979
    %3858 = vmatmul.mubr.bf16.gmra.mxu0 %v1978
    %v3859 = vpop.f32.mrf.mxu0
    %v3860 = vadd.f32 %v3819, %v3859
    %v3861 = vpop.f32.mrf.mxu0
    %v3862 = vadd.f32 %v3821, %v3861
    %v3863 = vpop.f32.mrf.mxu0
    %v3864 = vpop.f32.mrf.mxu0
    %3865 = vdwg.mxu0
    %v3866 = vmax.f32 %v3696, 0.0
    %v3867 = vmax.f32 %v3698, 0.0
    %v3868 = vmax.f32 %v3860, 0.0
    %v3869 = vmax.f32 %v3862, 0.0
    %v3870 = vpack.c.bf16 %v3866, %v3866
    %v3871 = vpack.c.bf16 %v3867, %v3867
    %v3872 = vpack.c.bf16 %v3868, %v3868
    %v3873 = vpack.c.bf16 %v3869, %v3869
    %v3874 = vld [vmem:[%s5] sm:$0xf]
    %v3875 = vld [vmem:[%s5 + $0x4] sm:$0xf]
    %v3876 = vld [vmem:[%s5 + $0x8] sm:$0xf]
    %v3877 = vld [vmem:[%s5 + $0xc] sm:$0xf]
    %v3878 = vld [vmem:[%s5 + $0x10] sm:$0xf]
    %v3879 = vld [vmem:[%s5 + $0x14] sm:$0xf]
    %v3880 = vld [vmem:[%s5 + $0x18] sm:$0xf]
    %v3881 = vld [vmem:[%s5 + $0x1c] sm:$0xf]
    %v3882 = vld [vmem:[%s5 + $0x20] sm:$0xf]
    %v3883 = vld [vmem:[%s5 + $0x24] sm:$0xf]
    %v3884 = vld [vmem:[%s5 + $0x28] sm:$0xf]
    %v3885 = vld [vmem:[%s5 + $0x2c] sm:$0xf]
    %v3886 = vld [vmem:[%s5 + $0x30] sm:$0xf]
    %v3887 = vld [vmem:[%s5 + $0x34] sm:$0xf]
    %v3888 = vld [vmem:[%s5 + $0x38] sm:$0xf]
    %v3889 = vld [vmem:[%s5 + $0x3c] sm:$0xf]
    %v3890 = vld [vmem:[%s5 + $0x40] sm:$0xf]
    %v3891 = vld [vmem:[%s5 + $0x44] sm:$0xf]
    %v3892 = vld [vmem:[%s5 + $0x48] sm:$0xf]
    %v3893 = vld [vmem:[%s5 + $0x4c] sm:$0xf]
    %v3894 = vld [vmem:[%s5 + $0x50] sm:$0xf]
    %v3895 = vld [vmem:[%s5 + $0x54] sm:$0xf]
    %v3896 = vld [vmem:[%s5 + $0x58] sm:$0xf]
    %v3897 = vld [vmem:[%s5 + $0x5c] sm:$0xf]
    %v3898 = vld [vmem:[%s5 + $0x60] sm:$0xf]
    %v3899 = vld [vmem:[%s5 + $0x64] sm:$0xf]
    %v3900 = vld [vmem:[%s5 + $0x68] sm:$0xf]
    %v3901 = vld [vmem:[%s5 + $0x6c] sm:$0xf]
    %v3902 = vld [vmem:[%s5 + $0x70] sm:$0xf]
    %v3903 = vld [vmem:[%s5 + $0x74] sm:$0xf]
    %v3904 = vld [vmem:[%s5 + $0x78] sm:$0xf]
    %v3905 = vld [vmem:[%s5 + $0x7c] sm:$0xf]
    %v3906 = vld [vmem:[%s5 + $0x80] sm:$0xf]
    %v3907 = vld [vmem:[%s5 + $0x84] sm:$0xf]
    %v3908 = vld [vmem:[%s5 + $0x88] sm:$0xf]
    %v3909 = vld [vmem:[%s5 + $0x8c] sm:$0xf]
    %v3910 = vld [vmem:[%s5 + $0x90] sm:$0xf]
    %v3911 = vld [vmem:[%s5 + $0x94] sm:$0xf]
    %v3912 = vld [vmem:[%s5 + $0x98] sm:$0xf]
    %v3913 = vld [vmem:[%s5 + $0x9c] sm:$0xf]
    %v3914 = vld [vmem:[%s5 + $0xa0] sm:$0xf]
    %v3915 = vld [vmem:[%s5 + $0xa4] sm:$0xf]
    %v3916 = vld [vmem:[%s5 + $0xa8] sm:$0xf]
    %v3917 = vld [vmem:[%s5 + $0xac] sm:$0xf]
    %v3918 = vld [vmem:[%s5 + $0xb0] sm:$0xf]
    %v3919 = vld [vmem:[%s5 + $0xb4] sm:$0xf]
    %v3920 = vld [vmem:[%s5 + $0xb8] sm:$0xf]
    %v3921 = vld [vmem:[%s5 + $0xbc] sm:$0xf]
    %v3922 = vld [vmem:[%s5 + $0xc0] sm:$0xf]
    %v3923 = vld [vmem:[%s5 + $0xc4] sm:$0xf]
    %v3924 = vld [vmem:[%s5 + $0xc8] sm:$0xf]
    %v3925 = vld [vmem:[%s5 + $0xcc] sm:$0xf]
    %v3926 = vld [vmem:[%s5 + $0xd0] sm:$0xf]
    %v3927 = vld [vmem:[%s5 + $0xd4] sm:$0xf]
    %v3928 = vld [vmem:[%s5 + $0xd8] sm:$0xf]
    %v3929 = vld [vmem:[%s5 + $0xdc] sm:$0xf]
    %v3930 = vld [vmem:[%s5 + $0xe0] sm:$0xf]
    %v3931 = vld [vmem:[%s5 + $0xe4] sm:$0xf]
    %v3932 = vld [vmem:[%s5 + $0xe8] sm:$0xf]
    %v3933 = vld [vmem:[%s5 + $0xec] sm:$0xf]
    %v3934 = vld [vmem:[%s5 + $0xf0] sm:$0xf]
    %v3935 = vld [vmem:[%s5 + $0xf4] sm:$0xf]
    %v3936 = vld [vmem:[%s5 + $0xf8] sm:$0xf]
    %v3937 = vld [vmem:[%s5 + $0xfc] sm:$0xf]
    %v3938 = vld [vmem:[%s6] sm:$0x1]
    %v3940 = vlaneseq
    %v3941 = vshrl.u32 %v3940, 7
    %v3942 = vsub.s32 0, %v3941
    %v3943 = vrot.slane %v3938, %v3942
    %v4009 = vunpack.c.l.b16 %v3874
    %v4010 = vunpack.c.l.b16 %v3875
    %v4011 = vunpack.c.l.b16 %v3876
    %v4012 = vunpack.c.l.b16 %v3877
    %v4013 = vunpack.c.l.b16 %v3878
    %v4014 = vunpack.c.l.b16 %v3879
    %v4015 = vunpack.c.l.b16 %v3880
    %v4016 = vunpack.c.l.b16 %v3881
    %v4017 = vunpack.c.l.b16 %v3882
    %v4018 = vunpack.c.l.b16 %v3883
    %v4019 = vunpack.c.l.b16 %v3884
    %v4020 = vunpack.c.l.b16 %v3885
    %v4021 = vunpack.c.l.b16 %v3886
    %v4022 = vunpack.c.l.b16 %v3887
    %v4023 = vunpack.c.l.b16 %v3888
    %v4024 = vunpack.c.l.b16 %v3889
    %v4025 = vunpack.c.l.b16 %v3890
    %v4026 = vunpack.c.l.b16 %v3891
    %v4027 = vunpack.c.l.b16 %v3892
    %v4028 = vunpack.c.l.b16 %v3893
    %v4029 = vunpack.c.l.b16 %v3894
    %v4030 = vunpack.c.l.b16 %v3895
    %v4031 = vunpack.c.l.b16 %v3896
    %v4032 = vunpack.c.l.b16 %v3897
    %v4033 = vunpack.c.l.b16 %v3898
    %v4034 = vunpack.c.l.b16 %v3899
    %v4035 = vunpack.c.l.b16 %v3900
    %v4036 = vunpack.c.l.b16 %v3901
    %v4037 = vunpack.c.l.b16 %v3902
    %v4038 = vunpack.c.l.b16 %v3903
    %v4039 = vunpack.c.l.b16 %v3904
    %v4040 = vunpack.c.l.b16 %v3905
    %v4041 = vunpack.c.l.b16 %v3906
    %v4042 = vunpack.c.l.b16 %v3907
    %v4043 = vunpack.c.l.b16 %v3908
    %v4044 = vunpack.c.l.b16 %v3909
    %v4045 = vunpack.c.l.b16 %v3910
    %v4046 = vunpack.c.l.b16 %v3911
    %v4047 = vunpack.c.l.b16 %v3912
    %v4048 = vunpack.c.l.b16 %v3913
    %v4049 = vunpack.c.l.b16 %v3914
    %v4050 = vunpack.c.l.b16 %v3915
    %v4051 = vunpack.c.l.b16 %v3916
    %v4052 = vunpack.c.l.b16 %v3917
    %v4053 = vunpack.c.l.b16 %v3918
    %v4054 = vunpack.c.l.b16 %v3919
    %v4055 = vunpack.c.l.b16 %v3920
    %v4056 = vunpack.c.l.b16 %v3921
    %v4057 = vunpack.c.l.b16 %v3922
    %v4058 = vunpack.c.l.b16 %v3923
    %v4059 = vunpack.c.l.b16 %v3924
    %v4060 = vunpack.c.l.b16 %v3925
    %v4061 = vunpack.c.l.b16 %v3926
    %v4062 = vunpack.c.l.b16 %v3927
    %v4063 = vunpack.c.l.b16 %v3928
    %v4064 = vunpack.c.l.b16 %v3929
    %v4065 = vunpack.c.l.b16 %v3930
    %v4066 = vunpack.c.l.b16 %v3931
    %v4067 = vunpack.c.l.b16 %v3932
    %v4068 = vunpack.c.l.b16 %v3933
    %v4069 = vunpack.c.l.b16 %v3934
    %v4070 = vunpack.c.l.b16 %v3935
    %v4071 = vunpack.c.l.b16 %v3936
    %v4072 = vunpack.c.l.b16 %v3937
    %v4073 = vpack.c.b16 %v4010, %v4009
    %v4074 = vpack.c.b16 %v4012, %v4011
    %v4075 = vpack.c.b16 %v4014, %v4013
    %v4076 = vpack.c.b16 %v4016, %v4015
    %v4077 = vpack.c.b16 %v4018, %v4017
    %v4078 = vpack.c.b16 %v4020, %v4019
    %v4079 = vpack.c.b16 %v4022, %v4021
    %v4080 = vpack.c.b16 %v4024, %v4023
    %v4081 = vpack.c.b16 %v4026, %v4025
    %v4082 = vpack.c.b16 %v4028, %v4027
    %v4083 = vpack.c.b16 %v4030, %v4029
    %v4084 = vpack.c.b16 %v4032, %v4031
    %v4085 = vpack.c.b16 %v4034, %v4033
    %v4086 = vpack.c.b16 %v4036, %v4035
    %v4087 = vpack.c.b16 %v4038, %v4037
    %v4088 = vpack.c.b16 %v4040, %v4039
    %v4089 = vpack.c.b16 %v4042, %v4041
    %v4090 = vpack.c.b16 %v4044, %v4043
    %v4091 = vpack.c.b16 %v4046, %v4045
    %v4092 = vpack.c.b16 %v4048, %v4047
    %v4093 = vpack.c.b16 %v4050, %v4049
    %v4094 = vpack.c.b16 %v4052, %v4051
    %v4095 = vpack.c.b16 %v4054, %v4053
    %v4096 = vpack.c.b16 %v4056, %v4055
    %v4097 = vpack.c.b16 %v4058, %v4057
    %v4098 = vpack.c.b16 %v4060, %v4059
    %v4099 = vpack.c.b16 %v4062, %v4061
    %v4100 = vpack.c.b16 %v4064, %v4063
    %v4101 = vpack.c.b16 %v4066, %v4065
    %v4102 = vpack.c.b16 %v4068, %v4067
    %v4103 = vpack.c.b16 %v4070, %v4069
    %v4104 = vpack.c.b16 %v4072, %v4071
    %4137 = vmatprep.subr.bf16.mxu0 0
    %4138 = vmatpush1.bf16.msra.mxu0 %v4080
    %4139 = vmatprep.subr.bf16.mxu0 0
    %4140 = vmatpush1.bf16.msra.mxu0 %v4079
    %4141 = vmatprep.subr.bf16.mxu0 0
    %4142 = vmatpush1.bf16.msra.mxu0 %v4078
    %4143 = vmatprep.subr.bf16.mxu0 0
    %4144 = vmatpush1.bf16.msra.mxu0 %v4077
    %4145 = vmatprep.subr.bf16.mxu0 0
    %4146 = vmatpush1.bf16.msra.mxu0 %v4076
    %4147 = vmatprep.subr.bf16.mxu0 0
    %4148 = vmatpush1.bf16.msra.mxu0 %v4075
    %4149 = vmatprep.subr.bf16.mxu0 0
    %4150 = vmatpush1.bf16.msra.mxu0 %v4074
    %4151 = vmatprep.subr.bf16.mxu0 0
    %4152 = vmatpush1.bf16.msra.mxu0 %v4073
    %4153 = vmatprep.subr.bf16.mxu0 0
    %4154 = vmatpush2.bf16.msra.mxu0 %v4088
    %4155 = vmatprep.subr.bf16.mxu0 0
    %4156 = vmatpush2.bf16.msra.mxu0 %v4087
    %4157 = vmatprep.subr.bf16.mxu0 0
    %4158 = vmatpush2.bf16.msra.mxu0 %v4086
    %4159 = vmatprep.subr.bf16.mxu0 0
    %4160 = vmatpush2.bf16.msra.mxu0 %v4085
    %4161 = vmatprep.subr.bf16.mxu0 0
    %4162 = vmatpush2.bf16.msra.mxu0 %v4084
    %4163 = vmatprep.subr.bf16.mxu0 0
    %4164 = vmatpush2.bf16.msra.mxu0 %v4083
    %4165 = vmatprep.subr.bf16.mxu0 0
    %4166 = vmatpush2.bf16.msra.mxu0 %v4082
    %4167 = vmatprep.subr.bf16.mxu0 0
    %4168 = vmatpush2.bf16.msra.mxu0 %v4081
    %4169 = vmatprep.mubr.bf16.mxu0 %v3871
    %4170 = vmatmul.mubr.bf16.gmra.mxu0 %v3870
    %v4171 = vpop.f32.mrf.mxu0
    %v4172 = vadd.f32 %v3943, %v4171
    %v4173 = vpop.f32.mrf.mxu0
    %v4174 = vpop.f32.mrf.mxu0
    %v4175 = vpop.f32.mrf.mxu0
    %4176 = vdwg.mxu0
    %4177 = vmatprep.subr.bf16.mxu0 0
    %4178 = vmatpush1.bf16.msra.mxu0 %v4096
    %4179 = vmatprep.subr.bf16.mxu0 0
    %4180 = vmatpush1.bf16.msra.mxu0 %v4095
    %4181 = vmatprep.subr.bf16.mxu0 0
    %4182 = vmatpush1.bf16.msra.mxu0 %v4094
    %4183 = vmatprep.subr.bf16.mxu0 0
    %4184 = vmatpush1.bf16.msra.mxu0 %v4093
    %4185 = vmatprep.subr.bf16.mxu0 0
    %4186 = vmatpush1.bf16.msra.mxu0 %v4092
    %4187 = vmatprep.subr.bf16.mxu0 0
    %4188 = vmatpush1.bf16.msra.mxu0 %v4091
    %4189 = vmatprep.subr.bf16.mxu0 0
    %4190 = vmatpush1.bf16.msra.mxu0 %v4090
    %4191 = vmatprep.subr.bf16.mxu0 0
    %4192 = vmatpush1.bf16.msra.mxu0 %v4089
    %4193 = vmatprep.subr.bf16.mxu0 0
    %4194 = vmatpush2.bf16.msra.mxu0 %v4104
    %4195 = vmatprep.subr.bf16.mxu0 0
    %4196 = vmatpush2.bf16.msra.mxu0 %v4103
    %4197 = vmatprep.subr.bf16.mxu0 0
    %4198 = vmatpush2.bf16.msra.mxu0 %v4102
    %4199 = vmatprep.subr.bf16.mxu0 0
    %4200 = vmatpush2.bf16.msra.mxu0 %v4101
    %4201 = vmatprep.subr.bf16.mxu0 0
    %4202 = vmatpush2.bf16.msra.mxu0 %v4100
    %4203 = vmatprep.subr.bf16.mxu0 0
    %4204 = vmatpush2.bf16.msra.mxu0 %v4099
    %4205 = vmatprep.subr.bf16.mxu0 0
    %4206 = vmatpush2.bf16.msra.mxu0 %v4098
    %4207 = vmatprep.subr.bf16.mxu0 0
    %4208 = vmatpush2.bf16.msra.mxu0 %v4097
    %4209 = vmatprep.mubr.bf16.mxu0 %v3873
    %4210 = vmatmul.mubr.bf16.gmra.mxu0 %v3872
    %v4211 = vpop.f32.mrf.mxu0
    %v4212 = vadd.f32 %v4172, %v4211
    %v4213 = vpop.f32.mrf.mxu0
    %v4214 = vpop.f32.mrf.mxu0
    %v4215 = vpop.f32.mrf.mxu0
    %4216 = vdwg.mxu0
    %vm4217 = vcmask 74752
    %4218 = vst.msk [vmem:[#allocation2] sm:$0x3] %vm4217, %v4212
    // Predicated region
    $region30: #{forward.7} parent=1 // pred_check
      _
    $region31: #{forward.7} parent=1 // pred_check_branch
      %4220 = sbr.rel (0) target = $region33
    $region32: #{forward.7} parent=1 // pred_region
      %s4222 = ssub.s32 32, 32
      %4223 = vsyncadd [#allocation3], %s4222
      %s4225 = sshll.u32 [#allocation2], 4
      %s4226 = int_to_ptr.vmem [resolvable:$true] %s4225
      %4228 = dma.vmem_to_hbm [thread:$0]  %s4226, 32, %s7, [#allocation3]
    $region33: #{forward.7} parent=1 // pred_fallthru
      _
    // Predicated region
    $region34: #{forward.7} parent=1 // pred_check
      _
    $region35: #{forward.7} parent=1 // pred_check_branch
      %4230 = sbr.rel (0) target = $region37
    $region36: #{forward.7} parent=1 // pred_region
      %4231 = dma.done [#allocation3], 32
    $region37: #{forward.7} parent=1 // pred_fallthru
      _
    %4232 = vsyncpa [#allocation3], 1

</llo_original>
